<compile_context>
chip_gen: v5e
topology: v5e:2x2
jax: 0.10.0
libtpu: 0.0.40
codegen_flags: <defaults>
</compile_context>

<pallas_src>
import functools

import jax
import jax.numpy as jnp
from jax import lax
from jax.experimental import pallas as pl
from jax.experimental.pallas import tpu as pltpu


_VMEM_LIMIT = 32 * 1024 * 1024   # safe on every generation (v7x has 64 MiB physical)
_IMG_PER_STEP = 8                # images per conv grid step (sublane-aligned block dim)


# ----------------------------------------------------------------------------
# Kernel 1: fused 3x3 conv (stride 1, pad 1) + bias + ReLU + 2x2 max-pool
#
# Layout: ev/od are the even/odd padded-column phases of the input, shaped
#         (H+2, IMG, (W2+1)*Cin) so that dy taps are leading-dim slices and the
#         dx taps live inside banded weight matrices of shape ((W2+1)*Cin, W2*Cout).
# ----------------------------------------------------------------------------
def _conv_pool_kernel(ev_ref, od_ref, wee_ref, woe_ref, weo_ref, woo_ref, b_ref, o_ref):
    H = ev_ref.shape[0] - 2          # conv input height
    IMG = ev_ref.shape[1]            # images per step
    K = ev_ref.shape[2]              # (W2+1)*Cin
    Nc = wee_ref.shape[2]            # W2*Cout   (lane-dense output width)
    M = H * IMG
    bias = b_ref[...]                # (1, Nc) f32, bias tiled over the W2 groups

    acc_e = jnp.zeros((M, Nc), jnp.float32)
    acc_o = jnp.zeros((M, Nc), jnp.float32)
    for dy in range(3):              # dy halo reuse: overlapping leading-dim slices
        lhs_e = ev_ref[dy:dy + H, :, :].reshape(M, K)      # aligned collapse (sublane=IMG)
        lhs_o = od_ref[dy:dy + H, :, :].reshape(M, K)
        acc_e = acc_e + jnp.dot(lhs_e, wee_ref[dy], preferred_element_type=jnp.float32)
        acc_e = acc_e + jnp.dot(lhs_o, woe_ref[dy], preferred_element_type=jnp.float32)
        acc_o = acc_o + jnp.dot(lhs_o, woo_ref[dy], preferred_element_type=jnp.float32)
        acc_o = acc_o + jnp.dot(lhs_e, weo_ref[dy], preferred_element_type=jnp.float32)

    y_even = jnp.maximum(acc_e + bias, 0.0)                # conv output at even columns
    y_odd = jnp.maximum(acc_o + bias, 0.0)                 # conv output at odd  columns
    wmax = jnp.maximum(y_even, y_odd)                      # 2x2 pool, W direction
    h4 = wmax.reshape(H // 2, 2, IMG, Nc)                  # rows are h-major, img-minor
    pooled = jnp.maximum(h4[:, 0], h4[:, 1])               # 2x2 pool, H direction
    o_ref[...] = pooled.astype(o_ref.dtype)                # (H//2, IMG, Nc) lane-dense store


def conv3x3_relu_pool(x_hnwc, layer, *, out_dtype=jnp.bfloat16, img_per_step=_IMG_PER_STEP):
    """3x3 conv (stride 1, pad 1) + bias + ReLU + 2x2 max-pool.

    x_hnwc : [Hin, N, Win, Cin]  ->  returns [Hin//2, N, Win//2, Cout].
    """
    Hin, N, Win, Cin = x_hnwc.shape
    assert Hin % 2 == 0 and Win % 2 == 0 and img_per_step % 8 == 0
    W2 = Win // 2
    K = (W2 + 1) * Cin
    Nc = layer["bias"].shape[1]
    Cout = Nc // W2
    assert layer["w_ee"].shape == (3, K, Nc), "params built for a different resolution"

    # 1x traffic: pad spatially, split into even/odd column phases (exact partition).
    xp = jnp.pad(x_hnwc.astype(jnp.bfloat16), ((1, 1), (0, 0), (1, 1), (0, 0)))
    ev = xp[:, :, 0::2, :].reshape(Hin + 2, N, K)
    od = xp[:, :, 1::2, :].reshape(Hin + 2, N, K)

    n_pad = img_per_step * pl.cdiv(N, img_per_step)
    if n_pad != N:
        ev = jnp.pad(ev, ((0, 0), (0, n_pad - N), (0, 0)))
        od = jnp.pad(od, ((0, 0), (0, n_pad - N), (0, 0)))

    out = pl.pallas_call(
        _conv_pool_kernel,
        out_shape=jax.ShapeDtypeStruct((Hin // 2, n_pad, Nc), out_dtype),
        grid=(n_pad // img_per_step,),
        in_specs=[
            pl.BlockSpec((Hin + 2, img_per_step, K), lambda n: (0, n, 0)),
            pl.BlockSpec((Hin + 2, img_per_step, K), lambda n: (0, n, 0)),
            pl.BlockSpec((3, K, Nc), lambda n: (0, 0, 0)),
            pl.BlockSpec((3, K, Nc), lambda n: (0, 0, 0)),
            pl.BlockSpec((3, K, Nc), lambda n: (0, 0, 0)),
            pl.BlockSpec((3, K, Nc), lambda n: (0, 0, 0)),
            pl.BlockSpec((1, Nc), lambda n: (0, 0)),
        ],
        out_specs=pl.BlockSpec((Hin // 2, img_per_step, Nc), lambda n: (0, n, 0)),
        compiler_params=pltpu.CompilerParams(
            dimension_semantics=("parallel",),
            vmem_limit_bytes=_VMEM_LIMIT),
    )(ev, od, layer["w_ee"], layer["w_oe"], layer["w_eo"], layer["w_oo"], layer["bias"])

    out = out[:, :N, :]
    return out.reshape(Hin // 2, N, W2, Cout)


def encoder(x_nchw, params):
    """Small ConvNet encoder standing in for AmdimNet.  Returns [N, D] bf16 features."""
    x = jnp.transpose(x_nchw, (2, 0, 3, 1))                  # NCHW -> (H, N, W, C)
    x = conv3x3_relu_pool(x, params["conv1"], out_dtype=jnp.bfloat16)
    x = conv3x3_relu_pool(x, params["conv2"], out_dtype=jnp.bfloat16)
    # (H/4, N, W/4, C) -> [N, D]; the permutation is fixed, so L2 distances are unaffected.
    return jnp.transpose(x, (1, 0, 2, 3)).reshape(x.shape[1], -1)


# ----------------------------------------------------------------------------
# Kernel 2: GLVQ distances  (torch.norm(x - protos, 2, dim=-1) -> reshape -> min)
# ----------------------------------------------------------------------------
def _glvq_kernel(x_ref, p_ref, sqp_ref, o_ref, *, num_protos, num_classes):
    x = x_ref[...].astype(jnp.float32)                     # [TN, D]
    p = p_ref[...].astype(jnp.float32)                     # [P,  D]
    dn = (((1,), (1,)), ((), ()))
    cross = lax.dot_general(x, p, dn, preferred_element_type=jnp.float32)   # f32 cross term
    sq_x = jnp.sum(x * x, axis=1, keepdims=True)                            # [TN, 1]
    dist = jnp.sqrt(jnp.maximum(sq_x + sqp_ref[...] - 2.0 * cross, 0.0))    # [TN, P]
    # min over prototypes-per-class (class is the fast axis of P)
    mins = dist[:, 0:num_classes]
    for i in range(1, num_protos):
        mins = jnp.minimum(mins, dist[:, i * num_classes:(i + 1) * num_classes])
    o_ref[...] = mins


def _pad_rows(x, max_tile=512):
    n = x.shape[0]
    tile = min(max_tile, 8 * pl.cdiv(n, 8))
    n_pad = tile * pl.cdiv(n, tile)
    if n_pad != n:
        x = jnp.pad(x, ((0, n_pad - n), (0, 0)))
    return x, tile, n_pad


def glvq_distances(x_feat, enc_protos, num_protos, num_classes):
    N, D = x_feat.shape
    P = enc_protos.shape[0]
    x_feat, row_tile, n_pad = _pad_rows(x_feat)
    # hoisted prototype squared norms (f32), prototypes streamed as bf16
    pf = enc_protos.astype(jnp.float32)
    sq_p = jnp.sum(pf * pf, axis=1)[None, :]
    kernel = functools.partial(_glvq_kernel, num_protos=num_protos, num_classes=num_classes)
    out = pl.pallas_call(
        kernel,
        out_shape=jax.ShapeDtypeStruct((n_pad, num_classes), jnp.float32),
        grid=(n_pad // row_tile,),
        in_specs=[
            pl.BlockSpec((row_tile, D), lambda i: (i, 0)),
            pl.BlockSpec((P, D), lambda i: (0, 0)),
            pl.BlockSpec((1, P), lambda i: (0, 0)),
        ],
        out_specs=pl.BlockSpec((row_tile, num_classes), lambda i: (i, 0)),
        compiler_params=pltpu.CompilerParams(
            dimension_semantics=("parallel",),
            vmem_limit_bytes=_VMEM_LIMIT),
    )(x_feat, enc_protos.astype(jnp.bfloat16), sq_p)
    return out[:N]


# ----------------------------------------------------------------------------
# Kernel 3: euclidean_metric  logits[n,m] = -sum_k (a[n,k]-b[m,k])^2 / temperature
# ----------------------------------------------------------------------------
def _euclid_kernel(a_ref, b_ref, sqb_ref, o_ref, *, inv_temp):
    a = a_ref[...].astype(jnp.float32)                     # [tn, K]
    b = b_ref[...].astype(jnp.float32)                     # [m,  K]
    dn = (((1,), (1,)), ((), ()))
    cross = lax.dot_general(a, b, dn, preferred_element_type=jnp.float32)   # [tn, m]
    sq_a = jnp.sum(a * a, axis=1, keepdims=True)                            # [tn, 1]
    o_ref[...] = -(sq_a + sqb_ref[...] - 2.0 * cross) * inv_temp


def euclidean_metric(a, b, temperature):
    n, K = a.shape
    m = b.shape[0]
    a, row_tile, n_pad = _pad_rows(a)
    bf = b.astype(jnp.float32)
    sq_b = jnp.sum(bf * bf, axis=1)[None, :]               # hoisted, grid-invariant
    kernel = functools.partial(_euclid_kernel, inv_temp=float(1.0 / temperature))
    out = pl.pallas_call(
        kernel,
        out_shape=jax.ShapeDtypeStruct((n_pad, m), jnp.float32),
        grid=(n_pad // row_tile,),
        in_specs=[
            pl.BlockSpec((row_tile, K), lambda i: (i, 0)),
            pl.BlockSpec((m, K), lambda i: (0, 0)),
            pl.BlockSpec((1, m), lambda i: (0, 0)),
        ],
        out_specs=pl.BlockSpec((row_tile, m), lambda i: (i, 0)),
        compiler_params=pltpu.CompilerParams(
            dimension_semantics=("parallel",),
            vmem_limit_bytes=_VMEM_LIMIT),
    )(a, b, sq_b)
    return out[:n]


# ----------------------------------------------------------------------------
# ProtoNet forward
# ----------------------------------------------------------------------------
@functools.partial(jax.jit, static_argnames=("way", "protos_per_class", "shot",
                                              "temperature", "train"))
def protonet_forward(data_shot, data_query, params, protos, *, way, protos_per_class,
                     shot, temperature, train=True):
    ns, nq = data_shot.shape[0], data_query.shape[0]
    if train:
        # one batched encoder pass over shot + query + GLVQ prototypes (weights DMA'd once)
        feats = encoder(jnp.concatenate([data_shot, data_query, protos], axis=0), params)
        proto = feats[:ns]
        proto_q = feats[ns:ns + nq]
        enc_protos = feats[ns + nq:]
        # one merged single-step GLVQ call for shot + query rows
        d = glvq_distances(jnp.concatenate([proto, proto_q], axis=0), enc_protos,
                           protos_per_class, way)
        proto_glvq, proto_q_glvq = d[:ns], d[ns:]
        logits = euclidean_metric(proto_q_glvq, proto_glvq, temperature)
    else:
        feats = encoder(jnp.concatenate([data_shot, data_query], axis=0), params)
        proto, proto_q = feats[:ns], feats[ns:]
        proto_mean = proto.reshape(shot, way, -1).mean(axis=0)             # [way, D]
        logits = euclidean_metric(proto_q, proto_mean, temperature)
    return logits


# ----------------------------------------------------------------------------
# Parameter construction (PyTorch [Cout, Cin, 3, 3] layout -> banded kernel layout)
# ----------------------------------------------------------------------------
def make_conv_params(w_oihw, b, w2):
    """Build block-Toeplitz weights for one conv layer at output half-width w2."""
    cout, cin = w_oihw.shape[0], w_oihw.shape[1]
    wt = jnp.transpose(w_oihw, (2, 3, 1, 0))               # [dy, dx, Cin, Cout]
    nc = w2 * cout

    def banded(taps):
        # taps: list of (row_shift, weight [Cin, Cout]); result [(w2+1)*Cin, w2*Cout]
        B = jnp.zeros((w2 + 1, w2, cin, cout), jnp.float32)
        q = jnp.arange(w2)
        for r, w in taps:
            B = B.at[q + r, q, :, :].add(jnp.broadcast_to(w, (w2, cin, cout)))
        return jnp.transpose(B, (0, 2, 1, 3)).reshape((w2 + 1) * cin, nc)

    w_ee, w_oe, w_eo, w_oo = [], [], [], []
    for dy in range(3):
        w_ee.append(banded([(0, wt[dy, 0]), (1, wt[dy, 2])]))   # ev -> even cols: dx=0, dx=2
        w_oe.append(banded([(0, wt[dy, 1])]))                   # od -> even cols: dx=1
        w_eo.append(banded([(1, wt[dy, 1])]))                   # ev -> odd  cols: dx=1
        w_oo.append(banded([(0, wt[dy, 0]), (1, wt[dy, 2])]))   # od -> odd  cols: dx=0, dx=2
    pack = lambda ws: jnp.stack(ws).astype(jnp.bfloat16)        # (3, (w2+1)*Cin, w2*Cout)
    bias = jnp.tile(b, (w2,)).reshape(1, nc).astype(jnp.float32)
    return {"w_ee": pack(w_ee), "w_oe": pack(w_oe),
            "w_eo": pack(w_eo), "w_oo": pack(w_oo), "bias": bias}


def init_params(key, cin, hid, img_hw):
    H, W = img_hw
    k1, k2, k3, k4 = jax.random.split(key, 4)
    # weights created in PyTorch [Cout, Cin, kH, kW] layout
    w1 = 0.1 * jax.random.normal(k1, (hid, cin, 3, 3), jnp.float32)
    w2 = 0.1 * jax.random.normal(k2, (hid, hid, 3, 3), jnp.float32)
    b1 = 0.01 * jax.random.normal(k3, (hid,), jnp.float32)
    b2 = 0.01 * jax.random.normal(k4, (hid,), jnp.float32)
    return {"conv1": make_conv_params(w1, b1, W // 2),
            "conv2": make_conv_params(w2, b2, W // 4)}


if __name__ == "__main__":
    key = jax.random.PRNGKey(0)
    k_data, k_shot, k_query, k_param = jax.random.split(key, 4)

    # args (synthetic): way=4 classes, 2 prototypes per class, 1 shot, temperature=16
    way, protos_per_class, shot, temperature = 4, 2, 1, 16.0
    C, H, W = 3, 32, 32
    n_query_per_class = 2

    # GLVQ.__init__: protos = mean(data, dim=0) repeated (num_protos * num_classes) times
    data_for_init = jax.random.normal(k_data, (6, C, H, W), jnp.float32)
    nall = way * protos_per_class
    protos = jnp.repeat(jnp.mean(data_for_init, axis=0)[None, :], nall, axis=0)   # [8,3,32,32]

    data_shot = jax.random.normal(k_shot, (way * shot, C, H, W), jnp.float32)                 # [4,3,32,32]
    data_query = jax.random.normal(k_query, (way * n_query_per_class, C, H, W), jnp.float32)  # [8,3,32,32]

    params = init_params(k_param, C, hid=16, img_hw=(H, W))

    logits_train = protonet_forward(
        data_shot, data_query, params, protos,
        way=way, protos_per_class=protos_per_class, shot=shot,
        temperature=temperature, train=True)
    logits_eval = protonet_forward(
        data_shot, data_query, params, protos,
        way=way, protos_per_class=protos_per_class, shot=shot,
        temperature=temperature, train=False)

    jax.block_until_ready(logits_train)
    jax.block_until_ready(logits_eval)

    assert logits_train.shape == (way * n_query_per_class, way * shot)
    assert logits_eval.shape == (way * n_query_per_class, way)
    assert bool(jnp.all(jnp.isfinite(logits_train)))
    assert bool(jnp.all(jnp.isfinite(logits_eval)))
    print("KERNEL_OK")
</pallas_src>

<mosaic_0001>
module attributes {stable_mosaic.version = 11 : i64} {
  func.func @_conv_pool_kernel(%arg0: i32, %arg1: memref<34x8x51xbf16, #tpu.memory_space<vmem>>, %arg2: memref<34x8x51xbf16, #tpu.memory_space<vmem>>, %arg3: memref<3x51x256xbf16, #tpu.memory_space<vmem>>, %arg4: memref<3x51x256xbf16, #tpu.memory_space<vmem>>, %arg5: memref<3x51x256xbf16, #tpu.memory_space<vmem>>, %arg6: memref<3x51x256xbf16, #tpu.memory_space<vmem>>, %arg7: memref<1x256xf32, #tpu.memory_space<vmem>>, %arg8: memref<16x8x256xbf16, #tpu.memory_space<vmem>>) attributes {dimension_semantics = [#tpu.dimension_semantics<parallel>], iteration_bounds = array<i64: 3>, scalar_prefetch = 0 : i64, scratch_operands = 0 : i64, tpu.core_type = #tpu.core_type<tc>, window_params = [{transform_indices = @transform_0, window_bounds = array<i64: 34, 8, 51>}, {transform_indices = @transform_1, window_bounds = array<i64: 34, 8, 51>}, {pipeline_mode = #tpu.pipeline_mode<synchronous>, transform_indices = @transform_2, window_bounds = array<i64: 3, 51, 256>}, {pipeline_mode = #tpu.pipeline_mode<synchronous>, transform_indices = @transform_3, window_bounds = array<i64: 3, 51, 256>}, {pipeline_mode = #tpu.pipeline_mode<synchronous>, transform_indices = @transform_4, window_bounds = array<i64: 3, 51, 256>}, {pipeline_mode = #tpu.pipeline_mode<synchronous>, transform_indices = @transform_5, window_bounds = array<i64: 3, 51, 256>}, {pipeline_mode = #tpu.pipeline_mode<synchronous>, transform_indices = @transform_6, window_bounds = array<i64: 1, 256>}, {transform_indices = @transform_7, window_bounds = array<i64: 16, 8, 256>}]} {
    %c0 = arith.constant 0 : index
    %c0_0 = arith.constant 0 : index
    %0 = vector.load %arg7[%c0, %c0_0] : memref<1x256xf32, #tpu.memory_space<vmem>>, vector<1x256xf32>
    %cst = arith.constant 0.000000e+00 : f32
    %1 = vector.broadcast %cst : f32 to vector<256x256xf32>
    %cst_1 = arith.constant 0.000000e+00 : f32
    %2 = vector.broadcast %cst_1 : f32 to vector<256x256xf32>
    %c0_2 = arith.constant 0 : index
    %c0_3 = arith.constant 0 : index
    %c0_4 = arith.constant 0 : index
    %3 = vector.load %arg1[%c0_2, %c0_3, %c0_4] : memref<34x8x51xbf16, #tpu.memory_space<vmem>>, vector<32x8x51xbf16>
    %4 = vector.shape_cast %3 : vector<32x8x51xbf16> to vector<256x51xbf16>
    %c0_5 = arith.constant 0 : index
    %c0_6 = arith.constant 0 : index
    %c0_7 = arith.constant 0 : index
    %5 = vector.load %arg2[%c0_5, %c0_6, %c0_7] : memref<34x8x51xbf16, #tpu.memory_space<vmem>>, vector<32x8x51xbf16>
    %6 = vector.shape_cast %5 : vector<32x8x51xbf16> to vector<256x51xbf16>
    %c0_8 = arith.constant 0 : index
    %c0_9 = arith.constant 0 : index
    %c0_10 = arith.constant 0 : index
    %7 = vector.load %arg3[%c0_8, %c0_9, %c0_10] : memref<3x51x256xbf16, #tpu.memory_space<vmem>>, vector<1x51x256xbf16>
    %8 = vector.shape_cast %7 : vector<1x51x256xbf16> to vector<51x256xbf16>
    %cst_11 = arith.constant dense<0.000000e+00> : vector<256x256xf32>
    %9 = tpu.matmul %4, %8, %cst_11 {dimension_numbers = #tpu.dot_dimension_numbers<[1], [0], [0], [1], [0, 0, 1, 1], [], []>} : vector<256x51xbf16>, vector<51x256xbf16>, vector<256x256xf32> -> vector<256x256xf32>
    %10 = arith.addf %1, %9 : vector<256x256xf32>
    %c0_12 = arith.constant 0 : index
    %c0_13 = arith.constant 0 : index
    %c0_14 = arith.constant 0 : index
    %11 = vector.load %arg4[%c0_12, %c0_13, %c0_14] : memref<3x51x256xbf16, #tpu.memory_space<vmem>>, vector<1x51x256xbf16>
    %12 = vector.shape_cast %11 : vector<1x51x256xbf16> to vector<51x256xbf16>
    %cst_15 = arith.constant dense<0.000000e+00> : vector<256x256xf32>
    %13 = tpu.matmul %6, %12, %cst_15 {dimension_numbers = #tpu.dot_dimension_numbers<[1], [0], [0], [1], [0, 0, 1, 1], [], []>} : vector<256x51xbf16>, vector<51x256xbf16>, vector<256x256xf32> -> vector<256x256xf32>
    %14 = arith.addf %10, %13 : vector<256x256xf32>
    %c0_16 = arith.constant 0 : index
    %c0_17 = arith.constant 0 : index
    %c0_18 = arith.constant 0 : index
    %15 = vector.load %arg6[%c0_16, %c0_17, %c0_18] : memref<3x51x256xbf16, #tpu.memory_space<vmem>>, vector<1x51x256xbf16>
    %16 = vector.shape_cast %15 : vector<1x51x256xbf16> to vector<51x256xbf16>
    %cst_19 = arith.constant dense<0.000000e+00> : vector<256x256xf32>
    %17 = tpu.matmul %6, %16, %cst_19 {dimension_numbers = #tpu.dot_dimension_numbers<[1], [0], [0], [1], [0, 0, 1, 1], [], []>} : vector<256x51xbf16>, vector<51x256xbf16>, vector<256x256xf32> -> vector<256x256xf32>
    %18 = arith.addf %2, %17 : vector<256x256xf32>
    %c0_20 = arith.constant 0 : index
    %c0_21 = arith.constant 0 : index
    %c0_22 = arith.constant 0 : index
    %19 = vector.load %arg5[%c0_20, %c0_21, %c0_22] : memref<3x51x256xbf16, #tpu.memory_space<vmem>>, vector<1x51x256xbf16>
    %20 = vector.shape_cast %19 : vector<1x51x256xbf16> to vector<51x256xbf16>
    %cst_23 = arith.constant dense<0.000000e+00> : vector<256x256xf32>
    %21 = tpu.matmul %4, %20, %cst_23 {dimension_numbers = #tpu.dot_dimension_numbers<[1], [0], [0], [1], [0, 0, 1, 1], [], []>} : vector<256x51xbf16>, vector<51x256xbf16>, vector<256x256xf32> -> vector<256x256xf32>
    %22 = arith.addf %18, %21 : vector<256x256xf32>
    %c1 = arith.constant 1 : index
    %c0_24 = arith.constant 0 : index
    %c0_25 = arith.constant 0 : index
    %23 = vector.load %arg1[%c1, %c0_24, %c0_25] : memref<34x8x51xbf16, #tpu.memory_space<vmem>>, vector<32x8x51xbf16>
    %24 = vector.shape_cast %23 : vector<32x8x51xbf16> to vector<256x51xbf16>
    %c1_26 = arith.constant 1 : index
    %c0_27 = arith.constant 0 : index
    %c0_28 = arith.constant 0 : index
    %25 = vector.load %arg2[%c1_26, %c0_27, %c0_28] : memref<34x8x51xbf16, #tpu.memory_space<vmem>>, vector<32x8x51xbf16>
    %26 = vector.shape_cast %25 : vector<32x8x51xbf16> to vector<256x51xbf16>
    %c1_29 = arith.constant 1 : index
    %c0_30 = arith.constant 0 : index
    %c0_31 = arith.constant 0 : index
    %27 = vector.load %arg3[%c1_29, %c0_30, %c0_31] : memref<3x51x256xbf16, #tpu.memory_space<vmem>>, vector<1x51x256xbf16>
    %28 = vector.shape_cast %27 : vector<1x51x256xbf16> to vector<51x256xbf16>
    %cst_32 = arith.constant dense<0.000000e+00> : vector<256x256xf32>
    %29 = tpu.matmul %24, %28, %cst_32 {dimension_numbers = #tpu.dot_dimension_numbers<[1], [0], [0], [1], [0, 0, 1, 1], [], []>} : vector<256x51xbf16>, vector<51x256xbf16>, vector<256x256xf32> -> vector<256x256xf32>
    %30 = arith.addf %14, %29 : vector<256x256xf32>
    %c1_33 = arith.constant 1 : index
    %c0_34 = arith.constant 0 : index
    %c0_35 = arith.constant 0 : index
    %31 = vector.load %arg4[%c1_33, %c0_34, %c0_35] : memref<3x51x256xbf16, #tpu.memory_space<vmem>>, vector<1x51x256xbf16>
    %32 = vector.shape_cast %31 : vector<1x51x256xbf16> to vector<51x256xbf16>
    %cst_36 = arith.constant dense<0.000000e+00> : vector<256x256xf32>
    %33 = tpu.matmul %26, %32, %cst_36 {dimension_numbers = #tpu.dot_dimension_numbers<[1], [0], [0], [1], [0, 0, 1, 1], [], []>} : vector<256x51xbf16>, vector<51x256xbf16>, vector<256x256xf32> -> vector<256x256xf32>
    %34 = arith.addf %30, %33 : vector<256x256xf32>
    %c1_37 = arith.constant 1 : index
    %c0_38 = arith.constant 0 : index
    %c0_39 = arith.constant 0 : index
    %35 = vector.load %arg6[%c1_37, %c0_38, %c0_39] : memref<3x51x256xbf16, #tpu.memory_space<vmem>>, vector<1x51x256xbf16>
    %36 = vector.shape_cast %35 : vector<1x51x256xbf16> to vector<51x256xbf16>
    %cst_40 = arith.constant dense<0.000000e+00> : vector<256x256xf32>
    %37 = tpu.matmul %26, %36, %cst_40 {dimension_numbers = #tpu.dot_dimension_numbers<[1], [0], [0], [1], [0, 0, 1, 1], [], []>} : vector<256x51xbf16>, vector<51x256xbf16>, vector<256x256xf32> -> vector<256x256xf32>
    %38 = arith.addf %22, %37 : vector<256x256xf32>
    %c1_41 = arith.constant 1 : index
    %c0_42 = arith.constant 0 : index
    %c0_43 = arith.constant 0 : index
    %39 = vector.load %arg5[%c1_41, %c0_42, %c0_43] : memref<3x51x256xbf16, #tpu.memory_space<vmem>>, vector<1x51x256xbf16>
    %40 = vector.shape_cast %39 : vector<1x51x256xbf16> to vector<51x256xbf16>
    %cst_44 = arith.constant dense<0.000000e+00> : vector<256x256xf32>
    %41 = tpu.matmul %24, %40, %cst_44 {dimension_numbers = #tpu.dot_dimension_numbers<[1], [0], [0], [1], [0, 0, 1, 1], [], []>} : vector<256x51xbf16>, vector<51x256xbf16>, vector<256x256xf32> -> vector<256x256xf32>
    %42 = arith.addf %38, %41 : vector<256x256xf32>
    %c2 = arith.constant 2 : index
    %c0_45 = arith.constant 0 : index
    %c0_46 = arith.constant 0 : index
    %43 = vector.load %arg1[%c2, %c0_45, %c0_46] : memref<34x8x51xbf16, #tpu.memory_space<vmem>>, vector<32x8x51xbf16>
    %44 = vector.shape_cast %43 : vector<32x8x51xbf16> to vector<256x51xbf16>
    %c2_47 = arith.constant 2 : index
    %c0_48 = arith.constant 0 : index
    %c0_49 = arith.constant 0 : index
    %45 = vector.load %arg2[%c2_47, %c0_48, %c0_49] : memref<34x8x51xbf16, #tpu.memory_space<vmem>>, vector<32x8x51xbf16>
    %46 = vector.shape_cast %45 : vector<32x8x51xbf16> to vector<256x51xbf16>
    %c2_50 = arith.constant 2 : index
    %c0_51 = arith.constant 0 : index
    %c0_52 = arith.constant 0 : index
    %47 = vector.load %arg3[%c2_50, %c0_51, %c0_52] : memref<3x51x256xbf16, #tpu.memory_space<vmem>>, vector<1x51x256xbf16>
    %48 = vector.shape_cast %47 : vector<1x51x256xbf16> to vector<51x256xbf16>
    %cst_53 = arith.constant dense<0.000000e+00> : vector<256x256xf32>
    %49 = tpu.matmul %44, %48, %cst_53 {dimension_numbers = #tpu.dot_dimension_numbers<[1], [0], [0], [1], [0, 0, 1, 1], [], []>} : vector<256x51xbf16>, vector<51x256xbf16>, vector<256x256xf32> -> vector<256x256xf32>
    %50 = arith.addf %34, %49 : vector<256x256xf32>
    %c2_54 = arith.constant 2 : index
    %c0_55 = arith.constant 0 : index
    %c0_56 = arith.constant 0 : index
    %51 = vector.load %arg4[%c2_54, %c0_55, %c0_56] : memref<3x51x256xbf16, #tpu.memory_space<vmem>>, vector<1x51x256xbf16>
    %52 = vector.shape_cast %51 : vector<1x51x256xbf16> to vector<51x256xbf16>
    %cst_57 = arith.constant dense<0.000000e+00> : vector<256x256xf32>
    %53 = tpu.matmul %46, %52, %cst_57 {dimension_numbers = #tpu.dot_dimension_numbers<[1], [0], [0], [1], [0, 0, 1, 1], [], []>} : vector<256x51xbf16>, vector<51x256xbf16>, vector<256x256xf32> -> vector<256x256xf32>
    %54 = arith.addf %50, %53 : vector<256x256xf32>
    %c2_58 = arith.constant 2 : index
    %c0_59 = arith.constant 0 : index
    %c0_60 = arith.constant 0 : index
    %55 = vector.load %arg6[%c2_58, %c0_59, %c0_60] : memref<3x51x256xbf16, #tpu.memory_space<vmem>>, vector<1x51x256xbf16>
    %56 = vector.shape_cast %55 : vector<1x51x256xbf16> to vector<51x256xbf16>
    %cst_61 = arith.constant dense<0.000000e+00> : vector<256x256xf32>
    %57 = tpu.matmul %46, %56, %cst_61 {dimension_numbers = #tpu.dot_dimension_numbers<[1], [0], [0], [1], [0, 0, 1, 1], [], []>} : vector<256x51xbf16>, vector<51x256xbf16>, vector<256x256xf32> -> vector<256x256xf32>
    %58 = arith.addf %42, %57 : vector<256x256xf32>
    %c2_62 = arith.constant 2 : index
    %c0_63 = arith.constant 0 : index
    %c0_64 = arith.constant 0 : index
    %59 = vector.load %arg5[%c2_62, %c0_63, %c0_64] : memref<3x51x256xbf16, #tpu.memory_space<vmem>>, vector<1x51x256xbf16>
    %60 = vector.shape_cast %59 : vector<1x51x256xbf16> to vector<51x256xbf16>
    %cst_65 = arith.constant dense<0.000000e+00> : vector<256x256xf32>
    %61 = tpu.matmul %44, %60, %cst_65 {dimension_numbers = #tpu.dot_dimension_numbers<[1], [0], [0], [1], [0, 0, 1, 1], [], []>} : vector<256x51xbf16>, vector<51x256xbf16>, vector<256x256xf32> -> vector<256x256xf32>
    %62 = arith.addf %58, %61 : vector<256x256xf32>
    %63 = vector.broadcast %0 : vector<1x256xf32> to vector<256x256xf32>
    %64 = arith.addf %54, %63 : vector<256x256xf32>
    %cst_66 = arith.constant 0.000000e+00 : f32
    %65 = vector.broadcast %cst_66 : f32 to vector<256x256xf32>
    %66 = arith.maximumf %64, %65 : vector<256x256xf32>
    %67 = vector.broadcast %0 : vector<1x256xf32> to vector<256x256xf32>
    %68 = arith.addf %62, %67 : vector<256x256xf32>
    %cst_67 = arith.constant 0.000000e+00 : f32
    %69 = vector.broadcast %cst_67 : f32 to vector<256x256xf32>
    %70 = arith.maximumf %68, %69 : vector<256x256xf32>
    %71 = arith.maximumf %66, %70 : vector<256x256xf32>
    %72 = vector.shape_cast %71 : vector<256x256xf32> to vector<16x2x8x256xf32>
    %73 = vector.extract_strided_slice %72 {offsets = [0, 0, 0, 0], sizes = [16, 1, 8, 256], strides = [1, 1, 1, 1]} : vector<16x2x8x256xf32> to vector<16x1x8x256xf32>
    %74 = vector.shape_cast %73 : vector<16x1x8x256xf32> to vector<16x8x256xf32>
    %75 = vector.extract_strided_slice %72 {offsets = [0, 1, 0, 0], sizes = [16, 1, 8, 256], strides = [1, 1, 1, 1]} : vector<16x2x8x256xf32> to vector<16x1x8x256xf32>
    %76 = vector.shape_cast %75 : vector<16x1x8x256xf32> to vector<16x8x256xf32>
    %77 = arith.maximumf %74, %76 : vector<16x8x256xf32>
    %78 = arith.truncf %77 : vector<16x8x256xf32> to vector<16x8x256xbf16>
    %c0_68 = arith.constant 0 : index
    %c0_69 = arith.constant 0 : index
    %c0_70 = arith.constant 0 : index
    %79 = vector.load %arg8[%c0_68, %c0_69, %c0_70] : memref<16x8x256xbf16, #tpu.memory_space<vmem>>, vector<16x8x256xbf16>
    tpu.vector_store %arg8[%c0_68, %c0_69, %c0_70], %78 {strides = array<i32>} : memref<16x8x256xbf16, #tpu.memory_space<vmem>>, vector<16x8x256xbf16>,
    return
  }
  func.func @transform_0(%arg0: i32) -> (i32, i32, i32) {
    %c0_i32 = arith.constant 0 : i32
    %c0_i32_0 = arith.constant 0 : i32
    %c0_i32_1 = arith.constant 0 : i32
    return %c0_i32, %arg0, %c0_i32_0 : i32, i32, i32
  }
  func.func @transform_1(%arg0: i32) -> (i32, i32, i32) {
    %c0_i32 = arith.constant 0 : i32
    %c0_i32_0 = arith.constant 0 : i32
    %c0_i32_1 = arith.constant 0 : i32
    return %c0_i32, %arg0, %c0_i32_0 : i32, i32, i32
  }
  func.func @transform_2(%arg0: i32) -> (i32, i32, i32) {
    %c0_i32 = arith.constant 0 : i32
    %c0_i32_0 = arith.constant 0 : i32
    %c0_i32_1 = arith.constant 0 : i32
    %c0_i32_2 = arith.constant 0 : i32
    return %c0_i32, %c0_i32_0, %c0_i32_1 : i32, i32, i32
  }
  func.func @transform_3(%arg0: i32) -> (i32, i32, i32) {
    %c0_i32 = arith.constant 0 : i32
    %c0_i32_0 = arith.constant 0 : i32
    %c0_i32_1 = arith.constant 0 : i32
    %c0_i32_2 = arith.constant 0 : i32
    return %c0_i32, %c0_i32_0, %c0_i32_1 : i32, i32, i32
  }
  func.func @transform_4(%arg0: i32) -> (i32, i32, i32) {
    %c0_i32 = arith.constant 0 : i32
    %c0_i32_0 = arith.constant 0 : i32
    %c0_i32_1 = arith.constant 0 : i32
    %c0_i32_2 = arith.constant 0 : i32
    return %c0_i32, %c0_i32_0, %c0_i32_1 : i32, i32, i32
  }
  func.func @transform_5(%arg0: i32) -> (i32, i32, i32) {
    %c0_i32 = arith.constant 0 : i32
    %c0_i32_0 = arith.constant 0 : i32
    %c0_i32_1 = arith.constant 0 : i32
    %c0_i32_2 = arith.constant 0 : i32
    return %c0_i32, %c0_i32_0, %c0_i32_1 : i32, i32, i32
  }
  func.func @transform_6(%arg0: i32) -> (i32, i32) {
    %c0_i32 = arith.constant 0 : i32
    %c0_i32_0 = arith.constant 0 : i32
    %c0_i32_1 = arith.constant 0 : i32
    return %c0_i32, %c0_i32_0 : i32, i32
  }
  func.func @transform_7(%arg0: i32) -> (i32, i32, i32) {
    %c0_i32 = arith.constant 0 : i32
    %c0_i32_0 = arith.constant 0 : i32
    %c0_i32_1 = arith.constant 0 : i32
    return %c0_i32, %arg0, %c0_i32_0 : i32, i32, i32
  }
}

module attributes {stable_mosaic.version = 11 : i64} {
  func.func @_conv_pool_kernel(%arg0: i32, %arg1: memref<18x8x144xbf16, #tpu.memory_space<vmem>>, %arg2: memref<18x8x144xbf16, #tpu.memory_space<vmem>>, %arg3: memref<3x144x128xbf16, #tpu.memory_space<vmem>>, %arg4: memref<3x144x128xbf16, #tpu.memory_space<vmem>>, %arg5: memref<3x144x128xbf16, #tpu.memory_space<vmem>>, %arg6: memref<3x144x128xbf16, #tpu.memory_space<vmem>>, %arg7: memref<1x128xf32, #tpu.memory_space<vmem>>, %arg8: memref<8x8x128xbf16, #tpu.memory_space<vmem>>) attributes {dimension_semantics = [#tpu.dimension_semantics<parallel>], iteration_bounds = array<i64: 3>, scalar_prefetch = 0 : i64, scratch_operands = 0 : i64, tpu.core_type = #tpu.core_type<tc>, window_params = [{transform_indices = @transform_0, window_bounds = array<i64: 18, 8, 144>}, {transform_indices = @transform_1, window_bounds = array<i64: 18, 8, 144>}, {pipeline_mode = #tpu.pipeline_mode<synchronous>, transform_indices = @transform_2, window_bounds = array<i64: 3, 144, 128>}, {pipeline_mode = #tpu.pipeline_mode<synchronous>, transform_indices = @transform_3, window_bounds = array<i64: 3, 144, 128>}, {pipeline_mode = #tpu.pipeline_mode<synchronous>, transform_indices = @transform_4, window_bounds = array<i64: 3, 144, 128>}, {pipeline_mode = #tpu.pipeline_mode<synchronous>, transform_indices = @transform_5, window_bounds = array<i64: 3, 144, 128>}, {pipeline_mode = #tpu.pipeline_mode<synchronous>, transform_indices = @transform_6, window_bounds = array<i64: 1, 128>}, {transform_indices = @transform_7, window_bounds = array<i64: 8, 8, 128>}]} {
    %c0 = arith.constant 0 : index
    %c0_0 = arith.constant 0 : index
    %0 = vector.load %arg7[%c0, %c0_0] : memref<1x128xf32, #tpu.memory_space<vmem>>, vector<1x128xf32>
    %cst = arith.constant 0.000000e+00 : f32
    %1 = vector.broadcast %cst : f32 to vector<128x128xf32>
    %cst_1 = arith.constant 0.000000e+00 : f32
    %2 = vector.broadcast %cst_1 : f32 to vector<128x128xf32>
    %c0_2 = arith.constant 0 : index
    %c0_3 = arith.constant 0 : index
    %c0_4 = arith.constant 0 : index
    %3 = vector.load %arg1[%c0_2, %c0_3, %c0_4] : memref<18x8x144xbf16, #tpu.memory_space<vmem>>, vector<16x8x144xbf16>
    %4 = vector.shape_cast %3 : vector<16x8x144xbf16> to vector<128x144xbf16>
    %c0_5 = arith.constant 0 : index
    %c0_6 = arith.constant 0 : index
    %c0_7 = arith.constant 0 : index
    %5 = vector.load %arg2[%c0_5, %c0_6, %c0_7] : memref<18x8x144xbf16, #tpu.memory_space<vmem>>, vector<16x8x144xbf16>
    %6 = vector.shape_cast %5 : vector<16x8x144xbf16> to vector<128x144xbf16>
    %c0_8 = arith.constant 0 : index
    %c0_9 = arith.constant 0 : index
    %c0_10 = arith.constant 0 : index
    %7 = vector.load %arg3[%c0_8, %c0_9, %c0_10] : memref<3x144x128xbf16, #tpu.memory_space<vmem>>, vector<1x144x128xbf16>
    %8 = vector.shape_cast %7 : vector<1x144x128xbf16> to vector<144x128xbf16>
    %cst_11 = arith.constant dense<0.000000e+00> : vector<128x128xf32>
    %9 = tpu.matmul %4, %8, %cst_11 {dimension_numbers = #tpu.dot_dimension_numbers<[1], [0], [0], [1], [0, 0, 1, 1], [], []>} : vector<128x144xbf16>, vector<144x128xbf16>, vector<128x128xf32> -> vector<128x128xf32>
    %10 = arith.addf %1, %9 : vector<128x128xf32>
    %c0_12 = arith.constant 0 : index
    %c0_13 = arith.constant 0 : index
    %c0_14 = arith.constant 0 : index
    %11 = vector.load %arg4[%c0_12, %c0_13, %c0_14] : memref<3x144x128xbf16, #tpu.memory_space<vmem>>, vector<1x144x128xbf16>
    %12 = vector.shape_cast %11 : vector<1x144x128xbf16> to vector<144x128xbf16>
    %cst_15 = arith.constant dense<0.000000e+00> : vector<128x128xf32>
    %13 = tpu.matmul %6, %12, %cst_15 {dimension_numbers = #tpu.dot_dimension_numbers<[1], [0], [0], [1], [0, 0, 1, 1], [], []>} : vector<128x144xbf16>, vector<144x128xbf16>, vector<128x128xf32> -> vector<128x128xf32>
    %14 = arith.addf %10, %13 : vector<128x128xf32>
    %c0_16 = arith.constant 0 : index
    %c0_17 = arith.constant 0 : index
    %c0_18 = arith.constant 0 : index
    %15 = vector.load %arg6[%c0_16, %c0_17, %c0_18] : memref<3x144x128xbf16, #tpu.memory_space<vmem>>, vector<1x144x128xbf16>
    %16 = vector.shape_cast %15 : vector<1x144x128xbf16> to vector<144x128xbf16>
    %cst_19 = arith.constant dense<0.000000e+00> : vector<128x128xf32>
    %17 = tpu.matmul %6, %16, %cst_19 {dimension_numbers = #tpu.dot_dimension_numbers<[1], [0], [0], [1], [0, 0, 1, 1], [], []>} : vector<128x144xbf16>, vector<144x128xbf16>, vector<128x128xf32> -> vector<128x128xf32>
    %18 = arith.addf %2, %17 : vector<128x128xf32>
    %c0_20 = arith.constant 0 : index
    %c0_21 = arith.constant 0 : index
    %c0_22 = arith.constant 0 : index
    %19 = vector.load %arg5[%c0_20, %c0_21, %c0_22] : memref<3x144x128xbf16, #tpu.memory_space<vmem>>, vector<1x144x128xbf16>
    %20 = vector.shape_cast %19 : vector<1x144x128xbf16> to vector<144x128xbf16>
    %cst_23 = arith.constant dense<0.000000e+00> : vector<128x128xf32>
    %21 = tpu.matmul %4, %20, %cst_23 {dimension_numbers = #tpu.dot_dimension_numbers<[1], [0], [0], [1], [0, 0, 1, 1], [], []>} : vector<128x144xbf16>, vector<144x128xbf16>, vector<128x128xf32> -> vector<128x128xf32>
    %22 = arith.addf %18, %21 : vector<128x128xf32>
    %c1 = arith.constant 1 : index
    %c0_24 = arith.constant 0 : index
    %c0_25 = arith.constant 0 : index
    %23 = vector.load %arg1[%c1, %c0_24, %c0_25] : memref<18x8x144xbf16, #tpu.memory_space<vmem>>, vector<16x8x144xbf16>
    %24 = vector.shape_cast %23 : vector<16x8x144xbf16> to vector<128x144xbf16>
    %c1_26 = arith.constant 1 : index
    %c0_27 = arith.constant 0 : index
    %c0_28 = arith.constant 0 : index
    %25 = vector.load %arg2[%c1_26, %c0_27, %c0_28] : memref<18x8x144xbf16, #tpu.memory_space<vmem>>, vector<16x8x144xbf16>
    %26 = vector.shape_cast %25 : vector<16x8x144xbf16> to vector<128x144xbf16>
    %c1_29 = arith.constant 1 : index
    %c0_30 = arith.constant 0 : index
    %c0_31 = arith.constant 0 : index
    %27 = vector.load %arg3[%c1_29, %c0_30, %c0_31] : memref<3x144x128xbf16, #tpu.memory_space<vmem>>, vector<1x144x128xbf16>
    %28 = vector.shape_cast %27 : vector<1x144x128xbf16> to vector<144x128xbf16>
    %cst_32 = arith.constant dense<0.000000e+00> : vector<128x128xf32>
    %29 = tpu.matmul %24, %28, %cst_32 {dimension_numbers = #tpu.dot_dimension_numbers<[1], [0], [0], [1], [0, 0, 1, 1], [], []>} : vector<128x144xbf16>, vector<144x128xbf16>, vector<128x128xf32> -> vector<128x128xf32>
    %30 = arith.addf %14, %29 : vector<128x128xf32>
    %c1_33 = arith.constant 1 : index
    %c0_34 = arith.constant 0 : index
    %c0_35 = arith.constant 0 : index
    %31 = vector.load %arg4[%c1_33, %c0_34, %c0_35] : memref<3x144x128xbf16, #tpu.memory_space<vmem>>, vector<1x144x128xbf16>
    %32 = vector.shape_cast %31 : vector<1x144x128xbf16> to vector<144x128xbf16>
    %cst_36 = arith.constant dense<0.000000e+00> : vector<128x128xf32>
    %33 = tpu.matmul %26, %32, %cst_36 {dimension_numbers = #tpu.dot_dimension_numbers<[1], [0], [0], [1], [0, 0, 1, 1], [], []>} : vector<128x144xbf16>, vector<144x128xbf16>, vector<128x128xf32> -> vector<128x128xf32>
    %34 = arith.addf %30, %33 : vector<128x128xf32>
    %c1_37 = arith.constant 1 : index
    %c0_38 = arith.constant 0 : index
    %c0_39 = arith.constant 0 : index
    %35 = vector.load %arg6[%c1_37, %c0_38, %c0_39] : memref<3x144x128xbf16, #tpu.memory_space<vmem>>, vector<1x144x128xbf16>
    %36 = vector.shape_cast %35 : vector<1x144x128xbf16> to vector<144x128xbf16>
    %cst_40 = arith.constant dense<0.000000e+00> : vector<128x128xf32>
    %37 = tpu.matmul %26, %36, %cst_40 {dimension_numbers = #tpu.dot_dimension_numbers<[1], [0], [0], [1], [0, 0, 1, 1], [], []>} : vector<128x144xbf16>, vector<144x128xbf16>, vector<128x128xf32> -> vector<128x128xf32>
    %38 = arith.addf %22, %37 : vector<128x128xf32>
    %c1_41 = arith.constant 1 : index
    %c0_42 = arith.constant 0 : index
    %c0_43 = arith.constant 0 : index
    %39 = vector.load %arg5[%c1_41, %c0_42, %c0_43] : memref<3x144x128xbf16, #tpu.memory_space<vmem>>, vector<1x144x128xbf16>
    %40 = vector.shape_cast %39 : vector<1x144x128xbf16> to vector<144x128xbf16>
    %cst_44 = arith.constant dense<0.000000e+00> : vector<128x128xf32>
    %41 = tpu.matmul %24, %40, %cst_44 {dimension_numbers = #tpu.dot_dimension_numbers<[1], [0], [0], [1], [0, 0, 1, 1], [], []>} : vector<128x144xbf16>, vector<144x128xbf16>, vector<128x128xf32> -> vector<128x128xf32>
    %42 = arith.addf %38, %41 : vector<128x128xf32>
    %c2 = arith.constant 2 : index
    %c0_45 = arith.constant 0 : index
    %c0_46 = arith.constant 0 : index
    %43 = vector.load %arg1[%c2, %c0_45, %c0_46] : memref<18x8x144xbf16, #tpu.memory_space<vmem>>, vector<16x8x144xbf16>
    %44 = vector.shape_cast %43 : vector<16x8x144xbf16> to vector<128x144xbf16>
    %c2_47 = arith.constant 2 : index
    %c0_48 = arith.constant 0 : index
    %c0_49 = arith.constant 0 : index
    %45 = vector.load %arg2[%c2_47, %c0_48, %c0_49] : memref<18x8x144xbf16, #tpu.memory_space<vmem>>, vector<16x8x144xbf16>
    %46 = vector.shape_cast %45 : vector<16x8x144xbf16> to vector<128x144xbf16>
    %c2_50 = arith.constant 2 : index
    %c0_51 = arith.constant 0 : index
    %c0_52 = arith.constant 0 : index
    %47 = vector.load %arg3[%c2_50, %c0_51, %c0_52] : memref<3x144x128xbf16, #tpu.memory_space<vmem>>, vector<1x144x128xbf16>
    %48 = vector.shape_cast %47 : vector<1x144x128xbf16> to vector<144x128xbf16>
    %cst_53 = arith.constant dense<0.000000e+00> : vector<128x128xf32>
    %49 = tpu.matmul %44, %48, %cst_53 {dimension_numbers = #tpu.dot_dimension_numbers<[1], [0], [0], [1], [0, 0, 1, 1], [], []>} : vector<128x144xbf16>, vector<144x128xbf16>, vector<128x128xf32> -> vector<128x128xf32>
    %50 = arith.addf %34, %49 : vector<128x128xf32>
    %c2_54 = arith.constant 2 : index
    %c0_55 = arith.constant 0 : index
    %c0_56 = arith.constant 0 : index
    %51 = vector.load %arg4[%c2_54, %c0_55, %c0_56] : memref<3x144x128xbf16, #tpu.memory_space<vmem>>, vector<1x144x128xbf16>
    %52 = vector.shape_cast %51 : vector<1x144x128xbf16> to vector<144x128xbf16>
    %cst_57 = arith.constant dense<0.000000e+00> : vector<128x128xf32>
    %53 = tpu.matmul %46, %52, %cst_57 {dimension_numbers = #tpu.dot_dimension_numbers<[1], [0], [0], [1], [0, 0, 1, 1], [], []>} : vector<128x144xbf16>, vector<144x128xbf16>, vector<128x128xf32> -> vector<128x128xf32>
    %54 = arith.addf %50, %53 : vector<128x128xf32>
    %c2_58 = arith.constant 2 : index
    %c0_59 = arith.constant 0 : index
    %c0_60 = arith.constant 0 : index
    %55 = vector.load %arg6[%c2_58, %c0_59, %c0_60] : memref<3x144x128xbf16, #tpu.memory_space<vmem>>, vector<1x144x128xbf16>
    %56 = vector.shape_cast %55 : vector<1x144x128xbf16> to vector<144x128xbf16>
    %cst_61 = arith.constant dense<0.000000e+00> : vector<128x128xf32>
    %57 = tpu.matmul %46, %56, %cst_61 {dimension_numbers = #tpu.dot_dimension_numbers<[1], [0], [0], [1], [0, 0, 1, 1], [], []>} : vector<128x144xbf16>, vector<144x128xbf16>, vector<128x128xf32> -> vector<128x128xf32>
    %58 = arith.addf %42, %57 : vector<128x128xf32>
    %c2_62 = arith.constant 2 : index
    %c0_63 = arith.constant 0 : index
    %c0_64 = arith.constant 0 : index
    %59 = vector.load %arg5[%c2_62, %c0_63, %c0_64] : memref<3x144x128xbf16, #tpu.memory_space<vmem>>, vector<1x144x128xbf16>
    %60 = vector.shape_cast %59 : vector<1x144x128xbf16> to vector<144x128xbf16>
    %cst_65 = arith.constant dense<0.000000e+00> : vector<128x128xf32>
    %61 = tpu.matmul %44, %60, %cst_65 {dimension_numbers = #tpu.dot_dimension_numbers<[1], [0], [0], [1], [0, 0, 1, 1], [], []>} : vector<128x144xbf16>, vector<144x128xbf16>, vector<128x128xf32> -> vector<128x128xf32>
    %62 = arith.addf %58, %61 : vector<128x128xf32>
    %63 = vector.broadcast %0 : vector<1x128xf32> to vector<128x128xf32>
    %64 = arith.addf %54, %63 : vector<128x128xf32>
    %cst_66 = arith.constant 0.000000e+00 : f32
    %65 = vector.broadcast %cst_66 : f32 to vector<128x128xf32>
    %66 = arith.maximumf %64, %65 : vector<128x128xf32>
    %67 = vector.broadcast %0 : vector<1x128xf32> to vector<128x128xf32>
    %68 = arith.addf %62, %67 : vector<128x128xf32>
    %cst_67 = arith.constant 0.000000e+00 : f32
    %69 = vector.broadcast %cst_67 : f32 to vector<128x128xf32>
    %70 = arith.maximumf %68, %69 : vector<128x128xf32>
    %71 = arith.maximumf %66, %70 : vector<128x128xf32>
    %72 = vector.shape_cast %71 : vector<128x128xf32> to vector<8x2x8x128xf32>
    %73 = vector.extract_strided_slice %72 {offsets = [0, 0, 0, 0], sizes = [8, 1, 8, 128], strides = [1, 1, 1, 1]} : vector<8x2x8x128xf32> to vector<8x1x8x128xf32>
    %74 = vector.shape_cast %73 : vector<8x1x8x128xf32> to vector<8x8x128xf32>
    %75 = vector.extract_strided_slice %72 {offsets = [0, 1, 0, 0], sizes = [8, 1, 8, 128], strides = [1, 1, 1, 1]} : vector<8x2x8x128xf32> to vector<8x1x8x128xf32>
    %76 = vector.shape_cast %75 : vector<8x1x8x128xf32> to vector<8x8x128xf32>
    %77 = arith.maximumf %74, %76 : vector<8x8x128xf32>
    %78 = arith.truncf %77 : vector<8x8x128xf32> to vector<8x8x128xbf16>
    %c0_68 = arith.constant 0 : index
    %c0_69 = arith.constant 0 : index
    %c0_70 = arith.constant 0 : index
    %79 = vector.load %arg8[%c0_68, %c0_69, %c0_70] : memref<8x8x128xbf16, #tpu.memory_space<vmem>>, vector<8x8x128xbf16>
    tpu.vector_store %arg8[%c0_68, %c0_69, %c0_70], %78 {strides = array<i32>} : memref<8x8x128xbf16, #tpu.memory_space<vmem>>, vector<8x8x128xbf16>,
    return
  }
  func.func @transform_0(%arg0: i32) -> (i32, i32, i32) {
    %c0_i32 = arith.constant 0 : i32
    %c0_i32_0 = arith.constant 0 : i32
    %c0_i32_1 = arith.constant 0 : i32
    return %c0_i32, %arg0, %c0_i32_0 : i32, i32, i32
  }
  func.func @transform_1(%arg0: i32) -> (i32, i32, i32) {
    %c0_i32 = arith.constant 0 : i32
    %c0_i32_0 = arith.constant 0 : i32
    %c0_i32_1 = arith.constant 0 : i32
    return %c0_i32, %arg0, %c0_i32_0 : i32, i32, i32
  }
  func.func @transform_2(%arg0: i32) -> (i32, i32, i32) {
    %c0_i32 = arith.constant 0 : i32
    %c0_i32_0 = arith.constant 0 : i32
    %c0_i32_1 = arith.constant 0 : i32
    %c0_i32_2 = arith.constant 0 : i32
    return %c0_i32, %c0_i32_0, %c0_i32_1 : i32, i32, i32
  }
  func.func @transform_3(%arg0: i32) -> (i32, i32, i32) {
    %c0_i32 = arith.constant 0 : i32
    %c0_i32_0 = arith.constant 0 : i32
    %c0_i32_1 = arith.constant 0 : i32
    %c0_i32_2 = arith.constant 0 : i32
    return %c0_i32, %c0_i32_0, %c0_i32_1 : i32, i32, i32
  }
  func.func @transform_4(%arg0: i32) -> (i32, i32, i32) {
    %c0_i32 = arith.constant 0 : i32
    %c0_i32_0 = arith.constant 0 : i32
    %c0_i32_1 = arith.constant 0 : i32
    %c0_i32_2 = arith.constant 0 : i32
    return %c0_i32, %c0_i32_0, %c0_i32_1 : i32, i32, i32
  }
  func.func @transform_5(%arg0: i32) -> (i32, i32, i32) {
    %c0_i32 = arith.constant 0 : i32
    %c0_i32_0 = arith.constant 0 : i32
    %c0_i32_1 = arith.constant 0 : i32
    %c0_i32_2 = arith.constant 0 : i32
    return %c0_i32, %c0_i32_0, %c0_i32_1 : i32, i32, i32
  }
  func.func @transform_6(%arg0: i32) -> (i32, i32) {
    %c0_i32 = arith.constant 0 : i32
    %c0_i32_0 = arith.constant 0 : i32
    %c0_i32_1 = arith.constant 0 : i32
    return %c0_i32, %c0_i32_0 : i32, i32
  }
  func.func @transform_7(%arg0: i32) -> (i32, i32, i32) {
    %c0_i32 = arith.constant 0 : i32
    %c0_i32_0 = arith.constant 0 : i32
    %c0_i32_1 = arith.constant 0 : i32
    return %c0_i32, %arg0, %c0_i32_0 : i32, i32, i32
  }
}

module attributes {stable_mosaic.version = 11 : i64} {
  func.func @_glvq_kernel(%arg0: i32, %arg1: memref<16x1024xbf16, #tpu.memory_space<vmem>>, %arg2: memref<8x1024xbf16, #tpu.memory_space<vmem>>, %arg3: memref<1x8xf32, #tpu.memory_space<vmem>>, %arg4: memref<16x4xf32, #tpu.memory_space<vmem>>) attributes {dimension_semantics = [#tpu.dimension_semantics<parallel>], iteration_bounds = array<i64: 1>, scalar_prefetch = 0 : i64, scratch_operands = 0 : i64, tpu.core_type = #tpu.core_type<tc>, window_params = [{transform_indices = @transform_0, window_bounds = array<i64: 16, 1024>}, {pipeline_mode = #tpu.pipeline_mode<synchronous>, transform_indices = @transform_1, window_bounds = array<i64: 8, 1024>}, {pipeline_mode = #tpu.pipeline_mode<synchronous>, transform_indices = @transform_2, window_bounds = array<i64: 1, 8>}, {transform_indices = @transform_3, window_bounds = array<i64: 16, 4>}]} {
    %c0 = arith.constant 0 : index
    %c0_0 = arith.constant 0 : index
    %0 = vector.load %arg1[%c0, %c0_0] : memref<16x1024xbf16, #tpu.memory_space<vmem>>, vector<16x1024xbf16>
    %1 = arith.extf %0 : vector<16x1024xbf16> to vector<16x1024xf32>
    %c0_1 = arith.constant 0 : index
    %c0_2 = arith.constant 0 : index
    %2 = vector.load %arg2[%c0_1, %c0_2] : memref<8x1024xbf16, #tpu.memory_space<vmem>>, vector<8x1024xbf16>
    %3 = arith.extf %2 : vector<8x1024xbf16> to vector<8x1024xf32>
    %cst = arith.constant dense<0.000000e+00> : vector<16x8xf32>
    %4 = tpu.matmul %1, %3, %cst {dimension_numbers = #tpu.dot_dimension_numbers<[1], [1], [0], [0], [0, 0, 1, 0], [], []>} : vector<16x1024xf32>, vector<8x1024xf32>, vector<16x8xf32> -> vector<16x8xf32>
    %5 = arith.mulf %1, %1 : vector<16x1024xf32>
    %cst_3 = arith.constant dense<0.000000e+00> : vector<16xf32>
    %6 = vector.multi_reduction <add>, %5, %cst_3 [1] : vector<16x1024xf32> to vector<16xf32>
    %7 = vector.shape_cast %6 : vector<16xf32> to vector<16x1xf32>
    %c0_4 = arith.constant 0 : index
    %c0_5 = arith.constant 0 : index
    %8 = vector.load %arg3[%c0_4, %c0_5] : memref<1x8xf32, #tpu.memory_space<vmem>>, vector<1x8xf32>
    %9 = vector.broadcast %7 : vector<16x1xf32> to vector<16x8xf32>
    %10 = vector.broadcast %8 : vector<1x8xf32> to vector<16x8xf32>
    %11 = arith.addf %9, %10 : vector<16x8xf32>
    %cst_6 = arith.constant 2.000000e+00 : f32
    %12 = vector.broadcast %cst_6 : f32 to vector<16x8xf32>
    %13 = arith.mulf %12, %4 : vector<16x8xf32>
    %14 = arith.subf %11, %13 : vector<16x8xf32>
    %cst_7 = arith.constant 0.000000e+00 : f32
    %15 = vector.broadcast %cst_7 : f32 to vector<16x8xf32>
    %16 = arith.maximumf %14, %15 : vector<16x8xf32>
    %17 = math.sqrt %16 : vector<16x8xf32>
    %18 = vector.extract_strided_slice %17 {offsets = [0, 0], sizes = [16, 4], strides = [1, 1]} : vector<16x8xf32> to vector<16x4xf32>
    %19 = vector.extract_strided_slice %17 {offsets = [0, 4], sizes = [16, 4], strides = [1, 1]} : vector<16x8xf32> to vector<16x4xf32>
    %20 = arith.minimumf %18, %19 : vector<16x4xf32>
    %c0_8 = arith.constant 0 : index
    %c0_9 = arith.constant 0 : index
    %21 = vector.load %arg4[%c0_8, %c0_9] : memref<16x4xf32, #tpu.memory_space<vmem>>, vector<16x4xf32>
    tpu.vector_store %arg4[%c0_8, %c0_9], %20 {strides = array<i32>} : memref<16x4xf32, #tpu.memory_space<vmem>>, vector<16x4xf32>,
    return
  }
  func.func @transform_0(%arg0: i32) -> (i32, i32) {
    %c0_i32 = arith.constant 0 : i32
    %c0_i32_0 = arith.constant 0 : i32
    return %arg0, %c0_i32 : i32, i32
  }
  func.func @transform_1(%arg0: i32) -> (i32, i32) {
    %c0_i32 = arith.constant 0 : i32
    %c0_i32_0 = arith.constant 0 : i32
    %c0_i32_1 = arith.constant 0 : i32
    return %c0_i32, %c0_i32_0 : i32, i32
  }
  func.func @transform_2(%arg0: i32) -> (i32, i32) {
    %c0_i32 = arith.constant 0 : i32
    %c0_i32_0 = arith.constant 0 : i32
    %c0_i32_1 = arith.constant 0 : i32
    return %c0_i32, %c0_i32_0 : i32, i32
  }
  func.func @transform_3(%arg0: i32) -> (i32, i32) {
    %c0_i32 = arith.constant 0 : i32
    %c0_i32_0 = arith.constant 0 : i32
    return %arg0, %c0_i32 : i32, i32
  }
}

module attributes {stable_mosaic.version = 11 : i64} {
  func.func @_euclid_kernel(%arg0: i32, %arg1: memref<8x4xf32, #tpu.memory_space<vmem>>, %arg2: memref<4x4xf32, #tpu.memory_space<vmem>>, %arg3: memref<1x4xf32, #tpu.memory_space<vmem>>, %arg4: memref<8x4xf32, #tpu.memory_space<vmem>>) attributes {dimension_semantics = [#tpu.dimension_semantics<parallel>], iteration_bounds = array<i64: 1>, scalar_prefetch = 0 : i64, scratch_operands = 0 : i64, tpu.core_type = #tpu.core_type<tc>, window_params = [{transform_indices = @transform_0, window_bounds = array<i64: 8, 4>}, {pipeline_mode = #tpu.pipeline_mode<synchronous>, transform_indices = @transform_1, window_bounds = array<i64: 4, 4>}, {pipeline_mode = #tpu.pipeline_mode<synchronous>, transform_indices = @transform_2, window_bounds = array<i64: 1, 4>}, {transform_indices = @transform_3, window_bounds = array<i64: 8, 4>}]} {
    %c0 = arith.constant 0 : index
    %c0_0 = arith.constant 0 : index
    %0 = vector.load %arg1[%c0, %c0_0] : memref<8x4xf32, #tpu.memory_space<vmem>>, vector<8x4xf32>
    %c0_1 = arith.constant 0 : index
    %c0_2 = arith.constant 0 : index
    %1 = vector.load %arg2[%c0_1, %c0_2] : memref<4x4xf32, #tpu.memory_space<vmem>>, vector<4x4xf32>
    %cst = arith.constant dense<0.000000e+00> : vector<8x4xf32>
    %2 = tpu.matmul %0, %1, %cst {dimension_numbers = #tpu.dot_dimension_numbers<[1], [1], [0], [0], [0, 0, 1, 0], [], []>} : vector<8x4xf32>, vector<4x4xf32>, vector<8x4xf32> -> vector<8x4xf32>
    %3 = arith.mulf %0, %0 : vector<8x4xf32>
    %cst_3 = arith.constant dense<0.000000e+00> : vector<8xf32>
    %4 = vector.multi_reduction <add>, %3, %cst_3 [1] : vector<8x4xf32> to vector<8xf32>
    %5 = vector.shape_cast %4 : vector<8xf32> to vector<8x1xf32>
    %c0_4 = arith.constant 0 : index
    %c0_5 = arith.constant 0 : index
    %6 = vector.load %arg3[%c0_4, %c0_5] : memref<1x4xf32, #tpu.memory_space<vmem>>, vector<1x4xf32>
    %7 = vector.broadcast %5 : vector<8x1xf32> to vector<8x4xf32>
    %8 = vector.broadcast %6 : vector<1x4xf32> to vector<8x4xf32>
    %9 = arith.addf %7, %8 : vector<8x4xf32>
    %cst_6 = arith.constant 2.000000e+00 : f32
    %10 = vector.broadcast %cst_6 : f32 to vector<8x4xf32>
    %11 = arith.mulf %10, %2 : vector<8x4xf32>
    %12 = arith.subf %9, %11 : vector<8x4xf32>
    %cst_7 = arith.constant 0.000000e+00 : f32
    %13 = vector.broadcast %cst_7 : f32 to vector<8x4xf32>
    %14 = arith.subf %13, %12 : vector<8x4xf32>
    %cst_8 = arith.constant 6.250000e-02 : f32
    %15 = vector.broadcast %cst_8 : f32 to vector<8x4xf32>
    %16 = arith.mulf %14, %15 : vector<8x4xf32>
    %c0_9 = arith.constant 0 : index
    %c0_10 = arith.constant 0 : index
    %17 = vector.load %arg4[%c0_9, %c0_10] : memref<8x4xf32, #tpu.memory_space<vmem>>, vector<8x4xf32>
    tpu.vector_store %arg4[%c0_9, %c0_10], %16 {strides = array<i32>} : memref<8x4xf32, #tpu.memory_space<vmem>>, vector<8x4xf32>,
    return
  }
  func.func @transform_0(%arg0: i32) -> (i32, i32) {
    %c0_i32 = arith.constant 0 : i32
    %c0_i32_0 = arith.constant 0 : i32
    return %arg0, %c0_i32 : i32, i32
  }
  func.func @transform_1(%arg0: i32) -> (i32, i32) {
    %c0_i32 = arith.constant 0 : i32
    %c0_i32_0 = arith.constant 0 : i32
    %c0_i32_1 = arith.constant 0 : i32
    return %c0_i32, %c0_i32_0 : i32, i32
  }
  func.func @transform_2(%arg0: i32) -> (i32, i32) {
    %c0_i32 = arith.constant 0 : i32
    %c0_i32_0 = arith.constant 0 : i32
    %c0_i32_1 = arith.constant 0 : i32
    return %c0_i32, %c0_i32_0 : i32, i32
  }
  func.func @transform_3(%arg0: i32) -> (i32, i32) {
    %c0_i32 = arith.constant 0 : i32
    %c0_i32_0 = arith.constant 0 : i32
    return %arg0, %c0_i32 : i32, i32
  }
}

</mosaic_0001>

<llo_original>
// kernel: protonet_forward.4
$region0: #{protonet_forward.4}
  #allocation0 [shape = 'u32[]', space=smem, size = 0x4, offset = 0x4, fixed_abs, tag = 'smem constant byte address 0x4 - core index']
  #allocation1 [shape = 'u32[72,128]{1,0:T(1,128)}', space=vmem, size = 0x9000, scoped, tag = 'internal scratch']
  %s0 = inlined_call_operand.vmem [shape: bf16[34,24,51], index: 0, kind: input, shape index: {}]
  %s1 = inlined_call_operand.vmem [shape: bf16[34,24,51], index: 1, kind: input, shape index: {}]
  %s2 = inlined_call_operand.vmem [shape: bf16[3,51,256], index: 2, kind: input, shape index: {}]
  %s3 = inlined_call_operand.vmem [shape: bf16[3,51,256], index: 3, kind: input, shape index: {}]
  %s4 = inlined_call_operand.vmem [shape: bf16[3,51,256], index: 4, kind: input, shape index: {}]
  %s5 = inlined_call_operand.vmem [shape: bf16[3,51,256], index: 5, kind: input, shape index: {}]
  %s6 = inlined_call_operand.vmem [shape: f32[1,256], index: 6, kind: input, shape index: {}]
  %s7 = inlined_call_operand.vmem [shape: bf16[16,24,256], index: 7, kind: output, shape index: {}]
  %s8 = sld [smem:[#allocation0]]
  $region177: #{protonet_forward.4} parent=0
    _
  %s10 = ssub.s32 1, %s8
  %s11 = scalar_select 0, %s10, %s8
  $region1: #{protonet_forward.4} parent=0
    #allocation2 [shape = 'u8[139264]{0}', space=vmem, size = 0x22000, scoped, tag = 'input window, operand 0']
    #allocation3 [shape = 'u8[139264]{0}', space=vmem, size = 0x22000, scoped, tag = 'input window, operand 1']
    #allocation4 [shape = 'u8[131072]{0}', space=vmem, size = 0x20000, scoped, tag = 'output window, operand 0']
    loop: start=0, step=1, limit=5
    $region2: #{protonet_forward.4} parent=1 // loop_pre_header
      _
    $region3: #{protonet_forward.4} parent=1 // loop_header
      %s13 = sphi 0, %s17
      %p14 = scmp.ge.s32.totalorder %s13, 5
      %s23 = sphi 0, %s25
      %s26 = sphi 0, %s23
      %s27 = sphi 0, %s26
      %s43 = sphi 0, %s27
      %s49 = sphi 0, %s51
      %s52 = sphi 0, %s49
      %s53 = sphi 0, %s52
      %s69 = sphi 0, %s53
      %s73 = sphi 0, %s73
      %s75 = sphi 0, %s73
      %s76 = sphi 0, %s75
      %s90 = sphi 0, %s76
      %s94 = sphi 0, %s94
      %s96 = sphi 0, %s94
      %s97 = sphi 0, %s96
      %s111 = sphi 0, %s97
      %s115 = sphi 0, %s115
      %s117 = sphi 0, %s115
      %s118 = sphi 0, %s117
      %s132 = sphi 0, %s118
      %s136 = sphi 0, %s136
      %s138 = sphi 0, %s136
      %s139 = sphi 0, %s138
      %s153 = sphi 0, %s139
      %s157 = sphi 0, %s157
      %s159 = sphi 0, %s157
      %s160 = sphi 0, %s159
      %s174 = sphi 0, %s160
      %s180 = sphi 0, %s182
      %s183 = sphi 0, %s180
      %s184 = sphi 0, %s183
      %s200 = sphi 0, %s184
    $region4: #{protonet_forward.4} parent=1 // loop_header_branch
      %16 = sbr.rel (%p14) target = $region8
    $region5: #{protonet_forward.4} parent=1 // loop_body
      %s18 = ssub.s32 %s13, 1
      %s19 = ssub.s32 %s13, 2
      %s20 = sadd.s32 %s13, 1
      %s21 = ssub.s32 %s13, %s20
      %p22 = scmp.eq.s32.totalorder %s21, 0
      %s24 = sadd.s32 %s23, 1
      %s25 = scalar_select %p22, %s23, %s24
      %p28 = pneg %p22
      %p29 = scmp.eq.s32.totalorder %s13, 2
      %p30 = por %p28, %p29
      %p31 = scmp.ne.s32.totalorder %s23, %s26
      %p32 = scmp.eq.s32.totalorder %s13, 0
      %p33 = por %p31, %p32
      %p34 = scmp.ne.s32.totalorder %s23, %s26
      %p35 = scmp.eq.s32.totalorder %s18, 2
      %p36 = por %p34, %p35
      %p37 = scmp.ne.s32.totalorder %s26, %s27
      %p38 = scmp.eq.s32.totalorder %s18, 0
      %p39 = por %p37, %p38
      %p40 = scmp.ne.s32.totalorder %s26, %s27
      %p41 = scmp.eq.s32.totalorder %s19, 2
      %p42 = por %p40, %p41
      %p44 = scmp.ne.s32.totalorder %s27, %s43
      %p45 = scmp.eq.s32.totalorder %s19, 0
      %p46 = por %p44, %p45
      %s47 = ssub.s32 %s13, %s20
      %p48 = scmp.eq.s32.totalorder %s47, 0
      %s50 = sadd.s32 %s49, 1
      %s51 = scalar_select %p48, %s49, %s50
      %p54 = pneg %p48
      %p55 = scmp.eq.s32.totalorder %s13, 2
      %p56 = por %p54, %p55
      %p57 = scmp.ne.s32.totalorder %s49, %s52
      %p58 = scmp.eq.s32.totalorder %s13, 0
      %p59 = por %p57, %p58
      %p60 = scmp.ne.s32.totalorder %s49, %s52
      %p61 = scmp.eq.s32.totalorder %s18, 2
      %p62 = por %p60, %p61
      %p63 = scmp.ne.s32.totalorder %s52, %s53
      %p64 = scmp.eq.s32.totalorder %s18, 0
      %p65 = por %p63, %p64
      %p66 = scmp.ne.s32.totalorder %s52, %s53
      %p67 = scmp.eq.s32.totalorder %s19, 2
      %p68 = por %p66, %p67
      %p70 = scmp.ne.s32.totalorder %s53, %s69
      %p71 = scmp.eq.s32.totalorder %s19, 0
      %p72 = por %p70, %p71
      %s74 = sadd.s32 %s73, 1
      %p77 = scmp.eq.s32.totalorder %s13, 2
      %p78 = scmp.ne.s32.totalorder %s73, %s75
      %p79 = scmp.eq.s32.totalorder %s13, 0
      %p80 = por %p78, %p79
      %p81 = scmp.ne.s32.totalorder %s73, %s75
      %p82 = scmp.eq.s32.totalorder %s18, 2
      %p83 = por %p81, %p82
      %p84 = scmp.ne.s32.totalorder %s75, %s76
      %p85 = scmp.eq.s32.totalorder %s18, 0
      %p86 = por %p84, %p85
      %p87 = scmp.ne.s32.totalorder %s75, %s76
      %p88 = scmp.eq.s32.totalorder %s19, 2
      %p89 = por %p87, %p88
      %p91 = scmp.ne.s32.totalorder %s76, %s90
      %p92 = scmp.eq.s32.totalorder %s19, 0
      %p93 = por %p91, %p92
      %s95 = sadd.s32 %s94, 1
      %p98 = scmp.eq.s32.totalorder %s13, 2
      %p99 = scmp.ne.s32.totalorder %s94, %s96
      %p100 = scmp.eq.s32.totalorder %s13, 0
      %p101 = por %p99, %p100
      %p102 = scmp.ne.s32.totalorder %s94, %s96
      %p103 = scmp.eq.s32.totalorder %s18, 2
      %p104 = por %p102, %p103
      %p105 = scmp.ne.s32.totalorder %s96, %s97
      %p106 = scmp.eq.s32.totalorder %s18, 0
      %p107 = por %p105, %p106
      %p108 = scmp.ne.s32.totalorder %s96, %s97
      %p109 = scmp.eq.s32.totalorder %s19, 2
      %p110 = por %p108, %p109
      %p112 = scmp.ne.s32.totalorder %s97, %s111
      %p113 = scmp.eq.s32.totalorder %s19, 0
      %p114 = por %p112, %p113
      %s116 = sadd.s32 %s115, 1
      %p119 = scmp.eq.s32.totalorder %s13, 2
      %p120 = scmp.ne.s32.totalorder %s115, %s117
      %p121 = scmp.eq.s32.totalorder %s13, 0
      %p122 = por %p120, %p121
      %p123 = scmp.ne.s32.totalorder %s115, %s117
      %p124 = scmp.eq.s32.totalorder %s18, 2
      %p125 = por %p123, %p124
      %p126 = scmp.ne.s32.totalorder %s117, %s118
      %p127 = scmp.eq.s32.totalorder %s18, 0
      %p128 = por %p126, %p127
      %p129 = scmp.ne.s32.totalorder %s117, %s118
      %p130 = scmp.eq.s32.totalorder %s19, 2
      %p131 = por %p129, %p130
      %p133 = scmp.ne.s32.totalorder %s118, %s132
      %p134 = scmp.eq.s32.totalorder %s19, 0
      %p135 = por %p133, %p134
      %s137 = sadd.s32 %s136, 1
      %p140 = scmp.eq.s32.totalorder %s13, 2
      %p141 = scmp.ne.s32.totalorder %s136, %s138
      %p142 = scmp.eq.s32.totalorder %s13, 0
      %p143 = por %p141, %p142
      %p144 = scmp.ne.s32.totalorder %s136, %s138
      %p145 = scmp.eq.s32.totalorder %s18, 2
      %p146 = por %p144, %p145
      %p147 = scmp.ne.s32.totalorder %s138, %s139
      %p148 = scmp.eq.s32.totalorder %s18, 0
      %p149 = por %p147, %p148
      %p150 = scmp.ne.s32.totalorder %s138, %s139
      %p151 = scmp.eq.s32.totalorder %s19, 2
      %p152 = por %p150, %p151
      %p154 = scmp.ne.s32.totalorder %s139, %s153
      %p155 = scmp.eq.s32.totalorder %s19, 0
      %p156 = por %p154, %p155
      %s158 = sadd.s32 %s157, 1
      %p161 = scmp.eq.s32.totalorder %s13, 2
      %p162 = scmp.ne.s32.totalorder %s157, %s159
      %p163 = scmp.eq.s32.totalorder %s13, 0
      %p164 = por %p162, %p163
      %p165 = scmp.ne.s32.totalorder %s157, %s159
      %p166 = scmp.eq.s32.totalorder %s18, 2
      %p167 = por %p165, %p166
      %p168 = scmp.ne.s32.totalorder %s159, %s160
      %p169 = scmp.eq.s32.totalorder %s18, 0
      %p170 = por %p168, %p169
      %p171 = scmp.ne.s32.totalorder %s159, %s160
      %p172 = scmp.eq.s32.totalorder %s19, 2
      %p173 = por %p171, %p172
      %p175 = scmp.ne.s32.totalorder %s160, %s174
      %p176 = scmp.eq.s32.totalorder %s19, 0
      %p177 = por %p175, %p176
      %s178 = ssub.s32 %s13, %s20
      %p179 = scmp.eq.s32.totalorder %s178, 0
      %s181 = sadd.s32 %s180, 1
      %s182 = scalar_select %p179, %s180, %s181
      %p185 = pneg %p179
      %p186 = scmp.eq.s32.totalorder %s13, 2
      %p187 = por %p185, %p186
      %p188 = scmp.ne.s32.totalorder %s180, %s183
      %p189 = scmp.eq.s32.totalorder %s13, 0
      %p190 = por %p188, %p189
      %p191 = scmp.ne.s32.totalorder %s180, %s183
      %p192 = scmp.eq.s32.totalorder %s18, 2
      %p193 = por %p191, %p192
      %p194 = scmp.ne.s32.totalorder %s183, %s184
      %p195 = scmp.eq.s32.totalorder %s18, 0
      %p196 = por %p194, %p195
      %p197 = scmp.ne.s32.totalorder %s183, %s184
      %p198 = scmp.eq.s32.totalorder %s19, 2
      %p199 = por %p197, %p198
      %p201 = scmp.ne.s32.totalorder %s184, %s200
      %p202 = scmp.eq.s32.totalorder %s19, 0
      %p203 = por %p201, %p202
      %p204 = scmp.le.s32.totalorder 1, %s13
      %p205 = scmp.lt.s32.totalorder %s13, 4
      %p206 = pnand %p204, %p205
      %p207 = pneg %p206
      // Predicated region
      $region9: #{protonet_forward.4} parent=5 // pred_check
        _
      $region10: #{protonet_forward.4} parent=5 // pred_check_branch
        %209 = sbr.rel (%p206) target = $region12
      $region11: #{protonet_forward.4} parent=5 // pred_region
        %s210 = ssub.s32 %s13, 1
        // Predicated region
        $region13: #{protonet_forward.4} parent=11 // pred_check
          %p211 = pneg %p86
        $region14: #{protonet_forward.4} parent=11 // pred_check_branch
          %213 = sbr.rel (%p211) target = $region16
        $region15: #{protonet_forward.4} parent=11 // pred_region
          _
        $region16: #{protonet_forward.4} parent=11 // pred_fallthru
          _
        // Predicated region
        $region17: #{protonet_forward.4} parent=11 // pred_check
          %p214 = pneg %p107
        $region18: #{protonet_forward.4} parent=11 // pred_check_branch
          %216 = sbr.rel (%p214) target = $region20
        $region19: #{protonet_forward.4} parent=11 // pred_region
          _
        $region20: #{protonet_forward.4} parent=11 // pred_fallthru
          _
        // Predicated region
        $region21: #{protonet_forward.4} parent=11 // pred_check
          %p217 = pneg %p128
        $region22: #{protonet_forward.4} parent=11 // pred_check_branch
          %219 = sbr.rel (%p217) target = $region24
        $region23: #{protonet_forward.4} parent=11 // pred_region
          _
        $region24: #{protonet_forward.4} parent=11 // pred_fallthru
          _
        // Predicated region
        $region25: #{protonet_forward.4} parent=11 // pred_check
          %p220 = pneg %p149
        $region26: #{protonet_forward.4} parent=11 // pred_check_branch
          %222 = sbr.rel (%p220) target = $region28
        $region27: #{protonet_forward.4} parent=11 // pred_region
          _
        $region28: #{protonet_forward.4} parent=11 // pred_fallthru
          _
        // Predicated region
        $region29: #{protonet_forward.4} parent=11 // pred_check
          %p223 = pneg %p170
        $region30: #{protonet_forward.4} parent=11 // pred_check_branch
          %225 = sbr.rel (%p223) target = $region32
        $region31: #{protonet_forward.4} parent=11 // pred_region
          _
        $region32: #{protonet_forward.4} parent=11 // pred_fallthru
          _
      $region12: #{protonet_forward.4} parent=5 // pred_fallthru
        _
      %p226 = scmp.lt.s32.totalorder %s13, 3
      // Predicated region
      $region33: #{protonet_forward.4} parent=5 // pred_check
        %p227 = pneg %p226
      $region34: #{protonet_forward.4} parent=5 // pred_check_branch
        %229 = sbr.rel (%p227) target = $region36
      $region35: #{protonet_forward.4} parent=5 // pred_region
        // Predicated region
        $region37: #{protonet_forward.4} parent=35 // pred_check
          %p230 = pneg %p33
        $region38: #{protonet_forward.4} parent=35 // pred_check_branch
          %232 = sbr.rel (%p230) target = $region40
        $region39: #{protonet_forward.4} parent=35 // pred_region
          %s233 = sand.u32 %s23, 1
          %s234 = sand.u32 %s23, 1
          %s235 = smul.addr %s234, 136
          %s236 = scalar_lea.vmem [#allocation2], %s235
          %s237 = smul.addr %s13, 4
          %s238 = scalar_lea.vmem %s0, %s237
          // Predicated region
          $region41: #{protonet_forward.4} parent=39 // pred_check
            _
          $region42: #{protonet_forward.4} parent=39 // pred_check_branch
            %240 = sbr.rel (0) target = $region44
          $region43: #{protonet_forward.4} parent=39 // pred_region
            // Predicated region
            $region45: #{protonet_forward.4} parent=43 // pred_check
              _
            $region46: #{protonet_forward.4} parent=43 // pred_check_branch
              %242 = sbr.rel target = $region48
            $region47: #{protonet_forward.4} parent=43 // pred_region
              // Predicated region
              $region60: #{protonet_forward.4} parent=47 // pred_check
                _
              $region61: #{protonet_forward.4} parent=47 // pred_check_branch
                %324 = sbr.rel (0) target = $region63
              $region62: #{protonet_forward.4} parent=47 // pred_region
                loop: start=0, step=1, limit=1
                $region64: #{protonet_forward.4} parent=62 // loop_pre_header
                  _
                $region65: #{protonet_forward.4} parent=62 // loop_header
                  %s326 = sphi 0, %s330
                  %p327 = scmp.ge.s32.totalorder %s326, 1
                  %s331 = sphi %s238, %s238
                  %s332 = sphi %s236, %s236
                $region66: #{protonet_forward.4} parent=62 // loop_header_branch
                  %329 = sbr.rel (%p327) target = $region70
                $region67: #{protonet_forward.4} parent=62 // loop_body
                  _
                $region68: #{protonet_forward.4} parent=62 // loop_footer
                  %s330 = sadd.s32 1, %s326
                $region69: #{protonet_forward.4} parent=62 // loop_footer_branch
                  %325 = sbr.rel target = $region65
                $region70: #{protonet_forward.4} parent=62 // loop_exit
                  _
                %s334 = ssub.s32 16, 1
                loop: start=0, step=1, limit=1
                $region71: #{protonet_forward.4} parent=62 // loop_pre_header
                  _
                $region72: #{protonet_forward.4} parent=62 // loop_header
                  %s336 = sphi 0, %s340
                  %p337 = scmp.ge.s32.totalorder %s336, 1
                  %s341 = sphi %s238, %s238
                  %s342 = sphi %s236, %s236
                $region73: #{protonet_forward.4} parent=62 // loop_header_branch
                  %339 = sbr.rel (%p337) target = $region77
                $region74: #{protonet_forward.4} parent=62 // loop_body
                  %v343 = vld [vmem:[%s341] sm:%s334]
                  %344 = vst [vmem:[%s342] sm:%s334] %v343
                  %v345 = vld [vmem:[%s341 + $0xc] sm:%s334]
                  %346 = vst [vmem:[%s342 + $0x4] sm:%s334] %v345
                  %v347 = vld [vmem:[%s341 + $0x18] sm:%s334]
                  %348 = vst [vmem:[%s342 + $0x8] sm:%s334] %v347
                  %v349 = vld [vmem:[%s341 + $0x24] sm:%s334]
                  %350 = vst [vmem:[%s342 + $0xc] sm:%s334] %v349
                  %v351 = vld [vmem:[%s341 + $0x30] sm:%s334]
                  %352 = vst [vmem:[%s342 + $0x10] sm:%s334] %v351
                  %v353 = vld [vmem:[%s341 + $0x3c] sm:%s334]
                  %354 = vst [vmem:[%s342 + $0x14] sm:%s334] %v353
                  %v355 = vld [vmem:[%s341 + $0x48] sm:%s334]
                  %356 = vst [vmem:[%s342 + $0x18] sm:%s334] %v355
                  %v357 = vld [vmem:[%s341 + $0x54] sm:%s334]
                  %358 = vst [vmem:[%s342 + $0x1c] sm:%s334] %v357
                  %v359 = vld [vmem:[%s341 + $0x60] sm:%s334]
                  %360 = vst [vmem:[%s342 + $0x20] sm:%s334] %v359
                  %v361 = vld [vmem:[%s341 + $0x6c] sm:%s334]
                  %362 = vst [vmem:[%s342 + $0x24] sm:%s334] %v361
                  %v363 = vld [vmem:[%s341 + $0x78] sm:%s334]
                  %364 = vst [vmem:[%s342 + $0x28] sm:%s334] %v363
                  %v365 = vld [vmem:[%s341 + $0x84] sm:%s334]
                  %366 = vst [vmem:[%s342 + $0x2c] sm:%s334] %v365
                  %v367 = vld [vmem:[%s341 + $0x90] sm:%s334]
                  %368 = vst [vmem:[%s342 + $0x30] sm:%s334] %v367
                  %v369 = vld [vmem:[%s341 + $0x9c] sm:%s334]
                  %370 = vst [vmem:[%s342 + $0x34] sm:%s334] %v369
                  %v371 = vld [vmem:[%s341 + $0xa8] sm:%s334]
                  %372 = vst [vmem:[%s342 + $0x38] sm:%s334] %v371
                  %v373 = vld [vmem:[%s341 + $0xb4] sm:%s334]
                  %374 = vst [vmem:[%s342 + $0x3c] sm:%s334] %v373
                  %v375 = vld [vmem:[%s341 + $0xc0] sm:%s334]
                  %376 = vst [vmem:[%s342 + $0x40] sm:%s334] %v375
                  %v377 = vld [vmem:[%s341 + $0xcc] sm:%s334]
                  %378 = vst [vmem:[%s342 + $0x44] sm:%s334] %v377
                  %v379 = vld [vmem:[%s341 + $0xd8] sm:%s334]
                  %380 = vst [vmem:[%s342 + $0x48] sm:%s334] %v379
                  %v381 = vld [vmem:[%s341 + $0xe4] sm:%s334]
                  %382 = vst [vmem:[%s342 + $0x4c] sm:%s334] %v381
                  %v383 = vld [vmem:[%s341 + $0xf0] sm:%s334]
                  %384 = vst [vmem:[%s342 + $0x50] sm:%s334] %v383
                  %v385 = vld [vmem:[%s341 + $0xfc] sm:%s334]
                  %386 = vst [vmem:[%s342 + $0x54] sm:%s334] %v385
                  %v387 = vld [vmem:[%s341 + $0x108] sm:%s334]
                  %388 = vst [vmem:[%s342 + $0x58] sm:%s334] %v387
                  %v389 = vld [vmem:[%s341 + $0x114] sm:%s334]
                  %390 = vst [vmem:[%s342 + $0x5c] sm:%s334] %v389
                  %v391 = vld [vmem:[%s341 + $0x120] sm:%s334]
                  %392 = vst [vmem:[%s342 + $0x60] sm:%s334] %v391
                  %v393 = vld [vmem:[%s341 + $0x12c] sm:%s334]
                  %394 = vst [vmem:[%s342 + $0x64] sm:%s334] %v393
                  %v395 = vld [vmem:[%s341 + $0x138] sm:%s334]
                  %396 = vst [vmem:[%s342 + $0x68] sm:%s334] %v395
                  %v397 = vld [vmem:[%s341 + $0x144] sm:%s334]
                  %398 = vst [vmem:[%s342 + $0x6c] sm:%s334] %v397
                  %v399 = vld [vmem:[%s341 + $0x150] sm:%s334]
                  %400 = vst [vmem:[%s342 + $0x70] sm:%s334] %v399
                  %v401 = vld [vmem:[%s341 + $0x15c] sm:%s334]
                  %402 = vst [vmem:[%s342 + $0x74] sm:%s334] %v401
                  %v403 = vld [vmem:[%s341 + $0x168] sm:%s334]
                  %404 = vst [vmem:[%s342 + $0x78] sm:%s334] %v403
                  %v405 = vld [vmem:[%s341 + $0x174] sm:%s334]
                  %406 = vst [vmem:[%s342 + $0x7c] sm:%s334] %v405
                  %v407 = vld [vmem:[%s341 + $0x180] sm:%s334]
                  %408 = vst [vmem:[%s342 + $0x80] sm:%s334] %v407
                  %v409 = vld [vmem:[%s341 + $0x18c] sm:%s334]
                  %410 = vst [vmem:[%s342 + $0x84] sm:%s334] %v409
                $region75: #{protonet_forward.4} parent=62 // loop_footer
                  %s340 = sadd.s32 1, %s336
                $region76: #{protonet_forward.4} parent=62 // loop_footer_branch
                  %335 = sbr.rel target = $region72
                $region77: #{protonet_forward.4} parent=62 // loop_exit
                  _
              $region63: #{protonet_forward.4} parent=47 // pred_fallthru
                _
            $region48: #{protonet_forward.4} parent=43 // pred_fallthru
              _
            // Predicated region
            $region49: #{protonet_forward.4} parent=43 // pred_check
              _
            $region50: #{protonet_forward.4} parent=43 // pred_check_branch
              %244 = sbr.rel (0) target = $region52
            $region51: #{protonet_forward.4} parent=43 // pred_region
              %s246 = ssub.s32 16, 1
              loop: start=0, step=1, limit=1
              $region53: #{protonet_forward.4} parent=51 // loop_pre_header
                _
              $region54: #{protonet_forward.4} parent=51 // loop_header
                %s248 = sphi 0, %s252
                %p249 = scmp.ge.s32.totalorder %s248, 1
                %s253 = sphi %s238, %s238
                %s254 = sphi %s236, %s236
              $region55: #{protonet_forward.4} parent=51 // loop_header_branch
                %251 = sbr.rel (%p249) target = $region59
              $region56: #{protonet_forward.4} parent=51 // loop_body
                %v255 = vld [vmem:[%s253] sm:%s246]
                %256 = vst [vmem:[%s254] sm:%s246] %v255
                %v257 = vld [vmem:[%s253 + $0xc] sm:%s246]
                %258 = vst [vmem:[%s254 + $0x4] sm:%s246] %v257
                %v259 = vld [vmem:[%s253 + $0x18] sm:%s246]
                %260 = vst [vmem:[%s254 + $0x8] sm:%s246] %v259
                %v261 = vld [vmem:[%s253 + $0x24] sm:%s246]
                %262 = vst [vmem:[%s254 + $0xc] sm:%s246] %v261
                %v263 = vld [vmem:[%s253 + $0x30] sm:%s246]
                %264 = vst [vmem:[%s254 + $0x10] sm:%s246] %v263
                %v265 = vld [vmem:[%s253 + $0x3c] sm:%s246]
                %266 = vst [vmem:[%s254 + $0x14] sm:%s246] %v265
                %v267 = vld [vmem:[%s253 + $0x48] sm:%s246]
                %268 = vst [vmem:[%s254 + $0x18] sm:%s246] %v267
                %v269 = vld [vmem:[%s253 + $0x54] sm:%s246]
                %270 = vst [vmem:[%s254 + $0x1c] sm:%s246] %v269
                %v271 = vld [vmem:[%s253 + $0x60] sm:%s246]
                %272 = vst [vmem:[%s254 + $0x20] sm:%s246] %v271
                %v273 = vld [vmem:[%s253 + $0x6c] sm:%s246]
                %274 = vst [vmem:[%s254 + $0x24] sm:%s246] %v273
                %v275 = vld [vmem:[%s253 + $0x78] sm:%s246]
                %276 = vst [vmem:[%s254 + $0x28] sm:%s246] %v275
                %v277 = vld [vmem:[%s253 + $0x84] sm:%s246]
                %278 = vst [vmem:[%s254 + $0x2c] sm:%s246] %v277
                %v279 = vld [vmem:[%s253 + $0x90] sm:%s246]
                %280 = vst [vmem:[%s254 + $0x30] sm:%s246] %v279
                %v281 = vld [vmem:[%s253 + $0x9c] sm:%s246]
                %282 = vst [vmem:[%s254 + $0x34] sm:%s246] %v281
                %v283 = vld [vmem:[%s253 + $0xa8] sm:%s246]
                %284 = vst [vmem:[%s254 + $0x38] sm:%s246] %v283
                %v285 = vld [vmem:[%s253 + $0xb4] sm:%s246]
                %286 = vst [vmem:[%s254 + $0x3c] sm:%s246] %v285
                %v287 = vld [vmem:[%s253 + $0xc0] sm:%s246]
                %288 = vst [vmem:[%s254 + $0x40] sm:%s246] %v287
                %v289 = vld [vmem:[%s253 + $0xcc] sm:%s246]
                %290 = vst [vmem:[%s254 + $0x44] sm:%s246] %v289
                %v291 = vld [vmem:[%s253 + $0xd8] sm:%s246]
                %292 = vst [vmem:[%s254 + $0x48] sm:%s246] %v291
                %v293 = vld [vmem:[%s253 + $0xe4] sm:%s246]
                %294 = vst [vmem:[%s254 + $0x4c] sm:%s246] %v293
                %v295 = vld [vmem:[%s253 + $0xf0] sm:%s246]
                %296 = vst [vmem:[%s254 + $0x50] sm:%s246] %v295
                %v297 = vld [vmem:[%s253 + $0xfc] sm:%s246]
                %298 = vst [vmem:[%s254 + $0x54] sm:%s246] %v297
                %v299 = vld [vmem:[%s253 + $0x108] sm:%s246]
                %300 = vst [vmem:[%s254 + $0x58] sm:%s246] %v299
                %v301 = vld [vmem:[%s253 + $0x114] sm:%s246]
                %302 = vst [vmem:[%s254 + $0x5c] sm:%s246] %v301
                %v303 = vld [vmem:[%s253 + $0x120] sm:%s246]
                %304 = vst [vmem:[%s254 + $0x60] sm:%s246] %v303
                %v305 = vld [vmem:[%s253 + $0x12c] sm:%s246]
                %306 = vst [vmem:[%s254 + $0x64] sm:%s246] %v305
                %v307 = vld [vmem:[%s253 + $0x138] sm:%s246]
                %308 = vst [vmem:[%s254 + $0x68] sm:%s246] %v307
                %v309 = vld [vmem:[%s253 + $0x144] sm:%s246]
                %310 = vst [vmem:[%s254 + $0x6c] sm:%s246] %v309
                %v311 = vld [vmem:[%s253 + $0x150] sm:%s246]
                %312 = vst [vmem:[%s254 + $0x70] sm:%s246] %v311
                %v313 = vld [vmem:[%s253 + $0x15c] sm:%s246]
                %314 = vst [vmem:[%s254 + $0x74] sm:%s246] %v313
                %v315 = vld [vmem:[%s253 + $0x168] sm:%s246]
                %316 = vst [vmem:[%s254 + $0x78] sm:%s246] %v315
                %v317 = vld [vmem:[%s253 + $0x174] sm:%s246]
                %318 = vst [vmem:[%s254 + $0x7c] sm:%s246] %v317
                %v319 = vld [vmem:[%s253 + $0x180] sm:%s246]
                %320 = vst [vmem:[%s254 + $0x80] sm:%s246] %v319
                %v321 = vld [vmem:[%s253 + $0x18c] sm:%s246]
                %322 = vst [vmem:[%s254 + $0x84] sm:%s246] %v321
              $region57: #{protonet_forward.4} parent=51 // loop_footer
                %s252 = sadd.s32 1, %s248
              $region58: #{protonet_forward.4} parent=51 // loop_footer_branch
                %247 = sbr.rel target = $region54
              $region59: #{protonet_forward.4} parent=51 // loop_exit
                _
            $region52: #{protonet_forward.4} parent=43 // pred_fallthru
              _
          $region44: #{protonet_forward.4} parent=39 // pred_fallthru
            _
          %411 = vnop
        $region40: #{protonet_forward.4} parent=35 // pred_fallthru
          _
        // Predicated region
        $region78: #{protonet_forward.4} parent=35 // pred_check
          %p412 = pneg %p59
        $region79: #{protonet_forward.4} parent=35 // pred_check_branch
          %414 = sbr.rel (%p412) target = $region81
        $region80: #{protonet_forward.4} parent=35 // pred_region
          %s415 = sand.u32 %s49, 1
          %s416 = sand.u32 %s49, 1
          %s417 = smul.addr %s416, 136
          %s418 = scalar_lea.vmem [#allocation3], %s417
          %s419 = smul.addr %s13, 4
          %s420 = scalar_lea.vmem %s1, %s419
          // Predicated region
          $region82: #{protonet_forward.4} parent=80 // pred_check
            _
          $region83: #{protonet_forward.4} parent=80 // pred_check_branch
            %422 = sbr.rel (0) target = $region85
          $region84: #{protonet_forward.4} parent=80 // pred_region
            // Predicated region
            $region86: #{protonet_forward.4} parent=84 // pred_check
              _
            $region87: #{protonet_forward.4} parent=84 // pred_check_branch
              %424 = sbr.rel target = $region89
            $region88: #{protonet_forward.4} parent=84 // pred_region
              // Predicated region
              $region101: #{protonet_forward.4} parent=88 // pred_check
                _
              $region102: #{protonet_forward.4} parent=88 // pred_check_branch
                %506 = sbr.rel (0) target = $region104
              $region103: #{protonet_forward.4} parent=88 // pred_region
                loop: start=0, step=1, limit=1
                $region105: #{protonet_forward.4} parent=103 // loop_pre_header
                  _
                $region106: #{protonet_forward.4} parent=103 // loop_header
                  %s508 = sphi 0, %s512
                  %p509 = scmp.ge.s32.totalorder %s508, 1
                  %s513 = sphi %s420, %s420
                  %s514 = sphi %s418, %s418
                $region107: #{protonet_forward.4} parent=103 // loop_header_branch
                  %511 = sbr.rel (%p509) target = $region111
                $region108: #{protonet_forward.4} parent=103 // loop_body
                  _
                $region109: #{protonet_forward.4} parent=103 // loop_footer
                  %s512 = sadd.s32 1, %s508
                $region110: #{protonet_forward.4} parent=103 // loop_footer_branch
                  %507 = sbr.rel target = $region106
                $region111: #{protonet_forward.4} parent=103 // loop_exit
                  _
                %s516 = ssub.s32 16, 1
                loop: start=0, step=1, limit=1
                $region112: #{protonet_forward.4} parent=103 // loop_pre_header
                  _
                $region113: #{protonet_forward.4} parent=103 // loop_header
                  %s518 = sphi 0, %s522
                  %p519 = scmp.ge.s32.totalorder %s518, 1
                  %s523 = sphi %s420, %s420
                  %s524 = sphi %s418, %s418
                $region114: #{protonet_forward.4} parent=103 // loop_header_branch
                  %521 = sbr.rel (%p519) target = $region118
                $region115: #{protonet_forward.4} parent=103 // loop_body
                  %v525 = vld [vmem:[%s523] sm:%s516]
                  %526 = vst [vmem:[%s524] sm:%s516] %v525
                  %v527 = vld [vmem:[%s523 + $0xc] sm:%s516]
                  %528 = vst [vmem:[%s524 + $0x4] sm:%s516] %v527
                  %v529 = vld [vmem:[%s523 + $0x18] sm:%s516]
                  %530 = vst [vmem:[%s524 + $0x8] sm:%s516] %v529
                  %v531 = vld [vmem:[%s523 + $0x24] sm:%s516]
                  %532 = vst [vmem:[%s524 + $0xc] sm:%s516] %v531
                  %v533 = vld [vmem:[%s523 + $0x30] sm:%s516]
                  %534 = vst [vmem:[%s524 + $0x10] sm:%s516] %v533
                  %v535 = vld [vmem:[%s523 + $0x3c] sm:%s516]
                  %536 = vst [vmem:[%s524 + $0x14] sm:%s516] %v535
                  %v537 = vld [vmem:[%s523 + $0x48] sm:%s516]
                  %538 = vst [vmem:[%s524 + $0x18] sm:%s516] %v537
                  %v539 = vld [vmem:[%s523 + $0x54] sm:%s516]
                  %540 = vst [vmem:[%s524 + $0x1c] sm:%s516] %v539
                  %v541 = vld [vmem:[%s523 + $0x60] sm:%s516]
                  %542 = vst [vmem:[%s524 + $0x20] sm:%s516] %v541
                  %v543 = vld [vmem:[%s523 + $0x6c] sm:%s516]
                  %544 = vst [vmem:[%s524 + $0x24] sm:%s516] %v543
                  %v545 = vld [vmem:[%s523 + $0x78] sm:%s516]
                  %546 = vst [vmem:[%s524 + $0x28] sm:%s516] %v545
                  %v547 = vld [vmem:[%s523 + $0x84] sm:%s516]
                  %548 = vst [vmem:[%s524 + $0x2c] sm:%s516] %v547
                  %v549 = vld [vmem:[%s523 + $0x90] sm:%s516]
                  %550 = vst [vmem:[%s524 + $0x30] sm:%s516] %v549
                  %v551 = vld [vmem:[%s523 + $0x9c] sm:%s516]
                  %552 = vst [vmem:[%s524 + $0x34] sm:%s516] %v551
                  %v553 = vld [vmem:[%s523 + $0xa8] sm:%s516]
                  %554 = vst [vmem:[%s524 + $0x38] sm:%s516] %v553
                  %v555 = vld [vmem:[%s523 + $0xb4] sm:%s516]
                  %556 = vst [vmem:[%s524 + $0x3c] sm:%s516] %v555
                  %v557 = vld [vmem:[%s523 + $0xc0] sm:%s516]
                  %558 = vst [vmem:[%s524 + $0x40] sm:%s516] %v557
                  %v559 = vld [vmem:[%s523 + $0xcc] sm:%s516]
                  %560 = vst [vmem:[%s524 + $0x44] sm:%s516] %v559
                  %v561 = vld [vmem:[%s523 + $0xd8] sm:%s516]
                  %562 = vst [vmem:[%s524 + $0x48] sm:%s516] %v561
                  %v563 = vld [vmem:[%s523 + $0xe4] sm:%s516]
                  %564 = vst [vmem:[%s524 + $0x4c] sm:%s516] %v563
                  %v565 = vld [vmem:[%s523 + $0xf0] sm:%s516]
                  %566 = vst [vmem:[%s524 + $0x50] sm:%s516] %v565
                  %v567 = vld [vmem:[%s523 + $0xfc] sm:%s516]
                  %568 = vst [vmem:[%s524 + $0x54] sm:%s516] %v567
                  %v569 = vld [vmem:[%s523 + $0x108] sm:%s516]
                  %570 = vst [vmem:[%s524 + $0x58] sm:%s516] %v569
                  %v571 = vld [vmem:[%s523 + $0x114] sm:%s516]
                  %572 = vst [vmem:[%s524 + $0x5c] sm:%s516] %v571
                  %v573 = vld [vmem:[%s523 + $0x120] sm:%s516]
                  %574 = vst [vmem:[%s524 + $0x60] sm:%s516] %v573
                  %v575 = vld [vmem:[%s523 + $0x12c] sm:%s516]
                  %576 = vst [vmem:[%s524 + $0x64] sm:%s516] %v575
                  %v577 = vld [vmem:[%s523 + $0x138] sm:%s516]
                  %578 = vst [vmem:[%s524 + $0x68] sm:%s516] %v577
                  %v579 = vld [vmem:[%s523 + $0x144] sm:%s516]
                  %580 = vst [vmem:[%s524 + $0x6c] sm:%s516] %v579
                  %v581 = vld [vmem:[%s523 + $0x150] sm:%s516]
                  %582 = vst [vmem:[%s524 + $0x70] sm:%s516] %v581
                  %v583 = vld [vmem:[%s523 + $0x15c] sm:%s516]
                  %584 = vst [vmem:[%s524 + $0x74] sm:%s516] %v583
                  %v585 = vld [vmem:[%s523 + $0x168] sm:%s516]
                  %586 = vst [vmem:[%s524 + $0x78] sm:%s516] %v585
                  %v587 = vld [vmem:[%s523 + $0x174] sm:%s516]
                  %588 = vst [vmem:[%s524 + $0x7c] sm:%s516] %v587
                  %v589 = vld [vmem:[%s523 + $0x180] sm:%s516]
                  %590 = vst [vmem:[%s524 + $0x80] sm:%s516] %v589
                  %v591 = vld [vmem:[%s523 + $0x18c] sm:%s516]
                  %592 = vst [vmem:[%s524 + $0x84] sm:%s516] %v591
                $region116: #{protonet_forward.4} parent=103 // loop_footer
                  %s522 = sadd.s32 1, %s518
                $region117: #{protonet_forward.4} parent=103 // loop_footer_branch
                  %517 = sbr.rel target = $region113
                $region118: #{protonet_forward.4} parent=103 // loop_exit
                  _
              $region104: #{protonet_forward.4} parent=88 // pred_fallthru
                _
            $region89: #{protonet_forward.4} parent=84 // pred_fallthru
              _
            // Predicated region
            $region90: #{protonet_forward.4} parent=84 // pred_check
              _
            $region91: #{protonet_forward.4} parent=84 // pred_check_branch
              %426 = sbr.rel (0) target = $region93
            $region92: #{protonet_forward.4} parent=84 // pred_region
              %s428 = ssub.s32 16, 1
              loop: start=0, step=1, limit=1
              $region94: #{protonet_forward.4} parent=92 // loop_pre_header
                _
              $region95: #{protonet_forward.4} parent=92 // loop_header
                %s430 = sphi 0, %s434
                %p431 = scmp.ge.s32.totalorder %s430, 1
                %s435 = sphi %s420, %s420
                %s436 = sphi %s418, %s418
              $region96: #{protonet_forward.4} parent=92 // loop_header_branch
                %433 = sbr.rel (%p431) target = $region100
              $region97: #{protonet_forward.4} parent=92 // loop_body
                %v437 = vld [vmem:[%s435] sm:%s428]
                %438 = vst [vmem:[%s436] sm:%s428] %v437
                %v439 = vld [vmem:[%s435 + $0xc] sm:%s428]
                %440 = vst [vmem:[%s436 + $0x4] sm:%s428] %v439
                %v441 = vld [vmem:[%s435 + $0x18] sm:%s428]
                %442 = vst [vmem:[%s436 + $0x8] sm:%s428] %v441
                %v443 = vld [vmem:[%s435 + $0x24] sm:%s428]
                %444 = vst [vmem:[%s436 + $0xc] sm:%s428] %v443
                %v445 = vld [vmem:[%s435 + $0x30] sm:%s428]
                %446 = vst [vmem:[%s436 + $0x10] sm:%s428] %v445
                %v447 = vld [vmem:[%s435 + $0x3c] sm:%s428]
                %448 = vst [vmem:[%s436 + $0x14] sm:%s428] %v447
                %v449 = vld [vmem:[%s435 + $0x48] sm:%s428]
                %450 = vst [vmem:[%s436 + $0x18] sm:%s428] %v449
                %v451 = vld [vmem:[%s435 + $0x54] sm:%s428]
                %452 = vst [vmem:[%s436 + $0x1c] sm:%s428] %v451
                %v453 = vld [vmem:[%s435 + $0x60] sm:%s428]
                %454 = vst [vmem:[%s436 + $0x20] sm:%s428] %v453
                %v455 = vld [vmem:[%s435 + $0x6c] sm:%s428]
                %456 = vst [vmem:[%s436 + $0x24] sm:%s428] %v455
                %v457 = vld [vmem:[%s435 + $0x78] sm:%s428]
                %458 = vst [vmem:[%s436 + $0x28] sm:%s428] %v457
                %v459 = vld [vmem:[%s435 + $0x84] sm:%s428]
                %460 = vst [vmem:[%s436 + $0x2c] sm:%s428] %v459
                %v461 = vld [vmem:[%s435 + $0x90] sm:%s428]
                %462 = vst [vmem:[%s436 + $0x30] sm:%s428] %v461
                %v463 = vld [vmem:[%s435 + $0x9c] sm:%s428]
                %464 = vst [vmem:[%s436 + $0x34] sm:%s428] %v463
                %v465 = vld [vmem:[%s435 + $0xa8] sm:%s428]
                %466 = vst [vmem:[%s436 + $0x38] sm:%s428] %v465
                %v467 = vld [vmem:[%s435 + $0xb4] sm:%s428]
                %468 = vst [vmem:[%s436 + $0x3c] sm:%s428] %v467
                %v469 = vld [vmem:[%s435 + $0xc0] sm:%s428]
                %470 = vst [vmem:[%s436 + $0x40] sm:%s428] %v469
                %v471 = vld [vmem:[%s435 + $0xcc] sm:%s428]
                %472 = vst [vmem:[%s436 + $0x44] sm:%s428] %v471
                %v473 = vld [vmem:[%s435 + $0xd8] sm:%s428]
                %474 = vst [vmem:[%s436 + $0x48] sm:%s428] %v473
                %v475 = vld [vmem:[%s435 + $0xe4] sm:%s428]
                %476 = vst [vmem:[%s436 + $0x4c] sm:%s428] %v475
                %v477 = vld [vmem:[%s435 + $0xf0] sm:%s428]
                %478 = vst [vmem:[%s436 + $0x50] sm:%s428] %v477
                %v479 = vld [vmem:[%s435 + $0xfc] sm:%s428]
                %480 = vst [vmem:[%s436 + $0x54] sm:%s428] %v479
                %v481 = vld [vmem:[%s435 + $0x108] sm:%s428]
                %482 = vst [vmem:[%s436 + $0x58] sm:%s428] %v481
                %v483 = vld [vmem:[%s435 + $0x114] sm:%s428]
                %484 = vst [vmem:[%s436 + $0x5c] sm:%s428] %v483
                %v485 = vld [vmem:[%s435 + $0x120] sm:%s428]
                %486 = vst [vmem:[%s436 + $0x60] sm:%s428] %v485
                %v487 = vld [vmem:[%s435 + $0x12c] sm:%s428]
                %488 = vst [vmem:[%s436 + $0x64] sm:%s428] %v487
                %v489 = vld [vmem:[%s435 + $0x138] sm:%s428]
                %490 = vst [vmem:[%s436 + $0x68] sm:%s428] %v489
                %v491 = vld [vmem:[%s435 + $0x144] sm:%s428]
                %492 = vst [vmem:[%s436 + $0x6c] sm:%s428] %v491
                %v493 = vld [vmem:[%s435 + $0x150] sm:%s428]
                %494 = vst [vmem:[%s436 + $0x70] sm:%s428] %v493
                %v495 = vld [vmem:[%s435 + $0x15c] sm:%s428]
                %496 = vst [vmem:[%s436 + $0x74] sm:%s428] %v495
                %v497 = vld [vmem:[%s435 + $0x168] sm:%s428]
                %498 = vst [vmem:[%s436 + $0x78] sm:%s428] %v497
                %v499 = vld [vmem:[%s435 + $0x174] sm:%s428]
                %500 = vst [vmem:[%s436 + $0x7c] sm:%s428] %v499
                %v501 = vld [vmem:[%s435 + $0x180] sm:%s428]
                %502 = vst [vmem:[%s436 + $0x80] sm:%s428] %v501
                %v503 = vld [vmem:[%s435 + $0x18c] sm:%s428]
                %504 = vst [vmem:[%s436 + $0x84] sm:%s428] %v503
              $region98: #{protonet_forward.4} parent=92 // loop_footer
                %s434 = sadd.s32 1, %s430
              $region99: #{protonet_forward.4} parent=92 // loop_footer_branch
                %429 = sbr.rel target = $region95
              $region100: #{protonet_forward.4} parent=92 // loop_exit
                _
            $region93: #{protonet_forward.4} parent=84 // pred_fallthru
              _
          $region85: #{protonet_forward.4} parent=80 // pred_fallthru
            _
          %593 = vnop
        $region81: #{protonet_forward.4} parent=35 // pred_fallthru
          _
      $region36: #{protonet_forward.4} parent=5 // pred_fallthru
        _
      %p594 = scmp.le.s32.totalorder 1, %s13
      %p595 = scmp.lt.s32.totalorder %s13, 4
      %p596 = pnand %p594, %p595
      %p597 = pneg %p596
      // Predicated region
      $region119: #{protonet_forward.4} parent=5 // pred_check
        _
      $region120: #{protonet_forward.4} parent=5 // pred_check_branch
        %599 = sbr.rel (%p596) target = $region122
      $region121: #{protonet_forward.4} parent=5 // pred_region
        %s600 = ssub.s32 %s13, 1
        %s601 = sand.u32 %s26, 1
        %s602 = sand.u32 %s26, 1
        %s603 = smul.addr %s602, 136
        %s604 = scalar_lea.vmem [#allocation2], %s603
        // Predicated region
        $region123: #{protonet_forward.4} parent=121 // pred_check
          %p605 = pneg %p39
        $region124: #{protonet_forward.4} parent=121 // pred_check_branch
          %607 = sbr.rel (%p605) target = $region126
        $region125: #{protonet_forward.4} parent=121 // pred_region
          _
        $region126: #{protonet_forward.4} parent=121 // pred_fallthru
          _
        %s608 = sand.u32 %s52, 1
        %s609 = sand.u32 %s52, 1
        %s610 = smul.addr %s609, 136
        %s611 = scalar_lea.vmem [#allocation3], %s610
        // Predicated region
        $region127: #{protonet_forward.4} parent=121 // pred_check
          %p612 = pneg %p65
        $region128: #{protonet_forward.4} parent=121 // pred_check_branch
          %614 = sbr.rel (%p612) target = $region130
        $region129: #{protonet_forward.4} parent=121 // pred_region
          _
        $region130: #{protonet_forward.4} parent=121 // pred_fallthru
          _
        %s615 = sand.u32 %s26, 1
        %s616 = sand.u32 %s26, 1
        %s617 = smul.addr %s616, 136
        %s618 = scalar_lea.vmem [#allocation2], %s617
        %p619 = pneg %p39
        %p620 = pneg %p36
        %s621 = sand.u32 %s52, 1
        %s622 = sand.u32 %s52, 1
        %s623 = smul.addr %s622, 136
        %s624 = scalar_lea.vmem [#allocation3], %s623
        %p625 = pneg %p65
        %p626 = pneg %p62
        %p627 = pneg %p86
        %p628 = pneg %p83
        %p629 = pneg %p107
        %p630 = pneg %p104
        %p631 = pneg %p128
        %p632 = pneg %p125
        %p633 = pneg %p149
        %p634 = pneg %p146
        %p635 = pneg %p170
        %p636 = pneg %p167
        %p637 = pneg %p196
        %p638 = pneg %p193
        %s639 = sand.u32 %s183, 1
        %s640 = sand.u32 %s183, 1
        %s641 = smul.addr %s640, 128
        %s642 = scalar_lea.vmem [#allocation4], %s641
        %v644 = vld [vmem:[%s6] sm:$0x3]
        %v645 = vld [vmem:[%s604] sm:$0xf]
        %v646 = vld [vmem:[%s604 + $0x4] sm:$0xf]
        %v647 = vld [vmem:[%s604 + $0x8] sm:$0xf]
        %v648 = vld [vmem:[%s604 + $0xc] sm:$0xf]
        %v649 = vld [vmem:[%s604 + $0x10] sm:$0xf]
        %v650 = vld [vmem:[%s604 + $0x14] sm:$0xf]
        %v651 = vld [vmem:[%s604 + $0x18] sm:$0xf]
        %v652 = vld [vmem:[%s604 + $0x1c] sm:$0xf]
        %v653 = vld [vmem:[%s604 + $0x20] sm:$0xf]
        %v654 = vld [vmem:[%s604 + $0x24] sm:$0xf]
        %v655 = vld [vmem:[%s604 + $0x28] sm:$0xf]
        %v656 = vld [vmem:[%s604 + $0x2c] sm:$0xf]
        %v657 = vld [vmem:[%s604 + $0x30] sm:$0xf]
        %v658 = vld [vmem:[%s604 + $0x34] sm:$0xf]
        %v659 = vld [vmem:[%s604 + $0x38] sm:$0xf]
        %v660 = vld [vmem:[%s604 + $0x3c] sm:$0xf]
        %v661 = vld [vmem:[%s604 + $0x40] sm:$0xf]
        %v662 = vld [vmem:[%s604 + $0x44] sm:$0xf]
        %v663 = vld [vmem:[%s604 + $0x48] sm:$0xf]
        %v664 = vld [vmem:[%s604 + $0x4c] sm:$0xf]
        %v665 = vld [vmem:[%s604 + $0x50] sm:$0xf]
        %v666 = vld [vmem:[%s604 + $0x54] sm:$0xf]
        %v667 = vld [vmem:[%s604 + $0x58] sm:$0xf]
        %v668 = vld [vmem:[%s604 + $0x5c] sm:$0xf]
        %v669 = vld [vmem:[%s604 + $0x60] sm:$0xf]
        %v670 = vld [vmem:[%s604 + $0x64] sm:$0xf]
        %v671 = vld [vmem:[%s604 + $0x68] sm:$0xf]
        %v672 = vld [vmem:[%s604 + $0x6c] sm:$0xf]
        %v673 = vld [vmem:[%s604 + $0x70] sm:$0xf]
        %v674 = vld [vmem:[%s604 + $0x74] sm:$0xf]
        %v675 = vld [vmem:[%s604 + $0x78] sm:$0xf]
        %v676 = vld [vmem:[%s604 + $0x7c] sm:$0xf]
        %v677 = vld [vmem:[%s611] sm:$0xf]
        %v678 = vld [vmem:[%s611 + $0x4] sm:$0xf]
        %v679 = vld [vmem:[%s611 + $0x8] sm:$0xf]
        %v680 = vld [vmem:[%s611 + $0xc] sm:$0xf]
        %v681 = vld [vmem:[%s611 + $0x10] sm:$0xf]
        %v682 = vld [vmem:[%s611 + $0x14] sm:$0xf]
        %v683 = vld [vmem:[%s611 + $0x18] sm:$0xf]
        %v684 = vld [vmem:[%s611 + $0x1c] sm:$0xf]
        %v685 = vld [vmem:[%s611 + $0x20] sm:$0xf]
        %v686 = vld [vmem:[%s611 + $0x24] sm:$0xf]
        %v687 = vld [vmem:[%s611 + $0x28] sm:$0xf]
        %v688 = vld [vmem:[%s611 + $0x2c] sm:$0xf]
        %v689 = vld [vmem:[%s611 + $0x30] sm:$0xf]
        %v690 = vld [vmem:[%s611 + $0x34] sm:$0xf]
        %v691 = vld [vmem:[%s611 + $0x38] sm:$0xf]
        %v692 = vld [vmem:[%s611 + $0x3c] sm:$0xf]
        %v693 = vld [vmem:[%s611 + $0x40] sm:$0xf]
        %v694 = vld [vmem:[%s611 + $0x44] sm:$0xf]
        %v695 = vld [vmem:[%s611 + $0x48] sm:$0xf]
        %v696 = vld [vmem:[%s611 + $0x4c] sm:$0xf]
        %v697 = vld [vmem:[%s611 + $0x50] sm:$0xf]
        %v698 = vld [vmem:[%s611 + $0x54] sm:$0xf]
        %v699 = vld [vmem:[%s611 + $0x58] sm:$0xf]
        %v700 = vld [vmem:[%s611 + $0x5c] sm:$0xf]
        %v701 = vld [vmem:[%s611 + $0x60] sm:$0xf]
        %v702 = vld [vmem:[%s611 + $0x64] sm:$0xf]
        %v703 = vld [vmem:[%s611 + $0x68] sm:$0xf]
        %v704 = vld [vmem:[%s611 + $0x6c] sm:$0xf]
        %v705 = vld [vmem:[%s611 + $0x70] sm:$0xf]
        %v706 = vld [vmem:[%s611 + $0x74] sm:$0xf]
        %v707 = vld [vmem:[%s611 + $0x78] sm:$0xf]
        %v708 = vld [vmem:[%s611 + $0x7c] sm:$0xf]
        %v709 = vld [vmem:[%s2] sm:$0xff]
        %v710 = vld [vmem:[%s2 + $0x8] sm:$0xff]
        %v711 = vld [vmem:[%s2 + $0x10] sm:$0xff]
        %v712 = vld [vmem:[%s2 + $0x18] sm:$0xff]
        %v713 = vld [vmem:[%s2 + $0x20] sm:$0xff]
        %v714 = vld [vmem:[%s2 + $0x28] sm:$0xff]
        %v715 = vld [vmem:[%s2 + $0x30] sm:$0x33]
        %v716 = vld [vmem:[%s3] sm:$0xff]
        %v717 = vld [vmem:[%s3 + $0x8] sm:$0xff]
        %v718 = vld [vmem:[%s3 + $0x10] sm:$0xff]
        %v719 = vld [vmem:[%s3 + $0x18] sm:$0xff]
        %v720 = vld [vmem:[%s3 + $0x20] sm:$0xff]
        %v721 = vld [vmem:[%s3 + $0x28] sm:$0xff]
        %v722 = vld [vmem:[%s3 + $0x30] sm:$0x33]
        %v755 = vunpack.c.l.b16 %v677
        %v756 = vunpack.c.l.b16 %v678
        %v757 = vunpack.c.l.b16 %v679
        %v758 = vunpack.c.l.b16 %v680
        %v759 = vunpack.c.l.b16 %v681
        %v760 = vunpack.c.l.b16 %v682
        %v761 = vunpack.c.l.b16 %v683
        %v762 = vunpack.c.l.b16 %v684
        %v763 = vunpack.c.l.b16 %v685
        %v764 = vunpack.c.l.b16 %v686
        %v765 = vunpack.c.l.b16 %v687
        %v766 = vunpack.c.l.b16 %v688
        %v767 = vunpack.c.l.b16 %v689
        %v768 = vunpack.c.l.b16 %v690
        %v769 = vunpack.c.l.b16 %v691
        %v770 = vunpack.c.l.b16 %v692
        %v771 = vunpack.c.l.b16 %v693
        %v772 = vunpack.c.l.b16 %v694
        %v773 = vunpack.c.l.b16 %v695
        %v774 = vunpack.c.l.b16 %v696
        %v775 = vunpack.c.l.b16 %v697
        %v776 = vunpack.c.l.b16 %v698
        %v777 = vunpack.c.l.b16 %v699
        %v778 = vunpack.c.l.b16 %v700
        %v779 = vunpack.c.l.b16 %v701
        %v780 = vunpack.c.l.b16 %v702
        %v781 = vunpack.c.l.b16 %v703
        %v782 = vunpack.c.l.b16 %v704
        %v783 = vunpack.c.l.b16 %v705
        %v784 = vunpack.c.l.b16 %v706
        %v785 = vunpack.c.l.b16 %v707
        %v786 = vunpack.c.l.b16 %v708
        %v787 = vpack.c.b16 %v756, %v755
        %v788 = vpack.c.b16 %v758, %v757
        %v789 = vpack.c.b16 %v760, %v759
        %v790 = vpack.c.b16 %v762, %v761
        %v791 = vpack.c.b16 %v764, %v763
        %v792 = vpack.c.b16 %v766, %v765
        %v793 = vpack.c.b16 %v768, %v767
        %v794 = vpack.c.b16 %v770, %v769
        %v795 = vpack.c.b16 %v772, %v771
        %v796 = vpack.c.b16 %v774, %v773
        %v797 = vpack.c.b16 %v776, %v775
        %v798 = vpack.c.b16 %v778, %v777
        %v799 = vpack.c.b16 %v780, %v779
        %v800 = vpack.c.b16 %v782, %v781
        %v801 = vpack.c.b16 %v784, %v783
        %v802 = vpack.c.b16 %v786, %v785
        %v810 = vunpack.c.l.b16 %v716
        %v811 = vunpack.c.h.b16 %v716
        %v812 = vunpack.c.l.b16 %v717
        %v813 = vunpack.c.h.b16 %v717
        %v814 = vunpack.c.l.b16 %v718
        %v815 = vunpack.c.h.b16 %v718
        %v816 = vunpack.c.l.b16 %v719
        %v817 = vunpack.c.h.b16 %v719
        %v818 = vunpack.c.l.b16 %v720
        %v819 = vunpack.c.h.b16 %v720
        %v820 = vunpack.c.l.b16 %v721
        %v821 = vunpack.c.h.b16 %v721
        %v822 = vunpack.c.l.b16 %v722
        %v823 = vunpack.c.h.b16 %v722
        %v824 = vpack.c.b16 %v812, %v810
        %v825 = vpack.c.b16 %v813, %v811
        %v826 = vpack.c.b16 %v816, %v814
        %v827 = vpack.c.b16 %v817, %v815
        %v828 = vpack.c.b16 %v820, %v818
        %v829 = vpack.c.b16 %v821, %v819
        %v830 = vpack.c.b16 %v822, %v822
        %v831 = vpack.c.b16 %v823, %v823
        %vm838 = vcmask 416768
        %v840 = vsel %vm838, %v787, 0
        %v843 = vsel %vm838, %v788, 0
        %v846 = vsel %vm838, %v789, 0
        %v849 = vsel %vm838, %v790, 0
        %v852 = vsel %vm838, %v791, 0
        %v855 = vsel %vm838, %v792, 0
        %v858 = vsel %vm838, %v793, 0
        %v861 = vsel %vm838, %v794, 0
        %v864 = vsel %vm838, %v795, 0
        %v867 = vsel %vm838, %v796, 0
        %v870 = vsel %vm838, %v797, 0
        %v873 = vsel %vm838, %v798, 0
        %v876 = vsel %vm838, %v799, 0
        %v879 = vsel %vm838, %v800, 0
        %v882 = vsel %vm838, %v801, 0
        %v885 = vsel %vm838, %v802, 0
        %vm887 = vcmask 1040384
        %vm888 = vcmask 1041408
        %v889 = vsel %vm887, 4294967295, 65535
        %v890 = vsel %vm888, %v889, 0
        %v892 = vand.u32 %v830, %v890
        %v895 = vand.u32 %v831, %v890
        %897 = vmatpush.bf16.msra.mxu0 0
        %898 = vmatpush.bf16.msra.mxu0 0
        %899 = vmatpush.bf16.msra.mxu0 0
        %900 = vmatpush.bf16.msra.mxu0 0
        %901 = vmatpush.bf16.msra.mxu0 %v892
        %902 = vmatpush.bf16.msra.mxu0 %v828
        %903 = vmatpush.bf16.msra.mxu0 %v826
        %904 = vmatpush.bf16.msra.mxu0 %v824
        %905 = vmatmul.bf16.gmra.mxu0 %v840
        %v906 = vpop.f32.mrf.mxu0
        %v907 = vadd.f32 0.0, %v906
        %v908 = vpop.f32.mrf.mxu0
        %v909 = vadd.f32 0.0, %v908
        %910 = vmatmul.bf16.gmra.mxu0 %v843
        %v911 = vpop.f32.mrf.mxu0
        %v912 = vadd.f32 0.0, %v911
        %v913 = vpop.f32.mrf.mxu0
        %v914 = vadd.f32 0.0, %v913
        %915 = vmatmul.bf16.gmra.mxu0 %v846
        %v916 = vpop.f32.mrf.mxu0
        %v917 = vadd.f32 0.0, %v916
        %v918 = vpop.f32.mrf.mxu0
        %v919 = vadd.f32 0.0, %v918
        %920 = vmatmul.bf16.gmra.mxu0 %v849
        %v921 = vpop.f32.mrf.mxu0
        %v922 = vadd.f32 0.0, %v921
        %v923 = vpop.f32.mrf.mxu0
        %v924 = vadd.f32 0.0, %v923
        %925 = vmatmul.bf16.gmra.mxu0 %v852
        %v926 = vpop.f32.mrf.mxu0
        %v927 = vadd.f32 0.0, %v926
        %v928 = vpop.f32.mrf.mxu0
        %v929 = vadd.f32 0.0, %v928
        %930 = vmatmul.bf16.gmra.mxu0 %v855
        %v931 = vpop.f32.mrf.mxu0
        %v932 = vadd.f32 0.0, %v931
        %v933 = vpop.f32.mrf.mxu0
        %v934 = vadd.f32 0.0, %v933
        %935 = vmatmul.bf16.gmra.mxu0 %v858
        %v936 = vpop.f32.mrf.mxu0
        %v937 = vadd.f32 0.0, %v936
        %v938 = vpop.f32.mrf.mxu0
        %v939 = vadd.f32 0.0, %v938
        %940 = vmatmul.bf16.gmra.mxu0 %v861
        %v941 = vpop.f32.mrf.mxu0
        %v942 = vadd.f32 0.0, %v941
        %v943 = vpop.f32.mrf.mxu0
        %v944 = vadd.f32 0.0, %v943
        %945 = vmatmul.bf16.gmra.mxu0 %v864
        %v946 = vpop.f32.mrf.mxu0
        %v947 = vadd.f32 0.0, %v946
        %v948 = vpop.f32.mrf.mxu0
        %v949 = vadd.f32 0.0, %v948
        %950 = vmatmul.bf16.gmra.mxu0 %v867
        %v951 = vpop.f32.mrf.mxu0
        %v952 = vadd.f32 0.0, %v951
        %v953 = vpop.f32.mrf.mxu0
        %v954 = vadd.f32 0.0, %v953
        %955 = vmatmul.bf16.gmra.mxu0 %v870
        %v956 = vpop.f32.mrf.mxu0
        %v957 = vadd.f32 0.0, %v956
        %v958 = vpop.f32.mrf.mxu0
        %v959 = vadd.f32 0.0, %v958
        %960 = vmatmul.bf16.gmra.mxu0 %v873
        %v961 = vpop.f32.mrf.mxu0
        %v962 = vadd.f32 0.0, %v961
        %v963 = vpop.f32.mrf.mxu0
        %v964 = vadd.f32 0.0, %v963
        %965 = vmatmul.bf16.gmra.mxu0 %v876
        %v966 = vpop.f32.mrf.mxu0
        %v967 = vadd.f32 0.0, %v966
        %v968 = vpop.f32.mrf.mxu0
        %v969 = vadd.f32 0.0, %v968
        %970 = vmatmul.bf16.gmra.mxu0 %v879
        %v971 = vpop.f32.mrf.mxu0
        %v972 = vadd.f32 0.0, %v971
        %v973 = vpop.f32.mrf.mxu0
        %v974 = vadd.f32 0.0, %v973
        %975 = vmatmul.bf16.gmra.mxu0 %v882
        %v976 = vpop.f32.mrf.mxu0
        %v977 = vadd.f32 0.0, %v976
        %v978 = vpop.f32.mrf.mxu0
        %v979 = vadd.f32 0.0, %v978
        %980 = vmatmul.bf16.gmra.mxu0 %v885
        %v981 = vpop.f32.mrf.mxu0
        %v982 = vadd.f32 0.0, %v981
        %v983 = vpop.f32.mrf.mxu0
        %v984 = vadd.f32 0.0, %v983
        %985 = vdwg.mxu0
        %986 = vmatpush.bf16.msra.mxu0 0
        %987 = vmatpush.bf16.msra.mxu0 0
        %988 = vmatpush.bf16.msra.mxu0 0
        %989 = vmatpush.bf16.msra.mxu0 0
        %990 = vmatpush.bf16.msra.mxu0 %v895
        %991 = vmatpush.bf16.msra.mxu0 %v829
        %992 = vmatpush.bf16.msra.mxu0 %v827
        %993 = vmatpush.bf16.msra.mxu0 %v825
        %994 = vmatmul.bf16.gmra.mxu0 %v840
        %v995 = vpop.f32.mrf.mxu0
        %v996 = vadd.f32 0.0, %v995
        %v997 = vpop.f32.mrf.mxu0
        %v998 = vadd.f32 0.0, %v997
        %999 = vmatmul.bf16.gmra.mxu0 %v843
        %v1000 = vpop.f32.mrf.mxu0
        %v1001 = vadd.f32 0.0, %v1000
        %v1002 = vpop.f32.mrf.mxu0
        %v1003 = vadd.f32 0.0, %v1002
        %1004 = vmatmul.bf16.gmra.mxu0 %v846
        %v1005 = vpop.f32.mrf.mxu0
        %v1006 = vadd.f32 0.0, %v1005
        %v1007 = vpop.f32.mrf.mxu0
        %v1008 = vadd.f32 0.0, %v1007
        %1009 = vmatmul.bf16.gmra.mxu0 %v849
        %v1010 = vpop.f32.mrf.mxu0
        %v1011 = vadd.f32 0.0, %v1010
        %v1012 = vpop.f32.mrf.mxu0
        %v1013 = vadd.f32 0.0, %v1012
        %1014 = vmatmul.bf16.gmra.mxu0 %v852
        %v1015 = vpop.f32.mrf.mxu0
        %v1016 = vadd.f32 0.0, %v1015
        %v1017 = vpop.f32.mrf.mxu0
        %v1018 = vadd.f32 0.0, %v1017
        %1019 = vmatmul.bf16.gmra.mxu0 %v855
        %v1020 = vpop.f32.mrf.mxu0
        %v1021 = vadd.f32 0.0, %v1020
        %v1022 = vpop.f32.mrf.mxu0
        %v1023 = vadd.f32 0.0, %v1022
        %1024 = vmatmul.bf16.gmra.mxu0 %v858
        %v1025 = vpop.f32.mrf.mxu0
        %v1026 = vadd.f32 0.0, %v1025
        %v1027 = vpop.f32.mrf.mxu0
        %v1028 = vadd.f32 0.0, %v1027
        %1029 = vmatmul.bf16.gmra.mxu0 %v861
        %v1030 = vpop.f32.mrf.mxu0
        %v1031 = vadd.f32 0.0, %v1030
        %v1032 = vpop.f32.mrf.mxu0
        %v1033 = vadd.f32 0.0, %v1032
        %1034 = vmatmul.bf16.gmra.mxu0 %v864
        %v1035 = vpop.f32.mrf.mxu0
        %v1036 = vadd.f32 0.0, %v1035
        %v1037 = vpop.f32.mrf.mxu0
        %v1038 = vadd.f32 0.0, %v1037
        %1039 = vmatmul.bf16.gmra.mxu0 %v867
        %v1040 = vpop.f32.mrf.mxu0
        %v1041 = vadd.f32 0.0, %v1040
        %v1042 = vpop.f32.mrf.mxu0
        %v1043 = vadd.f32 0.0, %v1042
        %1044 = vmatmul.bf16.gmra.mxu0 %v870
        %v1045 = vpop.f32.mrf.mxu0
        %v1046 = vadd.f32 0.0, %v1045
        %v1047 = vpop.f32.mrf.mxu0
        %v1048 = vadd.f32 0.0, %v1047
        %1049 = vmatmul.bf16.gmra.mxu0 %v873
        %v1050 = vpop.f32.mrf.mxu0
        %v1051 = vadd.f32 0.0, %v1050
        %v1052 = vpop.f32.mrf.mxu0
        %v1053 = vadd.f32 0.0, %v1052
        %1054 = vmatmul.bf16.gmra.mxu0 %v876
        %v1055 = vpop.f32.mrf.mxu0
        %v1056 = vadd.f32 0.0, %v1055
        %v1057 = vpop.f32.mrf.mxu0
        %v1058 = vadd.f32 0.0, %v1057
        %1059 = vmatmul.bf16.gmra.mxu0 %v879
        %v1060 = vpop.f32.mrf.mxu0
        %v1061 = vadd.f32 0.0, %v1060
        %v1062 = vpop.f32.mrf.mxu0
        %v1063 = vadd.f32 0.0, %v1062
        %1064 = vmatmul.bf16.gmra.mxu0 %v882
        %v1065 = vpop.f32.mrf.mxu0
        %v1066 = vadd.f32 0.0, %v1065
        %v1067 = vpop.f32.mrf.mxu0
        %v1068 = vadd.f32 0.0, %v1067
        %1069 = vmatmul.bf16.gmra.mxu0 %v885
        %v1070 = vpop.f32.mrf.mxu0
        %v1071 = vadd.f32 0.0, %v1070
        %v1072 = vpop.f32.mrf.mxu0
        %v1073 = vadd.f32 0.0, %v1072
        %1074 = vdwg.mxu0
        %v1107 = vunpack.c.l.b16 %v645
        %v1108 = vunpack.c.l.b16 %v646
        %v1109 = vunpack.c.l.b16 %v647
        %v1110 = vunpack.c.l.b16 %v648
        %v1111 = vunpack.c.l.b16 %v649
        %v1112 = vunpack.c.l.b16 %v650
        %v1113 = vunpack.c.l.b16 %v651
        %v1114 = vunpack.c.l.b16 %v652
        %v1115 = vunpack.c.l.b16 %v653
        %v1116 = vunpack.c.l.b16 %v654
        %v1117 = vunpack.c.l.b16 %v655
        %v1118 = vunpack.c.l.b16 %v656
        %v1119 = vunpack.c.l.b16 %v657
        %v1120 = vunpack.c.l.b16 %v658
        %v1121 = vunpack.c.l.b16 %v659
        %v1122 = vunpack.c.l.b16 %v660
        %v1123 = vunpack.c.l.b16 %v661
        %v1124 = vunpack.c.l.b16 %v662
        %v1125 = vunpack.c.l.b16 %v663
        %v1126 = vunpack.c.l.b16 %v664
        %v1127 = vunpack.c.l.b16 %v665
        %v1128 = vunpack.c.l.b16 %v666
        %v1129 = vunpack.c.l.b16 %v667
        %v1130 = vunpack.c.l.b16 %v668
        %v1131 = vunpack.c.l.b16 %v669
        %v1132 = vunpack.c.l.b16 %v670
        %v1133 = vunpack.c.l.b16 %v671
        %v1134 = vunpack.c.l.b16 %v672
        %v1135 = vunpack.c.l.b16 %v673
        %v1136 = vunpack.c.l.b16 %v674
        %v1137 = vunpack.c.l.b16 %v675
        %v1138 = vunpack.c.l.b16 %v676
        %v1139 = vpack.c.b16 %v1108, %v1107
        %v1140 = vpack.c.b16 %v1110, %v1109
        %v1141 = vpack.c.b16 %v1112, %v1111
        %v1142 = vpack.c.b16 %v1114, %v1113
        %v1143 = vpack.c.b16 %v1116, %v1115
        %v1144 = vpack.c.b16 %v1118, %v1117
        %v1145 = vpack.c.b16 %v1120, %v1119
        %v1146 = vpack.c.b16 %v1122, %v1121
        %v1147 = vpack.c.b16 %v1124, %v1123
        %v1148 = vpack.c.b16 %v1126, %v1125
        %v1149 = vpack.c.b16 %v1128, %v1127
        %v1150 = vpack.c.b16 %v1130, %v1129
        %v1151 = vpack.c.b16 %v1132, %v1131
        %v1152 = vpack.c.b16 %v1134, %v1133
        %v1153 = vpack.c.b16 %v1136, %v1135
        %v1154 = vpack.c.b16 %v1138, %v1137
        %v1162 = vunpack.c.l.b16 %v709
        %v1163 = vunpack.c.h.b16 %v709
        %v1164 = vunpack.c.l.b16 %v710
        %v1165 = vunpack.c.h.b16 %v710
        %v1166 = vunpack.c.l.b16 %v711
        %v1167 = vunpack.c.h.b16 %v711
        %v1168 = vunpack.c.l.b16 %v712
        %v1169 = vunpack.c.h.b16 %v712
        %v1170 = vunpack.c.l.b16 %v713
        %v1171 = vunpack.c.h.b16 %v713
        %v1172 = vunpack.c.l.b16 %v714
        %v1173 = vunpack.c.h.b16 %v714
        %v1174 = vunpack.c.l.b16 %v715
        %v1175 = vunpack.c.h.b16 %v715
        %v1176 = vpack.c.b16 %v1164, %v1162
        %v1177 = vpack.c.b16 %v1165, %v1163
        %v1178 = vpack.c.b16 %v1168, %v1166
        %v1179 = vpack.c.b16 %v1169, %v1167
        %v1180 = vpack.c.b16 %v1172, %v1170
        %v1181 = vpack.c.b16 %v1173, %v1171
        %v1182 = vpack.c.b16 %v1174, %v1174
        %v1183 = vpack.c.b16 %v1175, %v1175
        %v1191 = vsel %vm838, %v1139, 0
        %v1194 = vsel %vm838, %v1140, 0
        %v1197 = vsel %vm838, %v1141, 0
        %v1200 = vsel %vm838, %v1142, 0
        %v1203 = vsel %vm838, %v1143, 0
        %v1206 = vsel %vm838, %v1144, 0
        %v1209 = vsel %vm838, %v1145, 0
        %v1212 = vsel %vm838, %v1146, 0
        %v1215 = vsel %vm838, %v1147, 0
        %v1218 = vsel %vm838, %v1148, 0
        %v1221 = vsel %vm838, %v1149, 0
        %v1224 = vsel %vm838, %v1150, 0
        %v1227 = vsel %vm838, %v1151, 0
        %v1230 = vsel %vm838, %v1152, 0
        %v1233 = vsel %vm838, %v1153, 0
        %v1236 = vsel %vm838, %v1154, 0
        %v1239 = vand.u32 %v1182, %v890
        %v1242 = vand.u32 %v1183, %v890
        %1244 = vmatpush.bf16.msra.mxu0 0
        %1245 = vmatpush.bf16.msra.mxu0 0
        %1246 = vmatpush.bf16.msra.mxu0 0
        %1247 = vmatpush.bf16.msra.mxu0 0
        %1248 = vmatpush.bf16.msra.mxu0 %v1239
        %1249 = vmatpush.bf16.msra.mxu0 %v1180
        %1250 = vmatpush.bf16.msra.mxu0 %v1178
        %1251 = vmatpush.bf16.msra.mxu0 %v1176
        %1252 = vmatmul.bf16.gmra.mxu0 %v1191
        %v1253 = vpop.f32.mrf.mxu0
        %v1254 = vadd.f32 %v907, %v1253
        %v1255 = vpop.f32.mrf.mxu0
        %v1256 = vadd.f32 %v909, %v1255
        %1257 = vmatmul.bf16.gmra.mxu0 %v1194
        %v1258 = vpop.f32.mrf.mxu0
        %v1259 = vadd.f32 %v912, %v1258
        %v1260 = vpop.f32.mrf.mxu0
        %v1261 = vadd.f32 %v914, %v1260
        %1262 = vmatmul.bf16.gmra.mxu0 %v1197
        %v1263 = vpop.f32.mrf.mxu0
        %v1264 = vadd.f32 %v917, %v1263
        %v1265 = vpop.f32.mrf.mxu0
        %v1266 = vadd.f32 %v919, %v1265
        %1267 = vmatmul.bf16.gmra.mxu0 %v1200
        %v1268 = vpop.f32.mrf.mxu0
        %v1269 = vadd.f32 %v922, %v1268
        %v1270 = vpop.f32.mrf.mxu0
        %v1271 = vadd.f32 %v924, %v1270
        %1272 = vmatmul.bf16.gmra.mxu0 %v1203
        %v1273 = vpop.f32.mrf.mxu0
        %v1274 = vadd.f32 %v927, %v1273
        %v1275 = vpop.f32.mrf.mxu0
        %v1276 = vadd.f32 %v929, %v1275
        %1277 = vmatmul.bf16.gmra.mxu0 %v1206
        %v1278 = vpop.f32.mrf.mxu0
        %v1279 = vadd.f32 %v932, %v1278
        %v1280 = vpop.f32.mrf.mxu0
        %v1281 = vadd.f32 %v934, %v1280
        %1282 = vmatmul.bf16.gmra.mxu0 %v1209
        %v1283 = vpop.f32.mrf.mxu0
        %v1284 = vadd.f32 %v937, %v1283
        %v1285 = vpop.f32.mrf.mxu0
        %v1286 = vadd.f32 %v939, %v1285
        %1287 = vmatmul.bf16.gmra.mxu0 %v1212
        %v1288 = vpop.f32.mrf.mxu0
        %v1289 = vadd.f32 %v942, %v1288
        %v1290 = vpop.f32.mrf.mxu0
        %v1291 = vadd.f32 %v944, %v1290
        %1292 = vmatmul.bf16.gmra.mxu0 %v1215
        %v1293 = vpop.f32.mrf.mxu0
        %v1294 = vadd.f32 %v947, %v1293
        %v1295 = vpop.f32.mrf.mxu0
        %v1296 = vadd.f32 %v949, %v1295
        %1297 = vmatmul.bf16.gmra.mxu0 %v1218
        %v1298 = vpop.f32.mrf.mxu0
        %v1299 = vadd.f32 %v952, %v1298
        %v1300 = vpop.f32.mrf.mxu0
        %v1301 = vadd.f32 %v954, %v1300
        %1302 = vmatmul.bf16.gmra.mxu0 %v1221
        %v1303 = vpop.f32.mrf.mxu0
        %v1304 = vadd.f32 %v957, %v1303
        %v1305 = vpop.f32.mrf.mxu0
        %v1306 = vadd.f32 %v959, %v1305
        %1307 = vmatmul.bf16.gmra.mxu0 %v1224
        %v1308 = vpop.f32.mrf.mxu0
        %v1309 = vadd.f32 %v962, %v1308
        %v1310 = vpop.f32.mrf.mxu0
        %v1311 = vadd.f32 %v964, %v1310
        %1312 = vmatmul.bf16.gmra.mxu0 %v1227
        %v1313 = vpop.f32.mrf.mxu0
        %v1314 = vadd.f32 %v967, %v1313
        %v1315 = vpop.f32.mrf.mxu0
        %v1316 = vadd.f32 %v969, %v1315
        %1317 = vmatmul.bf16.gmra.mxu0 %v1230
        %v1318 = vpop.f32.mrf.mxu0
        %v1319 = vadd.f32 %v972, %v1318
        %v1320 = vpop.f32.mrf.mxu0
        %v1321 = vadd.f32 %v974, %v1320
        %1322 = vmatmul.bf16.gmra.mxu0 %v1233
        %v1323 = vpop.f32.mrf.mxu0
        %v1324 = vadd.f32 %v977, %v1323
        %v1325 = vpop.f32.mrf.mxu0
        %v1326 = vadd.f32 %v979, %v1325
        %1327 = vmatmul.bf16.gmra.mxu0 %v1236
        %v1328 = vpop.f32.mrf.mxu0
        %v1329 = vadd.f32 %v982, %v1328
        %v1330 = vpop.f32.mrf.mxu0
        %v1331 = vadd.f32 %v984, %v1330
        %1332 = vdwg.mxu0
        %1333 = vmatpush.bf16.msra.mxu0 0
        %1334 = vmatpush.bf16.msra.mxu0 0
        %1335 = vmatpush.bf16.msra.mxu0 0
        %1336 = vmatpush.bf16.msra.mxu0 0
        %1337 = vmatpush.bf16.msra.mxu0 %v1242
        %1338 = vmatpush.bf16.msra.mxu0 %v1181
        %1339 = vmatpush.bf16.msra.mxu0 %v1179
        %1340 = vmatpush.bf16.msra.mxu0 %v1177
        %1341 = vmatmul.bf16.gmra.mxu0 %v1191
        %v1342 = vpop.f32.mrf.mxu0
        %v1343 = vadd.f32 %v996, %v1342
        %v1344 = vpop.f32.mrf.mxu0
        %v1345 = vadd.f32 %v998, %v1344
        %1346 = vmatmul.bf16.gmra.mxu0 %v1194
        %v1347 = vpop.f32.mrf.mxu0
        %v1348 = vadd.f32 %v1001, %v1347
        %v1349 = vpop.f32.mrf.mxu0
        %v1350 = vadd.f32 %v1003, %v1349
        %1351 = vmatmul.bf16.gmra.mxu0 %v1197
        %v1352 = vpop.f32.mrf.mxu0
        %v1353 = vadd.f32 %v1006, %v1352
        %v1354 = vpop.f32.mrf.mxu0
        %v1355 = vadd.f32 %v1008, %v1354
        %1356 = vmatmul.bf16.gmra.mxu0 %v1200
        %v1357 = vpop.f32.mrf.mxu0
        %v1358 = vadd.f32 %v1011, %v1357
        %v1359 = vpop.f32.mrf.mxu0
        %v1360 = vadd.f32 %v1013, %v1359
        %1361 = vmatmul.bf16.gmra.mxu0 %v1203
        %v1362 = vpop.f32.mrf.mxu0
        %v1363 = vadd.f32 %v1016, %v1362
        %v1364 = vpop.f32.mrf.mxu0
        %v1365 = vadd.f32 %v1018, %v1364
        %1366 = vmatmul.bf16.gmra.mxu0 %v1206
        %v1367 = vpop.f32.mrf.mxu0
        %v1368 = vadd.f32 %v1021, %v1367
        %v1369 = vpop.f32.mrf.mxu0
        %v1370 = vadd.f32 %v1023, %v1369
        %1371 = vmatmul.bf16.gmra.mxu0 %v1209
        %v1372 = vpop.f32.mrf.mxu0
        %v1373 = vadd.f32 %v1026, %v1372
        %v1374 = vpop.f32.mrf.mxu0
        %v1375 = vadd.f32 %v1028, %v1374
        %1376 = vmatmul.bf16.gmra.mxu0 %v1212
        %v1377 = vpop.f32.mrf.mxu0
        %v1378 = vadd.f32 %v1031, %v1377
        %v1379 = vpop.f32.mrf.mxu0
        %v1380 = vadd.f32 %v1033, %v1379
        %1381 = vmatmul.bf16.gmra.mxu0 %v1215
        %v1382 = vpop.f32.mrf.mxu0
        %v1383 = vadd.f32 %v1036, %v1382
        %v1384 = vpop.f32.mrf.mxu0
        %v1385 = vadd.f32 %v1038, %v1384
        %1386 = vmatmul.bf16.gmra.mxu0 %v1218
        %v1387 = vpop.f32.mrf.mxu0
        %v1388 = vadd.f32 %v1041, %v1387
        %v1389 = vpop.f32.mrf.mxu0
        %v1390 = vadd.f32 %v1043, %v1389
        %1391 = vmatmul.bf16.gmra.mxu0 %v1221
        %v1392 = vpop.f32.mrf.mxu0
        %v1393 = vadd.f32 %v1046, %v1392
        %v1394 = vpop.f32.mrf.mxu0
        %v1395 = vadd.f32 %v1048, %v1394
        %1396 = vmatmul.bf16.gmra.mxu0 %v1224
        %v1397 = vpop.f32.mrf.mxu0
        %v1398 = vadd.f32 %v1051, %v1397
        %v1399 = vpop.f32.mrf.mxu0
        %v1400 = vadd.f32 %v1053, %v1399
        %1401 = vmatmul.bf16.gmra.mxu0 %v1227
        %v1402 = vpop.f32.mrf.mxu0
        %v1403 = vadd.f32 %v1056, %v1402
        %v1404 = vpop.f32.mrf.mxu0
        %v1405 = vadd.f32 %v1058, %v1404
        %1406 = vmatmul.bf16.gmra.mxu0 %v1230
        %v1407 = vpop.f32.mrf.mxu0
        %v1408 = vadd.f32 %v1061, %v1407
        %v1409 = vpop.f32.mrf.mxu0
        %v1410 = vadd.f32 %v1063, %v1409
        %1411 = vmatmul.bf16.gmra.mxu0 %v1233
        %v1412 = vpop.f32.mrf.mxu0
        %v1413 = vadd.f32 %v1066, %v1412
        %v1414 = vpop.f32.mrf.mxu0
        %v1415 = vadd.f32 %v1068, %v1414
        %1416 = vmatmul.bf16.gmra.mxu0 %v1236
        %v1417 = vpop.f32.mrf.mxu0
        %v1418 = vadd.f32 %v1071, %v1417
        %v1419 = vpop.f32.mrf.mxu0
        %v1420 = vadd.f32 %v1073, %v1419
        %1421 = vdwg.mxu0
        %v1422 = vld [vmem:[%s5] sm:$0xff]
        %v1423 = vld [vmem:[%s5 + $0x8] sm:$0xff]
        %v1424 = vld [vmem:[%s5 + $0x10] sm:$0xff]
        %v1425 = vld [vmem:[%s5 + $0x18] sm:$0xff]
        %v1426 = vld [vmem:[%s5 + $0x20] sm:$0xff]
        %v1427 = vld [vmem:[%s5 + $0x28] sm:$0xff]
        %v1428 = vld [vmem:[%s5 + $0x30] sm:$0x33]
        %v1429 = vld [vmem:[%s4] sm:$0xff]
        %v1430 = vld [vmem:[%s4 + $0x8] sm:$0xff]
        %v1431 = vld [vmem:[%s4 + $0x10] sm:$0xff]
        %v1432 = vld [vmem:[%s4 + $0x18] sm:$0xff]
        %v1433 = vld [vmem:[%s4 + $0x20] sm:$0xff]
        %v1434 = vld [vmem:[%s4 + $0x28] sm:$0xff]
        %v1435 = vld [vmem:[%s4 + $0x30] sm:$0x33]
        %v1443 = vunpack.c.l.b16 %v1429
        %v1444 = vunpack.c.h.b16 %v1429
        %v1445 = vunpack.c.l.b16 %v1430
        %v1446 = vunpack.c.h.b16 %v1430
        %v1447 = vunpack.c.l.b16 %v1431
        %v1448 = vunpack.c.h.b16 %v1431
        %v1449 = vunpack.c.l.b16 %v1432
        %v1450 = vunpack.c.h.b16 %v1432
        %v1451 = vunpack.c.l.b16 %v1433
        %v1452 = vunpack.c.h.b16 %v1433
        %v1453 = vunpack.c.l.b16 %v1434
        %v1454 = vunpack.c.h.b16 %v1434
        %v1455 = vunpack.c.l.b16 %v1435
        %v1456 = vunpack.c.h.b16 %v1435
        %v1457 = vpack.c.b16 %v1445, %v1443
        %v1458 = vpack.c.b16 %v1446, %v1444
        %v1459 = vpack.c.b16 %v1449, %v1447
        %v1460 = vpack.c.b16 %v1450, %v1448
        %v1461 = vpack.c.b16 %v1453, %v1451
        %v1462 = vpack.c.b16 %v1454, %v1452
        %v1463 = vpack.c.b16 %v1455, %v1455
        %v1464 = vpack.c.b16 %v1456, %v1456
        %v1472 = vand.u32 %v1463, %v890
        %v1475 = vand.u32 %v1464, %v890
        %1477 = vmatpush.bf16.msra.mxu0 0
        %1478 = vmatpush.bf16.msra.mxu0 0
        %1479 = vmatpush.bf16.msra.mxu0 0
        %1480 = vmatpush.bf16.msra.mxu0 0
        %1481 = vmatpush.bf16.msra.mxu0 %v1472
        %1482 = vmatpush.bf16.msra.mxu0 %v1461
        %1483 = vmatpush.bf16.msra.mxu0 %v1459
        %1484 = vmatpush.bf16.msra.mxu0 %v1457
        %1485 = vmatmul.bf16.gmra.mxu0 %v1191
        %v1486 = vpop.f32.mrf.mxu0
        %v1487 = vadd.f32 0.0, %v1486
        %v1488 = vpop.f32.mrf.mxu0
        %v1489 = vadd.f32 0.0, %v1488
        %1490 = vmatmul.bf16.gmra.mxu0 %v1194
        %v1491 = vpop.f32.mrf.mxu0
        %v1492 = vadd.f32 0.0, %v1491
        %v1493 = vpop.f32.mrf.mxu0
        %v1494 = vadd.f32 0.0, %v1493
        %1495 = vmatmul.bf16.gmra.mxu0 %v1197
        %v1496 = vpop.f32.mrf.mxu0
        %v1497 = vadd.f32 0.0, %v1496
        %v1498 = vpop.f32.mrf.mxu0
        %v1499 = vadd.f32 0.0, %v1498
        %1500 = vmatmul.bf16.gmra.mxu0 %v1200
        %v1501 = vpop.f32.mrf.mxu0
        %v1502 = vadd.f32 0.0, %v1501
        %v1503 = vpop.f32.mrf.mxu0
        %v1504 = vadd.f32 0.0, %v1503
        %1505 = vmatmul.bf16.gmra.mxu0 %v1203
        %v1506 = vpop.f32.mrf.mxu0
        %v1507 = vadd.f32 0.0, %v1506
        %v1508 = vpop.f32.mrf.mxu0
        %v1509 = vadd.f32 0.0, %v1508
        %1510 = vmatmul.bf16.gmra.mxu0 %v1206
        %v1511 = vpop.f32.mrf.mxu0
        %v1512 = vadd.f32 0.0, %v1511
        %v1513 = vpop.f32.mrf.mxu0
        %v1514 = vadd.f32 0.0, %v1513
        %1515 = vmatmul.bf16.gmra.mxu0 %v1209
        %v1516 = vpop.f32.mrf.mxu0
        %v1517 = vadd.f32 0.0, %v1516
        %v1518 = vpop.f32.mrf.mxu0
        %v1519 = vadd.f32 0.0, %v1518
        %1520 = vmatmul.bf16.gmra.mxu0 %v1212
        %v1521 = vpop.f32.mrf.mxu0
        %v1522 = vadd.f32 0.0, %v1521
        %v1523 = vpop.f32.mrf.mxu0
        %v1524 = vadd.f32 0.0, %v1523
        %1525 = vmatmul.bf16.gmra.mxu0 %v1215
        %v1526 = vpop.f32.mrf.mxu0
        %v1527 = vadd.f32 0.0, %v1526
        %v1528 = vpop.f32.mrf.mxu0
        %v1529 = vadd.f32 0.0, %v1528
        %1530 = vmatmul.bf16.gmra.mxu0 %v1218
        %v1531 = vpop.f32.mrf.mxu0
        %v1532 = vadd.f32 0.0, %v1531
        %v1533 = vpop.f32.mrf.mxu0
        %v1534 = vadd.f32 0.0, %v1533
        %1535 = vmatmul.bf16.gmra.mxu0 %v1221
        %v1536 = vpop.f32.mrf.mxu0
        %v1537 = vadd.f32 0.0, %v1536
        %v1538 = vpop.f32.mrf.mxu0
        %v1539 = vadd.f32 0.0, %v1538
        %1540 = vmatmul.bf16.gmra.mxu0 %v1224
        %v1541 = vpop.f32.mrf.mxu0
        %v1542 = vadd.f32 0.0, %v1541
        %v1543 = vpop.f32.mrf.mxu0
        %v1544 = vadd.f32 0.0, %v1543
        %1545 = vmatmul.bf16.gmra.mxu0 %v1227
        %v1546 = vpop.f32.mrf.mxu0
        %v1547 = vadd.f32 0.0, %v1546
        %v1548 = vpop.f32.mrf.mxu0
        %v1549 = vadd.f32 0.0, %v1548
        %1550 = vmatmul.bf16.gmra.mxu0 %v1230
        %v1551 = vpop.f32.mrf.mxu0
        %v1552 = vadd.f32 0.0, %v1551
        %v1553 = vpop.f32.mrf.mxu0
        %v1554 = vadd.f32 0.0, %v1553
        %1555 = vmatmul.bf16.gmra.mxu0 %v1233
        %v1556 = vpop.f32.mrf.mxu0
        %v1557 = vadd.f32 0.0, %v1556
        %v1558 = vpop.f32.mrf.mxu0
        %v1559 = vadd.f32 0.0, %v1558
        %1560 = vmatmul.bf16.gmra.mxu0 %v1236
        %v1561 = vpop.f32.mrf.mxu0
        %v1562 = vadd.f32 0.0, %v1561
        %v1563 = vpop.f32.mrf.mxu0
        %v1564 = vadd.f32 0.0, %v1563
        %1565 = vdwg.mxu0
        %1566 = vmatpush.bf16.msra.mxu0 0
        %1567 = vmatpush.bf16.msra.mxu0 0
        %1568 = vmatpush.bf16.msra.mxu0 0
        %1569 = vmatpush.bf16.msra.mxu0 0
        %1570 = vmatpush.bf16.msra.mxu0 %v1475
        %1571 = vmatpush.bf16.msra.mxu0 %v1462
        %1572 = vmatpush.bf16.msra.mxu0 %v1460
        %1573 = vmatpush.bf16.msra.mxu0 %v1458
        %1574 = vmatmul.bf16.gmra.mxu0 %v1191
        %v1575 = vpop.f32.mrf.mxu0
        %v1576 = vadd.f32 0.0, %v1575
        %v1577 = vpop.f32.mrf.mxu0
        %v1578 = vadd.f32 0.0, %v1577
        %1579 = vmatmul.bf16.gmra.mxu0 %v1194
        %v1580 = vpop.f32.mrf.mxu0
        %v1581 = vadd.f32 0.0, %v1580
        %v1582 = vpop.f32.mrf.mxu0
        %v1583 = vadd.f32 0.0, %v1582
        %1584 = vmatmul.bf16.gmra.mxu0 %v1197
        %v1585 = vpop.f32.mrf.mxu0
        %v1586 = vadd.f32 0.0, %v1585
        %v1587 = vpop.f32.mrf.mxu0
        %v1588 = vadd.f32 0.0, %v1587
        %1589 = vmatmul.bf16.gmra.mxu0 %v1200
        %v1590 = vpop.f32.mrf.mxu0
        %v1591 = vadd.f32 0.0, %v1590
        %v1592 = vpop.f32.mrf.mxu0
        %v1593 = vadd.f32 0.0, %v1592
        %1594 = vmatmul.bf16.gmra.mxu0 %v1203
        %v1595 = vpop.f32.mrf.mxu0
        %v1596 = vadd.f32 0.0, %v1595
        %v1597 = vpop.f32.mrf.mxu0
        %v1598 = vadd.f32 0.0, %v1597
        %1599 = vmatmul.bf16.gmra.mxu0 %v1206
        %v1600 = vpop.f32.mrf.mxu0
        %v1601 = vadd.f32 0.0, %v1600
        %v1602 = vpop.f32.mrf.mxu0
        %v1603 = vadd.f32 0.0, %v1602
        %1604 = vmatmul.bf16.gmra.mxu0 %v1209
        %v1605 = vpop.f32.mrf.mxu0
        %v1606 = vadd.f32 0.0, %v1605
        %v1607 = vpop.f32.mrf.mxu0
        %v1608 = vadd.f32 0.0, %v1607
        %1609 = vmatmul.bf16.gmra.mxu0 %v1212
        %v1610 = vpop.f32.mrf.mxu0
        %v1611 = vadd.f32 0.0, %v1610
        %v1612 = vpop.f32.mrf.mxu0
        %v1613 = vadd.f32 0.0, %v1612
        %1614 = vmatmul.bf16.gmra.mxu0 %v1215
        %v1615 = vpop.f32.mrf.mxu0
        %v1616 = vadd.f32 0.0, %v1615
        %v1617 = vpop.f32.mrf.mxu0
        %v1618 = vadd.f32 0.0, %v1617
        %1619 = vmatmul.bf16.gmra.mxu0 %v1218
        %v1620 = vpop.f32.mrf.mxu0
        %v1621 = vadd.f32 0.0, %v1620
        %v1622 = vpop.f32.mrf.mxu0
        %v1623 = vadd.f32 0.0, %v1622
        %1624 = vmatmul.bf16.gmra.mxu0 %v1221
        %v1625 = vpop.f32.mrf.mxu0
        %v1626 = vadd.f32 0.0, %v1625
        %v1627 = vpop.f32.mrf.mxu0
        %v1628 = vadd.f32 0.0, %v1627
        %1629 = vmatmul.bf16.gmra.mxu0 %v1224
        %v1630 = vpop.f32.mrf.mxu0
        %v1631 = vadd.f32 0.0, %v1630
        %v1632 = vpop.f32.mrf.mxu0
        %v1633 = vadd.f32 0.0, %v1632
        %1634 = vmatmul.bf16.gmra.mxu0 %v1227
        %v1635 = vpop.f32.mrf.mxu0
        %v1636 = vadd.f32 0.0, %v1635
        %v1637 = vpop.f32.mrf.mxu0
        %v1638 = vadd.f32 0.0, %v1637
        %1639 = vmatmul.bf16.gmra.mxu0 %v1230
        %v1640 = vpop.f32.mrf.mxu0
        %v1641 = vadd.f32 0.0, %v1640
        %v1642 = vpop.f32.mrf.mxu0
        %v1643 = vadd.f32 0.0, %v1642
        %1644 = vmatmul.bf16.gmra.mxu0 %v1233
        %v1645 = vpop.f32.mrf.mxu0
        %v1646 = vadd.f32 0.0, %v1645
        %v1647 = vpop.f32.mrf.mxu0
        %v1648 = vadd.f32 0.0, %v1647
        %1649 = vmatmul.bf16.gmra.mxu0 %v1236
        %v1650 = vpop.f32.mrf.mxu0
        %v1651 = vadd.f32 0.0, %v1650
        %v1652 = vpop.f32.mrf.mxu0
        %v1653 = vadd.f32 0.0, %v1652
        %1654 = vdwg.mxu0
        %v1662 = vunpack.c.l.b16 %v1422
        %v1663 = vunpack.c.h.b16 %v1422
        %v1664 = vunpack.c.l.b16 %v1423
        %v1665 = vunpack.c.h.b16 %v1423
        %v1666 = vunpack.c.l.b16 %v1424
        %v1667 = vunpack.c.h.b16 %v1424
        %v1668 = vunpack.c.l.b16 %v1425
        %v1669 = vunpack.c.h.b16 %v1425
        %v1670 = vunpack.c.l.b16 %v1426
        %v1671 = vunpack.c.h.b16 %v1426
        %v1672 = vunpack.c.l.b16 %v1427
        %v1673 = vunpack.c.h.b16 %v1427
        %v1674 = vunpack.c.l.b16 %v1428
        %v1675 = vunpack.c.h.b16 %v1428
        %v1676 = vpack.c.b16 %v1664, %v1662
        %v1677 = vpack.c.b16 %v1665, %v1663
        %v1678 = vpack.c.b16 %v1668, %v1666
        %v1679 = vpack.c.b16 %v1669, %v1667
        %v1680 = vpack.c.b16 %v1672, %v1670
        %v1681 = vpack.c.b16 %v1673, %v1671
        %v1682 = vpack.c.b16 %v1674, %v1674
        %v1683 = vpack.c.b16 %v1675, %v1675
        %v1691 = vand.u32 %v1682, %v890
        %v1694 = vand.u32 %v1683, %v890
        %1696 = vmatpush.bf16.msra.mxu0 0
        %1697 = vmatpush.bf16.msra.mxu0 0
        %1698 = vmatpush.bf16.msra.mxu0 0
        %1699 = vmatpush.bf16.msra.mxu0 0
        %1700 = vmatpush.bf16.msra.mxu0 %v1691
        %1701 = vmatpush.bf16.msra.mxu0 %v1680
        %1702 = vmatpush.bf16.msra.mxu0 %v1678
        %1703 = vmatpush.bf16.msra.mxu0 %v1676
        %1704 = vmatmul.bf16.gmra.mxu0 %v840
        %v1705 = vpop.f32.mrf.mxu0
        %v1706 = vadd.f32 %v1487, %v1705
        %v1707 = vpop.f32.mrf.mxu0
        %v1708 = vadd.f32 %v1489, %v1707
        %1709 = vmatmul.bf16.gmra.mxu0 %v843
        %v1710 = vpop.f32.mrf.mxu0
        %v1711 = vadd.f32 %v1492, %v1710
        %v1712 = vpop.f32.mrf.mxu0
        %v1713 = vadd.f32 %v1494, %v1712
        %1714 = vmatmul.bf16.gmra.mxu0 %v846
        %v1715 = vpop.f32.mrf.mxu0
        %v1716 = vadd.f32 %v1497, %v1715
        %v1717 = vpop.f32.mrf.mxu0
        %v1718 = vadd.f32 %v1499, %v1717
        %1719 = vmatmul.bf16.gmra.mxu0 %v849
        %v1720 = vpop.f32.mrf.mxu0
        %v1721 = vadd.f32 %v1502, %v1720
        %v1722 = vpop.f32.mrf.mxu0
        %v1723 = vadd.f32 %v1504, %v1722
        %1724 = vmatmul.bf16.gmra.mxu0 %v852
        %v1725 = vpop.f32.mrf.mxu0
        %v1726 = vadd.f32 %v1507, %v1725
        %v1727 = vpop.f32.mrf.mxu0
        %v1728 = vadd.f32 %v1509, %v1727
        %1729 = vmatmul.bf16.gmra.mxu0 %v855
        %v1730 = vpop.f32.mrf.mxu0
        %v1731 = vadd.f32 %v1512, %v1730
        %v1732 = vpop.f32.mrf.mxu0
        %v1733 = vadd.f32 %v1514, %v1732
        %1734 = vmatmul.bf16.gmra.mxu0 %v858
        %v1735 = vpop.f32.mrf.mxu0
        %v1736 = vadd.f32 %v1517, %v1735
        %v1737 = vpop.f32.mrf.mxu0
        %v1738 = vadd.f32 %v1519, %v1737
        %1739 = vmatmul.bf16.gmra.mxu0 %v861
        %v1740 = vpop.f32.mrf.mxu0
        %v1741 = vadd.f32 %v1522, %v1740
        %v1742 = vpop.f32.mrf.mxu0
        %v1743 = vadd.f32 %v1524, %v1742
        %1744 = vmatmul.bf16.gmra.mxu0 %v864
        %v1745 = vpop.f32.mrf.mxu0
        %v1746 = vadd.f32 %v1527, %v1745
        %v1747 = vpop.f32.mrf.mxu0
        %v1748 = vadd.f32 %v1529, %v1747
        %1749 = vmatmul.bf16.gmra.mxu0 %v867
        %v1750 = vpop.f32.mrf.mxu0
        %v1751 = vadd.f32 %v1532, %v1750
        %v1752 = vpop.f32.mrf.mxu0
        %v1753 = vadd.f32 %v1534, %v1752
        %1754 = vmatmul.bf16.gmra.mxu0 %v870
        %v1755 = vpop.f32.mrf.mxu0
        %v1756 = vadd.f32 %v1537, %v1755
        %v1757 = vpop.f32.mrf.mxu0
        %v1758 = vadd.f32 %v1539, %v1757
        %1759 = vmatmul.bf16.gmra.mxu0 %v873
        %v1760 = vpop.f32.mrf.mxu0
        %v1761 = vadd.f32 %v1542, %v1760
        %v1762 = vpop.f32.mrf.mxu0
        %v1763 = vadd.f32 %v1544, %v1762
        %1764 = vmatmul.bf16.gmra.mxu0 %v876
        %v1765 = vpop.f32.mrf.mxu0
        %v1766 = vadd.f32 %v1547, %v1765
        %v1767 = vpop.f32.mrf.mxu0
        %v1768 = vadd.f32 %v1549, %v1767
        %1769 = vmatmul.bf16.gmra.mxu0 %v879
        %v1770 = vpop.f32.mrf.mxu0
        %v1771 = vadd.f32 %v1552, %v1770
        %v1772 = vpop.f32.mrf.mxu0
        %v1773 = vadd.f32 %v1554, %v1772
        %1774 = vmatmul.bf16.gmra.mxu0 %v882
        %v1775 = vpop.f32.mrf.mxu0
        %v1776 = vadd.f32 %v1557, %v1775
        %v1777 = vpop.f32.mrf.mxu0
        %v1778 = vadd.f32 %v1559, %v1777
        %1779 = vmatmul.bf16.gmra.mxu0 %v885
        %v1780 = vpop.f32.mrf.mxu0
        %v1781 = vadd.f32 %v1562, %v1780
        %v1782 = vpop.f32.mrf.mxu0
        %v1783 = vadd.f32 %v1564, %v1782
        %1784 = vdwg.mxu0
        %1785 = vmatpush.bf16.msra.mxu0 0
        %1786 = vmatpush.bf16.msra.mxu0 0
        %1787 = vmatpush.bf16.msra.mxu0 0
        %1788 = vmatpush.bf16.msra.mxu0 0
        %1789 = vmatpush.bf16.msra.mxu0 %v1694
        %1790 = vmatpush.bf16.msra.mxu0 %v1681
        %1791 = vmatpush.bf16.msra.mxu0 %v1679
        %1792 = vmatpush.bf16.msra.mxu0 %v1677
        %1793 = vmatmul.bf16.gmra.mxu0 %v840
        %v1794 = vpop.f32.mrf.mxu0
        %v1795 = vadd.f32 %v1576, %v1794
        %v1796 = vpop.f32.mrf.mxu0
        %v1797 = vadd.f32 %v1578, %v1796
        %1798 = vmatmul.bf16.gmra.mxu0 %v843
        %v1799 = vpop.f32.mrf.mxu0
        %v1800 = vadd.f32 %v1581, %v1799
        %v1801 = vpop.f32.mrf.mxu0
        %v1802 = vadd.f32 %v1583, %v1801
        %1803 = vmatmul.bf16.gmra.mxu0 %v846
        %v1804 = vpop.f32.mrf.mxu0
        %v1805 = vadd.f32 %v1586, %v1804
        %v1806 = vpop.f32.mrf.mxu0
        %v1807 = vadd.f32 %v1588, %v1806
        %1808 = vmatmul.bf16.gmra.mxu0 %v849
        %v1809 = vpop.f32.mrf.mxu0
        %v1810 = vadd.f32 %v1591, %v1809
        %v1811 = vpop.f32.mrf.mxu0
        %v1812 = vadd.f32 %v1593, %v1811
        %1813 = vmatmul.bf16.gmra.mxu0 %v852
        %v1814 = vpop.f32.mrf.mxu0
        %v1815 = vadd.f32 %v1596, %v1814
        %v1816 = vpop.f32.mrf.mxu0
        %v1817 = vadd.f32 %v1598, %v1816
        %1818 = vmatmul.bf16.gmra.mxu0 %v855
        %v1819 = vpop.f32.mrf.mxu0
        %v1820 = vadd.f32 %v1601, %v1819
        %v1821 = vpop.f32.mrf.mxu0
        %v1822 = vadd.f32 %v1603, %v1821
        %1823 = vmatmul.bf16.gmra.mxu0 %v858
        %v1824 = vpop.f32.mrf.mxu0
        %v1825 = vadd.f32 %v1606, %v1824
        %v1826 = vpop.f32.mrf.mxu0
        %v1827 = vadd.f32 %v1608, %v1826
        %1828 = vmatmul.bf16.gmra.mxu0 %v861
        %v1829 = vpop.f32.mrf.mxu0
        %v1830 = vadd.f32 %v1611, %v1829
        %v1831 = vpop.f32.mrf.mxu0
        %v1832 = vadd.f32 %v1613, %v1831
        %1833 = vmatmul.bf16.gmra.mxu0 %v864
        %v1834 = vpop.f32.mrf.mxu0
        %v1835 = vadd.f32 %v1616, %v1834
        %v1836 = vpop.f32.mrf.mxu0
        %v1837 = vadd.f32 %v1618, %v1836
        %1838 = vmatmul.bf16.gmra.mxu0 %v867
        %v1839 = vpop.f32.mrf.mxu0
        %v1840 = vadd.f32 %v1621, %v1839
        %v1841 = vpop.f32.mrf.mxu0
        %v1842 = vadd.f32 %v1623, %v1841
        %1843 = vmatmul.bf16.gmra.mxu0 %v870
        %v1844 = vpop.f32.mrf.mxu0
        %v1845 = vadd.f32 %v1626, %v1844
        %v1846 = vpop.f32.mrf.mxu0
        %v1847 = vadd.f32 %v1628, %v1846
        %1848 = vmatmul.bf16.gmra.mxu0 %v873
        %v1849 = vpop.f32.mrf.mxu0
        %v1850 = vadd.f32 %v1631, %v1849
        %v1851 = vpop.f32.mrf.mxu0
        %v1852 = vadd.f32 %v1633, %v1851
        %1853 = vmatmul.bf16.gmra.mxu0 %v876
        %v1854 = vpop.f32.mrf.mxu0
        %v1855 = vadd.f32 %v1636, %v1854
        %v1856 = vpop.f32.mrf.mxu0
        %v1857 = vadd.f32 %v1638, %v1856
        %1858 = vmatmul.bf16.gmra.mxu0 %v879
        %v1859 = vpop.f32.mrf.mxu0
        %v1860 = vadd.f32 %v1641, %v1859
        %v1861 = vpop.f32.mrf.mxu0
        %v1862 = vadd.f32 %v1643, %v1861
        %1863 = vmatmul.bf16.gmra.mxu0 %v882
        %v1864 = vpop.f32.mrf.mxu0
        %v1865 = vadd.f32 %v1646, %v1864
        %v1866 = vpop.f32.mrf.mxu0
        %v1867 = vadd.f32 %v1648, %v1866
        %1868 = vmatmul.bf16.gmra.mxu0 %v885
        %v1869 = vpop.f32.mrf.mxu0
        %v1870 = vadd.f32 %v1651, %v1869
        %v1871 = vpop.f32.mrf.mxu0
        %v1872 = vadd.f32 %v1653, %v1871
        %1873 = vdwg.mxu0
        %s1874 = scalar_lea.vmem %s604, 4 [#allocation2]
        %v1875 = vld [vmem:[%s1874] sm:$0xf]
        %v1876 = vld [vmem:[%s1874 + $0x4] sm:$0xf]
        %v1877 = vld [vmem:[%s1874 + $0x8] sm:$0xf]
        %v1878 = vld [vmem:[%s1874 + $0xc] sm:$0xf]
        %v1879 = vld [vmem:[%s1874 + $0x10] sm:$0xf]
        %v1880 = vld [vmem:[%s1874 + $0x14] sm:$0xf]
        %v1881 = vld [vmem:[%s1874 + $0x18] sm:$0xf]
        %v1882 = vld [vmem:[%s1874 + $0x1c] sm:$0xf]
        %v1883 = vld [vmem:[%s1874 + $0x20] sm:$0xf]
        %v1884 = vld [vmem:[%s1874 + $0x24] sm:$0xf]
        %v1885 = vld [vmem:[%s1874 + $0x28] sm:$0xf]
        %v1886 = vld [vmem:[%s1874 + $0x2c] sm:$0xf]
        %v1887 = vld [vmem:[%s1874 + $0x30] sm:$0xf]
        %v1888 = vld [vmem:[%s1874 + $0x34] sm:$0xf]
        %v1889 = vld [vmem:[%s1874 + $0x38] sm:$0xf]
        %v1890 = vld [vmem:[%s1874 + $0x3c] sm:$0xf]
        %v1891 = vld [vmem:[%s1874 + $0x40] sm:$0xf]
        %v1892 = vld [vmem:[%s1874 + $0x44] sm:$0xf]
        %v1893 = vld [vmem:[%s1874 + $0x48] sm:$0xf]
        %v1894 = vld [vmem:[%s1874 + $0x4c] sm:$0xf]
        %v1895 = vld [vmem:[%s1874 + $0x50] sm:$0xf]
        %v1896 = vld [vmem:[%s1874 + $0x54] sm:$0xf]
        %v1897 = vld [vmem:[%s1874 + $0x58] sm:$0xf]
        %v1898 = vld [vmem:[%s1874 + $0x5c] sm:$0xf]
        %v1899 = vld [vmem:[%s1874 + $0x60] sm:$0xf]
        %v1900 = vld [vmem:[%s1874 + $0x64] sm:$0xf]
        %v1901 = vld [vmem:[%s1874 + $0x68] sm:$0xf]
        %v1902 = vld [vmem:[%s1874 + $0x6c] sm:$0xf]
        %v1903 = vld [vmem:[%s1874 + $0x70] sm:$0xf]
        %v1904 = vld [vmem:[%s1874 + $0x74] sm:$0xf]
        %v1905 = vld [vmem:[%s1874 + $0x78] sm:$0xf]
        %v1906 = vld [vmem:[%s1874 + $0x7c] sm:$0xf]
        %s1907 = scalar_lea.vmem %s611, 4 [#allocation3]
        %v1908 = vld [vmem:[%s1907] sm:$0xf]
        %v1909 = vld [vmem:[%s1907 + $0x4] sm:$0xf]
        %v1910 = vld [vmem:[%s1907 + $0x8] sm:$0xf]
        %v1911 = vld [vmem:[%s1907 + $0xc] sm:$0xf]
        %v1912 = vld [vmem:[%s1907 + $0x10] sm:$0xf]
        %v1913 = vld [vmem:[%s1907 + $0x14] sm:$0xf]
        %v1914 = vld [vmem:[%s1907 + $0x18] sm:$0xf]
        %v1915 = vld [vmem:[%s1907 + $0x1c] sm:$0xf]
        %v1916 = vld [vmem:[%s1907 + $0x20] sm:$0xf]
        %v1917 = vld [vmem:[%s1907 + $0x24] sm:$0xf]
        %v1918 = vld [vmem:[%s1907 + $0x28] sm:$0xf]
        %v1919 = vld [vmem:[%s1907 + $0x2c] sm:$0xf]
        %v1920 = vld [vmem:[%s1907 + $0x30] sm:$0xf]
        %v1921 = vld [vmem:[%s1907 + $0x34] sm:$0xf]
        %v1922 = vld [vmem:[%s1907 + $0x38] sm:$0xf]
        %v1923 = vld [vmem:[%s1907 + $0x3c] sm:$0xf]
        %v1924 = vld [vmem:[%s1907 + $0x40] sm:$0xf]
        %v1925 = vld [vmem:[%s1907 + $0x44] sm:$0xf]
        %v1926 = vld [vmem:[%s1907 + $0x48] sm:$0xf]
        %v1927 = vld [vmem:[%s1907 + $0x4c] sm:$0xf]
        %v1928 = vld [vmem:[%s1907 + $0x50] sm:$0xf]
        %v1929 = vld [vmem:[%s1907 + $0x54] sm:$0xf]
        %v1930 = vld [vmem:[%s1907 + $0x58] sm:$0xf]
        %v1931 = vld [vmem:[%s1907 + $0x5c] sm:$0xf]
        %v1932 = vld [vmem:[%s1907 + $0x60] sm:$0xf]
        %v1933 = vld [vmem:[%s1907 + $0x64] sm:$0xf]
        %v1934 = vld [vmem:[%s1907 + $0x68] sm:$0xf]
        %v1935 = vld [vmem:[%s1907 + $0x6c] sm:$0xf]
        %v1936 = vld [vmem:[%s1907 + $0x70] sm:$0xf]
        %v1937 = vld [vmem:[%s1907 + $0x74] sm:$0xf]
        %v1938 = vld [vmem:[%s1907 + $0x78] sm:$0xf]
        %v1939 = vld [vmem:[%s1907 + $0x7c] sm:$0xf]
        %s1940 = scalar_lea.vmem %s2, 56
        %v1941 = vld [vmem:[%s1940] sm:$0xff]
        %v1942 = vld [vmem:[%s1940 + $0x8] sm:$0xff]
        %v1943 = vld [vmem:[%s1940 + $0x10] sm:$0xff]
        %v1944 = vld [vmem:[%s1940 + $0x18] sm:$0xff]
        %v1945 = vld [vmem:[%s1940 + $0x20] sm:$0xff]
        %v1946 = vld [vmem:[%s1940 + $0x28] sm:$0xff]
        %v1947 = vld [vmem:[%s1940 + $0x30] sm:$0x33]
        %v1980 = vunpack.c.l.b16 %v1875
        %v1981 = vunpack.c.l.b16 %v1876
        %v1982 = vunpack.c.l.b16 %v1877
        %v1983 = vunpack.c.l.b16 %v1878
        %v1984 = vunpack.c.l.b16 %v1879
        %v1985 = vunpack.c.l.b16 %v1880
        %v1986 = vunpack.c.l.b16 %v1881
        %v1987 = vunpack.c.l.b16 %v1882
        %v1988 = vunpack.c.l.b16 %v1883
        %v1989 = vunpack.c.l.b16 %v1884
        %v1990 = vunpack.c.l.b16 %v1885
        %v1991 = vunpack.c.l.b16 %v1886
        %v1992 = vunpack.c.l.b16 %v1887
        %v1993 = vunpack.c.l.b16 %v1888
        %v1994 = vunpack.c.l.b16 %v1889
        %v1995 = vunpack.c.l.b16 %v1890
        %v1996 = vunpack.c.l.b16 %v1891
        %v1997 = vunpack.c.l.b16 %v1892
        %v1998 = vunpack.c.l.b16 %v1893
        %v1999 = vunpack.c.l.b16 %v1894
        %v2000 = vunpack.c.l.b16 %v1895
        %v2001 = vunpack.c.l.b16 %v1896
        %v2002 = vunpack.c.l.b16 %v1897
        %v2003 = vunpack.c.l.b16 %v1898
        %v2004 = vunpack.c.l.b16 %v1899
        %v2005 = vunpack.c.l.b16 %v1900
        %v2006 = vunpack.c.l.b16 %v1901
        %v2007 = vunpack.c.l.b16 %v1902
        %v2008 = vunpack.c.l.b16 %v1903
        %v2009 = vunpack.c.l.b16 %v1904
        %v2010 = vunpack.c.l.b16 %v1905
        %v2011 = vunpack.c.l.b16 %v1906
        %v2012 = vpack.c.b16 %v1981, %v1980
        %v2013 = vpack.c.b16 %v1983, %v1982
        %v2014 = vpack.c.b16 %v1985, %v1984
        %v2015 = vpack.c.b16 %v1987, %v1986
        %v2016 = vpack.c.b16 %v1989, %v1988
        %v2017 = vpack.c.b16 %v1991, %v1990
        %v2018 = vpack.c.b16 %v1993, %v1992
        %v2019 = vpack.c.b16 %v1995, %v1994
        %v2020 = vpack.c.b16 %v1997, %v1996
        %v2021 = vpack.c.b16 %v1999, %v1998
        %v2022 = vpack.c.b16 %v2001, %v2000
        %v2023 = vpack.c.b16 %v2003, %v2002
        %v2024 = vpack.c.b16 %v2005, %v2004
        %v2025 = vpack.c.b16 %v2007, %v2006
        %v2026 = vpack.c.b16 %v2009, %v2008
        %v2027 = vpack.c.b16 %v2011, %v2010
        %v2035 = vunpack.c.l.b16 %v1941
        %v2036 = vunpack.c.h.b16 %v1941
        %v2037 = vunpack.c.l.b16 %v1942
        %v2038 = vunpack.c.h.b16 %v1942
        %v2039 = vunpack.c.l.b16 %v1943
        %v2040 = vunpack.c.h.b16 %v1943
        %v2041 = vunpack.c.l.b16 %v1944
        %v2042 = vunpack.c.h.b16 %v1944
        %v2043 = vunpack.c.l.b16 %v1945
        %v2044 = vunpack.c.h.b16 %v1945
        %v2045 = vunpack.c.l.b16 %v1946
        %v2046 = vunpack.c.h.b16 %v1946
        %v2047 = vunpack.c.l.b16 %v1947
        %v2048 = vunpack.c.h.b16 %v1947
        %v2049 = vpack.c.b16 %v2037, %v2035
        %v2050 = vpack.c.b16 %v2038, %v2036
        %v2051 = vpack.c.b16 %v2041, %v2039
        %v2052 = vpack.c.b16 %v2042, %v2040
        %v2053 = vpack.c.b16 %v2045, %v2043
        %v2054 = vpack.c.b16 %v2046, %v2044
        %v2055 = vpack.c.b16 %v2047, %v2047
        %v2056 = vpack.c.b16 %v2048, %v2048
        %v2064 = vsel %vm838, %v2012, 0
        %v2067 = vsel %vm838, %v2013, 0
        %v2070 = vsel %vm838, %v2014, 0
        %v2073 = vsel %vm838, %v2015, 0
        %v2076 = vsel %vm838, %v2016, 0
        %v2079 = vsel %vm838, %v2017, 0
        %v2082 = vsel %vm838, %v2018, 0
        %v2085 = vsel %vm838, %v2019, 0
        %v2088 = vsel %vm838, %v2020, 0
        %v2091 = vsel %vm838, %v2021, 0
        %v2094 = vsel %vm838, %v2022, 0
        %v2097 = vsel %vm838, %v2023, 0
        %v2100 = vsel %vm838, %v2024, 0
        %v2103 = vsel %vm838, %v2025, 0
        %v2106 = vsel %vm838, %v2026, 0
        %v2109 = vsel %vm838, %v2027, 0
        %v2112 = vand.u32 %v2055, %v890
        %v2115 = vand.u32 %v2056, %v890
        %2117 = vmatpush.bf16.msra.mxu0 0
        %2118 = vmatpush.bf16.msra.mxu0 0
        %2119 = vmatpush.bf16.msra.mxu0 0
        %2120 = vmatpush.bf16.msra.mxu0 0
        %2121 = vmatpush.bf16.msra.mxu0 %v2112
        %2122 = vmatpush.bf16.msra.mxu0 %v2053
        %2123 = vmatpush.bf16.msra.mxu0 %v2051
        %2124 = vmatpush.bf16.msra.mxu0 %v2049
        %2125 = vmatmul.bf16.gmra.mxu0 %v2064
        %v2126 = vpop.f32.mrf.mxu0
        %v2127 = vadd.f32 0.0, %v2126
        %v2128 = vpop.f32.mrf.mxu0
        %v2129 = vadd.f32 0.0, %v2128
        %2130 = vmatmul.bf16.gmra.mxu0 %v2067
        %v2131 = vpop.f32.mrf.mxu0
        %v2132 = vadd.f32 0.0, %v2131
        %v2133 = vpop.f32.mrf.mxu0
        %v2134 = vadd.f32 0.0, %v2133
        %2135 = vmatmul.bf16.gmra.mxu0 %v2070
        %v2136 = vpop.f32.mrf.mxu0
        %v2137 = vadd.f32 0.0, %v2136
        %v2138 = vpop.f32.mrf.mxu0
        %v2139 = vadd.f32 0.0, %v2138
        %2140 = vmatmul.bf16.gmra.mxu0 %v2073
        %v2141 = vpop.f32.mrf.mxu0
        %v2142 = vadd.f32 0.0, %v2141
        %v2143 = vpop.f32.mrf.mxu0
        %v2144 = vadd.f32 0.0, %v2143
        %2145 = vmatmul.bf16.gmra.mxu0 %v2076
        %v2146 = vpop.f32.mrf.mxu0
        %v2147 = vadd.f32 0.0, %v2146
        %v2148 = vpop.f32.mrf.mxu0
        %v2149 = vadd.f32 0.0, %v2148
        %2150 = vmatmul.bf16.gmra.mxu0 %v2079
        %v2151 = vpop.f32.mrf.mxu0
        %v2152 = vadd.f32 0.0, %v2151
        %v2153 = vpop.f32.mrf.mxu0
        %v2154 = vadd.f32 0.0, %v2153
        %2155 = vmatmul.bf16.gmra.mxu0 %v2082
        %v2156 = vpop.f32.mrf.mxu0
        %v2157 = vadd.f32 0.0, %v2156
        %v2158 = vpop.f32.mrf.mxu0
        %v2159 = vadd.f32 0.0, %v2158
        %2160 = vmatmul.bf16.gmra.mxu0 %v2085
        %v2161 = vpop.f32.mrf.mxu0
        %v2162 = vadd.f32 0.0, %v2161
        %v2163 = vpop.f32.mrf.mxu0
        %v2164 = vadd.f32 0.0, %v2163
        %2165 = vmatmul.bf16.gmra.mxu0 %v2088
        %v2166 = vpop.f32.mrf.mxu0
        %v2167 = vadd.f32 0.0, %v2166
        %v2168 = vpop.f32.mrf.mxu0
        %v2169 = vadd.f32 0.0, %v2168
        %2170 = vmatmul.bf16.gmra.mxu0 %v2091
        %v2171 = vpop.f32.mrf.mxu0
        %v2172 = vadd.f32 0.0, %v2171
        %v2173 = vpop.f32.mrf.mxu0
        %v2174 = vadd.f32 0.0, %v2173
        %2175 = vmatmul.bf16.gmra.mxu0 %v2094
        %v2176 = vpop.f32.mrf.mxu0
        %v2177 = vadd.f32 0.0, %v2176
        %v2178 = vpop.f32.mrf.mxu0
        %v2179 = vadd.f32 0.0, %v2178
        %2180 = vmatmul.bf16.gmra.mxu0 %v2097
        %v2181 = vpop.f32.mrf.mxu0
        %v2182 = vadd.f32 0.0, %v2181
        %v2183 = vpop.f32.mrf.mxu0
        %v2184 = vadd.f32 0.0, %v2183
        %2185 = vmatmul.bf16.gmra.mxu0 %v2100
        %v2186 = vpop.f32.mrf.mxu0
        %v2187 = vadd.f32 0.0, %v2186
        %v2188 = vpop.f32.mrf.mxu0
        %v2189 = vadd.f32 0.0, %v2188
        %2190 = vmatmul.bf16.gmra.mxu0 %v2103
        %v2191 = vpop.f32.mrf.mxu0
        %v2192 = vadd.f32 0.0, %v2191
        %v2193 = vpop.f32.mrf.mxu0
        %v2194 = vadd.f32 0.0, %v2193
        %2195 = vmatmul.bf16.gmra.mxu0 %v2106
        %v2196 = vpop.f32.mrf.mxu0
        %v2197 = vadd.f32 0.0, %v2196
        %v2198 = vpop.f32.mrf.mxu0
        %v2199 = vadd.f32 0.0, %v2198
        %2200 = vmatmul.bf16.gmra.mxu0 %v2109
        %v2201 = vpop.f32.mrf.mxu0
        %v2202 = vadd.f32 0.0, %v2201
        %v2203 = vpop.f32.mrf.mxu0
        %v2204 = vadd.f32 0.0, %v2203
        %2205 = vdwg.mxu0
        %2206 = vmatpush.bf16.msra.mxu0 0
        %2207 = vmatpush.bf16.msra.mxu0 0
        %2208 = vmatpush.bf16.msra.mxu0 0
        %2209 = vmatpush.bf16.msra.mxu0 0
        %2210 = vmatpush.bf16.msra.mxu0 %v2115
        %2211 = vmatpush.bf16.msra.mxu0 %v2054
        %2212 = vmatpush.bf16.msra.mxu0 %v2052
        %2213 = vmatpush.bf16.msra.mxu0 %v2050
        %2214 = vmatmul.bf16.gmra.mxu0 %v2064
        %v2215 = vpop.f32.mrf.mxu0
        %v2216 = vadd.f32 0.0, %v2215
        %v2217 = vpop.f32.mrf.mxu0
        %v2218 = vadd.f32 0.0, %v2217
        %2219 = vmatmul.bf16.gmra.mxu0 %v2067
        %v2220 = vpop.f32.mrf.mxu0
        %v2221 = vadd.f32 0.0, %v2220
        %v2222 = vpop.f32.mrf.mxu0
        %v2223 = vadd.f32 0.0, %v2222
        %2224 = vmatmul.bf16.gmra.mxu0 %v2070
        %v2225 = vpop.f32.mrf.mxu0
        %v2226 = vadd.f32 0.0, %v2225
        %v2227 = vpop.f32.mrf.mxu0
        %v2228 = vadd.f32 0.0, %v2227
        %2229 = vmatmul.bf16.gmra.mxu0 %v2073
        %v2230 = vpop.f32.mrf.mxu0
        %v2231 = vadd.f32 0.0, %v2230
        %v2232 = vpop.f32.mrf.mxu0
        %v2233 = vadd.f32 0.0, %v2232
        %2234 = vmatmul.bf16.gmra.mxu0 %v2076
        %v2235 = vpop.f32.mrf.mxu0
        %v2236 = vadd.f32 0.0, %v2235
        %v2237 = vpop.f32.mrf.mxu0
        %v2238 = vadd.f32 0.0, %v2237
        %2239 = vmatmul.bf16.gmra.mxu0 %v2079
        %v2240 = vpop.f32.mrf.mxu0
        %v2241 = vadd.f32 0.0, %v2240
        %v2242 = vpop.f32.mrf.mxu0
        %v2243 = vadd.f32 0.0, %v2242
        %2244 = vmatmul.bf16.gmra.mxu0 %v2082
        %v2245 = vpop.f32.mrf.mxu0
        %v2246 = vadd.f32 0.0, %v2245
        %v2247 = vpop.f32.mrf.mxu0
        %v2248 = vadd.f32 0.0, %v2247
        %2249 = vmatmul.bf16.gmra.mxu0 %v2085
        %v2250 = vpop.f32.mrf.mxu0
        %v2251 = vadd.f32 0.0, %v2250
        %v2252 = vpop.f32.mrf.mxu0
        %v2253 = vadd.f32 0.0, %v2252
        %2254 = vmatmul.bf16.gmra.mxu0 %v2088
        %v2255 = vpop.f32.mrf.mxu0
        %v2256 = vadd.f32 0.0, %v2255
        %v2257 = vpop.f32.mrf.mxu0
        %v2258 = vadd.f32 0.0, %v2257
        %2259 = vmatmul.bf16.gmra.mxu0 %v2091
        %v2260 = vpop.f32.mrf.mxu0
        %v2261 = vadd.f32 0.0, %v2260
        %v2262 = vpop.f32.mrf.mxu0
        %v2263 = vadd.f32 0.0, %v2262
        %2264 = vmatmul.bf16.gmra.mxu0 %v2094
        %v2265 = vpop.f32.mrf.mxu0
        %v2266 = vadd.f32 0.0, %v2265
        %v2267 = vpop.f32.mrf.mxu0
        %v2268 = vadd.f32 0.0, %v2267
        %2269 = vmatmul.bf16.gmra.mxu0 %v2097
        %v2270 = vpop.f32.mrf.mxu0
        %v2271 = vadd.f32 0.0, %v2270
        %v2272 = vpop.f32.mrf.mxu0
        %v2273 = vadd.f32 0.0, %v2272
        %2274 = vmatmul.bf16.gmra.mxu0 %v2100
        %v2275 = vpop.f32.mrf.mxu0
        %v2276 = vadd.f32 0.0, %v2275
        %v2277 = vpop.f32.mrf.mxu0
        %v2278 = vadd.f32 0.0, %v2277
        %2279 = vmatmul.bf16.gmra.mxu0 %v2103
        %v2280 = vpop.f32.mrf.mxu0
        %v2281 = vadd.f32 0.0, %v2280
        %v2282 = vpop.f32.mrf.mxu0
        %v2283 = vadd.f32 0.0, %v2282
        %2284 = vmatmul.bf16.gmra.mxu0 %v2106
        %v2285 = vpop.f32.mrf.mxu0
        %v2286 = vadd.f32 0.0, %v2285
        %v2287 = vpop.f32.mrf.mxu0
        %v2288 = vadd.f32 0.0, %v2287
        %2289 = vmatmul.bf16.gmra.mxu0 %v2109
        %v2290 = vpop.f32.mrf.mxu0
        %v2291 = vadd.f32 0.0, %v2290
        %v2292 = vpop.f32.mrf.mxu0
        %v2293 = vadd.f32 0.0, %v2292
        %2294 = vdwg.mxu0
        %v2295 = vadd.f32 %v1254, %v2127
        %v2296 = vadd.f32 %v1343, %v2216
        %v2297 = vadd.f32 %v1256, %v2129
        %v2298 = vadd.f32 %v1345, %v2218
        %v2299 = vadd.f32 %v1259, %v2132
        %v2300 = vadd.f32 %v1348, %v2221
        %v2301 = vadd.f32 %v1261, %v2134
        %v2302 = vadd.f32 %v1350, %v2223
        %v2303 = vadd.f32 %v1264, %v2137
        %v2304 = vadd.f32 %v1353, %v2226
        %v2305 = vadd.f32 %v1266, %v2139
        %v2306 = vadd.f32 %v1355, %v2228
        %v2307 = vadd.f32 %v1269, %v2142
        %v2308 = vadd.f32 %v1358, %v2231
        %v2309 = vadd.f32 %v1271, %v2144
        %v2310 = vadd.f32 %v1360, %v2233
        %v2311 = vadd.f32 %v1274, %v2147
        %v2312 = vadd.f32 %v1363, %v2236
        %v2313 = vadd.f32 %v1276, %v2149
        %v2314 = vadd.f32 %v1365, %v2238
        %v2315 = vadd.f32 %v1279, %v2152
        %v2316 = vadd.f32 %v1368, %v2241
        %v2317 = vadd.f32 %v1281, %v2154
        %v2318 = vadd.f32 %v1370, %v2243
        %v2319 = vadd.f32 %v1284, %v2157
        %v2320 = vadd.f32 %v1373, %v2246
        %v2321 = vadd.f32 %v1286, %v2159
        %v2322 = vadd.f32 %v1375, %v2248
        %v2323 = vadd.f32 %v1289, %v2162
        %v2324 = vadd.f32 %v1378, %v2251
        %v2325 = vadd.f32 %v1291, %v2164
        %v2326 = vadd.f32 %v1380, %v2253
        %v2327 = vadd.f32 %v1294, %v2167
        %v2328 = vadd.f32 %v1383, %v2256
        %v2329 = vadd.f32 %v1296, %v2169
        %v2330 = vadd.f32 %v1385, %v2258
        %v2331 = vadd.f32 %v1299, %v2172
        %v2332 = vadd.f32 %v1388, %v2261
        %v2333 = vadd.f32 %v1301, %v2174
        %v2334 = vadd.f32 %v1390, %v2263
        %v2335 = vadd.f32 %v1304, %v2177
        %v2336 = vadd.f32 %v1393, %v2266
        %v2337 = vadd.f32 %v1306, %v2179
        %v2338 = vadd.f32 %v1395, %v2268
        %v2339 = vadd.f32 %v1309, %v2182
        %v2340 = vadd.f32 %v1398, %v2271
        %v2341 = vadd.f32 %v1311, %v2184
        %v2342 = vadd.f32 %v1400, %v2273
        %v2343 = vadd.f32 %v1314, %v2187
        %v2344 = vadd.f32 %v1403, %v2276
        %v2345 = vadd.f32 %v1316, %v2189
        %v2346 = vadd.f32 %v1405, %v2278
        %v2347 = vadd.f32 %v1319, %v2192
        %v2348 = vadd.f32 %v1408, %v2281
        %v2349 = vadd.f32 %v1321, %v2194
        %v2350 = vadd.f32 %v1410, %v2283
        %v2351 = vadd.f32 %v1324, %v2197
        %v2352 = vadd.f32 %v1413, %v2286
        %v2353 = vadd.f32 %v1326, %v2199
        %v2354 = vadd.f32 %v1415, %v2288
        %v2355 = vadd.f32 %v1329, %v2202
        %v2356 = vadd.f32 %v1418, %v2291
        %v2357 = vadd.f32 %v1331, %v2204
        %v2358 = vadd.f32 %v1420, %v2293
        %s2359 = scalar_lea.vmem %s3, 56
        %v2360 = vld [vmem:[%s2359] sm:$0xff]
        %v2361 = vld [vmem:[%s2359 + $0x8] sm:$0xff]
        %v2362 = vld [vmem:[%s2359 + $0x10] sm:$0xff]
        %v2363 = vld [vmem:[%s2359 + $0x18] sm:$0xff]
        %v2364 = vld [vmem:[%s2359 + $0x20] sm:$0xff]
        %v2365 = vld [vmem:[%s2359 + $0x28] sm:$0xff]
        %v2366 = vld [vmem:[%s2359 + $0x30] sm:$0x33]
        %v2399 = vunpack.c.l.b16 %v1908
        %v2400 = vunpack.c.l.b16 %v1909
        %v2401 = vunpack.c.l.b16 %v1910
        %v2402 = vunpack.c.l.b16 %v1911
        %v2403 = vunpack.c.l.b16 %v1912
        %v2404 = vunpack.c.l.b16 %v1913
        %v2405 = vunpack.c.l.b16 %v1914
        %v2406 = vunpack.c.l.b16 %v1915
        %v2407 = vunpack.c.l.b16 %v1916
        %v2408 = vunpack.c.l.b16 %v1917
        %v2409 = vunpack.c.l.b16 %v1918
        %v2410 = vunpack.c.l.b16 %v1919
        %v2411 = vunpack.c.l.b16 %v1920
        %v2412 = vunpack.c.l.b16 %v1921
        %v2413 = vunpack.c.l.b16 %v1922
        %v2414 = vunpack.c.l.b16 %v1923
        %v2415 = vunpack.c.l.b16 %v1924
        %v2416 = vunpack.c.l.b16 %v1925
        %v2417 = vunpack.c.l.b16 %v1926
        %v2418 = vunpack.c.l.b16 %v1927
        %v2419 = vunpack.c.l.b16 %v1928
        %v2420 = vunpack.c.l.b16 %v1929
        %v2421 = vunpack.c.l.b16 %v1930
        %v2422 = vunpack.c.l.b16 %v1931
        %v2423 = vunpack.c.l.b16 %v1932
        %v2424 = vunpack.c.l.b16 %v1933
        %v2425 = vunpack.c.l.b16 %v1934
        %v2426 = vunpack.c.l.b16 %v1935
        %v2427 = vunpack.c.l.b16 %v1936
        %v2428 = vunpack.c.l.b16 %v1937
        %v2429 = vunpack.c.l.b16 %v1938
        %v2430 = vunpack.c.l.b16 %v1939
        %v2431 = vpack.c.b16 %v2400, %v2399
        %v2432 = vpack.c.b16 %v2402, %v2401
        %v2433 = vpack.c.b16 %v2404, %v2403
        %v2434 = vpack.c.b16 %v2406, %v2405
        %v2435 = vpack.c.b16 %v2408, %v2407
        %v2436 = vpack.c.b16 %v2410, %v2409
        %v2437 = vpack.c.b16 %v2412, %v2411
        %v2438 = vpack.c.b16 %v2414, %v2413
        %v2439 = vpack.c.b16 %v2416, %v2415
        %v2440 = vpack.c.b16 %v2418, %v2417
        %v2441 = vpack.c.b16 %v2420, %v2419
        %v2442 = vpack.c.b16 %v2422, %v2421
        %v2443 = vpack.c.b16 %v2424, %v2423
        %v2444 = vpack.c.b16 %v2426, %v2425
        %v2445 = vpack.c.b16 %v2428, %v2427
        %v2446 = vpack.c.b16 %v2430, %v2429
        %v2454 = vunpack.c.l.b16 %v2360
        %v2455 = vunpack.c.h.b16 %v2360
        %v2456 = vunpack.c.l.b16 %v2361
        %v2457 = vunpack.c.h.b16 %v2361
        %v2458 = vunpack.c.l.b16 %v2362
        %v2459 = vunpack.c.h.b16 %v2362
        %v2460 = vunpack.c.l.b16 %v2363
        %v2461 = vunpack.c.h.b16 %v2363
        %v2462 = vunpack.c.l.b16 %v2364
        %v2463 = vunpack.c.h.b16 %v2364
        %v2464 = vunpack.c.l.b16 %v2365
        %v2465 = vunpack.c.h.b16 %v2365
        %v2466 = vunpack.c.l.b16 %v2366
        %v2467 = vunpack.c.h.b16 %v2366
        %v2468 = vpack.c.b16 %v2456, %v2454
        %v2469 = vpack.c.b16 %v2457, %v2455
        %v2470 = vpack.c.b16 %v2460, %v2458
        %v2471 = vpack.c.b16 %v2461, %v2459
        %v2472 = vpack.c.b16 %v2464, %v2462
        %v2473 = vpack.c.b16 %v2465, %v2463
        %v2474 = vpack.c.b16 %v2466, %v2466
        %v2475 = vpack.c.b16 %v2467, %v2467
        %v2483 = vsel %vm838, %v2431, 0
        %v2486 = vsel %vm838, %v2432, 0
        %v2489 = vsel %vm838, %v2433, 0
        %v2492 = vsel %vm838, %v2434, 0
        %v2495 = vsel %vm838, %v2435, 0
        %v2498 = vsel %vm838, %v2436, 0
        %v2501 = vsel %vm838, %v2437, 0
        %v2504 = vsel %vm838, %v2438, 0
        %v2507 = vsel %vm838, %v2439, 0
        %v2510 = vsel %vm838, %v2440, 0
        %v2513 = vsel %vm838, %v2441, 0
        %v2516 = vsel %vm838, %v2442, 0
        %v2519 = vsel %vm838, %v2443, 0
        %v2522 = vsel %vm838, %v2444, 0
        %v2525 = vsel %vm838, %v2445, 0
        %v2528 = vsel %vm838, %v2446, 0
        %v2531 = vand.u32 %v2474, %v890
        %v2534 = vand.u32 %v2475, %v890
        %2536 = vmatpush.bf16.msra.mxu0 0
        %2537 = vmatpush.bf16.msra.mxu0 0
        %2538 = vmatpush.bf16.msra.mxu0 0
        %2539 = vmatpush.bf16.msra.mxu0 0
        %2540 = vmatpush.bf16.msra.mxu0 %v2531
        %2541 = vmatpush.bf16.msra.mxu0 %v2472
        %2542 = vmatpush.bf16.msra.mxu0 %v2470
        %2543 = vmatpush.bf16.msra.mxu0 %v2468
        %2544 = vmatmul.bf16.gmra.mxu0 %v2483
        %v2545 = vpop.f32.mrf.mxu0
        %v2546 = vadd.f32 0.0, %v2545
        %v2547 = vpop.f32.mrf.mxu0
        %v2548 = vadd.f32 0.0, %v2547
        %2549 = vmatmul.bf16.gmra.mxu0 %v2486
        %v2550 = vpop.f32.mrf.mxu0
        %v2551 = vadd.f32 0.0, %v2550
        %v2552 = vpop.f32.mrf.mxu0
        %v2553 = vadd.f32 0.0, %v2552
        %2554 = vmatmul.bf16.gmra.mxu0 %v2489
        %v2555 = vpop.f32.mrf.mxu0
        %v2556 = vadd.f32 0.0, %v2555
        %v2557 = vpop.f32.mrf.mxu0
        %v2558 = vadd.f32 0.0, %v2557
        %2559 = vmatmul.bf16.gmra.mxu0 %v2492
        %v2560 = vpop.f32.mrf.mxu0
        %v2561 = vadd.f32 0.0, %v2560
        %v2562 = vpop.f32.mrf.mxu0
        %v2563 = vadd.f32 0.0, %v2562
        %2564 = vmatmul.bf16.gmra.mxu0 %v2495
        %v2565 = vpop.f32.mrf.mxu0
        %v2566 = vadd.f32 0.0, %v2565
        %v2567 = vpop.f32.mrf.mxu0
        %v2568 = vadd.f32 0.0, %v2567
        %2569 = vmatmul.bf16.gmra.mxu0 %v2498
        %v2570 = vpop.f32.mrf.mxu0
        %v2571 = vadd.f32 0.0, %v2570
        %v2572 = vpop.f32.mrf.mxu0
        %v2573 = vadd.f32 0.0, %v2572
        %2574 = vmatmul.bf16.gmra.mxu0 %v2501
        %v2575 = vpop.f32.mrf.mxu0
        %v2576 = vadd.f32 0.0, %v2575
        %v2577 = vpop.f32.mrf.mxu0
        %v2578 = vadd.f32 0.0, %v2577
        %2579 = vmatmul.bf16.gmra.mxu0 %v2504
        %v2580 = vpop.f32.mrf.mxu0
        %v2581 = vadd.f32 0.0, %v2580
        %v2582 = vpop.f32.mrf.mxu0
        %v2583 = vadd.f32 0.0, %v2582
        %2584 = vmatmul.bf16.gmra.mxu0 %v2507
        %v2585 = vpop.f32.mrf.mxu0
        %v2586 = vadd.f32 0.0, %v2585
        %v2587 = vpop.f32.mrf.mxu0
        %v2588 = vadd.f32 0.0, %v2587
        %2589 = vmatmul.bf16.gmra.mxu0 %v2510
        %v2590 = vpop.f32.mrf.mxu0
        %v2591 = vadd.f32 0.0, %v2590
        %v2592 = vpop.f32.mrf.mxu0
        %v2593 = vadd.f32 0.0, %v2592
        %2594 = vmatmul.bf16.gmra.mxu0 %v2513
        %v2595 = vpop.f32.mrf.mxu0
        %v2596 = vadd.f32 0.0, %v2595
        %v2597 = vpop.f32.mrf.mxu0
        %v2598 = vadd.f32 0.0, %v2597
        %2599 = vmatmul.bf16.gmra.mxu0 %v2516
        %v2600 = vpop.f32.mrf.mxu0
        %v2601 = vadd.f32 0.0, %v2600
        %v2602 = vpop.f32.mrf.mxu0
        %v2603 = vadd.f32 0.0, %v2602
        %2604 = vmatmul.bf16.gmra.mxu0 %v2519
        %v2605 = vpop.f32.mrf.mxu0
        %v2606 = vadd.f32 0.0, %v2605
        %v2607 = vpop.f32.mrf.mxu0
        %v2608 = vadd.f32 0.0, %v2607
        %2609 = vmatmul.bf16.gmra.mxu0 %v2522
        %v2610 = vpop.f32.mrf.mxu0
        %v2611 = vadd.f32 0.0, %v2610
        %v2612 = vpop.f32.mrf.mxu0
        %v2613 = vadd.f32 0.0, %v2612
        %2614 = vmatmul.bf16.gmra.mxu0 %v2525
        %v2615 = vpop.f32.mrf.mxu0
        %v2616 = vadd.f32 0.0, %v2615
        %v2617 = vpop.f32.mrf.mxu0
        %v2618 = vadd.f32 0.0, %v2617
        %2619 = vmatmul.bf16.gmra.mxu0 %v2528
        %v2620 = vpop.f32.mrf.mxu0
        %v2621 = vadd.f32 0.0, %v2620
        %v2622 = vpop.f32.mrf.mxu0
        %v2623 = vadd.f32 0.0, %v2622
        %2624 = vdwg.mxu0
        %2625 = vmatpush.bf16.msra.mxu0 0
        %2626 = vmatpush.bf16.msra.mxu0 0
        %2627 = vmatpush.bf16.msra.mxu0 0
        %2628 = vmatpush.bf16.msra.mxu0 0
        %2629 = vmatpush.bf16.msra.mxu0 %v2534
        %2630 = vmatpush.bf16.msra.mxu0 %v2473
        %2631 = vmatpush.bf16.msra.mxu0 %v2471
        %2632 = vmatpush.bf16.msra.mxu0 %v2469
        %2633 = vmatmul.bf16.gmra.mxu0 %v2483
        %v2634 = vpop.f32.mrf.mxu0
        %v2635 = vadd.f32 0.0, %v2634
        %v2636 = vpop.f32.mrf.mxu0
        %v2637 = vadd.f32 0.0, %v2636
        %2638 = vmatmul.bf16.gmra.mxu0 %v2486
        %v2639 = vpop.f32.mrf.mxu0
        %v2640 = vadd.f32 0.0, %v2639
        %v2641 = vpop.f32.mrf.mxu0
        %v2642 = vadd.f32 0.0, %v2641
        %2643 = vmatmul.bf16.gmra.mxu0 %v2489
        %v2644 = vpop.f32.mrf.mxu0
        %v2645 = vadd.f32 0.0, %v2644
        %v2646 = vpop.f32.mrf.mxu0
        %v2647 = vadd.f32 0.0, %v2646
        %2648 = vmatmul.bf16.gmra.mxu0 %v2492
        %v2649 = vpop.f32.mrf.mxu0
        %v2650 = vadd.f32 0.0, %v2649
        %v2651 = vpop.f32.mrf.mxu0
        %v2652 = vadd.f32 0.0, %v2651
        %2653 = vmatmul.bf16.gmra.mxu0 %v2495
        %v2654 = vpop.f32.mrf.mxu0
        %v2655 = vadd.f32 0.0, %v2654
        %v2656 = vpop.f32.mrf.mxu0
        %v2657 = vadd.f32 0.0, %v2656
        %2658 = vmatmul.bf16.gmra.mxu0 %v2498
        %v2659 = vpop.f32.mrf.mxu0
        %v2660 = vadd.f32 0.0, %v2659
        %v2661 = vpop.f32.mrf.mxu0
        %v2662 = vadd.f32 0.0, %v2661
        %2663 = vmatmul.bf16.gmra.mxu0 %v2501
        %v2664 = vpop.f32.mrf.mxu0
        %v2665 = vadd.f32 0.0, %v2664
        %v2666 = vpop.f32.mrf.mxu0
        %v2667 = vadd.f32 0.0, %v2666
        %2668 = vmatmul.bf16.gmra.mxu0 %v2504
        %v2669 = vpop.f32.mrf.mxu0
        %v2670 = vadd.f32 0.0, %v2669
        %v2671 = vpop.f32.mrf.mxu0
        %v2672 = vadd.f32 0.0, %v2671
        %2673 = vmatmul.bf16.gmra.mxu0 %v2507
        %v2674 = vpop.f32.mrf.mxu0
        %v2675 = vadd.f32 0.0, %v2674
        %v2676 = vpop.f32.mrf.mxu0
        %v2677 = vadd.f32 0.0, %v2676
        %2678 = vmatmul.bf16.gmra.mxu0 %v2510
        %v2679 = vpop.f32.mrf.mxu0
        %v2680 = vadd.f32 0.0, %v2679
        %v2681 = vpop.f32.mrf.mxu0
        %v2682 = vadd.f32 0.0, %v2681
        %2683 = vmatmul.bf16.gmra.mxu0 %v2513
        %v2684 = vpop.f32.mrf.mxu0
        %v2685 = vadd.f32 0.0, %v2684
        %v2686 = vpop.f32.mrf.mxu0
        %v2687 = vadd.f32 0.0, %v2686
        %2688 = vmatmul.bf16.gmra.mxu0 %v2516
        %v2689 = vpop.f32.mrf.mxu0
        %v2690 = vadd.f32 0.0, %v2689
        %v2691 = vpop.f32.mrf.mxu0
        %v2692 = vadd.f32 0.0, %v2691
        %2693 = vmatmul.bf16.gmra.mxu0 %v2519
        %v2694 = vpop.f32.mrf.mxu0
        %v2695 = vadd.f32 0.0, %v2694
        %v2696 = vpop.f32.mrf.mxu0
        %v2697 = vadd.f32 0.0, %v2696
        %2698 = vmatmul.bf16.gmra.mxu0 %v2522
        %v2699 = vpop.f32.mrf.mxu0
        %v2700 = vadd.f32 0.0, %v2699
        %v2701 = vpop.f32.mrf.mxu0
        %v2702 = vadd.f32 0.0, %v2701
        %2703 = vmatmul.bf16.gmra.mxu0 %v2525
        %v2704 = vpop.f32.mrf.mxu0
        %v2705 = vadd.f32 0.0, %v2704
        %v2706 = vpop.f32.mrf.mxu0
        %v2707 = vadd.f32 0.0, %v2706
        %2708 = vmatmul.bf16.gmra.mxu0 %v2528
        %v2709 = vpop.f32.mrf.mxu0
        %v2710 = vadd.f32 0.0, %v2709
        %v2711 = vpop.f32.mrf.mxu0
        %v2712 = vadd.f32 0.0, %v2711
        %2713 = vdwg.mxu0
        %v2714 = vadd.f32 %v2295, %v2546
        %v2715 = vadd.f32 %v2296, %v2635
        %v2716 = vadd.f32 %v2297, %v2548
        %v2717 = vadd.f32 %v2298, %v2637
        %v2718 = vadd.f32 %v2299, %v2551
        %v2719 = vadd.f32 %v2300, %v2640
        %v2720 = vadd.f32 %v2301, %v2553
        %v2721 = vadd.f32 %v2302, %v2642
        %v2722 = vadd.f32 %v2303, %v2556
        %v2723 = vadd.f32 %v2304, %v2645
        %v2724 = vadd.f32 %v2305, %v2558
        %v2725 = vadd.f32 %v2306, %v2647
        %v2726 = vadd.f32 %v2307, %v2561
        %v2727 = vadd.f32 %v2308, %v2650
        %v2728 = vadd.f32 %v2309, %v2563
        %v2729 = vadd.f32 %v2310, %v2652
        %v2730 = vadd.f32 %v2311, %v2566
        %v2731 = vadd.f32 %v2312, %v2655
        %v2732 = vadd.f32 %v2313, %v2568
        %v2733 = vadd.f32 %v2314, %v2657
        %v2734 = vadd.f32 %v2315, %v2571
        %v2735 = vadd.f32 %v2316, %v2660
        %v2736 = vadd.f32 %v2317, %v2573
        %v2737 = vadd.f32 %v2318, %v2662
        %v2738 = vadd.f32 %v2319, %v2576
        %v2739 = vadd.f32 %v2320, %v2665
        %v2740 = vadd.f32 %v2321, %v2578
        %v2741 = vadd.f32 %v2322, %v2667
        %v2742 = vadd.f32 %v2323, %v2581
        %v2743 = vadd.f32 %v2324, %v2670
        %v2744 = vadd.f32 %v2325, %v2583
        %v2745 = vadd.f32 %v2326, %v2672
        %v2746 = vadd.f32 %v2327, %v2586
        %v2747 = vadd.f32 %v2328, %v2675
        %v2748 = vadd.f32 %v2329, %v2588
        %v2749 = vadd.f32 %v2330, %v2677
        %v2750 = vadd.f32 %v2331, %v2591
        %v2751 = vadd.f32 %v2332, %v2680
        %v2752 = vadd.f32 %v2333, %v2593
        %v2753 = vadd.f32 %v2334, %v2682
        %v2754 = vadd.f32 %v2335, %v2596
        %v2755 = vadd.f32 %v2336, %v2685
        %v2756 = vadd.f32 %v2337, %v2598
        %v2757 = vadd.f32 %v2338, %v2687
        %v2758 = vadd.f32 %v2339, %v2601
        %v2759 = vadd.f32 %v2340, %v2690
        %v2760 = vadd.f32 %v2341, %v2603
        %v2761 = vadd.f32 %v2342, %v2692
        %v2762 = vadd.f32 %v2343, %v2606
        %v2763 = vadd.f32 %v2344, %v2695
        %v2764 = vadd.f32 %v2345, %v2608
        %v2765 = vadd.f32 %v2346, %v2697
        %v2766 = vadd.f32 %v2347, %v2611
        %v2767 = vadd.f32 %v2348, %v2700
        %v2768 = vadd.f32 %v2349, %v2613
        %v2769 = vadd.f32 %v2350, %v2702
        %v2770 = vadd.f32 %v2351, %v2616
        %v2771 = vadd.f32 %v2352, %v2705
        %v2772 = vadd.f32 %v2353, %v2618
        %v2773 = vadd.f32 %v2354, %v2707
        %v2774 = vadd.f32 %v2355, %v2621
        %v2775 = vadd.f32 %v2356, %v2710
        %v2776 = vadd.f32 %v2357, %v2623
        %v2777 = vadd.f32 %v2358, %v2712
        %s2778 = scalar_lea.vmem %s5, 56
        %v2779 = vld [vmem:[%s2778] sm:$0xff]
        %v2780 = vld [vmem:[%s2778 + $0x8] sm:$0xff]
        %v2781 = vld [vmem:[%s2778 + $0x10] sm:$0xff]
        %v2782 = vld [vmem:[%s2778 + $0x18] sm:$0xff]
        %v2783 = vld [vmem:[%s2778 + $0x20] sm:$0xff]
        %v2784 = vld [vmem:[%s2778 + $0x28] sm:$0xff]
        %v2785 = vld [vmem:[%s2778 + $0x30] sm:$0x33]
        %v2793 = vunpack.c.l.b16 %v2779
        %v2794 = vunpack.c.h.b16 %v2779
        %v2795 = vunpack.c.l.b16 %v2780
        %v2796 = vunpack.c.h.b16 %v2780
        %v2797 = vunpack.c.l.b16 %v2781
        %v2798 = vunpack.c.h.b16 %v2781
        %v2799 = vunpack.c.l.b16 %v2782
        %v2800 = vunpack.c.h.b16 %v2782
        %v2801 = vunpack.c.l.b16 %v2783
        %v2802 = vunpack.c.h.b16 %v2783
        %v2803 = vunpack.c.l.b16 %v2784
        %v2804 = vunpack.c.h.b16 %v2784
        %v2805 = vunpack.c.l.b16 %v2785
        %v2806 = vunpack.c.h.b16 %v2785
        %v2807 = vpack.c.b16 %v2795, %v2793
        %v2808 = vpack.c.b16 %v2796, %v2794
        %v2809 = vpack.c.b16 %v2799, %v2797
        %v2810 = vpack.c.b16 %v2800, %v2798
        %v2811 = vpack.c.b16 %v2803, %v2801
        %v2812 = vpack.c.b16 %v2804, %v2802
        %v2813 = vpack.c.b16 %v2805, %v2805
        %v2814 = vpack.c.b16 %v2806, %v2806
        %v2822 = vand.u32 %v2813, %v890
        %v2825 = vand.u32 %v2814, %v890
        %2827 = vmatpush.bf16.msra.mxu0 0
        %2828 = vmatpush.bf16.msra.mxu0 0
        %2829 = vmatpush.bf16.msra.mxu0 0
        %2830 = vmatpush.bf16.msra.mxu0 0
        %2831 = vmatpush.bf16.msra.mxu0 %v2822
        %2832 = vmatpush.bf16.msra.mxu0 %v2811
        %2833 = vmatpush.bf16.msra.mxu0 %v2809
        %2834 = vmatpush.bf16.msra.mxu0 %v2807
        %2835 = vmatmul.bf16.gmra.mxu0 %v2483
        %v2836 = vpop.f32.mrf.mxu0
        %v2837 = vadd.f32 0.0, %v2836
        %v2838 = vpop.f32.mrf.mxu0
        %v2839 = vadd.f32 0.0, %v2838
        %2840 = vmatmul.bf16.gmra.mxu0 %v2486
        %v2841 = vpop.f32.mrf.mxu0
        %v2842 = vadd.f32 0.0, %v2841
        %v2843 = vpop.f32.mrf.mxu0
        %v2844 = vadd.f32 0.0, %v2843
        %2845 = vmatmul.bf16.gmra.mxu0 %v2489
        %v2846 = vpop.f32.mrf.mxu0
        %v2847 = vadd.f32 0.0, %v2846
        %v2848 = vpop.f32.mrf.mxu0
        %v2849 = vadd.f32 0.0, %v2848
        %2850 = vmatmul.bf16.gmra.mxu0 %v2492
        %v2851 = vpop.f32.mrf.mxu0
        %v2852 = vadd.f32 0.0, %v2851
        %v2853 = vpop.f32.mrf.mxu0
        %v2854 = vadd.f32 0.0, %v2853
        %2855 = vmatmul.bf16.gmra.mxu0 %v2495
        %v2856 = vpop.f32.mrf.mxu0
        %v2857 = vadd.f32 0.0, %v2856
        %v2858 = vpop.f32.mrf.mxu0
        %v2859 = vadd.f32 0.0, %v2858
        %2860 = vmatmul.bf16.gmra.mxu0 %v2498
        %v2861 = vpop.f32.mrf.mxu0
        %v2862 = vadd.f32 0.0, %v2861
        %v2863 = vpop.f32.mrf.mxu0
        %v2864 = vadd.f32 0.0, %v2863
        %2865 = vmatmul.bf16.gmra.mxu0 %v2501
        %v2866 = vpop.f32.mrf.mxu0
        %v2867 = vadd.f32 0.0, %v2866
        %v2868 = vpop.f32.mrf.mxu0
        %v2869 = vadd.f32 0.0, %v2868
        %2870 = vmatmul.bf16.gmra.mxu0 %v2504
        %v2871 = vpop.f32.mrf.mxu0
        %v2872 = vadd.f32 0.0, %v2871
        %v2873 = vpop.f32.mrf.mxu0
        %v2874 = vadd.f32 0.0, %v2873
        %2875 = vmatmul.bf16.gmra.mxu0 %v2507
        %v2876 = vpop.f32.mrf.mxu0
        %v2877 = vadd.f32 0.0, %v2876
        %v2878 = vpop.f32.mrf.mxu0
        %v2879 = vadd.f32 0.0, %v2878
        %2880 = vmatmul.bf16.gmra.mxu0 %v2510
        %v2881 = vpop.f32.mrf.mxu0
        %v2882 = vadd.f32 0.0, %v2881
        %v2883 = vpop.f32.mrf.mxu0
        %v2884 = vadd.f32 0.0, %v2883
        %2885 = vmatmul.bf16.gmra.mxu0 %v2513
        %v2886 = vpop.f32.mrf.mxu0
        %v2887 = vadd.f32 0.0, %v2886
        %v2888 = vpop.f32.mrf.mxu0
        %v2889 = vadd.f32 0.0, %v2888
        %2890 = vmatmul.bf16.gmra.mxu0 %v2516
        %v2891 = vpop.f32.mrf.mxu0
        %v2892 = vadd.f32 0.0, %v2891
        %v2893 = vpop.f32.mrf.mxu0
        %v2894 = vadd.f32 0.0, %v2893
        %2895 = vmatmul.bf16.gmra.mxu0 %v2519
        %v2896 = vpop.f32.mrf.mxu0
        %v2897 = vadd.f32 0.0, %v2896
        %v2898 = vpop.f32.mrf.mxu0
        %v2899 = vadd.f32 0.0, %v2898
        %2900 = vmatmul.bf16.gmra.mxu0 %v2522
        %v2901 = vpop.f32.mrf.mxu0
        %v2902 = vadd.f32 0.0, %v2901
        %v2903 = vpop.f32.mrf.mxu0
        %v2904 = vadd.f32 0.0, %v2903
        %2905 = vmatmul.bf16.gmra.mxu0 %v2525
        %v2906 = vpop.f32.mrf.mxu0
        %v2907 = vadd.f32 0.0, %v2906
        %v2908 = vpop.f32.mrf.mxu0
        %v2909 = vadd.f32 0.0, %v2908
        %2910 = vmatmul.bf16.gmra.mxu0 %v2528
        %v2911 = vpop.f32.mrf.mxu0
        %v2912 = vadd.f32 0.0, %v2911
        %v2913 = vpop.f32.mrf.mxu0
        %v2914 = vadd.f32 0.0, %v2913
        %2915 = vdwg.mxu0
        %2916 = vmatpush.bf16.msra.mxu0 0
        %2917 = vmatpush.bf16.msra.mxu0 0
        %2918 = vmatpush.bf16.msra.mxu0 0
        %2919 = vmatpush.bf16.msra.mxu0 0
        %2920 = vmatpush.bf16.msra.mxu0 %v2825
        %2921 = vmatpush.bf16.msra.mxu0 %v2812
        %2922 = vmatpush.bf16.msra.mxu0 %v2810
        %2923 = vmatpush.bf16.msra.mxu0 %v2808
        %2924 = vmatmul.bf16.gmra.mxu0 %v2483
        %v2925 = vpop.f32.mrf.mxu0
        %v2926 = vadd.f32 0.0, %v2925
        %v2927 = vpop.f32.mrf.mxu0
        %v2928 = vadd.f32 0.0, %v2927
        %2929 = vmatmul.bf16.gmra.mxu0 %v2486
        %v2930 = vpop.f32.mrf.mxu0
        %v2931 = vadd.f32 0.0, %v2930
        %v2932 = vpop.f32.mrf.mxu0
        %v2933 = vadd.f32 0.0, %v2932
        %2934 = vmatmul.bf16.gmra.mxu0 %v2489
        %v2935 = vpop.f32.mrf.mxu0
        %v2936 = vadd.f32 0.0, %v2935
        %v2937 = vpop.f32.mrf.mxu0
        %v2938 = vadd.f32 0.0, %v2937
        %2939 = vmatmul.bf16.gmra.mxu0 %v2492
        %v2940 = vpop.f32.mrf.mxu0
        %v2941 = vadd.f32 0.0, %v2940
        %v2942 = vpop.f32.mrf.mxu0
        %v2943 = vadd.f32 0.0, %v2942
        %2944 = vmatmul.bf16.gmra.mxu0 %v2495
        %v2945 = vpop.f32.mrf.mxu0
        %v2946 = vadd.f32 0.0, %v2945
        %v2947 = vpop.f32.mrf.mxu0
        %v2948 = vadd.f32 0.0, %v2947
        %2949 = vmatmul.bf16.gmra.mxu0 %v2498
        %v2950 = vpop.f32.mrf.mxu0
        %v2951 = vadd.f32 0.0, %v2950
        %v2952 = vpop.f32.mrf.mxu0
        %v2953 = vadd.f32 0.0, %v2952
        %2954 = vmatmul.bf16.gmra.mxu0 %v2501
        %v2955 = vpop.f32.mrf.mxu0
        %v2956 = vadd.f32 0.0, %v2955
        %v2957 = vpop.f32.mrf.mxu0
        %v2958 = vadd.f32 0.0, %v2957
        %2959 = vmatmul.bf16.gmra.mxu0 %v2504
        %v2960 = vpop.f32.mrf.mxu0
        %v2961 = vadd.f32 0.0, %v2960
        %v2962 = vpop.f32.mrf.mxu0
        %v2963 = vadd.f32 0.0, %v2962
        %2964 = vmatmul.bf16.gmra.mxu0 %v2507
        %v2965 = vpop.f32.mrf.mxu0
        %v2966 = vadd.f32 0.0, %v2965
        %v2967 = vpop.f32.mrf.mxu0
        %v2968 = vadd.f32 0.0, %v2967
        %2969 = vmatmul.bf16.gmra.mxu0 %v2510
        %v2970 = vpop.f32.mrf.mxu0
        %v2971 = vadd.f32 0.0, %v2970
        %v2972 = vpop.f32.mrf.mxu0
        %v2973 = vadd.f32 0.0, %v2972
        %2974 = vmatmul.bf16.gmra.mxu0 %v2513
        %v2975 = vpop.f32.mrf.mxu0
        %v2976 = vadd.f32 0.0, %v2975
        %v2977 = vpop.f32.mrf.mxu0
        %v2978 = vadd.f32 0.0, %v2977
        %2979 = vmatmul.bf16.gmra.mxu0 %v2516
        %v2980 = vpop.f32.mrf.mxu0
        %v2981 = vadd.f32 0.0, %v2980
        %v2982 = vpop.f32.mrf.mxu0
        %v2983 = vadd.f32 0.0, %v2982
        %2984 = vmatmul.bf16.gmra.mxu0 %v2519
        %v2985 = vpop.f32.mrf.mxu0
        %v2986 = vadd.f32 0.0, %v2985
        %v2987 = vpop.f32.mrf.mxu0
        %v2988 = vadd.f32 0.0, %v2987
        %2989 = vmatmul.bf16.gmra.mxu0 %v2522
        %v2990 = vpop.f32.mrf.mxu0
        %v2991 = vadd.f32 0.0, %v2990
        %v2992 = vpop.f32.mrf.mxu0
        %v2993 = vadd.f32 0.0, %v2992
        %2994 = vmatmul.bf16.gmra.mxu0 %v2525
        %v2995 = vpop.f32.mrf.mxu0
        %v2996 = vadd.f32 0.0, %v2995
        %v2997 = vpop.f32.mrf.mxu0
        %v2998 = vadd.f32 0.0, %v2997
        %2999 = vmatmul.bf16.gmra.mxu0 %v2528
        %v3000 = vpop.f32.mrf.mxu0
        %v3001 = vadd.f32 0.0, %v3000
        %v3002 = vpop.f32.mrf.mxu0
        %v3003 = vadd.f32 0.0, %v3002
        %3004 = vdwg.mxu0
        %v3005 = vadd.f32 %v1706, %v2837
        %v3006 = vadd.f32 %v1795, %v2926
        %v3007 = vadd.f32 %v1708, %v2839
        %v3008 = vadd.f32 %v1797, %v2928
        %v3009 = vadd.f32 %v1711, %v2842
        %v3010 = vadd.f32 %v1800, %v2931
        %v3011 = vadd.f32 %v1713, %v2844
        %v3012 = vadd.f32 %v1802, %v2933
        %v3013 = vadd.f32 %v1716, %v2847
        %v3014 = vadd.f32 %v1805, %v2936
        %v3015 = vadd.f32 %v1718, %v2849
        %v3016 = vadd.f32 %v1807, %v2938
        %v3017 = vadd.f32 %v1721, %v2852
        %v3018 = vadd.f32 %v1810, %v2941
        %v3019 = vadd.f32 %v1723, %v2854
        %v3020 = vadd.f32 %v1812, %v2943
        %v3021 = vadd.f32 %v1726, %v2857
        %v3022 = vadd.f32 %v1815, %v2946
        %v3023 = vadd.f32 %v1728, %v2859
        %v3024 = vadd.f32 %v1817, %v2948
        %v3025 = vadd.f32 %v1731, %v2862
        %v3026 = vadd.f32 %v1820, %v2951
        %v3027 = vadd.f32 %v1733, %v2864
        %v3028 = vadd.f32 %v1822, %v2953
        %v3029 = vadd.f32 %v1736, %v2867
        %v3030 = vadd.f32 %v1825, %v2956
        %v3031 = vadd.f32 %v1738, %v2869
        %v3032 = vadd.f32 %v1827, %v2958
        %v3033 = vadd.f32 %v1741, %v2872
        %v3034 = vadd.f32 %v1830, %v2961
        %v3035 = vadd.f32 %v1743, %v2874
        %v3036 = vadd.f32 %v1832, %v2963
        %v3037 = vadd.f32 %v1746, %v2877
        %v3038 = vadd.f32 %v1835, %v2966
        %v3039 = vadd.f32 %v1748, %v2879
        %v3040 = vadd.f32 %v1837, %v2968
        %v3041 = vadd.f32 %v1751, %v2882
        %v3042 = vadd.f32 %v1840, %v2971
        %v3043 = vadd.f32 %v1753, %v2884
        %v3044 = vadd.f32 %v1842, %v2973
        %v3045 = vadd.f32 %v1756, %v2887
        %v3046 = vadd.f32 %v1845, %v2976
        %v3047 = vadd.f32 %v1758, %v2889
        %v3048 = vadd.f32 %v1847, %v2978
        %v3049 = vadd.f32 %v1761, %v2892
        %v3050 = vadd.f32 %v1850, %v2981
        %v3051 = vadd.f32 %v1763, %v2894
        %v3052 = vadd.f32 %v1852, %v2983
        %v3053 = vadd.f32 %v1766, %v2897
        %v3054 = vadd.f32 %v1855, %v2986
        %v3055 = vadd.f32 %v1768, %v2899
        %v3056 = vadd.f32 %v1857, %v2988
        %v3057 = vadd.f32 %v1771, %v2902
        %v3058 = vadd.f32 %v1860, %v2991
        %v3059 = vadd.f32 %v1773, %v2904
        %v3060 = vadd.f32 %v1862, %v2993
        %v3061 = vadd.f32 %v1776, %v2907
        %v3062 = vadd.f32 %v1865, %v2996
        %v3063 = vadd.f32 %v1778, %v2909
        %v3064 = vadd.f32 %v1867, %v2998
        %v3065 = vadd.f32 %v1781, %v2912
        %v3066 = vadd.f32 %v1870, %v3001
        %v3067 = vadd.f32 %v1783, %v2914
        %v3068 = vadd.f32 %v1872, %v3003
        %s3069 = scalar_lea.vmem %s4, 56
        %v3070 = vld [vmem:[%s3069] sm:$0xff]
        %v3071 = vld [vmem:[%s3069 + $0x8] sm:$0xff]
        %v3072 = vld [vmem:[%s3069 + $0x10] sm:$0xff]
        %v3073 = vld [vmem:[%s3069 + $0x18] sm:$0xff]
        %v3074 = vld [vmem:[%s3069 + $0x20] sm:$0xff]
        %v3075 = vld [vmem:[%s3069 + $0x28] sm:$0xff]
        %v3076 = vld [vmem:[%s3069 + $0x30] sm:$0x33]
        %v3084 = vunpack.c.l.b16 %v3070
        %v3085 = vunpack.c.h.b16 %v3070
        %v3086 = vunpack.c.l.b16 %v3071
        %v3087 = vunpack.c.h.b16 %v3071
        %v3088 = vunpack.c.l.b16 %v3072
        %v3089 = vunpack.c.h.b16 %v3072
        %v3090 = vunpack.c.l.b16 %v3073
        %v3091 = vunpack.c.h.b16 %v3073
        %v3092 = vunpack.c.l.b16 %v3074
        %v3093 = vunpack.c.h.b16 %v3074
        %v3094 = vunpack.c.l.b16 %v3075
        %v3095 = vunpack.c.h.b16 %v3075
        %v3096 = vunpack.c.l.b16 %v3076
        %v3097 = vunpack.c.h.b16 %v3076
        %v3098 = vpack.c.b16 %v3086, %v3084
        %v3099 = vpack.c.b16 %v3087, %v3085
        %v3100 = vpack.c.b16 %v3090, %v3088
        %v3101 = vpack.c.b16 %v3091, %v3089
        %v3102 = vpack.c.b16 %v3094, %v3092
        %v3103 = vpack.c.b16 %v3095, %v3093
        %v3104 = vpack.c.b16 %v3096, %v3096
        %v3105 = vpack.c.b16 %v3097, %v3097
        %v3113 = vand.u32 %v3104, %v890
        %v3116 = vand.u32 %v3105, %v890
        %3118 = vmatpush.bf16.msra.mxu0 0
        %3119 = vmatpush.bf16.msra.mxu0 0
        %3120 = vmatpush.bf16.msra.mxu0 0
        %3121 = vmatpush.bf16.msra.mxu0 0
        %3122 = vmatpush.bf16.msra.mxu0 %v3113
        %3123 = vmatpush.bf16.msra.mxu0 %v3102
        %3124 = vmatpush.bf16.msra.mxu0 %v3100
        %3125 = vmatpush.bf16.msra.mxu0 %v3098
        %3126 = vmatmul.bf16.gmra.mxu0 %v2064
        %v3127 = vpop.f32.mrf.mxu0
        %v3128 = vadd.f32 0.0, %v3127
        %v3129 = vpop.f32.mrf.mxu0
        %v3130 = vadd.f32 0.0, %v3129
        %3131 = vmatmul.bf16.gmra.mxu0 %v2067
        %v3132 = vpop.f32.mrf.mxu0
        %v3133 = vadd.f32 0.0, %v3132
        %v3134 = vpop.f32.mrf.mxu0
        %v3135 = vadd.f32 0.0, %v3134
        %3136 = vmatmul.bf16.gmra.mxu0 %v2070
        %v3137 = vpop.f32.mrf.mxu0
        %v3138 = vadd.f32 0.0, %v3137
        %v3139 = vpop.f32.mrf.mxu0
        %v3140 = vadd.f32 0.0, %v3139
        %3141 = vmatmul.bf16.gmra.mxu0 %v2073
        %v3142 = vpop.f32.mrf.mxu0
        %v3143 = vadd.f32 0.0, %v3142
        %v3144 = vpop.f32.mrf.mxu0
        %v3145 = vadd.f32 0.0, %v3144
        %3146 = vmatmul.bf16.gmra.mxu0 %v2076
        %v3147 = vpop.f32.mrf.mxu0
        %v3148 = vadd.f32 0.0, %v3147
        %v3149 = vpop.f32.mrf.mxu0
        %v3150 = vadd.f32 0.0, %v3149
        %3151 = vmatmul.bf16.gmra.mxu0 %v2079
        %v3152 = vpop.f32.mrf.mxu0
        %v3153 = vadd.f32 0.0, %v3152
        %v3154 = vpop.f32.mrf.mxu0
        %v3155 = vadd.f32 0.0, %v3154
        %3156 = vmatmul.bf16.gmra.mxu0 %v2082
        %v3157 = vpop.f32.mrf.mxu0
        %v3158 = vadd.f32 0.0, %v3157
        %v3159 = vpop.f32.mrf.mxu0
        %v3160 = vadd.f32 0.0, %v3159
        %3161 = vmatmul.bf16.gmra.mxu0 %v2085
        %v3162 = vpop.f32.mrf.mxu0
        %v3163 = vadd.f32 0.0, %v3162
        %v3164 = vpop.f32.mrf.mxu0
        %v3165 = vadd.f32 0.0, %v3164
        %3166 = vmatmul.bf16.gmra.mxu0 %v2088
        %v3167 = vpop.f32.mrf.mxu0
        %v3168 = vadd.f32 0.0, %v3167
        %v3169 = vpop.f32.mrf.mxu0
        %v3170 = vadd.f32 0.0, %v3169
        %3171 = vmatmul.bf16.gmra.mxu0 %v2091
        %v3172 = vpop.f32.mrf.mxu0
        %v3173 = vadd.f32 0.0, %v3172
        %v3174 = vpop.f32.mrf.mxu0
        %v3175 = vadd.f32 0.0, %v3174
        %3176 = vmatmul.bf16.gmra.mxu0 %v2094
        %v3177 = vpop.f32.mrf.mxu0
        %v3178 = vadd.f32 0.0, %v3177
        %v3179 = vpop.f32.mrf.mxu0
        %v3180 = vadd.f32 0.0, %v3179
        %3181 = vmatmul.bf16.gmra.mxu0 %v2097
        %v3182 = vpop.f32.mrf.mxu0
        %v3183 = vadd.f32 0.0, %v3182
        %v3184 = vpop.f32.mrf.mxu0
        %v3185 = vadd.f32 0.0, %v3184
        %3186 = vmatmul.bf16.gmra.mxu0 %v2100
        %v3187 = vpop.f32.mrf.mxu0
        %v3188 = vadd.f32 0.0, %v3187
        %v3189 = vpop.f32.mrf.mxu0
        %v3190 = vadd.f32 0.0, %v3189
        %3191 = vmatmul.bf16.gmra.mxu0 %v2103
        %v3192 = vpop.f32.mrf.mxu0
        %v3193 = vadd.f32 0.0, %v3192
        %v3194 = vpop.f32.mrf.mxu0
        %v3195 = vadd.f32 0.0, %v3194
        %3196 = vmatmul.bf16.gmra.mxu0 %v2106
        %v3197 = vpop.f32.mrf.mxu0
        %v3198 = vadd.f32 0.0, %v3197
        %v3199 = vpop.f32.mrf.mxu0
        %v3200 = vadd.f32 0.0, %v3199
        %3201 = vmatmul.bf16.gmra.mxu0 %v2109
        %v3202 = vpop.f32.mrf.mxu0
        %v3203 = vadd.f32 0.0, %v3202
        %v3204 = vpop.f32.mrf.mxu0
        %v3205 = vadd.f32 0.0, %v3204
        %3206 = vdwg.mxu0
        %3207 = vmatpush.bf16.msra.mxu0 0
        %3208 = vmatpush.bf16.msra.mxu0 0
        %3209 = vmatpush.bf16.msra.mxu0 0
        %3210 = vmatpush.bf16.msra.mxu0 0
        %3211 = vmatpush.bf16.msra.mxu0 %v3116
        %3212 = vmatpush.bf16.msra.mxu0 %v3103
        %3213 = vmatpush.bf16.msra.mxu0 %v3101
        %3214 = vmatpush.bf16.msra.mxu0 %v3099
        %3215 = vmatmul.bf16.gmra.mxu0 %v2064
        %v3216 = vpop.f32.mrf.mxu0
        %v3217 = vadd.f32 0.0, %v3216
        %v3218 = vpop.f32.mrf.mxu0
        %v3219 = vadd.f32 0.0, %v3218
        %3220 = vmatmul.bf16.gmra.mxu0 %v2067
        %v3221 = vpop.f32.mrf.mxu0
        %v3222 = vadd.f32 0.0, %v3221
        %v3223 = vpop.f32.mrf.mxu0
        %v3224 = vadd.f32 0.0, %v3223
        %3225 = vmatmul.bf16.gmra.mxu0 %v2070
        %v3226 = vpop.f32.mrf.mxu0
        %v3227 = vadd.f32 0.0, %v3226
        %v3228 = vpop.f32.mrf.mxu0
        %v3229 = vadd.f32 0.0, %v3228
        %3230 = vmatmul.bf16.gmra.mxu0 %v2073
        %v3231 = vpop.f32.mrf.mxu0
        %v3232 = vadd.f32 0.0, %v3231
        %v3233 = vpop.f32.mrf.mxu0
        %v3234 = vadd.f32 0.0, %v3233
        %3235 = vmatmul.bf16.gmra.mxu0 %v2076
        %v3236 = vpop.f32.mrf.mxu0
        %v3237 = vadd.f32 0.0, %v3236
        %v3238 = vpop.f32.mrf.mxu0
        %v3239 = vadd.f32 0.0, %v3238
        %3240 = vmatmul.bf16.gmra.mxu0 %v2079
        %v3241 = vpop.f32.mrf.mxu0
        %v3242 = vadd.f32 0.0, %v3241
        %v3243 = vpop.f32.mrf.mxu0
        %v3244 = vadd.f32 0.0, %v3243
        %3245 = vmatmul.bf16.gmra.mxu0 %v2082
        %v3246 = vpop.f32.mrf.mxu0
        %v3247 = vadd.f32 0.0, %v3246
        %v3248 = vpop.f32.mrf.mxu0
        %v3249 = vadd.f32 0.0, %v3248
        %3250 = vmatmul.bf16.gmra.mxu0 %v2085
        %v3251 = vpop.f32.mrf.mxu0
        %v3252 = vadd.f32 0.0, %v3251
        %v3253 = vpop.f32.mrf.mxu0
        %v3254 = vadd.f32 0.0, %v3253
        %3255 = vmatmul.bf16.gmra.mxu0 %v2088
        %v3256 = vpop.f32.mrf.mxu0
        %v3257 = vadd.f32 0.0, %v3256
        %v3258 = vpop.f32.mrf.mxu0
        %v3259 = vadd.f32 0.0, %v3258
        %3260 = vmatmul.bf16.gmra.mxu0 %v2091
        %v3261 = vpop.f32.mrf.mxu0
        %v3262 = vadd.f32 0.0, %v3261
        %v3263 = vpop.f32.mrf.mxu0
        %v3264 = vadd.f32 0.0, %v3263
        %3265 = vmatmul.bf16.gmra.mxu0 %v2094
        %v3266 = vpop.f32.mrf.mxu0
        %v3267 = vadd.f32 0.0, %v3266
        %v3268 = vpop.f32.mrf.mxu0
        %v3269 = vadd.f32 0.0, %v3268
        %3270 = vmatmul.bf16.gmra.mxu0 %v2097
        %v3271 = vpop.f32.mrf.mxu0
        %v3272 = vadd.f32 0.0, %v3271
        %v3273 = vpop.f32.mrf.mxu0
        %v3274 = vadd.f32 0.0, %v3273
        %3275 = vmatmul.bf16.gmra.mxu0 %v2100
        %v3276 = vpop.f32.mrf.mxu0
        %v3277 = vadd.f32 0.0, %v3276
        %v3278 = vpop.f32.mrf.mxu0
        %v3279 = vadd.f32 0.0, %v3278
        %3280 = vmatmul.bf16.gmra.mxu0 %v2103
        %v3281 = vpop.f32.mrf.mxu0
        %v3282 = vadd.f32 0.0, %v3281
        %v3283 = vpop.f32.mrf.mxu0
        %v3284 = vadd.f32 0.0, %v3283
        %3285 = vmatmul.bf16.gmra.mxu0 %v2106
        %v3286 = vpop.f32.mrf.mxu0
        %v3287 = vadd.f32 0.0, %v3286
        %v3288 = vpop.f32.mrf.mxu0
        %v3289 = vadd.f32 0.0, %v3288
        %3290 = vmatmul.bf16.gmra.mxu0 %v2109
        %v3291 = vpop.f32.mrf.mxu0
        %v3292 = vadd.f32 0.0, %v3291
        %v3293 = vpop.f32.mrf.mxu0
        %v3294 = vadd.f32 0.0, %v3293
        %3295 = vdwg.mxu0
        %v3296 = vadd.f32 %v3005, %v3128
        %v3297 = vadd.f32 %v3006, %v3217
        %v3298 = vadd.f32 %v3007, %v3130
        %v3299 = vadd.f32 %v3008, %v3219
        %v3300 = vadd.f32 %v3009, %v3133
        %v3301 = vadd.f32 %v3010, %v3222
        %v3302 = vadd.f32 %v3011, %v3135
        %v3303 = vadd.f32 %v3012, %v3224
        %v3304 = vadd.f32 %v3013, %v3138
        %v3305 = vadd.f32 %v3014, %v3227
        %v3306 = vadd.f32 %v3015, %v3140
        %v3307 = vadd.f32 %v3016, %v3229
        %v3308 = vadd.f32 %v3017, %v3143
        %v3309 = vadd.f32 %v3018, %v3232
        %v3310 = vadd.f32 %v3019, %v3145
        %v3311 = vadd.f32 %v3020, %v3234
        %v3312 = vadd.f32 %v3021, %v3148
        %v3313 = vadd.f32 %v3022, %v3237
        %v3314 = vadd.f32 %v3023, %v3150
        %v3315 = vadd.f32 %v3024, %v3239
        %v3316 = vadd.f32 %v3025, %v3153
        %v3317 = vadd.f32 %v3026, %v3242
        %v3318 = vadd.f32 %v3027, %v3155
        %v3319 = vadd.f32 %v3028, %v3244
        %v3320 = vadd.f32 %v3029, %v3158
        %v3321 = vadd.f32 %v3030, %v3247
        %v3322 = vadd.f32 %v3031, %v3160
        %v3323 = vadd.f32 %v3032, %v3249
        %v3324 = vadd.f32 %v3033, %v3163
        %v3325 = vadd.f32 %v3034, %v3252
        %v3326 = vadd.f32 %v3035, %v3165
        %v3327 = vadd.f32 %v3036, %v3254
        %v3328 = vadd.f32 %v3037, %v3168
        %v3329 = vadd.f32 %v3038, %v3257
        %v3330 = vadd.f32 %v3039, %v3170
        %v3331 = vadd.f32 %v3040, %v3259
        %v3332 = vadd.f32 %v3041, %v3173
        %v3333 = vadd.f32 %v3042, %v3262
        %v3334 = vadd.f32 %v3043, %v3175
        %v3335 = vadd.f32 %v3044, %v3264
        %v3336 = vadd.f32 %v3045, %v3178
        %v3337 = vadd.f32 %v3046, %v3267
        %v3338 = vadd.f32 %v3047, %v3180
        %v3339 = vadd.f32 %v3048, %v3269
        %v3340 = vadd.f32 %v3049, %v3183
        %v3341 = vadd.f32 %v3050, %v3272
        %v3342 = vadd.f32 %v3051, %v3185
        %v3343 = vadd.f32 %v3052, %v3274
        %v3344 = vadd.f32 %v3053, %v3188
        %v3345 = vadd.f32 %v3054, %v3277
        %v3346 = vadd.f32 %v3055, %v3190
        %v3347 = vadd.f32 %v3056, %v3279
        %v3348 = vadd.f32 %v3057, %v3193
        %v3349 = vadd.f32 %v3058, %v3282
        %v3350 = vadd.f32 %v3059, %v3195
        %v3351 = vadd.f32 %v3060, %v3284
        %v3352 = vadd.f32 %v3061, %v3198
        %v3353 = vadd.f32 %v3062, %v3287
        %v3354 = vadd.f32 %v3063, %v3200
        %v3355 = vadd.f32 %v3064, %v3289
        %v3356 = vadd.f32 %v3065, %v3203
        %v3357 = vadd.f32 %v3066, %v3292
        %v3358 = vadd.f32 %v3067, %v3205
        %v3359 = vadd.f32 %v3068, %v3294
        %s3360 = scalar_lea.vmem %s604, 8 [#allocation2]
        %v3361 = vld [vmem:[%s3360] sm:$0xf]
        %v3362 = vld [vmem:[%s3360 + $0x4] sm:$0xf]
        %v3363 = vld [vmem:[%s3360 + $0x8] sm:$0xf]
        %v3364 = vld [vmem:[%s3360 + $0xc] sm:$0xf]
        %v3365 = vld [vmem:[%s3360 + $0x10] sm:$0xf]
        %v3366 = vld [vmem:[%s3360 + $0x14] sm:$0xf]
        %v3367 = vld [vmem:[%s3360 + $0x18] sm:$0xf]
        %v3368 = vld [vmem:[%s3360 + $0x1c] sm:$0xf]
        %v3369 = vld [vmem:[%s3360 + $0x20] sm:$0xf]
        %v3370 = vld [vmem:[%s3360 + $0x24] sm:$0xf]
        %v3371 = vld [vmem:[%s3360 + $0x28] sm:$0xf]
        %v3372 = vld [vmem:[%s3360 + $0x2c] sm:$0xf]
        %v3373 = vld [vmem:[%s3360 + $0x30] sm:$0xf]
        %v3374 = vld [vmem:[%s3360 + $0x34] sm:$0xf]
        %v3375 = vld [vmem:[%s3360 + $0x38] sm:$0xf]
        %v3376 = vld [vmem:[%s3360 + $0x3c] sm:$0xf]
        %v3377 = vld [vmem:[%s3360 + $0x40] sm:$0xf]
        %v3378 = vld [vmem:[%s3360 + $0x44] sm:$0xf]
        %v3379 = vld [vmem:[%s3360 + $0x48] sm:$0xf]
        %v3380 = vld [vmem:[%s3360 + $0x4c] sm:$0xf]
        %v3381 = vld [vmem:[%s3360 + $0x50] sm:$0xf]
        %v3382 = vld [vmem:[%s3360 + $0x54] sm:$0xf]
        %v3383 = vld [vmem:[%s3360 + $0x58] sm:$0xf]
        %v3384 = vld [vmem:[%s3360 + $0x5c] sm:$0xf]
        %v3385 = vld [vmem:[%s3360 + $0x60] sm:$0xf]
        %v3386 = vld [vmem:[%s3360 + $0x64] sm:$0xf]
        %v3387 = vld [vmem:[%s3360 + $0x68] sm:$0xf]
        %v3388 = vld [vmem:[%s3360 + $0x6c] sm:$0xf]
        %v3389 = vld [vmem:[%s3360 + $0x70] sm:$0xf]
        %v3390 = vld [vmem:[%s3360 + $0x74] sm:$0xf]
        %v3391 = vld [vmem:[%s3360 + $0x78] sm:$0xf]
        %v3392 = vld [vmem:[%s3360 + $0x7c] sm:$0xf]
        %s3393 = scalar_lea.vmem %s611, 8 [#allocation3]
        %v3394 = vld [vmem:[%s3393] sm:$0xf]
        %v3395 = vld [vmem:[%s3393 + $0x4] sm:$0xf]
        %v3396 = vld [vmem:[%s3393 + $0x8] sm:$0xf]
        %v3397 = vld [vmem:[%s3393 + $0xc] sm:$0xf]
        %v3398 = vld [vmem:[%s3393 + $0x10] sm:$0xf]
        %v3399 = vld [vmem:[%s3393 + $0x14] sm:$0xf]
        %v3400 = vld [vmem:[%s3393 + $0x18] sm:$0xf]
        %v3401 = vld [vmem:[%s3393 + $0x1c] sm:$0xf]
        %v3402 = vld [vmem:[%s3393 + $0x20] sm:$0xf]
        %v3403 = vld [vmem:[%s3393 + $0x24] sm:$0xf]
        %v3404 = vld [vmem:[%s3393 + $0x28] sm:$0xf]
        %v3405 = vld [vmem:[%s3393 + $0x2c] sm:$0xf]
        %v3406 = vld [vmem:[%s3393 + $0x30] sm:$0xf]
        %v3407 = vld [vmem:[%s3393 + $0x34] sm:$0xf]
        %v3408 = vld [vmem:[%s3393 + $0x38] sm:$0xf]
        %v3409 = vld [vmem:[%s3393 + $0x3c] sm:$0xf]
        %v3410 = vld [vmem:[%s3393 + $0x40] sm:$0xf]
        %v3411 = vld [vmem:[%s3393 + $0x44] sm:$0xf]
        %v3412 = vld [vmem:[%s3393 + $0x48] sm:$0xf]
        %v3413 = vld [vmem:[%s3393 + $0x4c] sm:$0xf]
        %v3414 = vld [vmem:[%s3393 + $0x50] sm:$0xf]
        %v3415 = vld [vmem:[%s3393 + $0x54] sm:$0xf]
        %v3416 = vld [vmem:[%s3393 + $0x58] sm:$0xf]
        %v3417 = vld [vmem:[%s3393 + $0x5c] sm:$0xf]
        %v3418 = vld [vmem:[%s3393 + $0x60] sm:$0xf]
        %v3419 = vld [vmem:[%s3393 + $0x64] sm:$0xf]
        %v3420 = vld [vmem:[%s3393 + $0x68] sm:$0xf]
        %v3421 = vld [vmem:[%s3393 + $0x6c] sm:$0xf]
        %v3422 = vld [vmem:[%s3393 + $0x70] sm:$0xf]
        %v3423 = vld [vmem:[%s3393 + $0x74] sm:$0xf]
        %v3424 = vld [vmem:[%s3393 + $0x78] sm:$0xf]
        %v3425 = vld [vmem:[%s3393 + $0x7c] sm:$0xf]
        %s3426 = scalar_lea.vmem %s2, 112
        %v3427 = vld [vmem:[%s3426] sm:$0xff]
        %v3428 = vld [vmem:[%s3426 + $0x8] sm:$0xff]
        %v3429 = vld [vmem:[%s3426 + $0x10] sm:$0xff]
        %v3430 = vld [vmem:[%s3426 + $0x18] sm:$0xff]
        %v3431 = vld [vmem:[%s3426 + $0x20] sm:$0xff]
        %v3432 = vld [vmem:[%s3426 + $0x28] sm:$0xff]
        %v3433 = vld [vmem:[%s3426 + $0x30] sm:$0x33]
        %v3466 = vunpack.c.l.b16 %v3361
        %v3467 = vunpack.c.l.b16 %v3362
        %v3468 = vunpack.c.l.b16 %v3363
        %v3469 = vunpack.c.l.b16 %v3364
        %v3470 = vunpack.c.l.b16 %v3365
        %v3471 = vunpack.c.l.b16 %v3366
        %v3472 = vunpack.c.l.b16 %v3367
        %v3473 = vunpack.c.l.b16 %v3368
        %v3474 = vunpack.c.l.b16 %v3369
        %v3475 = vunpack.c.l.b16 %v3370
        %v3476 = vunpack.c.l.b16 %v3371
        %v3477 = vunpack.c.l.b16 %v3372
        %v3478 = vunpack.c.l.b16 %v3373
        %v3479 = vunpack.c.l.b16 %v3374
        %v3480 = vunpack.c.l.b16 %v3375
        %v3481 = vunpack.c.l.b16 %v3376
        %v3482 = vunpack.c.l.b16 %v3377
        %v3483 = vunpack.c.l.b16 %v3378
        %v3484 = vunpack.c.l.b16 %v3379
        %v3485 = vunpack.c.l.b16 %v3380
        %v3486 = vunpack.c.l.b16 %v3381
        %v3487 = vunpack.c.l.b16 %v3382
        %v3488 = vunpack.c.l.b16 %v3383
        %v3489 = vunpack.c.l.b16 %v3384
        %v3490 = vunpack.c.l.b16 %v3385
        %v3491 = vunpack.c.l.b16 %v3386
        %v3492 = vunpack.c.l.b16 %v3387
        %v3493 = vunpack.c.l.b16 %v3388
        %v3494 = vunpack.c.l.b16 %v3389
        %v3495 = vunpack.c.l.b16 %v3390
        %v3496 = vunpack.c.l.b16 %v3391
        %v3497 = vunpack.c.l.b16 %v3392
        %v3498 = vpack.c.b16 %v3467, %v3466
        %v3499 = vpack.c.b16 %v3469, %v3468
        %v3500 = vpack.c.b16 %v3471, %v3470
        %v3501 = vpack.c.b16 %v3473, %v3472
        %v3502 = vpack.c.b16 %v3475, %v3474
        %v3503 = vpack.c.b16 %v3477, %v3476
        %v3504 = vpack.c.b16 %v3479, %v3478
        %v3505 = vpack.c.b16 %v3481, %v3480
        %v3506 = vpack.c.b16 %v3483, %v3482
        %v3507 = vpack.c.b16 %v3485, %v3484
        %v3508 = vpack.c.b16 %v3487, %v3486
        %v3509 = vpack.c.b16 %v3489, %v3488
        %v3510 = vpack.c.b16 %v3491, %v3490
        %v3511 = vpack.c.b16 %v3493, %v3492
        %v3512 = vpack.c.b16 %v3495, %v3494
        %v3513 = vpack.c.b16 %v3497, %v3496
        %v3521 = vunpack.c.l.b16 %v3427
        %v3522 = vunpack.c.h.b16 %v3427
        %v3523 = vunpack.c.l.b16 %v3428
        %v3524 = vunpack.c.h.b16 %v3428
        %v3525 = vunpack.c.l.b16 %v3429
        %v3526 = vunpack.c.h.b16 %v3429
        %v3527 = vunpack.c.l.b16 %v3430
        %v3528 = vunpack.c.h.b16 %v3430
        %v3529 = vunpack.c.l.b16 %v3431
        %v3530 = vunpack.c.h.b16 %v3431
        %v3531 = vunpack.c.l.b16 %v3432
        %v3532 = vunpack.c.h.b16 %v3432
        %v3533 = vunpack.c.l.b16 %v3433
        %v3534 = vunpack.c.h.b16 %v3433
        %v3535 = vpack.c.b16 %v3523, %v3521
        %v3536 = vpack.c.b16 %v3524, %v3522
        %v3537 = vpack.c.b16 %v3527, %v3525
        %v3538 = vpack.c.b16 %v3528, %v3526
        %v3539 = vpack.c.b16 %v3531, %v3529
        %v3540 = vpack.c.b16 %v3532, %v3530
        %v3541 = vpack.c.b16 %v3533, %v3533
        %v3542 = vpack.c.b16 %v3534, %v3534
        %v3550 = vsel %vm838, %v3498, 0
        %v3553 = vsel %vm838, %v3499, 0
        %v3556 = vsel %vm838, %v3500, 0
        %v3559 = vsel %vm838, %v3501, 0
        %v3562 = vsel %vm838, %v3502, 0
        %v3565 = vsel %vm838, %v3503, 0
        %v3568 = vsel %vm838, %v3504, 0
        %v3571 = vsel %vm838, %v3505, 0
        %v3574 = vsel %vm838, %v3506, 0
        %v3577 = vsel %vm838, %v3507, 0
        %v3580 = vsel %vm838, %v3508, 0
        %v3583 = vsel %vm838, %v3509, 0
        %v3586 = vsel %vm838, %v3510, 0
        %v3589 = vsel %vm838, %v3511, 0
        %v3592 = vsel %vm838, %v3512, 0
        %v3595 = vsel %vm838, %v3513, 0
        %v3598 = vand.u32 %v3541, %v890
        %v3601 = vand.u32 %v3542, %v890
        %3603 = vmatpush.bf16.msra.mxu0 0
        %3604 = vmatpush.bf16.msra.mxu0 0
        %3605 = vmatpush.bf16.msra.mxu0 0
        %3606 = vmatpush.bf16.msra.mxu0 0
        %3607 = vmatpush.bf16.msra.mxu0 %v3598
        %3608 = vmatpush.bf16.msra.mxu0 %v3539
        %3609 = vmatpush.bf16.msra.mxu0 %v3537
        %3610 = vmatpush.bf16.msra.mxu0 %v3535
        %3611 = vmatmul.bf16.gmra.mxu0 %v3550
        %v3612 = vpop.f32.mrf.mxu0
        %v3613 = vadd.f32 0.0, %v3612
        %v3614 = vpop.f32.mrf.mxu0
        %v3615 = vadd.f32 0.0, %v3614
        %3616 = vmatmul.bf16.gmra.mxu0 %v3553
        %v3617 = vpop.f32.mrf.mxu0
        %v3618 = vadd.f32 0.0, %v3617
        %v3619 = vpop.f32.mrf.mxu0
        %v3620 = vadd.f32 0.0, %v3619
        %3621 = vmatmul.bf16.gmra.mxu0 %v3556
        %v3622 = vpop.f32.mrf.mxu0
        %v3623 = vadd.f32 0.0, %v3622
        %v3624 = vpop.f32.mrf.mxu0
        %v3625 = vadd.f32 0.0, %v3624
        %3626 = vmatmul.bf16.gmra.mxu0 %v3559
        %v3627 = vpop.f32.mrf.mxu0
        %v3628 = vadd.f32 0.0, %v3627
        %v3629 = vpop.f32.mrf.mxu0
        %v3630 = vadd.f32 0.0, %v3629
        %3631 = vmatmul.bf16.gmra.mxu0 %v3562
        %v3632 = vpop.f32.mrf.mxu0
        %v3633 = vadd.f32 0.0, %v3632
        %v3634 = vpop.f32.mrf.mxu0
        %v3635 = vadd.f32 0.0, %v3634
        %3636 = vmatmul.bf16.gmra.mxu0 %v3565
        %v3637 = vpop.f32.mrf.mxu0
        %v3638 = vadd.f32 0.0, %v3637
        %v3639 = vpop.f32.mrf.mxu0
        %v3640 = vadd.f32 0.0, %v3639
        %3641 = vmatmul.bf16.gmra.mxu0 %v3568
        %v3642 = vpop.f32.mrf.mxu0
        %v3643 = vadd.f32 0.0, %v3642
        %v3644 = vpop.f32.mrf.mxu0
        %v3645 = vadd.f32 0.0, %v3644
        %3646 = vmatmul.bf16.gmra.mxu0 %v3571
        %v3647 = vpop.f32.mrf.mxu0
        %v3648 = vadd.f32 0.0, %v3647
        %v3649 = vpop.f32.mrf.mxu0
        %v3650 = vadd.f32 0.0, %v3649
        %3651 = vmatmul.bf16.gmra.mxu0 %v3574
        %v3652 = vpop.f32.mrf.mxu0
        %v3653 = vadd.f32 0.0, %v3652
        %v3654 = vpop.f32.mrf.mxu0
        %v3655 = vadd.f32 0.0, %v3654
        %3656 = vmatmul.bf16.gmra.mxu0 %v3577
        %v3657 = vpop.f32.mrf.mxu0
        %v3658 = vadd.f32 0.0, %v3657
        %v3659 = vpop.f32.mrf.mxu0
        %v3660 = vadd.f32 0.0, %v3659
        %3661 = vmatmul.bf16.gmra.mxu0 %v3580
        %v3662 = vpop.f32.mrf.mxu0
        %v3663 = vadd.f32 0.0, %v3662
        %v3664 = vpop.f32.mrf.mxu0
        %v3665 = vadd.f32 0.0, %v3664
        %3666 = vmatmul.bf16.gmra.mxu0 %v3583
        %v3667 = vpop.f32.mrf.mxu0
        %v3668 = vadd.f32 0.0, %v3667
        %v3669 = vpop.f32.mrf.mxu0
        %v3670 = vadd.f32 0.0, %v3669
        %3671 = vmatmul.bf16.gmra.mxu0 %v3586
        %v3672 = vpop.f32.mrf.mxu0
        %v3673 = vadd.f32 0.0, %v3672
        %v3674 = vpop.f32.mrf.mxu0
        %v3675 = vadd.f32 0.0, %v3674
        %3676 = vmatmul.bf16.gmra.mxu0 %v3589
        %v3677 = vpop.f32.mrf.mxu0
        %v3678 = vadd.f32 0.0, %v3677
        %v3679 = vpop.f32.mrf.mxu0
        %v3680 = vadd.f32 0.0, %v3679
        %3681 = vmatmul.bf16.gmra.mxu0 %v3592
        %v3682 = vpop.f32.mrf.mxu0
        %v3683 = vadd.f32 0.0, %v3682
        %v3684 = vpop.f32.mrf.mxu0
        %v3685 = vadd.f32 0.0, %v3684
        %3686 = vmatmul.bf16.gmra.mxu0 %v3595
        %v3687 = vpop.f32.mrf.mxu0
        %v3688 = vadd.f32 0.0, %v3687
        %v3689 = vpop.f32.mrf.mxu0
        %v3690 = vadd.f32 0.0, %v3689
        %3691 = vdwg.mxu0
        %3692 = vmatpush.bf16.msra.mxu0 0
        %3693 = vmatpush.bf16.msra.mxu0 0
        %3694 = vmatpush.bf16.msra.mxu0 0
        %3695 = vmatpush.bf16.msra.mxu0 0
        %3696 = vmatpush.bf16.msra.mxu0 %v3601
        %3697 = vmatpush.bf16.msra.mxu0 %v3540
        %3698 = vmatpush.bf16.msra.mxu0 %v3538
        %3699 = vmatpush.bf16.msra.mxu0 %v3536
        %3700 = vmatmul.bf16.gmra.mxu0 %v3550
        %v3701 = vpop.f32.mrf.mxu0
        %v3702 = vadd.f32 0.0, %v3701
        %v3703 = vpop.f32.mrf.mxu0
        %v3704 = vadd.f32 0.0, %v3703
        %3705 = vmatmul.bf16.gmra.mxu0 %v3553
        %v3706 = vpop.f32.mrf.mxu0
        %v3707 = vadd.f32 0.0, %v3706
        %v3708 = vpop.f32.mrf.mxu0
        %v3709 = vadd.f32 0.0, %v3708
        %3710 = vmatmul.bf16.gmra.mxu0 %v3556
        %v3711 = vpop.f32.mrf.mxu0
        %v3712 = vadd.f32 0.0, %v3711
        %v3713 = vpop.f32.mrf.mxu0
        %v3714 = vadd.f32 0.0, %v3713
        %3715 = vmatmul.bf16.gmra.mxu0 %v3559
        %v3716 = vpop.f32.mrf.mxu0
        %v3717 = vadd.f32 0.0, %v3716
        %v3718 = vpop.f32.mrf.mxu0
        %v3719 = vadd.f32 0.0, %v3718
        %3720 = vmatmul.bf16.gmra.mxu0 %v3562
        %v3721 = vpop.f32.mrf.mxu0
        %v3722 = vadd.f32 0.0, %v3721
        %v3723 = vpop.f32.mrf.mxu0
        %v3724 = vadd.f32 0.0, %v3723
        %3725 = vmatmul.bf16.gmra.mxu0 %v3565
        %v3726 = vpop.f32.mrf.mxu0
        %v3727 = vadd.f32 0.0, %v3726
        %v3728 = vpop.f32.mrf.mxu0
        %v3729 = vadd.f32 0.0, %v3728
        %3730 = vmatmul.bf16.gmra.mxu0 %v3568
        %v3731 = vpop.f32.mrf.mxu0
        %v3732 = vadd.f32 0.0, %v3731
        %v3733 = vpop.f32.mrf.mxu0
        %v3734 = vadd.f32 0.0, %v3733
        %3735 = vmatmul.bf16.gmra.mxu0 %v3571
        %v3736 = vpop.f32.mrf.mxu0
        %v3737 = vadd.f32 0.0, %v3736
        %v3738 = vpop.f32.mrf.mxu0
        %v3739 = vadd.f32 0.0, %v3738
        %3740 = vmatmul.bf16.gmra.mxu0 %v3574
        %v3741 = vpop.f32.mrf.mxu0
        %v3742 = vadd.f32 0.0, %v3741
        %v3743 = vpop.f32.mrf.mxu0
        %v3744 = vadd.f32 0.0, %v3743
        %3745 = vmatmul.bf16.gmra.mxu0 %v3577
        %v3746 = vpop.f32.mrf.mxu0
        %v3747 = vadd.f32 0.0, %v3746
        %v3748 = vpop.f32.mrf.mxu0
        %v3749 = vadd.f32 0.0, %v3748
        %3750 = vmatmul.bf16.gmra.mxu0 %v3580
        %v3751 = vpop.f32.mrf.mxu0
        %v3752 = vadd.f32 0.0, %v3751
        %v3753 = vpop.f32.mrf.mxu0
        %v3754 = vadd.f32 0.0, %v3753
        %3755 = vmatmul.bf16.gmra.mxu0 %v3583
        %v3756 = vpop.f32.mrf.mxu0
        %v3757 = vadd.f32 0.0, %v3756
        %v3758 = vpop.f32.mrf.mxu0
        %v3759 = vadd.f32 0.0, %v3758
        %3760 = vmatmul.bf16.gmra.mxu0 %v3586
        %v3761 = vpop.f32.mrf.mxu0
        %v3762 = vadd.f32 0.0, %v3761
        %v3763 = vpop.f32.mrf.mxu0
        %v3764 = vadd.f32 0.0, %v3763
        %3765 = vmatmul.bf16.gmra.mxu0 %v3589
        %v3766 = vpop.f32.mrf.mxu0
        %v3767 = vadd.f32 0.0, %v3766
        %v3768 = vpop.f32.mrf.mxu0
        %v3769 = vadd.f32 0.0, %v3768
        %3770 = vmatmul.bf16.gmra.mxu0 %v3592
        %v3771 = vpop.f32.mrf.mxu0
        %v3772 = vadd.f32 0.0, %v3771
        %v3773 = vpop.f32.mrf.mxu0
        %v3774 = vadd.f32 0.0, %v3773
        %3775 = vmatmul.bf16.gmra.mxu0 %v3595
        %v3776 = vpop.f32.mrf.mxu0
        %v3777 = vadd.f32 0.0, %v3776
        %v3778 = vpop.f32.mrf.mxu0
        %v3779 = vadd.f32 0.0, %v3778
        %3780 = vdwg.mxu0
        %v3781 = vadd.f32 %v2714, %v3613
        %v3782 = vadd.f32 %v2715, %v3702
        %v3783 = vadd.f32 %v2716, %v3615
        %v3784 = vadd.f32 %v2717, %v3704
        %v3785 = vadd.f32 %v2718, %v3618
        %v3786 = vadd.f32 %v2719, %v3707
        %v3787 = vadd.f32 %v2720, %v3620
        %v3788 = vadd.f32 %v2721, %v3709
        %v3789 = vadd.f32 %v2722, %v3623
        %v3790 = vadd.f32 %v2723, %v3712
        %v3791 = vadd.f32 %v2724, %v3625
        %v3792 = vadd.f32 %v2725, %v3714
        %v3793 = vadd.f32 %v2726, %v3628
        %v3794 = vadd.f32 %v2727, %v3717
        %v3795 = vadd.f32 %v2728, %v3630
        %v3796 = vadd.f32 %v2729, %v3719
        %v3797 = vadd.f32 %v2730, %v3633
        %v3798 = vadd.f32 %v2731, %v3722
        %v3799 = vadd.f32 %v2732, %v3635
        %v3800 = vadd.f32 %v2733, %v3724
        %v3801 = vadd.f32 %v2734, %v3638
        %v3802 = vadd.f32 %v2735, %v3727
        %v3803 = vadd.f32 %v2736, %v3640
        %v3804 = vadd.f32 %v2737, %v3729
        %v3805 = vadd.f32 %v2738, %v3643
        %v3806 = vadd.f32 %v2739, %v3732
        %v3807 = vadd.f32 %v2740, %v3645
        %v3808 = vadd.f32 %v2741, %v3734
        %v3809 = vadd.f32 %v2742, %v3648
        %v3810 = vadd.f32 %v2743, %v3737
        %v3811 = vadd.f32 %v2744, %v3650
        %v3812 = vadd.f32 %v2745, %v3739
        %v3813 = vadd.f32 %v2746, %v3653
        %v3814 = vadd.f32 %v2747, %v3742
        %v3815 = vadd.f32 %v2748, %v3655
        %v3816 = vadd.f32 %v2749, %v3744
        %v3817 = vadd.f32 %v2750, %v3658
        %v3818 = vadd.f32 %v2751, %v3747
        %v3819 = vadd.f32 %v2752, %v3660
        %v3820 = vadd.f32 %v2753, %v3749
        %v3821 = vadd.f32 %v2754, %v3663
        %v3822 = vadd.f32 %v2755, %v3752
        %v3823 = vadd.f32 %v2756, %v3665
        %v3824 = vadd.f32 %v2757, %v3754
        %v3825 = vadd.f32 %v2758, %v3668
        %v3826 = vadd.f32 %v2759, %v3757
        %v3827 = vadd.f32 %v2760, %v3670
        %v3828 = vadd.f32 %v2761, %v3759
        %v3829 = vadd.f32 %v2762, %v3673
        %v3830 = vadd.f32 %v2763, %v3762
        %v3831 = vadd.f32 %v2764, %v3675
        %v3832 = vadd.f32 %v2765, %v3764
        %v3833 = vadd.f32 %v2766, %v3678
        %v3834 = vadd.f32 %v2767, %v3767
        %v3835 = vadd.f32 %v2768, %v3680
        %v3836 = vadd.f32 %v2769, %v3769
        %v3837 = vadd.f32 %v2770, %v3683
        %v3838 = vadd.f32 %v2771, %v3772
        %v3839 = vadd.f32 %v2772, %v3685
        %v3840 = vadd.f32 %v2773, %v3774
        %v3841 = vadd.f32 %v2774, %v3688
        %v3842 = vadd.f32 %v2775, %v3777
        %v3843 = vadd.f32 %v2776, %v3690
        %v3844 = vadd.f32 %v2777, %v3779
        %s3845 = scalar_lea.vmem %s3, 112
        %v3846 = vld [vmem:[%s3845] sm:$0xff]
        %v3847 = vld [vmem:[%s3845 + $0x8] sm:$0xff]
        %v3848 = vld [vmem:[%s3845 + $0x10] sm:$0xff]
        %v3849 = vld [vmem:[%s3845 + $0x18] sm:$0xff]
        %v3850 = vld [vmem:[%s3845 + $0x20] sm:$0xff]
        %v3851 = vld [vmem:[%s3845 + $0x28] sm:$0xff]
        %v3852 = vld [vmem:[%s3845 + $0x30] sm:$0x33]
        %v3885 = vunpack.c.l.b16 %v3394
        %v3886 = vunpack.c.l.b16 %v3395
        %v3887 = vunpack.c.l.b16 %v3396
        %v3888 = vunpack.c.l.b16 %v3397
        %v3889 = vunpack.c.l.b16 %v3398
        %v3890 = vunpack.c.l.b16 %v3399
        %v3891 = vunpack.c.l.b16 %v3400
        %v3892 = vunpack.c.l.b16 %v3401
        %v3893 = vunpack.c.l.b16 %v3402
        %v3894 = vunpack.c.l.b16 %v3403
        %v3895 = vunpack.c.l.b16 %v3404
        %v3896 = vunpack.c.l.b16 %v3405
        %v3897 = vunpack.c.l.b16 %v3406
        %v3898 = vunpack.c.l.b16 %v3407
        %v3899 = vunpack.c.l.b16 %v3408
        %v3900 = vunpack.c.l.b16 %v3409
        %v3901 = vunpack.c.l.b16 %v3410
        %v3902 = vunpack.c.l.b16 %v3411
        %v3903 = vunpack.c.l.b16 %v3412
        %v3904 = vunpack.c.l.b16 %v3413
        %v3905 = vunpack.c.l.b16 %v3414
        %v3906 = vunpack.c.l.b16 %v3415
        %v3907 = vunpack.c.l.b16 %v3416
        %v3908 = vunpack.c.l.b16 %v3417
        %v3909 = vunpack.c.l.b16 %v3418
        %v3910 = vunpack.c.l.b16 %v3419
        %v3911 = vunpack.c.l.b16 %v3420
        %v3912 = vunpack.c.l.b16 %v3421
        %v3913 = vunpack.c.l.b16 %v3422
        %v3914 = vunpack.c.l.b16 %v3423
        %v3915 = vunpack.c.l.b16 %v3424
        %v3916 = vunpack.c.l.b16 %v3425
        %v3917 = vpack.c.b16 %v3886, %v3885
        %v3918 = vpack.c.b16 %v3888, %v3887
        %v3919 = vpack.c.b16 %v3890, %v3889
        %v3920 = vpack.c.b16 %v3892, %v3891
        %v3921 = vpack.c.b16 %v3894, %v3893
        %v3922 = vpack.c.b16 %v3896, %v3895
        %v3923 = vpack.c.b16 %v3898, %v3897
        %v3924 = vpack.c.b16 %v3900, %v3899
        %v3925 = vpack.c.b16 %v3902, %v3901
        %v3926 = vpack.c.b16 %v3904, %v3903
        %v3927 = vpack.c.b16 %v3906, %v3905
        %v3928 = vpack.c.b16 %v3908, %v3907
        %v3929 = vpack.c.b16 %v3910, %v3909
        %v3930 = vpack.c.b16 %v3912, %v3911
        %v3931 = vpack.c.b16 %v3914, %v3913
        %v3932 = vpack.c.b16 %v3916, %v3915
        %v3940 = vunpack.c.l.b16 %v3846
        %v3941 = vunpack.c.h.b16 %v3846
        %v3942 = vunpack.c.l.b16 %v3847
        %v3943 = vunpack.c.h.b16 %v3847
        %v3944 = vunpack.c.l.b16 %v3848
        %v3945 = vunpack.c.h.b16 %v3848
        %v3946 = vunpack.c.l.b16 %v3849
        %v3947 = vunpack.c.h.b16 %v3849
        %v3948 = vunpack.c.l.b16 %v3850
        %v3949 = vunpack.c.h.b16 %v3850
        %v3950 = vunpack.c.l.b16 %v3851
        %v3951 = vunpack.c.h.b16 %v3851
        %v3952 = vunpack.c.l.b16 %v3852
        %v3953 = vunpack.c.h.b16 %v3852
        %v3954 = vpack.c.b16 %v3942, %v3940
        %v3955 = vpack.c.b16 %v3943, %v3941
        %v3956 = vpack.c.b16 %v3946, %v3944
        %v3957 = vpack.c.b16 %v3947, %v3945
        %v3958 = vpack.c.b16 %v3950, %v3948
        %v3959 = vpack.c.b16 %v3951, %v3949
        %v3960 = vpack.c.b16 %v3952, %v3952
        %v3961 = vpack.c.b16 %v3953, %v3953
        %v3969 = vsel %vm838, %v3917, 0
        %v3972 = vsel %vm838, %v3918, 0
        %v3975 = vsel %vm838, %v3919, 0
        %v3978 = vsel %vm838, %v3920, 0
        %v3981 = vsel %vm838, %v3921, 0
        %v3984 = vsel %vm838, %v3922, 0
        %v3987 = vsel %vm838, %v3923, 0
        %v3990 = vsel %vm838, %v3924, 0
        %v3993 = vsel %vm838, %v3925, 0
        %v3996 = vsel %vm838, %v3926, 0
        %v3999 = vsel %vm838, %v3927, 0
        %v4002 = vsel %vm838, %v3928, 0
        %v4005 = vsel %vm838, %v3929, 0
        %v4008 = vsel %vm838, %v3930, 0
        %v4011 = vsel %vm838, %v3931, 0
        %v4014 = vsel %vm838, %v3932, 0
        %v4017 = vand.u32 %v3960, %v890
        %v4020 = vand.u32 %v3961, %v890
        %4022 = vmatpush.bf16.msra.mxu0 0
        %4023 = vmatpush.bf16.msra.mxu0 0
        %4024 = vmatpush.bf16.msra.mxu0 0
        %4025 = vmatpush.bf16.msra.mxu0 0
        %4026 = vmatpush.bf16.msra.mxu0 %v4017
        %4027 = vmatpush.bf16.msra.mxu0 %v3958
        %4028 = vmatpush.bf16.msra.mxu0 %v3956
        %4029 = vmatpush.bf16.msra.mxu0 %v3954
        %4030 = vmatmul.bf16.gmra.mxu0 %v3969
        %v4031 = vpop.f32.mrf.mxu0
        %v4032 = vadd.f32 0.0, %v4031
        %v4033 = vpop.f32.mrf.mxu0
        %v4034 = vadd.f32 0.0, %v4033
        %4035 = vmatmul.bf16.gmra.mxu0 %v3972
        %v4036 = vpop.f32.mrf.mxu0
        %v4037 = vadd.f32 0.0, %v4036
        %v4038 = vpop.f32.mrf.mxu0
        %v4039 = vadd.f32 0.0, %v4038
        %4040 = vmatmul.bf16.gmra.mxu0 %v3975
        %v4041 = vpop.f32.mrf.mxu0
        %v4042 = vadd.f32 0.0, %v4041
        %v4043 = vpop.f32.mrf.mxu0
        %v4044 = vadd.f32 0.0, %v4043
        %4045 = vmatmul.bf16.gmra.mxu0 %v3978
        %v4046 = vpop.f32.mrf.mxu0
        %v4047 = vadd.f32 0.0, %v4046
        %v4048 = vpop.f32.mrf.mxu0
        %v4049 = vadd.f32 0.0, %v4048
        %4050 = vmatmul.bf16.gmra.mxu0 %v3981
        %v4051 = vpop.f32.mrf.mxu0
        %v4052 = vadd.f32 0.0, %v4051
        %v4053 = vpop.f32.mrf.mxu0
        %v4054 = vadd.f32 0.0, %v4053
        %4055 = vmatmul.bf16.gmra.mxu0 %v3984
        %v4056 = vpop.f32.mrf.mxu0
        %v4057 = vadd.f32 0.0, %v4056
        %v4058 = vpop.f32.mrf.mxu0
        %v4059 = vadd.f32 0.0, %v4058
        %4060 = vmatmul.bf16.gmra.mxu0 %v3987
        %v4061 = vpop.f32.mrf.mxu0
        %v4062 = vadd.f32 0.0, %v4061
        %v4063 = vpop.f32.mrf.mxu0
        %v4064 = vadd.f32 0.0, %v4063
        %4065 = vmatmul.bf16.gmra.mxu0 %v3990
        %v4066 = vpop.f32.mrf.mxu0
        %v4067 = vadd.f32 0.0, %v4066
        %v4068 = vpop.f32.mrf.mxu0
        %v4069 = vadd.f32 0.0, %v4068
        %4070 = vmatmul.bf16.gmra.mxu0 %v3993
        %v4071 = vpop.f32.mrf.mxu0
        %v4072 = vadd.f32 0.0, %v4071
        %v4073 = vpop.f32.mrf.mxu0
        %v4074 = vadd.f32 0.0, %v4073
        %4075 = vmatmul.bf16.gmra.mxu0 %v3996
        %v4076 = vpop.f32.mrf.mxu0
        %v4077 = vadd.f32 0.0, %v4076
        %v4078 = vpop.f32.mrf.mxu0
        %v4079 = vadd.f32 0.0, %v4078
        %4080 = vmatmul.bf16.gmra.mxu0 %v3999
        %v4081 = vpop.f32.mrf.mxu0
        %v4082 = vadd.f32 0.0, %v4081
        %v4083 = vpop.f32.mrf.mxu0
        %v4084 = vadd.f32 0.0, %v4083
        %4085 = vmatmul.bf16.gmra.mxu0 %v4002
        %v4086 = vpop.f32.mrf.mxu0
        %v4087 = vadd.f32 0.0, %v4086
        %v4088 = vpop.f32.mrf.mxu0
        %v4089 = vadd.f32 0.0, %v4088
        %4090 = vmatmul.bf16.gmra.mxu0 %v4005
        %v4091 = vpop.f32.mrf.mxu0
        %v4092 = vadd.f32 0.0, %v4091
        %v4093 = vpop.f32.mrf.mxu0
        %v4094 = vadd.f32 0.0, %v4093
        %4095 = vmatmul.bf16.gmra.mxu0 %v4008
        %v4096 = vpop.f32.mrf.mxu0
        %v4097 = vadd.f32 0.0, %v4096
        %v4098 = vpop.f32.mrf.mxu0
        %v4099 = vadd.f32 0.0, %v4098
        %4100 = vmatmul.bf16.gmra.mxu0 %v4011
        %v4101 = vpop.f32.mrf.mxu0
        %v4102 = vadd.f32 0.0, %v4101
        %v4103 = vpop.f32.mrf.mxu0
        %v4104 = vadd.f32 0.0, %v4103
        %4105 = vmatmul.bf16.gmra.mxu0 %v4014
        %v4106 = vpop.f32.mrf.mxu0
        %v4107 = vadd.f32 0.0, %v4106
        %v4108 = vpop.f32.mrf.mxu0
        %v4109 = vadd.f32 0.0, %v4108
        %4110 = vdwg.mxu0
        %4111 = vmatpush.bf16.msra.mxu0 0
        %4112 = vmatpush.bf16.msra.mxu0 0
        %4113 = vmatpush.bf16.msra.mxu0 0
        %4114 = vmatpush.bf16.msra.mxu0 0
        %4115 = vmatpush.bf16.msra.mxu0 %v4020
        %4116 = vmatpush.bf16.msra.mxu0 %v3959
        %4117 = vmatpush.bf16.msra.mxu0 %v3957
        %4118 = vmatpush.bf16.msra.mxu0 %v3955
        %4119 = vmatmul.bf16.gmra.mxu0 %v3969
        %v4120 = vpop.f32.mrf.mxu0
        %v4121 = vadd.f32 0.0, %v4120
        %v4122 = vpop.f32.mrf.mxu0
        %v4123 = vadd.f32 0.0, %v4122
        %4124 = vmatmul.bf16.gmra.mxu0 %v3972
        %v4125 = vpop.f32.mrf.mxu0
        %v4126 = vadd.f32 0.0, %v4125
        %v4127 = vpop.f32.mrf.mxu0
        %v4128 = vadd.f32 0.0, %v4127
        %4129 = vmatmul.bf16.gmra.mxu0 %v3975
        %v4130 = vpop.f32.mrf.mxu0
        %v4131 = vadd.f32 0.0, %v4130
        %v4132 = vpop.f32.mrf.mxu0
        %v4133 = vadd.f32 0.0, %v4132
        %4134 = vmatmul.bf16.gmra.mxu0 %v3978
        %v4135 = vpop.f32.mrf.mxu0
        %v4136 = vadd.f32 0.0, %v4135
        %v4137 = vpop.f32.mrf.mxu0
        %v4138 = vadd.f32 0.0, %v4137
        %4139 = vmatmul.bf16.gmra.mxu0 %v3981
        %v4140 = vpop.f32.mrf.mxu0
        %v4141 = vadd.f32 0.0, %v4140
        %v4142 = vpop.f32.mrf.mxu0
        %v4143 = vadd.f32 0.0, %v4142
        %4144 = vmatmul.bf16.gmra.mxu0 %v3984
        %v4145 = vpop.f32.mrf.mxu0
        %v4146 = vadd.f32 0.0, %v4145
        %v4147 = vpop.f32.mrf.mxu0
        %v4148 = vadd.f32 0.0, %v4147
        %4149 = vmatmul.bf16.gmra.mxu0 %v3987
        %v4150 = vpop.f32.mrf.mxu0
        %v4151 = vadd.f32 0.0, %v4150
        %v4152 = vpop.f32.mrf.mxu0
        %v4153 = vadd.f32 0.0, %v4152
        %4154 = vmatmul.bf16.gmra.mxu0 %v3990
        %v4155 = vpop.f32.mrf.mxu0
        %v4156 = vadd.f32 0.0, %v4155
        %v4157 = vpop.f32.mrf.mxu0
        %v4158 = vadd.f32 0.0, %v4157
        %4159 = vmatmul.bf16.gmra.mxu0 %v3993
        %v4160 = vpop.f32.mrf.mxu0
        %v4161 = vadd.f32 0.0, %v4160
        %v4162 = vpop.f32.mrf.mxu0
        %v4163 = vadd.f32 0.0, %v4162
        %4164 = vmatmul.bf16.gmra.mxu0 %v3996
        %v4165 = vpop.f32.mrf.mxu0
        %v4166 = vadd.f32 0.0, %v4165
        %v4167 = vpop.f32.mrf.mxu0
        %v4168 = vadd.f32 0.0, %v4167
        %4169 = vmatmul.bf16.gmra.mxu0 %v3999
        %v4170 = vpop.f32.mrf.mxu0
        %v4171 = vadd.f32 0.0, %v4170
        %v4172 = vpop.f32.mrf.mxu0
        %v4173 = vadd.f32 0.0, %v4172
        %4174 = vmatmul.bf16.gmra.mxu0 %v4002
        %v4175 = vpop.f32.mrf.mxu0
        %v4176 = vadd.f32 0.0, %v4175
        %v4177 = vpop.f32.mrf.mxu0
        %v4178 = vadd.f32 0.0, %v4177
        %4179 = vmatmul.bf16.gmra.mxu0 %v4005
        %v4180 = vpop.f32.mrf.mxu0
        %v4181 = vadd.f32 0.0, %v4180
        %v4182 = vpop.f32.mrf.mxu0
        %v4183 = vadd.f32 0.0, %v4182
        %4184 = vmatmul.bf16.gmra.mxu0 %v4008
        %v4185 = vpop.f32.mrf.mxu0
        %v4186 = vadd.f32 0.0, %v4185
        %v4187 = vpop.f32.mrf.mxu0
        %v4188 = vadd.f32 0.0, %v4187
        %4189 = vmatmul.bf16.gmra.mxu0 %v4011
        %v4190 = vpop.f32.mrf.mxu0
        %v4191 = vadd.f32 0.0, %v4190
        %v4192 = vpop.f32.mrf.mxu0
        %v4193 = vadd.f32 0.0, %v4192
        %4194 = vmatmul.bf16.gmra.mxu0 %v4014
        %v4195 = vpop.f32.mrf.mxu0
        %v4196 = vadd.f32 0.0, %v4195
        %v4197 = vpop.f32.mrf.mxu0
        %v4198 = vadd.f32 0.0, %v4197
        %4199 = vdwg.mxu0
        %v4200 = vadd.f32 %v3781, %v4032
        %v4201 = vadd.f32 %v3782, %v4121
        %v4202 = vadd.f32 %v3783, %v4034
        %v4203 = vadd.f32 %v3784, %v4123
        %v4204 = vadd.f32 %v3785, %v4037
        %v4205 = vadd.f32 %v3786, %v4126
        %v4206 = vadd.f32 %v3787, %v4039
        %v4207 = vadd.f32 %v3788, %v4128
        %v4208 = vadd.f32 %v3789, %v4042
        %v4209 = vadd.f32 %v3790, %v4131
        %v4210 = vadd.f32 %v3791, %v4044
        %v4211 = vadd.f32 %v3792, %v4133
        %v4212 = vadd.f32 %v3793, %v4047
        %v4213 = vadd.f32 %v3794, %v4136
        %v4214 = vadd.f32 %v3795, %v4049
        %v4215 = vadd.f32 %v3796, %v4138
        %v4216 = vadd.f32 %v3797, %v4052
        %v4217 = vadd.f32 %v3798, %v4141
        %v4218 = vadd.f32 %v3799, %v4054
        %v4219 = vadd.f32 %v3800, %v4143
        %v4220 = vadd.f32 %v3801, %v4057
        %v4221 = vadd.f32 %v3802, %v4146
        %v4222 = vadd.f32 %v3803, %v4059
        %v4223 = vadd.f32 %v3804, %v4148
        %v4224 = vadd.f32 %v3805, %v4062
        %v4225 = vadd.f32 %v3806, %v4151
        %v4226 = vadd.f32 %v3807, %v4064
        %v4227 = vadd.f32 %v3808, %v4153
        %v4228 = vadd.f32 %v3809, %v4067
        %v4229 = vadd.f32 %v3810, %v4156
        %v4230 = vadd.f32 %v3811, %v4069
        %v4231 = vadd.f32 %v3812, %v4158
        %v4232 = vadd.f32 %v3813, %v4072
        %v4233 = vadd.f32 %v3814, %v4161
        %v4234 = vadd.f32 %v3815, %v4074
        %v4235 = vadd.f32 %v3816, %v4163
        %v4236 = vadd.f32 %v3817, %v4077
        %v4237 = vadd.f32 %v3818, %v4166
        %v4238 = vadd.f32 %v3819, %v4079
        %v4239 = vadd.f32 %v3820, %v4168
        %v4240 = vadd.f32 %v3821, %v4082
        %v4241 = vadd.f32 %v3822, %v4171
        %v4242 = vadd.f32 %v3823, %v4084
        %v4243 = vadd.f32 %v3824, %v4173
        %v4244 = vadd.f32 %v3825, %v4087
        %v4245 = vadd.f32 %v3826, %v4176
        %v4246 = vadd.f32 %v3827, %v4089
        %v4247 = vadd.f32 %v3828, %v4178
        %v4248 = vadd.f32 %v3829, %v4092
        %v4249 = vadd.f32 %v3830, %v4181
        %v4250 = vadd.f32 %v3831, %v4094
        %v4251 = vadd.f32 %v3832, %v4183
        %v4252 = vadd.f32 %v3833, %v4097
        %v4253 = vadd.f32 %v3834, %v4186
        %v4254 = vadd.f32 %v3835, %v4099
        %v4255 = vadd.f32 %v3836, %v4188
        %v4256 = vadd.f32 %v3837, %v4102
        %v4257 = vadd.f32 %v3838, %v4191
        %v4258 = vadd.f32 %v3839, %v4104
        %v4259 = vadd.f32 %v3840, %v4193
        %v4260 = vadd.f32 %v3841, %v4107
        %v4261 = vadd.f32 %v3842, %v4196
        %v4262 = vadd.f32 %v3843, %v4109
        %v4263 = vadd.f32 %v3844, %v4198
        %s4264 = scalar_lea.vmem %s5, 112
        %v4265 = vld [vmem:[%s4264] sm:$0xff]
        %v4266 = vld [vmem:[%s4264 + $0x8] sm:$0xff]
        %v4267 = vld [vmem:[%s4264 + $0x10] sm:$0xff]
        %v4268 = vld [vmem:[%s4264 + $0x18] sm:$0xff]
        %v4269 = vld [vmem:[%s4264 + $0x20] sm:$0xff]
        %v4270 = vld [vmem:[%s4264 + $0x28] sm:$0xff]
        %v4271 = vld [vmem:[%s4264 + $0x30] sm:$0x33]
        %v4279 = vunpack.c.l.b16 %v4265
        %v4280 = vunpack.c.h.b16 %v4265
        %v4281 = vunpack.c.l.b16 %v4266
        %v4282 = vunpack.c.h.b16 %v4266
        %v4283 = vunpack.c.l.b16 %v4267
        %v4284 = vunpack.c.h.b16 %v4267
        %v4285 = vunpack.c.l.b16 %v4268
        %v4286 = vunpack.c.h.b16 %v4268
        %v4287 = vunpack.c.l.b16 %v4269
        %v4288 = vunpack.c.h.b16 %v4269
        %v4289 = vunpack.c.l.b16 %v4270
        %v4290 = vunpack.c.h.b16 %v4270
        %v4291 = vunpack.c.l.b16 %v4271
        %v4292 = vunpack.c.h.b16 %v4271
        %v4293 = vpack.c.b16 %v4281, %v4279
        %v4294 = vpack.c.b16 %v4282, %v4280
        %v4295 = vpack.c.b16 %v4285, %v4283
        %v4296 = vpack.c.b16 %v4286, %v4284
        %v4297 = vpack.c.b16 %v4289, %v4287
        %v4298 = vpack.c.b16 %v4290, %v4288
        %v4299 = vpack.c.b16 %v4291, %v4291
        %v4300 = vpack.c.b16 %v4292, %v4292
        %v4308 = vand.u32 %v4299, %v890
        %v4311 = vand.u32 %v4300, %v890
        %4313 = vmatpush.bf16.msra.mxu0 0
        %4314 = vmatpush.bf16.msra.mxu0 0
        %4315 = vmatpush.bf16.msra.mxu0 0
        %4316 = vmatpush.bf16.msra.mxu0 0
        %4317 = vmatpush.bf16.msra.mxu0 %v4308
        %4318 = vmatpush.bf16.msra.mxu0 %v4297
        %4319 = vmatpush.bf16.msra.mxu0 %v4295
        %4320 = vmatpush.bf16.msra.mxu0 %v4293
        %4321 = vmatmul.bf16.gmra.mxu0 %v3969
        %v4322 = vpop.f32.mrf.mxu0
        %v4323 = vadd.f32 0.0, %v4322
        %v4324 = vpop.f32.mrf.mxu0
        %v4325 = vadd.f32 0.0, %v4324
        %4326 = vmatmul.bf16.gmra.mxu0 %v3972
        %v4327 = vpop.f32.mrf.mxu0
        %v4328 = vadd.f32 0.0, %v4327
        %v4329 = vpop.f32.mrf.mxu0
        %v4330 = vadd.f32 0.0, %v4329
        %4331 = vmatmul.bf16.gmra.mxu0 %v3975
        %v4332 = vpop.f32.mrf.mxu0
        %v4333 = vadd.f32 0.0, %v4332
        %v4334 = vpop.f32.mrf.mxu0
        %v4335 = vadd.f32 0.0, %v4334
        %4336 = vmatmul.bf16.gmra.mxu0 %v3978
        %v4337 = vpop.f32.mrf.mxu0
        %v4338 = vadd.f32 0.0, %v4337
        %v4339 = vpop.f32.mrf.mxu0
        %v4340 = vadd.f32 0.0, %v4339
        %4341 = vmatmul.bf16.gmra.mxu0 %v3981
        %v4342 = vpop.f32.mrf.mxu0
        %v4343 = vadd.f32 0.0, %v4342
        %v4344 = vpop.f32.mrf.mxu0
        %v4345 = vadd.f32 0.0, %v4344
        %4346 = vmatmul.bf16.gmra.mxu0 %v3984
        %v4347 = vpop.f32.mrf.mxu0
        %v4348 = vadd.f32 0.0, %v4347
        %v4349 = vpop.f32.mrf.mxu0
        %v4350 = vadd.f32 0.0, %v4349
        %4351 = vmatmul.bf16.gmra.mxu0 %v3987
        %v4352 = vpop.f32.mrf.mxu0
        %v4353 = vadd.f32 0.0, %v4352
        %v4354 = vpop.f32.mrf.mxu0
        %v4355 = vadd.f32 0.0, %v4354
        %4356 = vmatmul.bf16.gmra.mxu0 %v3990
        %v4357 = vpop.f32.mrf.mxu0
        %v4358 = vadd.f32 0.0, %v4357
        %v4359 = vpop.f32.mrf.mxu0
        %v4360 = vadd.f32 0.0, %v4359
        %4361 = vmatmul.bf16.gmra.mxu0 %v3993
        %v4362 = vpop.f32.mrf.mxu0
        %v4363 = vadd.f32 0.0, %v4362
        %v4364 = vpop.f32.mrf.mxu0
        %v4365 = vadd.f32 0.0, %v4364
        %4366 = vmatmul.bf16.gmra.mxu0 %v3996
        %v4367 = vpop.f32.mrf.mxu0
        %v4368 = vadd.f32 0.0, %v4367
        %v4369 = vpop.f32.mrf.mxu0
        %v4370 = vadd.f32 0.0, %v4369
        %4371 = vmatmul.bf16.gmra.mxu0 %v3999
        %v4372 = vpop.f32.mrf.mxu0
        %v4373 = vadd.f32 0.0, %v4372
        %v4374 = vpop.f32.mrf.mxu0
        %v4375 = vadd.f32 0.0, %v4374
        %4376 = vmatmul.bf16.gmra.mxu0 %v4002
        %v4377 = vpop.f32.mrf.mxu0
        %v4378 = vadd.f32 0.0, %v4377
        %v4379 = vpop.f32.mrf.mxu0
        %v4380 = vadd.f32 0.0, %v4379
        %4381 = vmatmul.bf16.gmra.mxu0 %v4005
        %v4382 = vpop.f32.mrf.mxu0
        %v4383 = vadd.f32 0.0, %v4382
        %v4384 = vpop.f32.mrf.mxu0
        %v4385 = vadd.f32 0.0, %v4384
        %4386 = vmatmul.bf16.gmra.mxu0 %v4008
        %v4387 = vpop.f32.mrf.mxu0
        %v4388 = vadd.f32 0.0, %v4387
        %v4389 = vpop.f32.mrf.mxu0
        %v4390 = vadd.f32 0.0, %v4389
        %4391 = vmatmul.bf16.gmra.mxu0 %v4011
        %v4392 = vpop.f32.mrf.mxu0
        %v4393 = vadd.f32 0.0, %v4392
        %v4394 = vpop.f32.mrf.mxu0
        %v4395 = vadd.f32 0.0, %v4394
        %4396 = vmatmul.bf16.gmra.mxu0 %v4014
        %v4397 = vpop.f32.mrf.mxu0
        %v4398 = vadd.f32 0.0, %v4397
        %v4399 = vpop.f32.mrf.mxu0
        %v4400 = vadd.f32 0.0, %v4399
        %4401 = vdwg.mxu0
        %4402 = vmatpush.bf16.msra.mxu0 0
        %4403 = vmatpush.bf16.msra.mxu0 0
        %4404 = vmatpush.bf16.msra.mxu0 0
        %4405 = vmatpush.bf16.msra.mxu0 0
        %4406 = vmatpush.bf16.msra.mxu0 %v4311
        %4407 = vmatpush.bf16.msra.mxu0 %v4298
        %4408 = vmatpush.bf16.msra.mxu0 %v4296
        %4409 = vmatpush.bf16.msra.mxu0 %v4294
        %4410 = vmatmul.bf16.gmra.mxu0 %v3969
        %v4411 = vpop.f32.mrf.mxu0
        %v4412 = vadd.f32 0.0, %v4411
        %v4413 = vpop.f32.mrf.mxu0
        %v4414 = vadd.f32 0.0, %v4413
        %4415 = vmatmul.bf16.gmra.mxu0 %v3972
        %v4416 = vpop.f32.mrf.mxu0
        %v4417 = vadd.f32 0.0, %v4416
        %v4418 = vpop.f32.mrf.mxu0
        %v4419 = vadd.f32 0.0, %v4418
        %4420 = vmatmul.bf16.gmra.mxu0 %v3975
        %v4421 = vpop.f32.mrf.mxu0
        %v4422 = vadd.f32 0.0, %v4421
        %v4423 = vpop.f32.mrf.mxu0
        %v4424 = vadd.f32 0.0, %v4423
        %4425 = vmatmul.bf16.gmra.mxu0 %v3978
        %v4426 = vpop.f32.mrf.mxu0
        %v4427 = vadd.f32 0.0, %v4426
        %v4428 = vpop.f32.mrf.mxu0
        %v4429 = vadd.f32 0.0, %v4428
        %4430 = vmatmul.bf16.gmra.mxu0 %v3981
        %v4431 = vpop.f32.mrf.mxu0
        %v4432 = vadd.f32 0.0, %v4431
        %v4433 = vpop.f32.mrf.mxu0
        %v4434 = vadd.f32 0.0, %v4433
        %4435 = vmatmul.bf16.gmra.mxu0 %v3984
        %v4436 = vpop.f32.mrf.mxu0
        %v4437 = vadd.f32 0.0, %v4436
        %v4438 = vpop.f32.mrf.mxu0
        %v4439 = vadd.f32 0.0, %v4438
        %4440 = vmatmul.bf16.gmra.mxu0 %v3987
        %v4441 = vpop.f32.mrf.mxu0
        %v4442 = vadd.f32 0.0, %v4441
        %v4443 = vpop.f32.mrf.mxu0
        %v4444 = vadd.f32 0.0, %v4443
        %4445 = vmatmul.bf16.gmra.mxu0 %v3990
        %v4446 = vpop.f32.mrf.mxu0
        %v4447 = vadd.f32 0.0, %v4446
        %v4448 = vpop.f32.mrf.mxu0
        %v4449 = vadd.f32 0.0, %v4448
        %4450 = vmatmul.bf16.gmra.mxu0 %v3993
        %v4451 = vpop.f32.mrf.mxu0
        %v4452 = vadd.f32 0.0, %v4451
        %v4453 = vpop.f32.mrf.mxu0
        %v4454 = vadd.f32 0.0, %v4453
        %4455 = vmatmul.bf16.gmra.mxu0 %v3996
        %v4456 = vpop.f32.mrf.mxu0
        %v4457 = vadd.f32 0.0, %v4456
        %v4458 = vpop.f32.mrf.mxu0
        %v4459 = vadd.f32 0.0, %v4458
        %4460 = vmatmul.bf16.gmra.mxu0 %v3999
        %v4461 = vpop.f32.mrf.mxu0
        %v4462 = vadd.f32 0.0, %v4461
        %v4463 = vpop.f32.mrf.mxu0
        %v4464 = vadd.f32 0.0, %v4463
        %4465 = vmatmul.bf16.gmra.mxu0 %v4002
        %v4466 = vpop.f32.mrf.mxu0
        %v4467 = vadd.f32 0.0, %v4466
        %v4468 = vpop.f32.mrf.mxu0
        %v4469 = vadd.f32 0.0, %v4468
        %4470 = vmatmul.bf16.gmra.mxu0 %v4005
        %v4471 = vpop.f32.mrf.mxu0
        %v4472 = vadd.f32 0.0, %v4471
        %v4473 = vpop.f32.mrf.mxu0
        %v4474 = vadd.f32 0.0, %v4473
        %4475 = vmatmul.bf16.gmra.mxu0 %v4008
        %v4476 = vpop.f32.mrf.mxu0
        %v4477 = vadd.f32 0.0, %v4476
        %v4478 = vpop.f32.mrf.mxu0
        %v4479 = vadd.f32 0.0, %v4478
        %4480 = vmatmul.bf16.gmra.mxu0 %v4011
        %v4481 = vpop.f32.mrf.mxu0
        %v4482 = vadd.f32 0.0, %v4481
        %v4483 = vpop.f32.mrf.mxu0
        %v4484 = vadd.f32 0.0, %v4483
        %4485 = vmatmul.bf16.gmra.mxu0 %v4014
        %v4486 = vpop.f32.mrf.mxu0
        %v4487 = vadd.f32 0.0, %v4486
        %v4488 = vpop.f32.mrf.mxu0
        %v4489 = vadd.f32 0.0, %v4488
        %4490 = vdwg.mxu0
        %v4491 = vadd.f32 %v3296, %v4323
        %v4492 = vadd.f32 %v3297, %v4412
        %v4493 = vadd.f32 %v3298, %v4325
        %v4494 = vadd.f32 %v3299, %v4414
        %v4495 = vadd.f32 %v3300, %v4328
        %v4496 = vadd.f32 %v3301, %v4417
        %v4497 = vadd.f32 %v3302, %v4330
        %v4498 = vadd.f32 %v3303, %v4419
        %v4499 = vadd.f32 %v3304, %v4333
        %v4500 = vadd.f32 %v3305, %v4422
        %v4501 = vadd.f32 %v3306, %v4335
        %v4502 = vadd.f32 %v3307, %v4424
        %v4503 = vadd.f32 %v3308, %v4338
        %v4504 = vadd.f32 %v3309, %v4427
        %v4505 = vadd.f32 %v3310, %v4340
        %v4506 = vadd.f32 %v3311, %v4429
        %v4507 = vadd.f32 %v3312, %v4343
        %v4508 = vadd.f32 %v3313, %v4432
        %v4509 = vadd.f32 %v3314, %v4345
        %v4510 = vadd.f32 %v3315, %v4434
        %v4511 = vadd.f32 %v3316, %v4348
        %v4512 = vadd.f32 %v3317, %v4437
        %v4513 = vadd.f32 %v3318, %v4350
        %v4514 = vadd.f32 %v3319, %v4439
        %v4515 = vadd.f32 %v3320, %v4353
        %v4516 = vadd.f32 %v3321, %v4442
        %v4517 = vadd.f32 %v3322, %v4355
        %v4518 = vadd.f32 %v3323, %v4444
        %v4519 = vadd.f32 %v3324, %v4358
        %v4520 = vadd.f32 %v3325, %v4447
        %v4521 = vadd.f32 %v3326, %v4360
        %v4522 = vadd.f32 %v3327, %v4449
        %v4523 = vadd.f32 %v3328, %v4363
        %v4524 = vadd.f32 %v3329, %v4452
        %v4525 = vadd.f32 %v3330, %v4365
        %v4526 = vadd.f32 %v3331, %v4454
        %v4527 = vadd.f32 %v3332, %v4368
        %v4528 = vadd.f32 %v3333, %v4457
        %v4529 = vadd.f32 %v3334, %v4370
        %v4530 = vadd.f32 %v3335, %v4459
        %v4531 = vadd.f32 %v3336, %v4373
        %v4532 = vadd.f32 %v3337, %v4462
        %v4533 = vadd.f32 %v3338, %v4375
        %v4534 = vadd.f32 %v3339, %v4464
        %v4535 = vadd.f32 %v3340, %v4378
        %v4536 = vadd.f32 %v3341, %v4467
        %v4537 = vadd.f32 %v3342, %v4380
        %v4538 = vadd.f32 %v3343, %v4469
        %v4539 = vadd.f32 %v3344, %v4383
        %v4540 = vadd.f32 %v3345, %v4472
        %v4541 = vadd.f32 %v3346, %v4385
        %v4542 = vadd.f32 %v3347, %v4474
        %v4543 = vadd.f32 %v3348, %v4388
        %v4544 = vadd.f32 %v3349, %v4477
        %v4545 = vadd.f32 %v3350, %v4390
        %v4546 = vadd.f32 %v3351, %v4479
        %v4547 = vadd.f32 %v3352, %v4393
        %v4548 = vadd.f32 %v3353, %v4482
        %v4549 = vadd.f32 %v3354, %v4395
        %v4550 = vadd.f32 %v3355, %v4484
        %v4551 = vadd.f32 %v3356, %v4398
        %v4552 = vadd.f32 %v3357, %v4487
        %v4553 = vadd.f32 %v3358, %v4400
        %v4554 = vadd.f32 %v3359, %v4489
        %s4555 = scalar_lea.vmem %s4, 112
        %v4556 = vld [vmem:[%s4555] sm:$0xff]
        %v4557 = vld [vmem:[%s4555 + $0x8] sm:$0xff]
        %v4558 = vld [vmem:[%s4555 + $0x10] sm:$0xff]
        %v4559 = vld [vmem:[%s4555 + $0x18] sm:$0xff]
        %v4560 = vld [vmem:[%s4555 + $0x20] sm:$0xff]
        %v4561 = vld [vmem:[%s4555 + $0x28] sm:$0xff]
        %v4562 = vld [vmem:[%s4555 + $0x30] sm:$0x33]
        %v4570 = vunpack.c.l.b16 %v4556
        %v4571 = vunpack.c.h.b16 %v4556
        %v4572 = vunpack.c.l.b16 %v4557
        %v4573 = vunpack.c.h.b16 %v4557
        %v4574 = vunpack.c.l.b16 %v4558
        %v4575 = vunpack.c.h.b16 %v4558
        %v4576 = vunpack.c.l.b16 %v4559
        %v4577 = vunpack.c.h.b16 %v4559
        %v4578 = vunpack.c.l.b16 %v4560
        %v4579 = vunpack.c.h.b16 %v4560
        %v4580 = vunpack.c.l.b16 %v4561
        %v4581 = vunpack.c.h.b16 %v4561
        %v4582 = vunpack.c.l.b16 %v4562
        %v4583 = vunpack.c.h.b16 %v4562
        %v4584 = vpack.c.b16 %v4572, %v4570
        %v4585 = vpack.c.b16 %v4573, %v4571
        %v4586 = vpack.c.b16 %v4576, %v4574
        %v4587 = vpack.c.b16 %v4577, %v4575
        %v4588 = vpack.c.b16 %v4580, %v4578
        %v4589 = vpack.c.b16 %v4581, %v4579
        %v4590 = vpack.c.b16 %v4582, %v4582
        %v4591 = vpack.c.b16 %v4583, %v4583
        %v4599 = vand.u32 %v4590, %v890
        %v4602 = vand.u32 %v4591, %v890
        %4604 = vmatpush.bf16.msra.mxu0 0
        %4605 = vmatpush.bf16.msra.mxu0 0
        %4606 = vmatpush.bf16.msra.mxu0 0
        %4607 = vmatpush.bf16.msra.mxu0 0
        %4608 = vmatpush.bf16.msra.mxu0 %v4599
        %4609 = vmatpush.bf16.msra.mxu0 %v4588
        %4610 = vmatpush.bf16.msra.mxu0 %v4586
        %4611 = vmatpush.bf16.msra.mxu0 %v4584
        %4612 = vmatmul.bf16.gmra.mxu0 %v3550
        %v4613 = vpop.f32.mrf.mxu0
        %v4614 = vadd.f32 0.0, %v4613
        %v4615 = vpop.f32.mrf.mxu0
        %v4616 = vadd.f32 0.0, %v4615
        %4617 = vmatmul.bf16.gmra.mxu0 %v3553
        %v4618 = vpop.f32.mrf.mxu0
        %v4619 = vadd.f32 0.0, %v4618
        %v4620 = vpop.f32.mrf.mxu0
        %v4621 = vadd.f32 0.0, %v4620
        %4622 = vmatmul.bf16.gmra.mxu0 %v3556
        %v4623 = vpop.f32.mrf.mxu0
        %v4624 = vadd.f32 0.0, %v4623
        %v4625 = vpop.f32.mrf.mxu0
        %v4626 = vadd.f32 0.0, %v4625
        %4627 = vmatmul.bf16.gmra.mxu0 %v3559
        %v4628 = vpop.f32.mrf.mxu0
        %v4629 = vadd.f32 0.0, %v4628
        %v4630 = vpop.f32.mrf.mxu0
        %v4631 = vadd.f32 0.0, %v4630
        %4632 = vmatmul.bf16.gmra.mxu0 %v3562
        %v4633 = vpop.f32.mrf.mxu0
        %v4634 = vadd.f32 0.0, %v4633
        %v4635 = vpop.f32.mrf.mxu0
        %v4636 = vadd.f32 0.0, %v4635
        %4637 = vmatmul.bf16.gmra.mxu0 %v3565
        %v4638 = vpop.f32.mrf.mxu0
        %v4639 = vadd.f32 0.0, %v4638
        %v4640 = vpop.f32.mrf.mxu0
        %v4641 = vadd.f32 0.0, %v4640
        %4642 = vmatmul.bf16.gmra.mxu0 %v3568
        %v4643 = vpop.f32.mrf.mxu0
        %v4644 = vadd.f32 0.0, %v4643
        %v4645 = vpop.f32.mrf.mxu0
        %v4646 = vadd.f32 0.0, %v4645
        %4647 = vmatmul.bf16.gmra.mxu0 %v3571
        %v4648 = vpop.f32.mrf.mxu0
        %v4649 = vadd.f32 0.0, %v4648
        %v4650 = vpop.f32.mrf.mxu0
        %v4651 = vadd.f32 0.0, %v4650
        %4652 = vmatmul.bf16.gmra.mxu0 %v3574
        %v4653 = vpop.f32.mrf.mxu0
        %v4654 = vadd.f32 0.0, %v4653
        %v4655 = vpop.f32.mrf.mxu0
        %v4656 = vadd.f32 0.0, %v4655
        %4657 = vmatmul.bf16.gmra.mxu0 %v3577
        %v4658 = vpop.f32.mrf.mxu0
        %v4659 = vadd.f32 0.0, %v4658
        %v4660 = vpop.f32.mrf.mxu0
        %v4661 = vadd.f32 0.0, %v4660
        %4662 = vmatmul.bf16.gmra.mxu0 %v3580
        %v4663 = vpop.f32.mrf.mxu0
        %v4664 = vadd.f32 0.0, %v4663
        %v4665 = vpop.f32.mrf.mxu0
        %v4666 = vadd.f32 0.0, %v4665
        %4667 = vmatmul.bf16.gmra.mxu0 %v3583
        %v4668 = vpop.f32.mrf.mxu0
        %v4669 = vadd.f32 0.0, %v4668
        %v4670 = vpop.f32.mrf.mxu0
        %v4671 = vadd.f32 0.0, %v4670
        %4672 = vmatmul.bf16.gmra.mxu0 %v3586
        %v4673 = vpop.f32.mrf.mxu0
        %v4674 = vadd.f32 0.0, %v4673
        %v4675 = vpop.f32.mrf.mxu0
        %v4676 = vadd.f32 0.0, %v4675
        %4677 = vmatmul.bf16.gmra.mxu0 %v3589
        %v4678 = vpop.f32.mrf.mxu0
        %v4679 = vadd.f32 0.0, %v4678
        %v4680 = vpop.f32.mrf.mxu0
        %v4681 = vadd.f32 0.0, %v4680
        %4682 = vmatmul.bf16.gmra.mxu0 %v3592
        %v4683 = vpop.f32.mrf.mxu0
        %v4684 = vadd.f32 0.0, %v4683
        %v4685 = vpop.f32.mrf.mxu0
        %v4686 = vadd.f32 0.0, %v4685
        %4687 = vmatmul.bf16.gmra.mxu0 %v3595
        %v4688 = vpop.f32.mrf.mxu0
        %v4689 = vadd.f32 0.0, %v4688
        %v4690 = vpop.f32.mrf.mxu0
        %v4691 = vadd.f32 0.0, %v4690
        %4692 = vdwg.mxu0
        %4693 = vmatpush.bf16.msra.mxu0 0
        %4694 = vmatpush.bf16.msra.mxu0 0
        %4695 = vmatpush.bf16.msra.mxu0 0
        %4696 = vmatpush.bf16.msra.mxu0 0
        %4697 = vmatpush.bf16.msra.mxu0 %v4602
        %4698 = vmatpush.bf16.msra.mxu0 %v4589
        %4699 = vmatpush.bf16.msra.mxu0 %v4587
        %4700 = vmatpush.bf16.msra.mxu0 %v4585
        %4701 = vmatmul.bf16.gmra.mxu0 %v3550
        %v4702 = vpop.f32.mrf.mxu0
        %v4703 = vadd.f32 0.0, %v4702
        %v4704 = vpop.f32.mrf.mxu0
        %v4705 = vadd.f32 0.0, %v4704
        %4706 = vmatmul.bf16.gmra.mxu0 %v3553
        %v4707 = vpop.f32.mrf.mxu0
        %v4708 = vadd.f32 0.0, %v4707
        %v4709 = vpop.f32.mrf.mxu0
        %v4710 = vadd.f32 0.0, %v4709
        %4711 = vmatmul.bf16.gmra.mxu0 %v3556
        %v4712 = vpop.f32.mrf.mxu0
        %v4713 = vadd.f32 0.0, %v4712
        %v4714 = vpop.f32.mrf.mxu0
        %v4715 = vadd.f32 0.0, %v4714
        %4716 = vmatmul.bf16.gmra.mxu0 %v3559
        %v4717 = vpop.f32.mrf.mxu0
        %v4718 = vadd.f32 0.0, %v4717
        %v4719 = vpop.f32.mrf.mxu0
        %v4720 = vadd.f32 0.0, %v4719
        %4721 = vmatmul.bf16.gmra.mxu0 %v3562
        %v4722 = vpop.f32.mrf.mxu0
        %v4723 = vadd.f32 0.0, %v4722
        %v4724 = vpop.f32.mrf.mxu0
        %v4725 = vadd.f32 0.0, %v4724
        %4726 = vmatmul.bf16.gmra.mxu0 %v3565
        %v4727 = vpop.f32.mrf.mxu0
        %v4728 = vadd.f32 0.0, %v4727
        %v4729 = vpop.f32.mrf.mxu0
        %v4730 = vadd.f32 0.0, %v4729
        %4731 = vmatmul.bf16.gmra.mxu0 %v3568
        %v4732 = vpop.f32.mrf.mxu0
        %v4733 = vadd.f32 0.0, %v4732
        %v4734 = vpop.f32.mrf.mxu0
        %v4735 = vadd.f32 0.0, %v4734
        %4736 = vmatmul.bf16.gmra.mxu0 %v3571
        %v4737 = vpop.f32.mrf.mxu0
        %v4738 = vadd.f32 0.0, %v4737
        %v4739 = vpop.f32.mrf.mxu0
        %v4740 = vadd.f32 0.0, %v4739
        %4741 = vmatmul.bf16.gmra.mxu0 %v3574
        %v4742 = vpop.f32.mrf.mxu0
        %v4743 = vadd.f32 0.0, %v4742
        %v4744 = vpop.f32.mrf.mxu0
        %v4745 = vadd.f32 0.0, %v4744
        %4746 = vmatmul.bf16.gmra.mxu0 %v3577
        %v4747 = vpop.f32.mrf.mxu0
        %v4748 = vadd.f32 0.0, %v4747
        %v4749 = vpop.f32.mrf.mxu0
        %v4750 = vadd.f32 0.0, %v4749
        %4751 = vmatmul.bf16.gmra.mxu0 %v3580
        %v4752 = vpop.f32.mrf.mxu0
        %v4753 = vadd.f32 0.0, %v4752
        %v4754 = vpop.f32.mrf.mxu0
        %v4755 = vadd.f32 0.0, %v4754
        %4756 = vmatmul.bf16.gmra.mxu0 %v3583
        %v4757 = vpop.f32.mrf.mxu0
        %v4758 = vadd.f32 0.0, %v4757
        %v4759 = vpop.f32.mrf.mxu0
        %v4760 = vadd.f32 0.0, %v4759
        %4761 = vmatmul.bf16.gmra.mxu0 %v3586
        %v4762 = vpop.f32.mrf.mxu0
        %v4763 = vadd.f32 0.0, %v4762
        %v4764 = vpop.f32.mrf.mxu0
        %v4765 = vadd.f32 0.0, %v4764
        %4766 = vmatmul.bf16.gmra.mxu0 %v3589
        %v4767 = vpop.f32.mrf.mxu0
        %v4768 = vadd.f32 0.0, %v4767
        %v4769 = vpop.f32.mrf.mxu0
        %v4770 = vadd.f32 0.0, %v4769
        %4771 = vmatmul.bf16.gmra.mxu0 %v3592
        %v4772 = vpop.f32.mrf.mxu0
        %v4773 = vadd.f32 0.0, %v4772
        %v4774 = vpop.f32.mrf.mxu0
        %v4775 = vadd.f32 0.0, %v4774
        %4776 = vmatmul.bf16.gmra.mxu0 %v3595
        %v4777 = vpop.f32.mrf.mxu0
        %v4778 = vadd.f32 0.0, %v4777
        %v4779 = vpop.f32.mrf.mxu0
        %v4780 = vadd.f32 0.0, %v4779
        %4781 = vdwg.mxu0
        %v4782 = vadd.f32 %v4491, %v4614
        %v4783 = vadd.f32 %v4492, %v4703
        %v4784 = vadd.f32 %v4493, %v4616
        %v4785 = vadd.f32 %v4494, %v4705
        %v4786 = vadd.f32 %v4495, %v4619
        %v4787 = vadd.f32 %v4496, %v4708
        %v4788 = vadd.f32 %v4497, %v4621
        %v4789 = vadd.f32 %v4498, %v4710
        %v4790 = vadd.f32 %v4499, %v4624
        %v4791 = vadd.f32 %v4500, %v4713
        %v4792 = vadd.f32 %v4501, %v4626
        %v4793 = vadd.f32 %v4502, %v4715
        %v4794 = vadd.f32 %v4503, %v4629
        %v4795 = vadd.f32 %v4504, %v4718
        %v4796 = vadd.f32 %v4505, %v4631
        %v4797 = vadd.f32 %v4506, %v4720
        %v4798 = vadd.f32 %v4507, %v4634
        %v4799 = vadd.f32 %v4508, %v4723
        %v4800 = vadd.f32 %v4509, %v4636
        %v4801 = vadd.f32 %v4510, %v4725
        %v4802 = vadd.f32 %v4511, %v4639
        %v4803 = vadd.f32 %v4512, %v4728
        %v4804 = vadd.f32 %v4513, %v4641
        %v4805 = vadd.f32 %v4514, %v4730
        %v4806 = vadd.f32 %v4515, %v4644
        %v4807 = vadd.f32 %v4516, %v4733
        %v4808 = vadd.f32 %v4517, %v4646
        %v4809 = vadd.f32 %v4518, %v4735
        %v4810 = vadd.f32 %v4519, %v4649
        %v4811 = vadd.f32 %v4520, %v4738
        %v4812 = vadd.f32 %v4521, %v4651
        %v4813 = vadd.f32 %v4522, %v4740
        %v4814 = vadd.f32 %v4523, %v4654
        %v4815 = vadd.f32 %v4524, %v4743
        %v4816 = vadd.f32 %v4525, %v4656
        %v4817 = vadd.f32 %v4526, %v4745
        %v4818 = vadd.f32 %v4527, %v4659
        %v4819 = vadd.f32 %v4528, %v4748
        %v4820 = vadd.f32 %v4529, %v4661
        %v4821 = vadd.f32 %v4530, %v4750
        %v4822 = vadd.f32 %v4531, %v4664
        %v4823 = vadd.f32 %v4532, %v4753
        %v4824 = vadd.f32 %v4533, %v4666
        %v4825 = vadd.f32 %v4534, %v4755
        %v4826 = vadd.f32 %v4535, %v4669
        %v4827 = vadd.f32 %v4536, %v4758
        %v4828 = vadd.f32 %v4537, %v4671
        %v4829 = vadd.f32 %v4538, %v4760
        %v4830 = vadd.f32 %v4539, %v4674
        %v4831 = vadd.f32 %v4540, %v4763
        %v4832 = vadd.f32 %v4541, %v4676
        %v4833 = vadd.f32 %v4542, %v4765
        %v4834 = vadd.f32 %v4543, %v4679
        %v4835 = vadd.f32 %v4544, %v4768
        %v4836 = vadd.f32 %v4545, %v4681
        %v4837 = vadd.f32 %v4546, %v4770
        %v4838 = vadd.f32 %v4547, %v4684
        %v4839 = vadd.f32 %v4548, %v4773
        %v4840 = vadd.f32 %v4549, %v4686
        %v4841 = vadd.f32 %v4550, %v4775
        %v4842 = vadd.f32 %v4551, %v4689
        %v4843 = vadd.f32 %v4552, %v4778
        %v4844 = vadd.f32 %v4553, %v4691
        %v4845 = vadd.f32 %v4554, %v4780
        %v4847 = vperm.slane %v644, 0
        %v4848 = vperm.slane %v644, 1
        %v4851 = vadd.f32 %v4200, %v4847
        %v4852 = vadd.f32 %v4201, %v4848
        %v4853 = vadd.f32 %v4202, %v4847
        %v4854 = vadd.f32 %v4203, %v4848
        %v4855 = vadd.f32 %v4204, %v4847
        %v4856 = vadd.f32 %v4205, %v4848
        %v4857 = vadd.f32 %v4206, %v4847
        %v4858 = vadd.f32 %v4207, %v4848
        %v4859 = vadd.f32 %v4208, %v4847
        %v4860 = vadd.f32 %v4209, %v4848
        %v4861 = vadd.f32 %v4210, %v4847
        %v4862 = vadd.f32 %v4211, %v4848
        %v4863 = vadd.f32 %v4212, %v4847
        %v4864 = vadd.f32 %v4213, %v4848
        %v4865 = vadd.f32 %v4214, %v4847
        %v4866 = vadd.f32 %v4215, %v4848
        %v4867 = vadd.f32 %v4216, %v4847
        %v4868 = vadd.f32 %v4217, %v4848
        %v4869 = vadd.f32 %v4218, %v4847
        %v4870 = vadd.f32 %v4219, %v4848
        %v4871 = vadd.f32 %v4220, %v4847
        %v4872 = vadd.f32 %v4221, %v4848
        %v4873 = vadd.f32 %v4222, %v4847
        %v4874 = vadd.f32 %v4223, %v4848
        %v4875 = vadd.f32 %v4224, %v4847
        %v4876 = vadd.f32 %v4225, %v4848
        %v4877 = vadd.f32 %v4226, %v4847
        %v4878 = vadd.f32 %v4227, %v4848
        %v4879 = vadd.f32 %v4228, %v4847
        %v4880 = vadd.f32 %v4229, %v4848
        %v4881 = vadd.f32 %v4230, %v4847
        %v4882 = vadd.f32 %v4231, %v4848
        %v4883 = vadd.f32 %v4232, %v4847
        %v4884 = vadd.f32 %v4233, %v4848
        %v4885 = vadd.f32 %v4234, %v4847
        %v4886 = vadd.f32 %v4235, %v4848
        %v4887 = vadd.f32 %v4236, %v4847
        %v4888 = vadd.f32 %v4237, %v4848
        %v4889 = vadd.f32 %v4238, %v4847
        %v4890 = vadd.f32 %v4239, %v4848
        %v4891 = vadd.f32 %v4240, %v4847
        %v4892 = vadd.f32 %v4241, %v4848
        %v4893 = vadd.f32 %v4242, %v4847
        %v4894 = vadd.f32 %v4243, %v4848
        %v4895 = vadd.f32 %v4244, %v4847
        %v4896 = vadd.f32 %v4245, %v4848
        %v4897 = vadd.f32 %v4246, %v4847
        %v4898 = vadd.f32 %v4247, %v4848
        %v4899 = vadd.f32 %v4248, %v4847
        %v4900 = vadd.f32 %v4249, %v4848
        %v4901 = vadd.f32 %v4250, %v4847
        %v4902 = vadd.f32 %v4251, %v4848
        %v4903 = vadd.f32 %v4252, %v4847
        %v4904 = vadd.f32 %v4253, %v4848
        %v4905 = vadd.f32 %v4254, %v4847
        %v4906 = vadd.f32 %v4255, %v4848
        %v4907 = vadd.f32 %v4256, %v4847
        %v4908 = vadd.f32 %v4257, %v4848
        %v4909 = vadd.f32 %v4258, %v4847
        %v4910 = vadd.f32 %v4259, %v4848
        %v4911 = vadd.f32 %v4260, %v4847
        %v4912 = vadd.f32 %v4261, %v4848
        %v4913 = vadd.f32 %v4262, %v4847
        %v4914 = vadd.f32 %v4263, %v4848
        %v4915 = vmax.f32 %v4851, 0.0
        %v4916 = vmax.f32 %v4852, 0.0
        %v4917 = vmax.f32 %v4853, 0.0
        %v4918 = vmax.f32 %v4854, 0.0
        %v4919 = vmax.f32 %v4855, 0.0
        %v4920 = vmax.f32 %v4856, 0.0
        %v4921 = vmax.f32 %v4857, 0.0
        %v4922 = vmax.f32 %v4858, 0.0
        %v4923 = vmax.f32 %v4859, 0.0
        %v4924 = vmax.f32 %v4860, 0.0
        %v4925 = vmax.f32 %v4861, 0.0
        %v4926 = vmax.f32 %v4862, 0.0
        %v4927 = vmax.f32 %v4863, 0.0
        %v4928 = vmax.f32 %v4864, 0.0
        %v4929 = vmax.f32 %v4865, 0.0
        %v4930 = vmax.f32 %v4866, 0.0
        %v4931 = vmax.f32 %v4867, 0.0
        %v4932 = vmax.f32 %v4868, 0.0
        %v4933 = vmax.f32 %v4869, 0.0
        %v4934 = vmax.f32 %v4870, 0.0
        %v4935 = vmax.f32 %v4871, 0.0
        %v4936 = vmax.f32 %v4872, 0.0
        %v4937 = vmax.f32 %v4873, 0.0
        %v4938 = vmax.f32 %v4874, 0.0
        %v4939 = vmax.f32 %v4875, 0.0
        %v4940 = vmax.f32 %v4876, 0.0
        %v4941 = vmax.f32 %v4877, 0.0
        %v4942 = vmax.f32 %v4878, 0.0
        %v4943 = vmax.f32 %v4879, 0.0
        %v4944 = vmax.f32 %v4880, 0.0
        %v4945 = vmax.f32 %v4881, 0.0
        %v4946 = vmax.f32 %v4882, 0.0
        %v4947 = vmax.f32 %v4883, 0.0
        %v4948 = vmax.f32 %v4884, 0.0
        %v4949 = vmax.f32 %v4885, 0.0
        %v4950 = vmax.f32 %v4886, 0.0
        %v4951 = vmax.f32 %v4887, 0.0
        %v4952 = vmax.f32 %v4888, 0.0
        %v4953 = vmax.f32 %v4889, 0.0
        %v4954 = vmax.f32 %v4890, 0.0
        %v4955 = vmax.f32 %v4891, 0.0
        %v4956 = vmax.f32 %v4892, 0.0
        %v4957 = vmax.f32 %v4893, 0.0
        %v4958 = vmax.f32 %v4894, 0.0
        %v4959 = vmax.f32 %v4895, 0.0
        %v4960 = vmax.f32 %v4896, 0.0
        %v4961 = vmax.f32 %v4897, 0.0
        %v4962 = vmax.f32 %v4898, 0.0
        %v4963 = vmax.f32 %v4899, 0.0
        %v4964 = vmax.f32 %v4900, 0.0
        %v4965 = vmax.f32 %v4901, 0.0
        %v4966 = vmax.f32 %v4902, 0.0
        %v4967 = vmax.f32 %v4903, 0.0
        %v4968 = vmax.f32 %v4904, 0.0
        %v4969 = vmax.f32 %v4905, 0.0
        %v4970 = vmax.f32 %v4906, 0.0
        %v4971 = vmax.f32 %v4907, 0.0
        %v4972 = vmax.f32 %v4908, 0.0
        %v4973 = vmax.f32 %v4909, 0.0
        %v4974 = vmax.f32 %v4910, 0.0
        %v4975 = vmax.f32 %v4911, 0.0
        %v4976 = vmax.f32 %v4912, 0.0
        %v4977 = vmax.f32 %v4913, 0.0
        %v4978 = vmax.f32 %v4914, 0.0
        %v4979 = vadd.f32 %v4782, %v4847
        %v4980 = vadd.f32 %v4783, %v4848
        %v4981 = vadd.f32 %v4784, %v4847
        %v4982 = vadd.f32 %v4785, %v4848
        %v4983 = vadd.f32 %v4786, %v4847
        %v4984 = vadd.f32 %v4787, %v4848
        %v4985 = vadd.f32 %v4788, %v4847
        %v4986 = vadd.f32 %v4789, %v4848
        %v4987 = vadd.f32 %v4790, %v4847
        %v4988 = vadd.f32 %v4791, %v4848
        %v4989 = vadd.f32 %v4792, %v4847
        %v4990 = vadd.f32 %v4793, %v4848
        %v4991 = vadd.f32 %v4794, %v4847
        %v4992 = vadd.f32 %v4795, %v4848
        %v4993 = vadd.f32 %v4796, %v4847
        %v4994 = vadd.f32 %v4797, %v4848
        %v4995 = vadd.f32 %v4798, %v4847
        %v4996 = vadd.f32 %v4799, %v4848
        %v4997 = vadd.f32 %v4800, %v4847
        %v4998 = vadd.f32 %v4801, %v4848
        %v4999 = vadd.f32 %v4802, %v4847
        %v5000 = vadd.f32 %v4803, %v4848
        %v5001 = vadd.f32 %v4804, %v4847
        %v5002 = vadd.f32 %v4805, %v4848
        %v5003 = vadd.f32 %v4806, %v4847
        %v5004 = vadd.f32 %v4807, %v4848
        %v5005 = vadd.f32 %v4808, %v4847
        %v5006 = vadd.f32 %v4809, %v4848
        %v5007 = vadd.f32 %v4810, %v4847
        %v5008 = vadd.f32 %v4811, %v4848
        %v5009 = vadd.f32 %v4812, %v4847
        %v5010 = vadd.f32 %v4813, %v4848
        %v5011 = vadd.f32 %v4814, %v4847
        %v5012 = vadd.f32 %v4815, %v4848
        %v5013 = vadd.f32 %v4816, %v4847
        %v5014 = vadd.f32 %v4817, %v4848
        %v5015 = vadd.f32 %v4818, %v4847
        %v5016 = vadd.f32 %v4819, %v4848
        %v5017 = vadd.f32 %v4820, %v4847
        %v5018 = vadd.f32 %v4821, %v4848
        %v5019 = vadd.f32 %v4822, %v4847
        %v5020 = vadd.f32 %v4823, %v4848
        %v5021 = vadd.f32 %v4824, %v4847
        %v5022 = vadd.f32 %v4825, %v4848
        %v5023 = vadd.f32 %v4826, %v4847
        %v5024 = vadd.f32 %v4827, %v4848
        %v5025 = vadd.f32 %v4828, %v4847
        %v5026 = vadd.f32 %v4829, %v4848
        %v5027 = vadd.f32 %v4830, %v4847
        %v5028 = vadd.f32 %v4831, %v4848
        %v5029 = vadd.f32 %v4832, %v4847
        %v5030 = vadd.f32 %v4833, %v4848
        %v5031 = vadd.f32 %v4834, %v4847
        %v5032 = vadd.f32 %v4835, %v4848
        %v5033 = vadd.f32 %v4836, %v4847
        %v5034 = vadd.f32 %v4837, %v4848
        %v5035 = vadd.f32 %v4838, %v4847
        %v5036 = vadd.f32 %v4839, %v4848
        %v5037 = vadd.f32 %v4840, %v4847
        %v5038 = vadd.f32 %v4841, %v4848
        %v5039 = vadd.f32 %v4842, %v4847
        %v5040 = vadd.f32 %v4843, %v4848
        %v5041 = vadd.f32 %v4844, %v4847
        %v5042 = vadd.f32 %v4845, %v4848
        %v5043 = vmax.f32 %v4979, 0.0
        %v5044 = vmax.f32 %v4980, 0.0
        %v5045 = vmax.f32 %v4981, 0.0
        %v5046 = vmax.f32 %v4982, 0.0
        %v5047 = vmax.f32 %v4983, 0.0
        %v5048 = vmax.f32 %v4984, 0.0
        %v5049 = vmax.f32 %v4985, 0.0
        %v5050 = vmax.f32 %v4986, 0.0
        %v5051 = vmax.f32 %v4987, 0.0
        %v5052 = vmax.f32 %v4988, 0.0
        %v5053 = vmax.f32 %v4989, 0.0
        %v5054 = vmax.f32 %v4990, 0.0
        %v5055 = vmax.f32 %v4991, 0.0
        %v5056 = vmax.f32 %v4992, 0.0
        %v5057 = vmax.f32 %v4993, 0.0
        %v5058 = vmax.f32 %v4994, 0.0
        %v5059 = vmax.f32 %v4995, 0.0
        %v5060 = vmax.f32 %v4996, 0.0
        %v5061 = vmax.f32 %v4997, 0.0
        %v5062 = vmax.f32 %v4998, 0.0
        %v5063 = vmax.f32 %v4999, 0.0
        %v5064 = vmax.f32 %v5000, 0.0
        %v5065 = vmax.f32 %v5001, 0.0
        %v5066 = vmax.f32 %v5002, 0.0
        %v5067 = vmax.f32 %v5003, 0.0
        %v5068 = vmax.f32 %v5004, 0.0
        %v5069 = vmax.f32 %v5005, 0.0
        %v5070 = vmax.f32 %v5006, 0.0
        %v5071 = vmax.f32 %v5007, 0.0
        %v5072 = vmax.f32 %v5008, 0.0
        %v5073 = vmax.f32 %v5009, 0.0
        %v5074 = vmax.f32 %v5010, 0.0
        %v5075 = vmax.f32 %v5011, 0.0
        %v5076 = vmax.f32 %v5012, 0.0
        %v5077 = vmax.f32 %v5013, 0.0
        %v5078 = vmax.f32 %v5014, 0.0
        %v5079 = vmax.f32 %v5015, 0.0
        %v5080 = vmax.f32 %v5016, 0.0
        %v5081 = vmax.f32 %v5017, 0.0
        %v5082 = vmax.f32 %v5018, 0.0
        %v5083 = vmax.f32 %v5019, 0.0
        %v5084 = vmax.f32 %v5020, 0.0
        %v5085 = vmax.f32 %v5021, 0.0
        %v5086 = vmax.f32 %v5022, 0.0
        %v5087 = vmax.f32 %v5023, 0.0
        %v5088 = vmax.f32 %v5024, 0.0
        %v5089 = vmax.f32 %v5025, 0.0
        %v5090 = vmax.f32 %v5026, 0.0
        %v5091 = vmax.f32 %v5027, 0.0
        %v5092 = vmax.f32 %v5028, 0.0
        %v5093 = vmax.f32 %v5029, 0.0
        %v5094 = vmax.f32 %v5030, 0.0
        %v5095 = vmax.f32 %v5031, 0.0
        %v5096 = vmax.f32 %v5032, 0.0
        %v5097 = vmax.f32 %v5033, 0.0
        %v5098 = vmax.f32 %v5034, 0.0
        %v5099 = vmax.f32 %v5035, 0.0
        %v5100 = vmax.f32 %v5036, 0.0
        %v5101 = vmax.f32 %v5037, 0.0
        %v5102 = vmax.f32 %v5038, 0.0
        %v5103 = vmax.f32 %v5039, 0.0
        %v5104 = vmax.f32 %v5040, 0.0
        %v5105 = vmax.f32 %v5041, 0.0
        %v5106 = vmax.f32 %v5042, 0.0
        %v5107 = vmax.f32 %v4915, %v5043
        %v5108 = vmax.f32 %v4916, %v5044
        %v5109 = vmax.f32 %v4917, %v5045
        %v5110 = vmax.f32 %v4918, %v5046
        %v5111 = vmax.f32 %v4919, %v5047
        %v5112 = vmax.f32 %v4920, %v5048
        %v5113 = vmax.f32 %v4921, %v5049
        %v5114 = vmax.f32 %v4922, %v5050
        %v5115 = vmax.f32 %v4923, %v5051
        %v5116 = vmax.f32 %v4924, %v5052
        %v5117 = vmax.f32 %v4925, %v5053
        %v5118 = vmax.f32 %v4926, %v5054
        %v5119 = vmax.f32 %v4927, %v5055
        %v5120 = vmax.f32 %v4928, %v5056
        %v5121 = vmax.f32 %v4929, %v5057
        %v5122 = vmax.f32 %v4930, %v5058
        %v5123 = vmax.f32 %v4931, %v5059
        %v5124 = vmax.f32 %v4932, %v5060
        %v5125 = vmax.f32 %v4933, %v5061
        %v5126 = vmax.f32 %v4934, %v5062
        %v5127 = vmax.f32 %v4935, %v5063
        %v5128 = vmax.f32 %v4936, %v5064
        %v5129 = vmax.f32 %v4937, %v5065
        %v5130 = vmax.f32 %v4938, %v5066
        %v5131 = vmax.f32 %v4939, %v5067
        %v5132 = vmax.f32 %v4940, %v5068
        %v5133 = vmax.f32 %v4941, %v5069
        %v5134 = vmax.f32 %v4942, %v5070
        %v5135 = vmax.f32 %v4943, %v5071
        %v5136 = vmax.f32 %v4944, %v5072
        %v5137 = vmax.f32 %v4945, %v5073
        %v5138 = vmax.f32 %v4946, %v5074
        %v5139 = vmax.f32 %v4947, %v5075
        %v5140 = vmax.f32 %v4948, %v5076
        %v5141 = vmax.f32 %v4949, %v5077
        %v5142 = vmax.f32 %v4950, %v5078
        %v5143 = vmax.f32 %v4951, %v5079
        %v5144 = vmax.f32 %v4952, %v5080
        %v5145 = vmax.f32 %v4953, %v5081
        %v5146 = vmax.f32 %v4954, %v5082
        %v5147 = vmax.f32 %v4955, %v5083
        %v5148 = vmax.f32 %v4956, %v5084
        %v5149 = vmax.f32 %v4957, %v5085
        %v5150 = vmax.f32 %v4958, %v5086
        %v5151 = vmax.f32 %v4959, %v5087
        %v5152 = vmax.f32 %v4960, %v5088
        %v5153 = vmax.f32 %v4961, %v5089
        %v5154 = vmax.f32 %v4962, %v5090
        %v5155 = vmax.f32 %v4963, %v5091
        %v5156 = vmax.f32 %v4964, %v5092
        %v5157 = vmax.f32 %v4965, %v5093
        %v5158 = vmax.f32 %v4966, %v5094
        %v5159 = vmax.f32 %v4967, %v5095
        %v5160 = vmax.f32 %v4968, %v5096
        %v5161 = vmax.f32 %v4969, %v5097
        %v5162 = vmax.f32 %v4970, %v5098
        %v5163 = vmax.f32 %v4971, %v5099
        %v5164 = vmax.f32 %v4972, %v5100
        %v5165 = vmax.f32 %v4973, %v5101
        %v5166 = vmax.f32 %v4974, %v5102
        %v5167 = vmax.f32 %v4975, %v5103
        %v5168 = vmax.f32 %v4976, %v5104
        %v5169 = vmax.f32 %v4977, %v5105
        %v5170 = vmax.f32 %v4978, %v5106
        %v5171 = vmax.f32 %v5107, %v5109
        %v5172 = vmax.f32 %v5108, %v5110
        %v5173 = vmax.f32 %v5111, %v5113
        %v5174 = vmax.f32 %v5112, %v5114
        %v5175 = vmax.f32 %v5115, %v5117
        %v5176 = vmax.f32 %v5116, %v5118
        %v5177 = vmax.f32 %v5119, %v5121
        %v5178 = vmax.f32 %v5120, %v5122
        %v5179 = vmax.f32 %v5123, %v5125
        %v5180 = vmax.f32 %v5124, %v5126
        %v5181 = vmax.f32 %v5127, %v5129
        %v5182 = vmax.f32 %v5128, %v5130
        %v5183 = vmax.f32 %v5131, %v5133
        %v5184 = vmax.f32 %v5132, %v5134
        %v5185 = vmax.f32 %v5135, %v5137
        %v5186 = vmax.f32 %v5136, %v5138
        %v5187 = vmax.f32 %v5139, %v5141
        %v5188 = vmax.f32 %v5140, %v5142
        %v5189 = vmax.f32 %v5143, %v5145
        %v5190 = vmax.f32 %v5144, %v5146
        %v5191 = vmax.f32 %v5147, %v5149
        %v5192 = vmax.f32 %v5148, %v5150
        %v5193 = vmax.f32 %v5151, %v5153
        %v5194 = vmax.f32 %v5152, %v5154
        %v5195 = vmax.f32 %v5155, %v5157
        %v5196 = vmax.f32 %v5156, %v5158
        %v5197 = vmax.f32 %v5159, %v5161
        %v5198 = vmax.f32 %v5160, %v5162
        %v5199 = vmax.f32 %v5163, %v5165
        %v5200 = vmax.f32 %v5164, %v5166
        %v5201 = vmax.f32 %v5167, %v5169
        %v5202 = vmax.f32 %v5168, %v5170
        %v5203 = vpack.c.bf16 %v5172, %v5171
        %v5204 = vpack.c.bf16 %v5174, %v5173
        %v5205 = vpack.c.bf16 %v5176, %v5175
        %v5206 = vpack.c.bf16 %v5178, %v5177
        %v5207 = vpack.c.bf16 %v5180, %v5179
        %v5208 = vpack.c.bf16 %v5182, %v5181
        %v5209 = vpack.c.bf16 %v5184, %v5183
        %v5210 = vpack.c.bf16 %v5186, %v5185
        %v5211 = vpack.c.bf16 %v5188, %v5187
        %v5212 = vpack.c.bf16 %v5190, %v5189
        %v5213 = vpack.c.bf16 %v5192, %v5191
        %v5214 = vpack.c.bf16 %v5194, %v5193
        %v5215 = vpack.c.bf16 %v5196, %v5195
        %v5216 = vpack.c.bf16 %v5198, %v5197
        %v5217 = vpack.c.bf16 %v5200, %v5199
        %v5218 = vpack.c.bf16 %v5202, %v5201
        %5219 = vst [vmem:[%s642] sm:$0xff] %v5203
        %5220 = vst [vmem:[%s642 + $0x8] sm:$0xff] %v5204
        %5221 = vst [vmem:[%s642 + $0x10] sm:$0xff] %v5205
        %5222 = vst [vmem:[%s642 + $0x18] sm:$0xff] %v5206
        %5223 = vst [vmem:[%s642 + $0x20] sm:$0xff] %v5207
        %5224 = vst [vmem:[%s642 + $0x28] sm:$0xff] %v5208
        %5225 = vst [vmem:[%s642 + $0x30] sm:$0xff] %v5209
        %5226 = vst [vmem:[%s642 + $0x38] sm:$0xff] %v5210
        %5227 = vst [vmem:[%s642 + $0x40] sm:$0xff] %v5211
        %5228 = vst [vmem:[%s642 + $0x48] sm:$0xff] %v5212
        %5229 = vst [vmem:[%s642 + $0x50] sm:$0xff] %v5213
        %5230 = vst [vmem:[%s642 + $0x58] sm:$0xff] %v5214
        %5231 = vst [vmem:[%s642 + $0x60] sm:$0xff] %v5215
        %5232 = vst [vmem:[%s642 + $0x68] sm:$0xff] %v5216
        %5233 = vst [vmem:[%s642 + $0x70] sm:$0xff] %v5217
        %5234 = vst [vmem:[%s642 + $0x78] sm:$0xff] %v5218
        %s5235 = sand.u32 %s183, 1
        %s5236 = sand.u32 %s183, 1
        %s5237 = smul.addr %s5236, 128
        %s5238 = scalar_lea.vmem [#allocation4], %s5237
        // Predicated region
        $region131: #{protonet_forward.4} parent=121 // pred_check
          %p5239 = pneg %p193
        $region132: #{protonet_forward.4} parent=121 // pred_check_branch
          %5241 = sbr.rel (%p5239) target = $region134
        $region133: #{protonet_forward.4} parent=121 // pred_region
          %s5242 = smul.addr %s18, 2
          %s5243 = smul.addr %s5242, 4
          %s5244 = scalar_lea.vmem %s7, %s5243
          // Predicated region
          $region135: #{protonet_forward.4} parent=133 // pred_check
            _
          $region136: #{protonet_forward.4} parent=133 // pred_check_branch
            %5246 = sbr.rel (0) target = $region138
          $region137: #{protonet_forward.4} parent=133 // pred_region
            // Predicated region
            $region139: #{protonet_forward.4} parent=137 // pred_check
              _
            $region140: #{protonet_forward.4} parent=137 // pred_check_branch
              %5248 = sbr.rel (0) target = $region142
            $region141: #{protonet_forward.4} parent=137 // pred_region
              // Predicated region
              $region154: #{protonet_forward.4} parent=141 // pred_check
                _
              $region155: #{protonet_forward.4} parent=141 // pred_check_branch
                %5294 = sbr.rel (0) target = $region157
              $region156: #{protonet_forward.4} parent=141 // pred_region
                loop: start=0, step=1, limit=1
                $region158: #{protonet_forward.4} parent=156 // loop_pre_header
                  _
                $region159: #{protonet_forward.4} parent=156 // loop_header
                  %s5296 = sphi 0, %s5300
                  %p5297 = scmp.ge.s32.totalorder %s5296, 1
                  %s5301 = sphi %s5238, %s5238
                  %s5302 = sphi %s5244, %s5244
                $region160: #{protonet_forward.4} parent=156 // loop_header_branch
                  %5299 = sbr.rel (%p5297) target = $region164
                $region161: #{protonet_forward.4} parent=156 // loop_body
                  %v5303 = vld [vmem:[%s5301] sm:$0xff]
                  %5304 = vst [vmem:[%s5302] sm:$0xff] %v5303
                  %v5305 = vld [vmem:[%s5301 + $0x8] sm:$0xff]
                  %5306 = vst [vmem:[%s5302 + $0x18] sm:$0xff] %v5305
                  %v5307 = vld [vmem:[%s5301 + $0x10] sm:$0xff]
                  %5308 = vst [vmem:[%s5302 + $0x30] sm:$0xff] %v5307
                  %v5309 = vld [vmem:[%s5301 + $0x18] sm:$0xff]
                  %5310 = vst [vmem:[%s5302 + $0x48] sm:$0xff] %v5309
                  %v5311 = vld [vmem:[%s5301 + $0x20] sm:$0xff]
                  %5312 = vst [vmem:[%s5302 + $0x60] sm:$0xff] %v5311
                  %v5313 = vld [vmem:[%s5301 + $0x28] sm:$0xff]
                  %5314 = vst [vmem:[%s5302 + $0x78] sm:$0xff] %v5313
                  %v5315 = vld [vmem:[%s5301 + $0x30] sm:$0xff]
                  %5316 = vst [vmem:[%s5302 + $0x90] sm:$0xff] %v5315
                  %v5317 = vld [vmem:[%s5301 + $0x38] sm:$0xff]
                  %5318 = vst [vmem:[%s5302 + $0xa8] sm:$0xff] %v5317
                  %v5319 = vld [vmem:[%s5301 + $0x40] sm:$0xff]
                  %5320 = vst [vmem:[%s5302 + $0xc0] sm:$0xff] %v5319
                  %v5321 = vld [vmem:[%s5301 + $0x48] sm:$0xff]
                  %5322 = vst [vmem:[%s5302 + $0xd8] sm:$0xff] %v5321
                  %v5323 = vld [vmem:[%s5301 + $0x50] sm:$0xff]
                  %5324 = vst [vmem:[%s5302 + $0xf0] sm:$0xff] %v5323
                  %v5325 = vld [vmem:[%s5301 + $0x58] sm:$0xff]
                  %5326 = vst [vmem:[%s5302 + $0x108] sm:$0xff] %v5325
                  %v5327 = vld [vmem:[%s5301 + $0x60] sm:$0xff]
                  %5328 = vst [vmem:[%s5302 + $0x120] sm:$0xff] %v5327
                  %v5329 = vld [vmem:[%s5301 + $0x68] sm:$0xff]
                  %5330 = vst [vmem:[%s5302 + $0x138] sm:$0xff] %v5329
                  %v5331 = vld [vmem:[%s5301 + $0x70] sm:$0xff]
                  %5332 = vst [vmem:[%s5302 + $0x150] sm:$0xff] %v5331
                  %v5333 = vld [vmem:[%s5301 + $0x78] sm:$0xff]
                  %5334 = vst [vmem:[%s5302 + $0x168] sm:$0xff] %v5333
                $region162: #{protonet_forward.4} parent=156 // loop_footer
                  %s5300 = sadd.s32 1, %s5296
                $region163: #{protonet_forward.4} parent=156 // loop_footer_branch
                  %5295 = sbr.rel target = $region159
                $region164: #{protonet_forward.4} parent=156 // loop_exit
                  _
              $region157: #{protonet_forward.4} parent=141 // pred_fallthru
                _
              // Predicated region
              $region165: #{protonet_forward.4} parent=141 // pred_check
                _
              $region166: #{protonet_forward.4} parent=141 // pred_check_branch
                %5336 = sbr.rel target = $region168
              $region167: #{protonet_forward.4} parent=141 // pred_region
                _
              $region168: #{protonet_forward.4} parent=141 // pred_fallthru
                _
            $region142: #{protonet_forward.4} parent=137 // pred_fallthru
              _
            // Predicated region
            $region143: #{protonet_forward.4} parent=137 // pred_check
              _
            $region144: #{protonet_forward.4} parent=137 // pred_check_branch
              %5250 = sbr.rel target = $region146
            $region145: #{protonet_forward.4} parent=137 // pred_region
              %s5252 = ssub.s32 256, 1
              loop: start=0, step=1, limit=1
              $region147: #{protonet_forward.4} parent=145 // loop_pre_header
                _
              $region148: #{protonet_forward.4} parent=145 // loop_header
                %s5254 = sphi 0, %s5258
                %p5255 = scmp.ge.s32.totalorder %s5254, 1
                %s5259 = sphi %s5238, %s5238
                %s5260 = sphi %s5244, %s5244
              $region149: #{protonet_forward.4} parent=145 // loop_header_branch
                %5257 = sbr.rel (%p5255) target = $region153
              $region150: #{protonet_forward.4} parent=145 // loop_body
                %v5261 = vld [vmem:[%s5259] sm:%s5252]
                %5262 = vst [vmem:[%s5260] sm:%s5252] %v5261
                %v5263 = vld [vmem:[%s5259 + $0x8] sm:%s5252]
                %5264 = vst [vmem:[%s5260 + $0x18] sm:%s5252] %v5263
                %v5265 = vld [vmem:[%s5259 + $0x10] sm:%s5252]
                %5266 = vst [vmem:[%s5260 + $0x30] sm:%s5252] %v5265
                %v5267 = vld [vmem:[%s5259 + $0x18] sm:%s5252]
                %5268 = vst [vmem:[%s5260 + $0x48] sm:%s5252] %v5267
                %v5269 = vld [vmem:[%s5259 + $0x20] sm:%s5252]
                %5270 = vst [vmem:[%s5260 + $0x60] sm:%s5252] %v5269
                %v5271 = vld [vmem:[%s5259 + $0x28] sm:%s5252]
                %5272 = vst [vmem:[%s5260 + $0x78] sm:%s5252] %v5271
                %v5273 = vld [vmem:[%s5259 + $0x30] sm:%s5252]
                %5274 = vst [vmem:[%s5260 + $0x90] sm:%s5252] %v5273
                %v5275 = vld [vmem:[%s5259 + $0x38] sm:%s5252]
                %5276 = vst [vmem:[%s5260 + $0xa8] sm:%s5252] %v5275
                %v5277 = vld [vmem:[%s5259 + $0x40] sm:%s5252]
                %5278 = vst [vmem:[%s5260 + $0xc0] sm:%s5252] %v5277
                %v5279 = vld [vmem:[%s5259 + $0x48] sm:%s5252]
                %5280 = vst [vmem:[%s5260 + $0xd8] sm:%s5252] %v5279
                %v5281 = vld [vmem:[%s5259 + $0x50] sm:%s5252]
                %5282 = vst [vmem:[%s5260 + $0xf0] sm:%s5252] %v5281
                %v5283 = vld [vmem:[%s5259 + $0x58] sm:%s5252]
                %5284 = vst [vmem:[%s5260 + $0x108] sm:%s5252] %v5283
                %v5285 = vld [vmem:[%s5259 + $0x60] sm:%s5252]
                %5286 = vst [vmem:[%s5260 + $0x120] sm:%s5252] %v5285
                %v5287 = vld [vmem:[%s5259 + $0x68] sm:%s5252]
                %5288 = vst [vmem:[%s5260 + $0x138] sm:%s5252] %v5287
                %v5289 = vld [vmem:[%s5259 + $0x70] sm:%s5252]
                %5290 = vst [vmem:[%s5260 + $0x150] sm:%s5252] %v5289
                %v5291 = vld [vmem:[%s5259 + $0x78] sm:%s5252]
                %5292 = vst [vmem:[%s5260 + $0x168] sm:%s5252] %v5291
              $region151: #{protonet_forward.4} parent=145 // loop_footer
                %s5258 = sadd.s32 1, %s5254
              $region152: #{protonet_forward.4} parent=145 // loop_footer_branch
                %5253 = sbr.rel target = $region148
              $region153: #{protonet_forward.4} parent=145 // loop_exit
                _
            $region146: #{protonet_forward.4} parent=137 // pred_fallthru
              _
          $region138: #{protonet_forward.4} parent=133 // pred_fallthru
            _
          %5337 = vnop
        $region134: #{protonet_forward.4} parent=121 // pred_fallthru
          _
      $region122: #{protonet_forward.4} parent=5 // pred_fallthru
        _
      %p5338 = scmp.le.s32.totalorder 2, %s13
      // Predicated region
      $region169: #{protonet_forward.4} parent=5 // pred_check
        %p5339 = pneg %p5338
      $region170: #{protonet_forward.4} parent=5 // pred_check_branch
        %5341 = sbr.rel (%p5339) target = $region172
      $region171: #{protonet_forward.4} parent=5 // pred_region
        %s5342 = ssub.s32 %s13, 2
        // Predicated region
        $region173: #{protonet_forward.4} parent=171 // pred_check
          %p5343 = pneg %p199
        $region174: #{protonet_forward.4} parent=171 // pred_check_branch
          %5345 = sbr.rel (%p5343) target = $region176
        $region175: #{protonet_forward.4} parent=171 // pred_region
          %s5346 = sand.u32 %s184, 1
          %s5347 = sand.u32 %s184, 1
          %s5348 = smul.addr %s5347, 128
          %s5349 = scalar_lea.vmem [#allocation4], %s5348
        $region176: #{protonet_forward.4} parent=171 // pred_fallthru
          _
      $region172: #{protonet_forward.4} parent=5 // pred_fallthru
        _
    $region6: #{protonet_forward.4} parent=1 // loop_footer
      %s17 = sadd.s32 1, %s13
    $region7: #{protonet_forward.4} parent=1 // loop_footer_branch
      %12 = sbr.rel target = $region3
    $region8: #{protonet_forward.4} parent=1 // loop_exit
      _

// kernel: protonet_forward.5
$region0: #{protonet_forward.5}
  #allocation0 [shape = 'u32[]', space=smem, size = 0x4, offset = 0x4, fixed_abs, tag = 'smem constant byte address 0x4 - core index']
  #allocation1 [shape = 'u32[72,128]{1,0:T(1,128)}', space=vmem, size = 0x9000, scoped, tag = 'internal scratch']
  %s0 = inlined_call_operand.vmem [shape: bf16[18,24,144], index: 0, kind: input, shape index: {}]
  %s1 = inlined_call_operand.vmem [shape: bf16[18,24,144], index: 1, kind: input, shape index: {}]
  %s2 = inlined_call_operand.vmem [shape: bf16[3,144,128], index: 2, kind: input, shape index: {}]
  %s3 = inlined_call_operand.vmem [shape: bf16[3,144,128], index: 3, kind: input, shape index: {}]
  %s4 = inlined_call_operand.vmem [shape: bf16[3,144,128], index: 4, kind: input, shape index: {}]
  %s5 = inlined_call_operand.vmem [shape: bf16[3,144,128], index: 5, kind: input, shape index: {}]
  %s6 = inlined_call_operand.vmem [shape: f32[1,128], index: 6, kind: input, shape index: {}]
  %s7 = inlined_call_operand.vmem [shape: bf16[8,24,128], index: 7, kind: output, shape index: {}]
  %s8 = sld [smem:[#allocation0]]
  $region174: #{protonet_forward.5} parent=0
    _
  %s10 = ssub.s32 1, %s8
  %s11 = scalar_select 0, %s10, %s8
  $region1: #{protonet_forward.5} parent=0
    #allocation2 [shape = 'u8[147456]{0}', space=vmem, size = 0x24000, scoped, tag = 'input window, operand 0']
    #allocation3 [shape = 'u8[147456]{0}', space=vmem, size = 0x24000, scoped, tag = 'input window, operand 1']
    #allocation4 [shape = 'u8[32768]{0}', space=vmem, size = 0x8000, scoped, tag = 'output window, operand 0']
    loop: start=0, step=1, limit=5
    $region2: #{protonet_forward.5} parent=1 // loop_pre_header
      _
    $region3: #{protonet_forward.5} parent=1 // loop_header
      %s13 = sphi 0, %s17
      %p14 = scmp.ge.s32.totalorder %s13, 5
      %s23 = sphi 0, %s25
      %s26 = sphi 0, %s23
      %s27 = sphi 0, %s26
      %s43 = sphi 0, %s27
      %s49 = sphi 0, %s51
      %s52 = sphi 0, %s49
      %s53 = sphi 0, %s52
      %s69 = sphi 0, %s53
      %s73 = sphi 0, %s73
      %s75 = sphi 0, %s73
      %s76 = sphi 0, %s75
      %s90 = sphi 0, %s76
      %s94 = sphi 0, %s94
      %s96 = sphi 0, %s94
      %s97 = sphi 0, %s96
      %s111 = sphi 0, %s97
      %s115 = sphi 0, %s115
      %s117 = sphi 0, %s115
      %s118 = sphi 0, %s117
      %s132 = sphi 0, %s118
      %s136 = sphi 0, %s136
      %s138 = sphi 0, %s136
      %s139 = sphi 0, %s138
      %s153 = sphi 0, %s139
      %s157 = sphi 0, %s157
      %s159 = sphi 0, %s157
      %s160 = sphi 0, %s159
      %s174 = sphi 0, %s160
      %s180 = sphi 0, %s182
      %s183 = sphi 0, %s180
      %s184 = sphi 0, %s183
      %s200 = sphi 0, %s184
    $region4: #{protonet_forward.5} parent=1 // loop_header_branch
      %16 = sbr.rel (%p14) target = $region8
    $region5: #{protonet_forward.5} parent=1 // loop_body
      %s18 = ssub.s32 %s13, 1
      %s19 = ssub.s32 %s13, 2
      %s20 = sadd.s32 %s13, 1
      %s21 = ssub.s32 %s13, %s20
      %p22 = scmp.eq.s32.totalorder %s21, 0
      %s24 = sadd.s32 %s23, 1
      %s25 = scalar_select %p22, %s23, %s24
      %p28 = pneg %p22
      %p29 = scmp.eq.s32.totalorder %s13, 2
      %p30 = por %p28, %p29
      %p31 = scmp.ne.s32.totalorder %s23, %s26
      %p32 = scmp.eq.s32.totalorder %s13, 0
      %p33 = por %p31, %p32
      %p34 = scmp.ne.s32.totalorder %s23, %s26
      %p35 = scmp.eq.s32.totalorder %s18, 2
      %p36 = por %p34, %p35
      %p37 = scmp.ne.s32.totalorder %s26, %s27
      %p38 = scmp.eq.s32.totalorder %s18, 0
      %p39 = por %p37, %p38
      %p40 = scmp.ne.s32.totalorder %s26, %s27
      %p41 = scmp.eq.s32.totalorder %s19, 2
      %p42 = por %p40, %p41
      %p44 = scmp.ne.s32.totalorder %s27, %s43
      %p45 = scmp.eq.s32.totalorder %s19, 0
      %p46 = por %p44, %p45
      %s47 = ssub.s32 %s13, %s20
      %p48 = scmp.eq.s32.totalorder %s47, 0
      %s50 = sadd.s32 %s49, 1
      %s51 = scalar_select %p48, %s49, %s50
      %p54 = pneg %p48
      %p55 = scmp.eq.s32.totalorder %s13, 2
      %p56 = por %p54, %p55
      %p57 = scmp.ne.s32.totalorder %s49, %s52
      %p58 = scmp.eq.s32.totalorder %s13, 0
      %p59 = por %p57, %p58
      %p60 = scmp.ne.s32.totalorder %s49, %s52
      %p61 = scmp.eq.s32.totalorder %s18, 2
      %p62 = por %p60, %p61
      %p63 = scmp.ne.s32.totalorder %s52, %s53
      %p64 = scmp.eq.s32.totalorder %s18, 0
      %p65 = por %p63, %p64
      %p66 = scmp.ne.s32.totalorder %s52, %s53
      %p67 = scmp.eq.s32.totalorder %s19, 2
      %p68 = por %p66, %p67
      %p70 = scmp.ne.s32.totalorder %s53, %s69
      %p71 = scmp.eq.s32.totalorder %s19, 0
      %p72 = por %p70, %p71
      %s74 = sadd.s32 %s73, 1
      %p77 = scmp.eq.s32.totalorder %s13, 2
      %p78 = scmp.ne.s32.totalorder %s73, %s75
      %p79 = scmp.eq.s32.totalorder %s13, 0
      %p80 = por %p78, %p79
      %p81 = scmp.ne.s32.totalorder %s73, %s75
      %p82 = scmp.eq.s32.totalorder %s18, 2
      %p83 = por %p81, %p82
      %p84 = scmp.ne.s32.totalorder %s75, %s76
      %p85 = scmp.eq.s32.totalorder %s18, 0
      %p86 = por %p84, %p85
      %p87 = scmp.ne.s32.totalorder %s75, %s76
      %p88 = scmp.eq.s32.totalorder %s19, 2
      %p89 = por %p87, %p88
      %p91 = scmp.ne.s32.totalorder %s76, %s90
      %p92 = scmp.eq.s32.totalorder %s19, 0
      %p93 = por %p91, %p92
      %s95 = sadd.s32 %s94, 1
      %p98 = scmp.eq.s32.totalorder %s13, 2
      %p99 = scmp.ne.s32.totalorder %s94, %s96
      %p100 = scmp.eq.s32.totalorder %s13, 0
      %p101 = por %p99, %p100
      %p102 = scmp.ne.s32.totalorder %s94, %s96
      %p103 = scmp.eq.s32.totalorder %s18, 2
      %p104 = por %p102, %p103
      %p105 = scmp.ne.s32.totalorder %s96, %s97
      %p106 = scmp.eq.s32.totalorder %s18, 0
      %p107 = por %p105, %p106
      %p108 = scmp.ne.s32.totalorder %s96, %s97
      %p109 = scmp.eq.s32.totalorder %s19, 2
      %p110 = por %p108, %p109
      %p112 = scmp.ne.s32.totalorder %s97, %s111
      %p113 = scmp.eq.s32.totalorder %s19, 0
      %p114 = por %p112, %p113
      %s116 = sadd.s32 %s115, 1
      %p119 = scmp.eq.s32.totalorder %s13, 2
      %p120 = scmp.ne.s32.totalorder %s115, %s117
      %p121 = scmp.eq.s32.totalorder %s13, 0
      %p122 = por %p120, %p121
      %p123 = scmp.ne.s32.totalorder %s115, %s117
      %p124 = scmp.eq.s32.totalorder %s18, 2
      %p125 = por %p123, %p124
      %p126 = scmp.ne.s32.totalorder %s117, %s118
      %p127 = scmp.eq.s32.totalorder %s18, 0
      %p128 = por %p126, %p127
      %p129 = scmp.ne.s32.totalorder %s117, %s118
      %p130 = scmp.eq.s32.totalorder %s19, 2
      %p131 = por %p129, %p130
      %p133 = scmp.ne.s32.totalorder %s118, %s132
      %p134 = scmp.eq.s32.totalorder %s19, 0
      %p135 = por %p133, %p134
      %s137 = sadd.s32 %s136, 1
      %p140 = scmp.eq.s32.totalorder %s13, 2
      %p141 = scmp.ne.s32.totalorder %s136, %s138
      %p142 = scmp.eq.s32.totalorder %s13, 0
      %p143 = por %p141, %p142
      %p144 = scmp.ne.s32.totalorder %s136, %s138
      %p145 = scmp.eq.s32.totalorder %s18, 2
      %p146 = por %p144, %p145
      %p147 = scmp.ne.s32.totalorder %s138, %s139
      %p148 = scmp.eq.s32.totalorder %s18, 0
      %p149 = por %p147, %p148
      %p150 = scmp.ne.s32.totalorder %s138, %s139
      %p151 = scmp.eq.s32.totalorder %s19, 2
      %p152 = por %p150, %p151
      %p154 = scmp.ne.s32.totalorder %s139, %s153
      %p155 = scmp.eq.s32.totalorder %s19, 0
      %p156 = por %p154, %p155
      %s158 = sadd.s32 %s157, 1
      %p161 = scmp.eq.s32.totalorder %s13, 2
      %p162 = scmp.ne.s32.totalorder %s157, %s159
      %p163 = scmp.eq.s32.totalorder %s13, 0
      %p164 = por %p162, %p163
      %p165 = scmp.ne.s32.totalorder %s157, %s159
      %p166 = scmp.eq.s32.totalorder %s18, 2
      %p167 = por %p165, %p166
      %p168 = scmp.ne.s32.totalorder %s159, %s160
      %p169 = scmp.eq.s32.totalorder %s18, 0
      %p170 = por %p168, %p169
      %p171 = scmp.ne.s32.totalorder %s159, %s160
      %p172 = scmp.eq.s32.totalorder %s19, 2
      %p173 = por %p171, %p172
      %p175 = scmp.ne.s32.totalorder %s160, %s174
      %p176 = scmp.eq.s32.totalorder %s19, 0
      %p177 = por %p175, %p176
      %s178 = ssub.s32 %s13, %s20
      %p179 = scmp.eq.s32.totalorder %s178, 0
      %s181 = sadd.s32 %s180, 1
      %s182 = scalar_select %p179, %s180, %s181
      %p185 = pneg %p179
      %p186 = scmp.eq.s32.totalorder %s13, 2
      %p187 = por %p185, %p186
      %p188 = scmp.ne.s32.totalorder %s180, %s183
      %p189 = scmp.eq.s32.totalorder %s13, 0
      %p190 = por %p188, %p189
      %p191 = scmp.ne.s32.totalorder %s180, %s183
      %p192 = scmp.eq.s32.totalorder %s18, 2
      %p193 = por %p191, %p192
      %p194 = scmp.ne.s32.totalorder %s183, %s184
      %p195 = scmp.eq.s32.totalorder %s18, 0
      %p196 = por %p194, %p195
      %p197 = scmp.ne.s32.totalorder %s183, %s184
      %p198 = scmp.eq.s32.totalorder %s19, 2
      %p199 = por %p197, %p198
      %p201 = scmp.ne.s32.totalorder %s184, %s200
      %p202 = scmp.eq.s32.totalorder %s19, 0
      %p203 = por %p201, %p202
      %p204 = scmp.le.s32.totalorder 1, %s13
      %p205 = scmp.lt.s32.totalorder %s13, 4
      %p206 = pnand %p204, %p205
      %p207 = pneg %p206
      // Predicated region
      $region9: #{protonet_forward.5} parent=5 // pred_check
        _
      $region10: #{protonet_forward.5} parent=5 // pred_check_branch
        %209 = sbr.rel (%p206) target = $region12
      $region11: #{protonet_forward.5} parent=5 // pred_region
        %s210 = ssub.s32 %s13, 1
        // Predicated region
        $region13: #{protonet_forward.5} parent=11 // pred_check
          %p211 = pneg %p86
        $region14: #{protonet_forward.5} parent=11 // pred_check_branch
          %213 = sbr.rel (%p211) target = $region16
        $region15: #{protonet_forward.5} parent=11 // pred_region
          _
        $region16: #{protonet_forward.5} parent=11 // pred_fallthru
          _
        // Predicated region
        $region17: #{protonet_forward.5} parent=11 // pred_check
          %p214 = pneg %p107
        $region18: #{protonet_forward.5} parent=11 // pred_check_branch
          %216 = sbr.rel (%p214) target = $region20
        $region19: #{protonet_forward.5} parent=11 // pred_region
          _
        $region20: #{protonet_forward.5} parent=11 // pred_fallthru
          _
        // Predicated region
        $region21: #{protonet_forward.5} parent=11 // pred_check
          %p217 = pneg %p128
        $region22: #{protonet_forward.5} parent=11 // pred_check_branch
          %219 = sbr.rel (%p217) target = $region24
        $region23: #{protonet_forward.5} parent=11 // pred_region
          _
        $region24: #{protonet_forward.5} parent=11 // pred_fallthru
          _
        // Predicated region
        $region25: #{protonet_forward.5} parent=11 // pred_check
          %p220 = pneg %p149
        $region26: #{protonet_forward.5} parent=11 // pred_check_branch
          %222 = sbr.rel (%p220) target = $region28
        $region27: #{protonet_forward.5} parent=11 // pred_region
          _
        $region28: #{protonet_forward.5} parent=11 // pred_fallthru
          _
        // Predicated region
        $region29: #{protonet_forward.5} parent=11 // pred_check
          %p223 = pneg %p170
        $region30: #{protonet_forward.5} parent=11 // pred_check_branch
          %225 = sbr.rel (%p223) target = $region32
        $region31: #{protonet_forward.5} parent=11 // pred_region
          _
        $region32: #{protonet_forward.5} parent=11 // pred_fallthru
          _
      $region12: #{protonet_forward.5} parent=5 // pred_fallthru
        _
      %p226 = scmp.lt.s32.totalorder %s13, 3
      // Predicated region
      $region33: #{protonet_forward.5} parent=5 // pred_check
        %p227 = pneg %p226
      $region34: #{protonet_forward.5} parent=5 // pred_check_branch
        %229 = sbr.rel (%p227) target = $region36
      $region35: #{protonet_forward.5} parent=5 // pred_region
        // Predicated region
        $region37: #{protonet_forward.5} parent=35 // pred_check
          %p230 = pneg %p33
        $region38: #{protonet_forward.5} parent=35 // pred_check_branch
          %232 = sbr.rel (%p230) target = $region40
        $region39: #{protonet_forward.5} parent=35 // pred_region
          %s233 = sand.u32 %s23, 1
          %s234 = sand.u32 %s23, 1
          %s235 = smul.addr %s234, 144
          %s236 = scalar_lea.vmem [#allocation2], %s235
          %s237 = smul.addr %s13, 2
          %s238 = smul.addr %s237, 4
          %s239 = scalar_lea.vmem %s0, %s238
          // Predicated region
          $region41: #{protonet_forward.5} parent=39 // pred_check
            _
          $region42: #{protonet_forward.5} parent=39 // pred_check_branch
            %241 = sbr.rel (0) target = $region44
          $region43: #{protonet_forward.5} parent=39 // pred_region
            // Predicated region
            $region45: #{protonet_forward.5} parent=43 // pred_check
              _
            $region46: #{protonet_forward.5} parent=43 // pred_check_branch
              %243 = sbr.rel (0) target = $region48
            $region47: #{protonet_forward.5} parent=43 // pred_region
              // Predicated region
              $region60: #{protonet_forward.5} parent=47 // pred_check
                _
              $region61: #{protonet_forward.5} parent=47 // pred_check_branch
                %293 = sbr.rel (0) target = $region63
              $region62: #{protonet_forward.5} parent=47 // pred_region
                loop: start=0, step=1, limit=1
                $region64: #{protonet_forward.5} parent=62 // loop_pre_header
                  _
                $region65: #{protonet_forward.5} parent=62 // loop_header
                  %s295 = sphi 0, %s299
                  %p296 = scmp.ge.s32.totalorder %s295, 1
                  %s300 = sphi %s239, %s239
                  %s301 = sphi %s236, %s236
                $region66: #{protonet_forward.5} parent=62 // loop_header_branch
                  %298 = sbr.rel (%p296) target = $region70
                $region67: #{protonet_forward.5} parent=62 // loop_body
                  %v302 = vld [vmem:[%s300] sm:$0xff]
                  %303 = vst [vmem:[%s301] sm:$0xff] %v302
                  %v304 = vld [vmem:[%s300 + $0x18] sm:$0xff]
                  %305 = vst [vmem:[%s301 + $0x8] sm:$0xff] %v304
                  %v306 = vld [vmem:[%s300 + $0x30] sm:$0xff]
                  %307 = vst [vmem:[%s301 + $0x10] sm:$0xff] %v306
                  %v308 = vld [vmem:[%s300 + $0x48] sm:$0xff]
                  %309 = vst [vmem:[%s301 + $0x18] sm:$0xff] %v308
                  %v310 = vld [vmem:[%s300 + $0x60] sm:$0xff]
                  %311 = vst [vmem:[%s301 + $0x20] sm:$0xff] %v310
                  %v312 = vld [vmem:[%s300 + $0x78] sm:$0xff]
                  %313 = vst [vmem:[%s301 + $0x28] sm:$0xff] %v312
                  %v314 = vld [vmem:[%s300 + $0x90] sm:$0xff]
                  %315 = vst [vmem:[%s301 + $0x30] sm:$0xff] %v314
                  %v316 = vld [vmem:[%s300 + $0xa8] sm:$0xff]
                  %317 = vst [vmem:[%s301 + $0x38] sm:$0xff] %v316
                  %v318 = vld [vmem:[%s300 + $0xc0] sm:$0xff]
                  %319 = vst [vmem:[%s301 + $0x40] sm:$0xff] %v318
                  %v320 = vld [vmem:[%s300 + $0xd8] sm:$0xff]
                  %321 = vst [vmem:[%s301 + $0x48] sm:$0xff] %v320
                  %v322 = vld [vmem:[%s300 + $0xf0] sm:$0xff]
                  %323 = vst [vmem:[%s301 + $0x50] sm:$0xff] %v322
                  %v324 = vld [vmem:[%s300 + $0x108] sm:$0xff]
                  %325 = vst [vmem:[%s301 + $0x58] sm:$0xff] %v324
                  %v326 = vld [vmem:[%s300 + $0x120] sm:$0xff]
                  %327 = vst [vmem:[%s301 + $0x60] sm:$0xff] %v326
                  %v328 = vld [vmem:[%s300 + $0x138] sm:$0xff]
                  %329 = vst [vmem:[%s301 + $0x68] sm:$0xff] %v328
                  %v330 = vld [vmem:[%s300 + $0x150] sm:$0xff]
                  %331 = vst [vmem:[%s301 + $0x70] sm:$0xff] %v330
                  %v332 = vld [vmem:[%s300 + $0x168] sm:$0xff]
                  %333 = vst [vmem:[%s301 + $0x78] sm:$0xff] %v332
                  %v334 = vld [vmem:[%s300 + $0x180] sm:$0xff]
                  %335 = vst [vmem:[%s301 + $0x80] sm:$0xff] %v334
                  %v336 = vld [vmem:[%s300 + $0x198] sm:$0xff]
                  %337 = vst [vmem:[%s301 + $0x88] sm:$0xff] %v336
                $region68: #{protonet_forward.5} parent=62 // loop_footer
                  %s299 = sadd.s32 1, %s295
                $region69: #{protonet_forward.5} parent=62 // loop_footer_branch
                  %294 = sbr.rel target = $region65
                $region70: #{protonet_forward.5} parent=62 // loop_exit
                  _
              $region63: #{protonet_forward.5} parent=47 // pred_fallthru
                _
              // Predicated region
              $region71: #{protonet_forward.5} parent=47 // pred_check
                _
              $region72: #{protonet_forward.5} parent=47 // pred_check_branch
                %339 = sbr.rel target = $region74
              $region73: #{protonet_forward.5} parent=47 // pred_region
                _
              $region74: #{protonet_forward.5} parent=47 // pred_fallthru
                _
            $region48: #{protonet_forward.5} parent=43 // pred_fallthru
              _
            // Predicated region
            $region49: #{protonet_forward.5} parent=43 // pred_check
              _
            $region50: #{protonet_forward.5} parent=43 // pred_check_branch
              %245 = sbr.rel target = $region52
            $region51: #{protonet_forward.5} parent=43 // pred_region
              %s247 = ssub.s32 256, 1
              loop: start=0, step=1, limit=1
              $region53: #{protonet_forward.5} parent=51 // loop_pre_header
                _
              $region54: #{protonet_forward.5} parent=51 // loop_header
                %s249 = sphi 0, %s253
                %p250 = scmp.ge.s32.totalorder %s249, 1
                %s254 = sphi %s239, %s239
                %s255 = sphi %s236, %s236
              $region55: #{protonet_forward.5} parent=51 // loop_header_branch
                %252 = sbr.rel (%p250) target = $region59
              $region56: #{protonet_forward.5} parent=51 // loop_body
                %v256 = vld [vmem:[%s254] sm:%s247]
                %257 = vst [vmem:[%s255] sm:%s247] %v256
                %v258 = vld [vmem:[%s254 + $0x18] sm:%s247]
                %259 = vst [vmem:[%s255 + $0x8] sm:%s247] %v258
                %v260 = vld [vmem:[%s254 + $0x30] sm:%s247]
                %261 = vst [vmem:[%s255 + $0x10] sm:%s247] %v260
                %v262 = vld [vmem:[%s254 + $0x48] sm:%s247]
                %263 = vst [vmem:[%s255 + $0x18] sm:%s247] %v262
                %v264 = vld [vmem:[%s254 + $0x60] sm:%s247]
                %265 = vst [vmem:[%s255 + $0x20] sm:%s247] %v264
                %v266 = vld [vmem:[%s254 + $0x78] sm:%s247]
                %267 = vst [vmem:[%s255 + $0x28] sm:%s247] %v266
                %v268 = vld [vmem:[%s254 + $0x90] sm:%s247]
                %269 = vst [vmem:[%s255 + $0x30] sm:%s247] %v268
                %v270 = vld [vmem:[%s254 + $0xa8] sm:%s247]
                %271 = vst [vmem:[%s255 + $0x38] sm:%s247] %v270
                %v272 = vld [vmem:[%s254 + $0xc0] sm:%s247]
                %273 = vst [vmem:[%s255 + $0x40] sm:%s247] %v272
                %v274 = vld [vmem:[%s254 + $0xd8] sm:%s247]
                %275 = vst [vmem:[%s255 + $0x48] sm:%s247] %v274
                %v276 = vld [vmem:[%s254 + $0xf0] sm:%s247]
                %277 = vst [vmem:[%s255 + $0x50] sm:%s247] %v276
                %v278 = vld [vmem:[%s254 + $0x108] sm:%s247]
                %279 = vst [vmem:[%s255 + $0x58] sm:%s247] %v278
                %v280 = vld [vmem:[%s254 + $0x120] sm:%s247]
                %281 = vst [vmem:[%s255 + $0x60] sm:%s247] %v280
                %v282 = vld [vmem:[%s254 + $0x138] sm:%s247]
                %283 = vst [vmem:[%s255 + $0x68] sm:%s247] %v282
                %v284 = vld [vmem:[%s254 + $0x150] sm:%s247]
                %285 = vst [vmem:[%s255 + $0x70] sm:%s247] %v284
                %v286 = vld [vmem:[%s254 + $0x168] sm:%s247]
                %287 = vst [vmem:[%s255 + $0x78] sm:%s247] %v286
                %v288 = vld [vmem:[%s254 + $0x180] sm:%s247]
                %289 = vst [vmem:[%s255 + $0x80] sm:%s247] %v288
                %v290 = vld [vmem:[%s254 + $0x198] sm:%s247]
                %291 = vst [vmem:[%s255 + $0x88] sm:%s247] %v290
              $region57: #{protonet_forward.5} parent=51 // loop_footer
                %s253 = sadd.s32 1, %s249
              $region58: #{protonet_forward.5} parent=51 // loop_footer_branch
                %248 = sbr.rel target = $region54
              $region59: #{protonet_forward.5} parent=51 // loop_exit
                _
            $region52: #{protonet_forward.5} parent=43 // pred_fallthru
              _
          $region44: #{protonet_forward.5} parent=39 // pred_fallthru
            _
          %340 = vnop
        $region40: #{protonet_forward.5} parent=35 // pred_fallthru
          _
        // Predicated region
        $region75: #{protonet_forward.5} parent=35 // pred_check
          %p341 = pneg %p59
        $region76: #{protonet_forward.5} parent=35 // pred_check_branch
          %343 = sbr.rel (%p341) target = $region78
        $region77: #{protonet_forward.5} parent=35 // pred_region
          %s344 = sand.u32 %s49, 1
          %s345 = sand.u32 %s49, 1
          %s346 = smul.addr %s345, 144
          %s347 = scalar_lea.vmem [#allocation3], %s346
          %s348 = smul.addr %s13, 2
          %s349 = smul.addr %s348, 4
          %s350 = scalar_lea.vmem %s1, %s349
          // Predicated region
          $region79: #{protonet_forward.5} parent=77 // pred_check
            _
          $region80: #{protonet_forward.5} parent=77 // pred_check_branch
            %352 = sbr.rel (0) target = $region82
          $region81: #{protonet_forward.5} parent=77 // pred_region
            // Predicated region
            $region83: #{protonet_forward.5} parent=81 // pred_check
              _
            $region84: #{protonet_forward.5} parent=81 // pred_check_branch
              %354 = sbr.rel (0) target = $region86
            $region85: #{protonet_forward.5} parent=81 // pred_region
              // Predicated region
              $region98: #{protonet_forward.5} parent=85 // pred_check
                _
              $region99: #{protonet_forward.5} parent=85 // pred_check_branch
                %404 = sbr.rel (0) target = $region101
              $region100: #{protonet_forward.5} parent=85 // pred_region
                loop: start=0, step=1, limit=1
                $region102: #{protonet_forward.5} parent=100 // loop_pre_header
                  _
                $region103: #{protonet_forward.5} parent=100 // loop_header
                  %s406 = sphi 0, %s410
                  %p407 = scmp.ge.s32.totalorder %s406, 1
                  %s411 = sphi %s350, %s350
                  %s412 = sphi %s347, %s347
                $region104: #{protonet_forward.5} parent=100 // loop_header_branch
                  %409 = sbr.rel (%p407) target = $region108
                $region105: #{protonet_forward.5} parent=100 // loop_body
                  %v413 = vld [vmem:[%s411] sm:$0xff]
                  %414 = vst [vmem:[%s412] sm:$0xff] %v413
                  %v415 = vld [vmem:[%s411 + $0x18] sm:$0xff]
                  %416 = vst [vmem:[%s412 + $0x8] sm:$0xff] %v415
                  %v417 = vld [vmem:[%s411 + $0x30] sm:$0xff]
                  %418 = vst [vmem:[%s412 + $0x10] sm:$0xff] %v417
                  %v419 = vld [vmem:[%s411 + $0x48] sm:$0xff]
                  %420 = vst [vmem:[%s412 + $0x18] sm:$0xff] %v419
                  %v421 = vld [vmem:[%s411 + $0x60] sm:$0xff]
                  %422 = vst [vmem:[%s412 + $0x20] sm:$0xff] %v421
                  %v423 = vld [vmem:[%s411 + $0x78] sm:$0xff]
                  %424 = vst [vmem:[%s412 + $0x28] sm:$0xff] %v423
                  %v425 = vld [vmem:[%s411 + $0x90] sm:$0xff]
                  %426 = vst [vmem:[%s412 + $0x30] sm:$0xff] %v425
                  %v427 = vld [vmem:[%s411 + $0xa8] sm:$0xff]
                  %428 = vst [vmem:[%s412 + $0x38] sm:$0xff] %v427
                  %v429 = vld [vmem:[%s411 + $0xc0] sm:$0xff]
                  %430 = vst [vmem:[%s412 + $0x40] sm:$0xff] %v429
                  %v431 = vld [vmem:[%s411 + $0xd8] sm:$0xff]
                  %432 = vst [vmem:[%s412 + $0x48] sm:$0xff] %v431
                  %v433 = vld [vmem:[%s411 + $0xf0] sm:$0xff]
                  %434 = vst [vmem:[%s412 + $0x50] sm:$0xff] %v433
                  %v435 = vld [vmem:[%s411 + $0x108] sm:$0xff]
                  %436 = vst [vmem:[%s412 + $0x58] sm:$0xff] %v435
                  %v437 = vld [vmem:[%s411 + $0x120] sm:$0xff]
                  %438 = vst [vmem:[%s412 + $0x60] sm:$0xff] %v437
                  %v439 = vld [vmem:[%s411 + $0x138] sm:$0xff]
                  %440 = vst [vmem:[%s412 + $0x68] sm:$0xff] %v439
                  %v441 = vld [vmem:[%s411 + $0x150] sm:$0xff]
                  %442 = vst [vmem:[%s412 + $0x70] sm:$0xff] %v441
                  %v443 = vld [vmem:[%s411 + $0x168] sm:$0xff]
                  %444 = vst [vmem:[%s412 + $0x78] sm:$0xff] %v443
                  %v445 = vld [vmem:[%s411 + $0x180] sm:$0xff]
                  %446 = vst [vmem:[%s412 + $0x80] sm:$0xff] %v445
                  %v447 = vld [vmem:[%s411 + $0x198] sm:$0xff]
                  %448 = vst [vmem:[%s412 + $0x88] sm:$0xff] %v447
                $region106: #{protonet_forward.5} parent=100 // loop_footer
                  %s410 = sadd.s32 1, %s406
                $region107: #{protonet_forward.5} parent=100 // loop_footer_branch
                  %405 = sbr.rel target = $region103
                $region108: #{protonet_forward.5} parent=100 // loop_exit
                  _
              $region101: #{protonet_forward.5} parent=85 // pred_fallthru
                _
              // Predicated region
              $region109: #{protonet_forward.5} parent=85 // pred_check
                _
              $region110: #{protonet_forward.5} parent=85 // pred_check_branch
                %450 = sbr.rel target = $region112
              $region111: #{protonet_forward.5} parent=85 // pred_region
                _
              $region112: #{protonet_forward.5} parent=85 // pred_fallthru
                _
            $region86: #{protonet_forward.5} parent=81 // pred_fallthru
              _
            // Predicated region
            $region87: #{protonet_forward.5} parent=81 // pred_check
              _
            $region88: #{protonet_forward.5} parent=81 // pred_check_branch
              %356 = sbr.rel target = $region90
            $region89: #{protonet_forward.5} parent=81 // pred_region
              %s358 = ssub.s32 256, 1
              loop: start=0, step=1, limit=1
              $region91: #{protonet_forward.5} parent=89 // loop_pre_header
                _
              $region92: #{protonet_forward.5} parent=89 // loop_header
                %s360 = sphi 0, %s364
                %p361 = scmp.ge.s32.totalorder %s360, 1
                %s365 = sphi %s350, %s350
                %s366 = sphi %s347, %s347
              $region93: #{protonet_forward.5} parent=89 // loop_header_branch
                %363 = sbr.rel (%p361) target = $region97
              $region94: #{protonet_forward.5} parent=89 // loop_body
                %v367 = vld [vmem:[%s365] sm:%s358]
                %368 = vst [vmem:[%s366] sm:%s358] %v367
                %v369 = vld [vmem:[%s365 + $0x18] sm:%s358]
                %370 = vst [vmem:[%s366 + $0x8] sm:%s358] %v369
                %v371 = vld [vmem:[%s365 + $0x30] sm:%s358]
                %372 = vst [vmem:[%s366 + $0x10] sm:%s358] %v371
                %v373 = vld [vmem:[%s365 + $0x48] sm:%s358]
                %374 = vst [vmem:[%s366 + $0x18] sm:%s358] %v373
                %v375 = vld [vmem:[%s365 + $0x60] sm:%s358]
                %376 = vst [vmem:[%s366 + $0x20] sm:%s358] %v375
                %v377 = vld [vmem:[%s365 + $0x78] sm:%s358]
                %378 = vst [vmem:[%s366 + $0x28] sm:%s358] %v377
                %v379 = vld [vmem:[%s365 + $0x90] sm:%s358]
                %380 = vst [vmem:[%s366 + $0x30] sm:%s358] %v379
                %v381 = vld [vmem:[%s365 + $0xa8] sm:%s358]
                %382 = vst [vmem:[%s366 + $0x38] sm:%s358] %v381
                %v383 = vld [vmem:[%s365 + $0xc0] sm:%s358]
                %384 = vst [vmem:[%s366 + $0x40] sm:%s358] %v383
                %v385 = vld [vmem:[%s365 + $0xd8] sm:%s358]
                %386 = vst [vmem:[%s366 + $0x48] sm:%s358] %v385
                %v387 = vld [vmem:[%s365 + $0xf0] sm:%s358]
                %388 = vst [vmem:[%s366 + $0x50] sm:%s358] %v387
                %v389 = vld [vmem:[%s365 + $0x108] sm:%s358]
                %390 = vst [vmem:[%s366 + $0x58] sm:%s358] %v389
                %v391 = vld [vmem:[%s365 + $0x120] sm:%s358]
                %392 = vst [vmem:[%s366 + $0x60] sm:%s358] %v391
                %v393 = vld [vmem:[%s365 + $0x138] sm:%s358]
                %394 = vst [vmem:[%s366 + $0x68] sm:%s358] %v393
                %v395 = vld [vmem:[%s365 + $0x150] sm:%s358]
                %396 = vst [vmem:[%s366 + $0x70] sm:%s358] %v395
                %v397 = vld [vmem:[%s365 + $0x168] sm:%s358]
                %398 = vst [vmem:[%s366 + $0x78] sm:%s358] %v397
                %v399 = vld [vmem:[%s365 + $0x180] sm:%s358]
                %400 = vst [vmem:[%s366 + $0x80] sm:%s358] %v399
                %v401 = vld [vmem:[%s365 + $0x198] sm:%s358]
                %402 = vst [vmem:[%s366 + $0x88] sm:%s358] %v401
              $region95: #{protonet_forward.5} parent=89 // loop_footer
                %s364 = sadd.s32 1, %s360
              $region96: #{protonet_forward.5} parent=89 // loop_footer_branch
                %359 = sbr.rel target = $region92
              $region97: #{protonet_forward.5} parent=89 // loop_exit
                _
            $region90: #{protonet_forward.5} parent=81 // pred_fallthru
              _
          $region82: #{protonet_forward.5} parent=77 // pred_fallthru
            _
          %451 = vnop
        $region78: #{protonet_forward.5} parent=35 // pred_fallthru
          _
      $region36: #{protonet_forward.5} parent=5 // pred_fallthru
        _
      %p452 = scmp.le.s32.totalorder 1, %s13
      %p453 = scmp.lt.s32.totalorder %s13, 4
      %p454 = pnand %p452, %p453
      %p455 = pneg %p454
      // Predicated region
      $region113: #{protonet_forward.5} parent=5 // pred_check
        _
      $region114: #{protonet_forward.5} parent=5 // pred_check_branch
        %457 = sbr.rel (%p454) target = $region116
      $region115: #{protonet_forward.5} parent=5 // pred_region
        %s458 = ssub.s32 %s13, 1
        %s459 = sand.u32 %s26, 1
        %s460 = sand.u32 %s26, 1
        %s461 = smul.addr %s460, 144
        %s462 = scalar_lea.vmem [#allocation2], %s461
        // Predicated region
        $region117: #{protonet_forward.5} parent=115 // pred_check
          %p463 = pneg %p39
        $region118: #{protonet_forward.5} parent=115 // pred_check_branch
          %465 = sbr.rel (%p463) target = $region120
        $region119: #{protonet_forward.5} parent=115 // pred_region
          _
        $region120: #{protonet_forward.5} parent=115 // pred_fallthru
          _
        %s466 = sand.u32 %s52, 1
        %s467 = sand.u32 %s52, 1
        %s468 = smul.addr %s467, 144
        %s469 = scalar_lea.vmem [#allocation3], %s468
        // Predicated region
        $region121: #{protonet_forward.5} parent=115 // pred_check
          %p470 = pneg %p65
        $region122: #{protonet_forward.5} parent=115 // pred_check_branch
          %472 = sbr.rel (%p470) target = $region124
        $region123: #{protonet_forward.5} parent=115 // pred_region
          _
        $region124: #{protonet_forward.5} parent=115 // pred_fallthru
          _
        %s473 = sand.u32 %s26, 1
        %s474 = sand.u32 %s26, 1
        %s475 = smul.addr %s474, 144
        %s476 = scalar_lea.vmem [#allocation2], %s475
        %p477 = pneg %p39
        %p478 = pneg %p36
        %s479 = sand.u32 %s52, 1
        %s480 = sand.u32 %s52, 1
        %s481 = smul.addr %s480, 144
        %s482 = scalar_lea.vmem [#allocation3], %s481
        %p483 = pneg %p65
        %p484 = pneg %p62
        %p485 = pneg %p86
        %p486 = pneg %p83
        %p487 = pneg %p107
        %p488 = pneg %p104
        %p489 = pneg %p128
        %p490 = pneg %p125
        %p491 = pneg %p149
        %p492 = pneg %p146
        %p493 = pneg %p170
        %p494 = pneg %p167
        %p495 = pneg %p196
        %p496 = pneg %p193
        %s497 = sand.u32 %s183, 1
        %s498 = sand.u32 %s183, 1
        %s499 = smul.addr %s498, 32
        %s500 = scalar_lea.vmem [#allocation4], %s499
        %v502 = vld [vmem:[%s6] sm:$0x1]
        %v503 = vld [vmem:[%s462] sm:$0xff]
        %v504 = vld [vmem:[%s462 + $0x8] sm:$0xff]
        %v505 = vld [vmem:[%s462 + $0x10] sm:$0xff]
        %v506 = vld [vmem:[%s462 + $0x18] sm:$0xff]
        %v507 = vld [vmem:[%s462 + $0x20] sm:$0xff]
        %v508 = vld [vmem:[%s462 + $0x28] sm:$0xff]
        %v509 = vld [vmem:[%s462 + $0x30] sm:$0xff]
        %v510 = vld [vmem:[%s462 + $0x38] sm:$0xff]
        %v511 = vld [vmem:[%s462 + $0x40] sm:$0xff]
        %v512 = vld [vmem:[%s462 + $0x48] sm:$0xff]
        %v513 = vld [vmem:[%s462 + $0x50] sm:$0xff]
        %v514 = vld [vmem:[%s462 + $0x58] sm:$0xff]
        %v515 = vld [vmem:[%s462 + $0x60] sm:$0xff]
        %v516 = vld [vmem:[%s462 + $0x68] sm:$0xff]
        %v517 = vld [vmem:[%s462 + $0x70] sm:$0xff]
        %v518 = vld [vmem:[%s462 + $0x78] sm:$0xff]
        %v519 = vld [vmem:[%s469] sm:$0xff]
        %v520 = vld [vmem:[%s469 + $0x8] sm:$0xff]
        %v521 = vld [vmem:[%s469 + $0x10] sm:$0xff]
        %v522 = vld [vmem:[%s469 + $0x18] sm:$0xff]
        %v523 = vld [vmem:[%s469 + $0x20] sm:$0xff]
        %v524 = vld [vmem:[%s469 + $0x28] sm:$0xff]
        %v525 = vld [vmem:[%s469 + $0x30] sm:$0xff]
        %v526 = vld [vmem:[%s469 + $0x38] sm:$0xff]
        %v527 = vld [vmem:[%s469 + $0x40] sm:$0xff]
        %v528 = vld [vmem:[%s469 + $0x48] sm:$0xff]
        %v529 = vld [vmem:[%s469 + $0x50] sm:$0xff]
        %v530 = vld [vmem:[%s469 + $0x58] sm:$0xff]
        %v531 = vld [vmem:[%s469 + $0x60] sm:$0xff]
        %v532 = vld [vmem:[%s469 + $0x68] sm:$0xff]
        %v533 = vld [vmem:[%s469 + $0x70] sm:$0xff]
        %v534 = vld [vmem:[%s469 + $0x78] sm:$0xff]
        %v535 = vld [vmem:[%s2] sm:$0xf]
        %v536 = vld [vmem:[%s2 + $0x4] sm:$0xf]
        %v537 = vld [vmem:[%s2 + $0x8] sm:$0xf]
        %v538 = vld [vmem:[%s2 + $0xc] sm:$0xf]
        %v539 = vld [vmem:[%s2 + $0x10] sm:$0xf]
        %v540 = vld [vmem:[%s2 + $0x14] sm:$0xf]
        %v541 = vld [vmem:[%s2 + $0x18] sm:$0xf]
        %v542 = vld [vmem:[%s2 + $0x1c] sm:$0xf]
        %v543 = vld [vmem:[%s2 + $0x20] sm:$0xf]
        %v544 = vld [vmem:[%s2 + $0x24] sm:$0xf]
        %v545 = vld [vmem:[%s2 + $0x28] sm:$0xf]
        %v546 = vld [vmem:[%s2 + $0x2c] sm:$0xf]
        %v547 = vld [vmem:[%s2 + $0x30] sm:$0xf]
        %v548 = vld [vmem:[%s2 + $0x34] sm:$0xf]
        %v549 = vld [vmem:[%s2 + $0x38] sm:$0xf]
        %v550 = vld [vmem:[%s2 + $0x3c] sm:$0xf]
        %v551 = vld [vmem:[%s2 + $0x40] sm:$0xf]
        %v552 = vld [vmem:[%s2 + $0x44] sm:$0xf]
        %v553 = vld [vmem:[%s3] sm:$0xf]
        %v554 = vld [vmem:[%s3 + $0x4] sm:$0xf]
        %v555 = vld [vmem:[%s3 + $0x8] sm:$0xf]
        %v556 = vld [vmem:[%s3 + $0xc] sm:$0xf]
        %v557 = vld [vmem:[%s3 + $0x10] sm:$0xf]
        %v558 = vld [vmem:[%s3 + $0x14] sm:$0xf]
        %v559 = vld [vmem:[%s3 + $0x18] sm:$0xf]
        %v560 = vld [vmem:[%s3 + $0x1c] sm:$0xf]
        %v561 = vld [vmem:[%s3 + $0x20] sm:$0xf]
        %v562 = vld [vmem:[%s3 + $0x24] sm:$0xf]
        %v563 = vld [vmem:[%s3 + $0x28] sm:$0xf]
        %v564 = vld [vmem:[%s3 + $0x2c] sm:$0xf]
        %v565 = vld [vmem:[%s3 + $0x30] sm:$0xf]
        %v566 = vld [vmem:[%s3 + $0x34] sm:$0xf]
        %v567 = vld [vmem:[%s3 + $0x38] sm:$0xf]
        %v568 = vld [vmem:[%s3 + $0x3c] sm:$0xf]
        %v569 = vld [vmem:[%s3 + $0x40] sm:$0xf]
        %v570 = vld [vmem:[%s3 + $0x44] sm:$0xf]
        %v587 = vunpack.c.l.b16 %v519
        %v588 = vunpack.c.h.b16 %v519
        %v589 = vunpack.c.l.b16 %v520
        %v590 = vunpack.c.h.b16 %v520
        %v591 = vunpack.c.l.b16 %v521
        %v592 = vunpack.c.h.b16 %v521
        %v593 = vunpack.c.l.b16 %v522
        %v594 = vunpack.c.h.b16 %v522
        %v595 = vunpack.c.l.b16 %v523
        %v596 = vunpack.c.h.b16 %v523
        %v597 = vunpack.c.l.b16 %v524
        %v598 = vunpack.c.h.b16 %v524
        %v599 = vunpack.c.l.b16 %v525
        %v600 = vunpack.c.h.b16 %v525
        %v601 = vunpack.c.l.b16 %v526
        %v602 = vunpack.c.h.b16 %v526
        %v603 = vunpack.c.l.b16 %v527
        %v604 = vunpack.c.h.b16 %v527
        %v605 = vunpack.c.l.b16 %v528
        %v606 = vunpack.c.h.b16 %v528
        %v607 = vunpack.c.l.b16 %v529
        %v608 = vunpack.c.h.b16 %v529
        %v609 = vunpack.c.l.b16 %v530
        %v610 = vunpack.c.h.b16 %v530
        %v611 = vunpack.c.l.b16 %v531
        %v612 = vunpack.c.h.b16 %v531
        %v613 = vunpack.c.l.b16 %v532
        %v614 = vunpack.c.h.b16 %v532
        %v615 = vunpack.c.l.b16 %v533
        %v616 = vunpack.c.h.b16 %v533
        %v617 = vunpack.c.l.b16 %v534
        %v618 = vunpack.c.h.b16 %v534
        %v619 = vpack.c.b16 %v589, %v587
        %v620 = vpack.c.b16 %v590, %v588
        %v621 = vpack.c.b16 %v593, %v591
        %v622 = vpack.c.b16 %v594, %v592
        %v623 = vpack.c.b16 %v597, %v595
        %v624 = vpack.c.b16 %v598, %v596
        %v625 = vpack.c.b16 %v601, %v599
        %v626 = vpack.c.b16 %v602, %v600
        %v627 = vpack.c.b16 %v605, %v603
        %v628 = vpack.c.b16 %v606, %v604
        %v629 = vpack.c.b16 %v609, %v607
        %v630 = vpack.c.b16 %v610, %v608
        %v631 = vpack.c.b16 %v613, %v611
        %v632 = vpack.c.b16 %v614, %v612
        %v633 = vpack.c.b16 %v617, %v615
        %v634 = vpack.c.b16 %v618, %v616
        %v661 = vunpack.c.l.b16 %v553
        %v662 = vunpack.c.l.b16 %v554
        %v663 = vunpack.c.l.b16 %v555
        %v664 = vunpack.c.l.b16 %v556
        %v665 = vunpack.c.l.b16 %v557
        %v666 = vunpack.c.l.b16 %v558
        %v667 = vunpack.c.l.b16 %v559
        %v668 = vunpack.c.l.b16 %v560
        %v669 = vunpack.c.l.b16 %v561
        %v670 = vunpack.c.l.b16 %v562
        %v671 = vunpack.c.l.b16 %v563
        %v672 = vunpack.c.l.b16 %v564
        %v673 = vunpack.c.l.b16 %v565
        %v674 = vunpack.c.l.b16 %v566
        %v675 = vunpack.c.l.b16 %v567
        %v676 = vunpack.c.l.b16 %v568
        %v677 = vunpack.c.l.b16 %v569
        %v678 = vunpack.c.l.b16 %v570
        %v679 = vpack.c.b16 %v662, %v661
        %v680 = vpack.c.b16 %v664, %v663
        %v681 = vpack.c.b16 %v666, %v665
        %v682 = vpack.c.b16 %v668, %v667
        %v683 = vpack.c.b16 %v670, %v669
        %v684 = vpack.c.b16 %v672, %v671
        %v685 = vpack.c.b16 %v674, %v673
        %v686 = vpack.c.b16 %v676, %v675
        %v687 = vpack.c.b16 %v678, %v677
        %vm697 = vcmask 130048
        %v699 = vsel %vm697, %v620, 0
        %v702 = vsel %vm697, %v622, 0
        %v705 = vsel %vm697, %v624, 0
        %v708 = vsel %vm697, %v626, 0
        %v711 = vsel %vm697, %v628, 0
        %v714 = vsel %vm697, %v630, 0
        %v717 = vsel %vm697, %v632, 0
        %v720 = vsel %vm697, %v634, 0
        %722 = vmatpush.bf16.msra.mxu0 %v686
        %723 = vmatpush.bf16.msra.mxu0 %v685
        %724 = vmatpush.bf16.msra.mxu0 %v684
        %725 = vmatpush.bf16.msra.mxu0 %v683
        %726 = vmatpush.bf16.msra.mxu0 %v682
        %727 = vmatpush.bf16.msra.mxu0 %v681
        %728 = vmatpush.bf16.msra.mxu0 %v680
        %729 = vmatpush.bf16.msra.mxu0 %v679
        %730 = vmatmul.bf16.gmra.mxu0 %v619
        %v731 = vpop.f32.mrf.mxu0
        %v732 = vadd.f32 0.0, %v731
        %v733 = vpop.f32.mrf.mxu0
        %v734 = vadd.f32 0.0, %v733
        %735 = vmatmul.bf16.gmra.mxu0 %v621
        %v736 = vpop.f32.mrf.mxu0
        %v737 = vadd.f32 0.0, %v736
        %v738 = vpop.f32.mrf.mxu0
        %v739 = vadd.f32 0.0, %v738
        %740 = vmatmul.bf16.gmra.mxu0 %v623
        %v741 = vpop.f32.mrf.mxu0
        %v742 = vadd.f32 0.0, %v741
        %v743 = vpop.f32.mrf.mxu0
        %v744 = vadd.f32 0.0, %v743
        %745 = vmatmul.bf16.gmra.mxu0 %v625
        %v746 = vpop.f32.mrf.mxu0
        %v747 = vadd.f32 0.0, %v746
        %v748 = vpop.f32.mrf.mxu0
        %v749 = vadd.f32 0.0, %v748
        %750 = vmatmul.bf16.gmra.mxu0 %v627
        %v751 = vpop.f32.mrf.mxu0
        %v752 = vadd.f32 0.0, %v751
        %v753 = vpop.f32.mrf.mxu0
        %v754 = vadd.f32 0.0, %v753
        %755 = vmatmul.bf16.gmra.mxu0 %v629
        %v756 = vpop.f32.mrf.mxu0
        %v757 = vadd.f32 0.0, %v756
        %v758 = vpop.f32.mrf.mxu0
        %v759 = vadd.f32 0.0, %v758
        %760 = vmatmul.bf16.gmra.mxu0 %v631
        %v761 = vpop.f32.mrf.mxu0
        %v762 = vadd.f32 0.0, %v761
        %v763 = vpop.f32.mrf.mxu0
        %v764 = vadd.f32 0.0, %v763
        %765 = vmatmul.bf16.gmra.mxu0 %v633
        %v766 = vpop.f32.mrf.mxu0
        %v767 = vadd.f32 0.0, %v766
        %v768 = vpop.f32.mrf.mxu0
        %v769 = vadd.f32 0.0, %v768
        %770 = vdwg.mxu0
        %771 = vmatpush.bf16.msra.mxu0 0
        %772 = vmatpush.bf16.msra.mxu0 0
        %773 = vmatpush.bf16.msra.mxu0 0
        %774 = vmatpush.bf16.msra.mxu0 0
        %775 = vmatpush.bf16.msra.mxu0 0
        %776 = vmatpush.bf16.msra.mxu0 0
        %777 = vmatpush.bf16.msra.mxu0 0
        %778 = vmatpush.bf16.msra.mxu0 %v687
        %779 = vmatmul.bf16.gmra.mxu0 %v699
        %v780 = vpop.f32.mrf.mxu0
        %v781 = vadd.f32 %v732, %v780
        %v782 = vpop.f32.mrf.mxu0
        %v783 = vadd.f32 %v734, %v782
        %784 = vmatmul.bf16.gmra.mxu0 %v702
        %v785 = vpop.f32.mrf.mxu0
        %v786 = vadd.f32 %v737, %v785
        %v787 = vpop.f32.mrf.mxu0
        %v788 = vadd.f32 %v739, %v787
        %789 = vmatmul.bf16.gmra.mxu0 %v705
        %v790 = vpop.f32.mrf.mxu0
        %v791 = vadd.f32 %v742, %v790
        %v792 = vpop.f32.mrf.mxu0
        %v793 = vadd.f32 %v744, %v792
        %794 = vmatmul.bf16.gmra.mxu0 %v708
        %v795 = vpop.f32.mrf.mxu0
        %v796 = vadd.f32 %v747, %v795
        %v797 = vpop.f32.mrf.mxu0
        %v798 = vadd.f32 %v749, %v797
        %799 = vmatmul.bf16.gmra.mxu0 %v711
        %v800 = vpop.f32.mrf.mxu0
        %v801 = vadd.f32 %v752, %v800
        %v802 = vpop.f32.mrf.mxu0
        %v803 = vadd.f32 %v754, %v802
        %804 = vmatmul.bf16.gmra.mxu0 %v714
        %v805 = vpop.f32.mrf.mxu0
        %v806 = vadd.f32 %v757, %v805
        %v807 = vpop.f32.mrf.mxu0
        %v808 = vadd.f32 %v759, %v807
        %809 = vmatmul.bf16.gmra.mxu0 %v717
        %v810 = vpop.f32.mrf.mxu0
        %v811 = vadd.f32 %v762, %v810
        %v812 = vpop.f32.mrf.mxu0
        %v813 = vadd.f32 %v764, %v812
        %814 = vmatmul.bf16.gmra.mxu0 %v720
        %v815 = vpop.f32.mrf.mxu0
        %v816 = vadd.f32 %v767, %v815
        %v817 = vpop.f32.mrf.mxu0
        %v818 = vadd.f32 %v769, %v817
        %819 = vdwg.mxu0
        %v836 = vunpack.c.l.b16 %v503
        %v837 = vunpack.c.h.b16 %v503
        %v838 = vunpack.c.l.b16 %v504
        %v839 = vunpack.c.h.b16 %v504
        %v840 = vunpack.c.l.b16 %v505
        %v841 = vunpack.c.h.b16 %v505
        %v842 = vunpack.c.l.b16 %v506
        %v843 = vunpack.c.h.b16 %v506
        %v844 = vunpack.c.l.b16 %v507
        %v845 = vunpack.c.h.b16 %v507
        %v846 = vunpack.c.l.b16 %v508
        %v847 = vunpack.c.h.b16 %v508
        %v848 = vunpack.c.l.b16 %v509
        %v849 = vunpack.c.h.b16 %v509
        %v850 = vunpack.c.l.b16 %v510
        %v851 = vunpack.c.h.b16 %v510
        %v852 = vunpack.c.l.b16 %v511
        %v853 = vunpack.c.h.b16 %v511
        %v854 = vunpack.c.l.b16 %v512
        %v855 = vunpack.c.h.b16 %v512
        %v856 = vunpack.c.l.b16 %v513
        %v857 = vunpack.c.h.b16 %v513
        %v858 = vunpack.c.l.b16 %v514
        %v859 = vunpack.c.h.b16 %v514
        %v860 = vunpack.c.l.b16 %v515
        %v861 = vunpack.c.h.b16 %v515
        %v862 = vunpack.c.l.b16 %v516
        %v863 = vunpack.c.h.b16 %v516
        %v864 = vunpack.c.l.b16 %v517
        %v865 = vunpack.c.h.b16 %v517
        %v866 = vunpack.c.l.b16 %v518
        %v867 = vunpack.c.h.b16 %v518
        %v868 = vpack.c.b16 %v838, %v836
        %v869 = vpack.c.b16 %v839, %v837
        %v870 = vpack.c.b16 %v842, %v840
        %v871 = vpack.c.b16 %v843, %v841
        %v872 = vpack.c.b16 %v846, %v844
        %v873 = vpack.c.b16 %v847, %v845
        %v874 = vpack.c.b16 %v850, %v848
        %v875 = vpack.c.b16 %v851, %v849
        %v876 = vpack.c.b16 %v854, %v852
        %v877 = vpack.c.b16 %v855, %v853
        %v878 = vpack.c.b16 %v858, %v856
        %v879 = vpack.c.b16 %v859, %v857
        %v880 = vpack.c.b16 %v862, %v860
        %v881 = vpack.c.b16 %v863, %v861
        %v882 = vpack.c.b16 %v866, %v864
        %v883 = vpack.c.b16 %v867, %v865
        %v910 = vunpack.c.l.b16 %v535
        %v911 = vunpack.c.l.b16 %v536
        %v912 = vunpack.c.l.b16 %v537
        %v913 = vunpack.c.l.b16 %v538
        %v914 = vunpack.c.l.b16 %v539
        %v915 = vunpack.c.l.b16 %v540
        %v916 = vunpack.c.l.b16 %v541
        %v917 = vunpack.c.l.b16 %v542
        %v918 = vunpack.c.l.b16 %v543
        %v919 = vunpack.c.l.b16 %v544
        %v920 = vunpack.c.l.b16 %v545
        %v921 = vunpack.c.l.b16 %v546
        %v922 = vunpack.c.l.b16 %v547
        %v923 = vunpack.c.l.b16 %v548
        %v924 = vunpack.c.l.b16 %v549
        %v925 = vunpack.c.l.b16 %v550
        %v926 = vunpack.c.l.b16 %v551
        %v927 = vunpack.c.l.b16 %v552
        %v928 = vpack.c.b16 %v911, %v910
        %v929 = vpack.c.b16 %v913, %v912
        %v930 = vpack.c.b16 %v915, %v914
        %v931 = vpack.c.b16 %v917, %v916
        %v932 = vpack.c.b16 %v919, %v918
        %v933 = vpack.c.b16 %v921, %v920
        %v934 = vpack.c.b16 %v923, %v922
        %v935 = vpack.c.b16 %v925, %v924
        %v936 = vpack.c.b16 %v927, %v926
        %v947 = vsel %vm697, %v869, 0
        %v950 = vsel %vm697, %v871, 0
        %v953 = vsel %vm697, %v873, 0
        %v956 = vsel %vm697, %v875, 0
        %v959 = vsel %vm697, %v877, 0
        %v962 = vsel %vm697, %v879, 0
        %v965 = vsel %vm697, %v881, 0
        %v968 = vsel %vm697, %v883, 0
        %970 = vmatpush.bf16.msra.mxu0 %v935
        %971 = vmatpush.bf16.msra.mxu0 %v934
        %972 = vmatpush.bf16.msra.mxu0 %v933
        %973 = vmatpush.bf16.msra.mxu0 %v932
        %974 = vmatpush.bf16.msra.mxu0 %v931
        %975 = vmatpush.bf16.msra.mxu0 %v930
        %976 = vmatpush.bf16.msra.mxu0 %v929
        %977 = vmatpush.bf16.msra.mxu0 %v928
        %978 = vmatmul.bf16.gmra.mxu0 %v868
        %v979 = vpop.f32.mrf.mxu0
        %v980 = vadd.f32 %v781, %v979
        %v981 = vpop.f32.mrf.mxu0
        %v982 = vadd.f32 %v783, %v981
        %983 = vmatmul.bf16.gmra.mxu0 %v870
        %v984 = vpop.f32.mrf.mxu0
        %v985 = vadd.f32 %v786, %v984
        %v986 = vpop.f32.mrf.mxu0
        %v987 = vadd.f32 %v788, %v986
        %988 = vmatmul.bf16.gmra.mxu0 %v872
        %v989 = vpop.f32.mrf.mxu0
        %v990 = vadd.f32 %v791, %v989
        %v991 = vpop.f32.mrf.mxu0
        %v992 = vadd.f32 %v793, %v991
        %993 = vmatmul.bf16.gmra.mxu0 %v874
        %v994 = vpop.f32.mrf.mxu0
        %v995 = vadd.f32 %v796, %v994
        %v996 = vpop.f32.mrf.mxu0
        %v997 = vadd.f32 %v798, %v996
        %998 = vmatmul.bf16.gmra.mxu0 %v876
        %v999 = vpop.f32.mrf.mxu0
        %v1000 = vadd.f32 %v801, %v999
        %v1001 = vpop.f32.mrf.mxu0
        %v1002 = vadd.f32 %v803, %v1001
        %1003 = vmatmul.bf16.gmra.mxu0 %v878
        %v1004 = vpop.f32.mrf.mxu0
        %v1005 = vadd.f32 %v806, %v1004
        %v1006 = vpop.f32.mrf.mxu0
        %v1007 = vadd.f32 %v808, %v1006
        %1008 = vmatmul.bf16.gmra.mxu0 %v880
        %v1009 = vpop.f32.mrf.mxu0
        %v1010 = vadd.f32 %v811, %v1009
        %v1011 = vpop.f32.mrf.mxu0
        %v1012 = vadd.f32 %v813, %v1011
        %1013 = vmatmul.bf16.gmra.mxu0 %v882
        %v1014 = vpop.f32.mrf.mxu0
        %v1015 = vadd.f32 %v816, %v1014
        %v1016 = vpop.f32.mrf.mxu0
        %v1017 = vadd.f32 %v818, %v1016
        %1018 = vdwg.mxu0
        %1019 = vmatpush.bf16.msra.mxu0 0
        %1020 = vmatpush.bf16.msra.mxu0 0
        %1021 = vmatpush.bf16.msra.mxu0 0
        %1022 = vmatpush.bf16.msra.mxu0 0
        %1023 = vmatpush.bf16.msra.mxu0 0
        %1024 = vmatpush.bf16.msra.mxu0 0
        %1025 = vmatpush.bf16.msra.mxu0 0
        %1026 = vmatpush.bf16.msra.mxu0 %v936
        %1027 = vmatmul.bf16.gmra.mxu0 %v947
        %v1028 = vpop.f32.mrf.mxu0
        %v1029 = vadd.f32 %v980, %v1028
        %v1030 = vpop.f32.mrf.mxu0
        %v1031 = vadd.f32 %v982, %v1030
        %1032 = vmatmul.bf16.gmra.mxu0 %v950
        %v1033 = vpop.f32.mrf.mxu0
        %v1034 = vadd.f32 %v985, %v1033
        %v1035 = vpop.f32.mrf.mxu0
        %v1036 = vadd.f32 %v987, %v1035
        %1037 = vmatmul.bf16.gmra.mxu0 %v953
        %v1038 = vpop.f32.mrf.mxu0
        %v1039 = vadd.f32 %v990, %v1038
        %v1040 = vpop.f32.mrf.mxu0
        %v1041 = vadd.f32 %v992, %v1040
        %1042 = vmatmul.bf16.gmra.mxu0 %v956
        %v1043 = vpop.f32.mrf.mxu0
        %v1044 = vadd.f32 %v995, %v1043
        %v1045 = vpop.f32.mrf.mxu0
        %v1046 = vadd.f32 %v997, %v1045
        %1047 = vmatmul.bf16.gmra.mxu0 %v959
        %v1048 = vpop.f32.mrf.mxu0
        %v1049 = vadd.f32 %v1000, %v1048
        %v1050 = vpop.f32.mrf.mxu0
        %v1051 = vadd.f32 %v1002, %v1050
        %1052 = vmatmul.bf16.gmra.mxu0 %v962
        %v1053 = vpop.f32.mrf.mxu0
        %v1054 = vadd.f32 %v1005, %v1053
        %v1055 = vpop.f32.mrf.mxu0
        %v1056 = vadd.f32 %v1007, %v1055
        %1057 = vmatmul.bf16.gmra.mxu0 %v965
        %v1058 = vpop.f32.mrf.mxu0
        %v1059 = vadd.f32 %v1010, %v1058
        %v1060 = vpop.f32.mrf.mxu0
        %v1061 = vadd.f32 %v1012, %v1060
        %1062 = vmatmul.bf16.gmra.mxu0 %v968
        %v1063 = vpop.f32.mrf.mxu0
        %v1064 = vadd.f32 %v1015, %v1063
        %v1065 = vpop.f32.mrf.mxu0
        %v1066 = vadd.f32 %v1017, %v1065
        %1067 = vdwg.mxu0
        %v1068 = vld [vmem:[%s5] sm:$0xf]
        %v1069 = vld [vmem:[%s5 + $0x4] sm:$0xf]
        %v1070 = vld [vmem:[%s5 + $0x8] sm:$0xf]
        %v1071 = vld [vmem:[%s5 + $0xc] sm:$0xf]
        %v1072 = vld [vmem:[%s5 + $0x10] sm:$0xf]
        %v1073 = vld [vmem:[%s5 + $0x14] sm:$0xf]
        %v1074 = vld [vmem:[%s5 + $0x18] sm:$0xf]
        %v1075 = vld [vmem:[%s5 + $0x1c] sm:$0xf]
        %v1076 = vld [vmem:[%s5 + $0x20] sm:$0xf]
        %v1077 = vld [vmem:[%s5 + $0x24] sm:$0xf]
        %v1078 = vld [vmem:[%s5 + $0x28] sm:$0xf]
        %v1079 = vld [vmem:[%s5 + $0x2c] sm:$0xf]
        %v1080 = vld [vmem:[%s5 + $0x30] sm:$0xf]
        %v1081 = vld [vmem:[%s5 + $0x34] sm:$0xf]
        %v1082 = vld [vmem:[%s5 + $0x38] sm:$0xf]
        %v1083 = vld [vmem:[%s5 + $0x3c] sm:$0xf]
        %v1084 = vld [vmem:[%s5 + $0x40] sm:$0xf]
        %v1085 = vld [vmem:[%s5 + $0x44] sm:$0xf]
        %v1086 = vld [vmem:[%s4] sm:$0xf]
        %v1087 = vld [vmem:[%s4 + $0x4] sm:$0xf]
        %v1088 = vld [vmem:[%s4 + $0x8] sm:$0xf]
        %v1089 = vld [vmem:[%s4 + $0xc] sm:$0xf]
        %v1090 = vld [vmem:[%s4 + $0x10] sm:$0xf]
        %v1091 = vld [vmem:[%s4 + $0x14] sm:$0xf]
        %v1092 = vld [vmem:[%s4 + $0x18] sm:$0xf]
        %v1093 = vld [vmem:[%s4 + $0x1c] sm:$0xf]
        %v1094 = vld [vmem:[%s4 + $0x20] sm:$0xf]
        %v1095 = vld [vmem:[%s4 + $0x24] sm:$0xf]
        %v1096 = vld [vmem:[%s4 + $0x28] sm:$0xf]
        %v1097 = vld [vmem:[%s4 + $0x2c] sm:$0xf]
        %v1098 = vld [vmem:[%s4 + $0x30] sm:$0xf]
        %v1099 = vld [vmem:[%s4 + $0x34] sm:$0xf]
        %v1100 = vld [vmem:[%s4 + $0x38] sm:$0xf]
        %v1101 = vld [vmem:[%s4 + $0x3c] sm:$0xf]
        %v1102 = vld [vmem:[%s4 + $0x40] sm:$0xf]
        %v1103 = vld [vmem:[%s4 + $0x44] sm:$0xf]
        %v1122 = vunpack.c.l.b16 %v1086
        %v1123 = vunpack.c.l.b16 %v1087
        %v1124 = vunpack.c.l.b16 %v1088
        %v1125 = vunpack.c.l.b16 %v1089
        %v1126 = vunpack.c.l.b16 %v1090
        %v1127 = vunpack.c.l.b16 %v1091
        %v1128 = vunpack.c.l.b16 %v1092
        %v1129 = vunpack.c.l.b16 %v1093
        %v1130 = vunpack.c.l.b16 %v1094
        %v1131 = vunpack.c.l.b16 %v1095
        %v1132 = vunpack.c.l.b16 %v1096
        %v1133 = vunpack.c.l.b16 %v1097
        %v1134 = vunpack.c.l.b16 %v1098
        %v1135 = vunpack.c.l.b16 %v1099
        %v1136 = vunpack.c.l.b16 %v1100
        %v1137 = vunpack.c.l.b16 %v1101
        %v1138 = vunpack.c.l.b16 %v1102
        %v1139 = vunpack.c.l.b16 %v1103
        %v1140 = vpack.c.b16 %v1123, %v1122
        %v1141 = vpack.c.b16 %v1125, %v1124
        %v1142 = vpack.c.b16 %v1127, %v1126
        %v1143 = vpack.c.b16 %v1129, %v1128
        %v1144 = vpack.c.b16 %v1131, %v1130
        %v1145 = vpack.c.b16 %v1133, %v1132
        %v1146 = vpack.c.b16 %v1135, %v1134
        %v1147 = vpack.c.b16 %v1137, %v1136
        %v1148 = vpack.c.b16 %v1139, %v1138
        %1158 = vmatpush.bf16.msra.mxu0 %v1147
        %1159 = vmatpush.bf16.msra.mxu0 %v1146
        %1160 = vmatpush.bf16.msra.mxu0 %v1145
        %1161 = vmatpush.bf16.msra.mxu0 %v1144
        %1162 = vmatpush.bf16.msra.mxu0 %v1143
        %1163 = vmatpush.bf16.msra.mxu0 %v1142
        %1164 = vmatpush.bf16.msra.mxu0 %v1141
        %1165 = vmatpush.bf16.msra.mxu0 %v1140
        %1166 = vmatmul.bf16.gmra.mxu0 %v868
        %v1167 = vpop.f32.mrf.mxu0
        %v1168 = vadd.f32 0.0, %v1167
        %v1169 = vpop.f32.mrf.mxu0
        %v1170 = vadd.f32 0.0, %v1169
        %1171 = vmatmul.bf16.gmra.mxu0 %v870
        %v1172 = vpop.f32.mrf.mxu0
        %v1173 = vadd.f32 0.0, %v1172
        %v1174 = vpop.f32.mrf.mxu0
        %v1175 = vadd.f32 0.0, %v1174
        %1176 = vmatmul.bf16.gmra.mxu0 %v872
        %v1177 = vpop.f32.mrf.mxu0
        %v1178 = vadd.f32 0.0, %v1177
        %v1179 = vpop.f32.mrf.mxu0
        %v1180 = vadd.f32 0.0, %v1179
        %1181 = vmatmul.bf16.gmra.mxu0 %v874
        %v1182 = vpop.f32.mrf.mxu0
        %v1183 = vadd.f32 0.0, %v1182
        %v1184 = vpop.f32.mrf.mxu0
        %v1185 = vadd.f32 0.0, %v1184
        %1186 = vmatmul.bf16.gmra.mxu0 %v876
        %v1187 = vpop.f32.mrf.mxu0
        %v1188 = vadd.f32 0.0, %v1187
        %v1189 = vpop.f32.mrf.mxu0
        %v1190 = vadd.f32 0.0, %v1189
        %1191 = vmatmul.bf16.gmra.mxu0 %v878
        %v1192 = vpop.f32.mrf.mxu0
        %v1193 = vadd.f32 0.0, %v1192
        %v1194 = vpop.f32.mrf.mxu0
        %v1195 = vadd.f32 0.0, %v1194
        %1196 = vmatmul.bf16.gmra.mxu0 %v880
        %v1197 = vpop.f32.mrf.mxu0
        %v1198 = vadd.f32 0.0, %v1197
        %v1199 = vpop.f32.mrf.mxu0
        %v1200 = vadd.f32 0.0, %v1199
        %1201 = vmatmul.bf16.gmra.mxu0 %v882
        %v1202 = vpop.f32.mrf.mxu0
        %v1203 = vadd.f32 0.0, %v1202
        %v1204 = vpop.f32.mrf.mxu0
        %v1205 = vadd.f32 0.0, %v1204
        %1206 = vdwg.mxu0
        %1207 = vmatpush.bf16.msra.mxu0 0
        %1208 = vmatpush.bf16.msra.mxu0 0
        %1209 = vmatpush.bf16.msra.mxu0 0
        %1210 = vmatpush.bf16.msra.mxu0 0
        %1211 = vmatpush.bf16.msra.mxu0 0
        %1212 = vmatpush.bf16.msra.mxu0 0
        %1213 = vmatpush.bf16.msra.mxu0 0
        %1214 = vmatpush.bf16.msra.mxu0 %v1148
        %1215 = vmatmul.bf16.gmra.mxu0 %v947
        %v1216 = vpop.f32.mrf.mxu0
        %v1217 = vadd.f32 %v1168, %v1216
        %v1218 = vpop.f32.mrf.mxu0
        %v1219 = vadd.f32 %v1170, %v1218
        %1220 = vmatmul.bf16.gmra.mxu0 %v950
        %v1221 = vpop.f32.mrf.mxu0
        %v1222 = vadd.f32 %v1173, %v1221
        %v1223 = vpop.f32.mrf.mxu0
        %v1224 = vadd.f32 %v1175, %v1223
        %1225 = vmatmul.bf16.gmra.mxu0 %v953
        %v1226 = vpop.f32.mrf.mxu0
        %v1227 = vadd.f32 %v1178, %v1226
        %v1228 = vpop.f32.mrf.mxu0
        %v1229 = vadd.f32 %v1180, %v1228
        %1230 = vmatmul.bf16.gmra.mxu0 %v956
        %v1231 = vpop.f32.mrf.mxu0
        %v1232 = vadd.f32 %v1183, %v1231
        %v1233 = vpop.f32.mrf.mxu0
        %v1234 = vadd.f32 %v1185, %v1233
        %1235 = vmatmul.bf16.gmra.mxu0 %v959
        %v1236 = vpop.f32.mrf.mxu0
        %v1237 = vadd.f32 %v1188, %v1236
        %v1238 = vpop.f32.mrf.mxu0
        %v1239 = vadd.f32 %v1190, %v1238
        %1240 = vmatmul.bf16.gmra.mxu0 %v962
        %v1241 = vpop.f32.mrf.mxu0
        %v1242 = vadd.f32 %v1193, %v1241
        %v1243 = vpop.f32.mrf.mxu0
        %v1244 = vadd.f32 %v1195, %v1243
        %1245 = vmatmul.bf16.gmra.mxu0 %v965
        %v1246 = vpop.f32.mrf.mxu0
        %v1247 = vadd.f32 %v1198, %v1246
        %v1248 = vpop.f32.mrf.mxu0
        %v1249 = vadd.f32 %v1200, %v1248
        %1250 = vmatmul.bf16.gmra.mxu0 %v968
        %v1251 = vpop.f32.mrf.mxu0
        %v1252 = vadd.f32 %v1203, %v1251
        %v1253 = vpop.f32.mrf.mxu0
        %v1254 = vadd.f32 %v1205, %v1253
        %1255 = vdwg.mxu0
        %v1274 = vunpack.c.l.b16 %v1068
        %v1275 = vunpack.c.l.b16 %v1069
        %v1276 = vunpack.c.l.b16 %v1070
        %v1277 = vunpack.c.l.b16 %v1071
        %v1278 = vunpack.c.l.b16 %v1072
        %v1279 = vunpack.c.l.b16 %v1073
        %v1280 = vunpack.c.l.b16 %v1074
        %v1281 = vunpack.c.l.b16 %v1075
        %v1282 = vunpack.c.l.b16 %v1076
        %v1283 = vunpack.c.l.b16 %v1077
        %v1284 = vunpack.c.l.b16 %v1078
        %v1285 = vunpack.c.l.b16 %v1079
        %v1286 = vunpack.c.l.b16 %v1080
        %v1287 = vunpack.c.l.b16 %v1081
        %v1288 = vunpack.c.l.b16 %v1082
        %v1289 = vunpack.c.l.b16 %v1083
        %v1290 = vunpack.c.l.b16 %v1084
        %v1291 = vunpack.c.l.b16 %v1085
        %v1292 = vpack.c.b16 %v1275, %v1274
        %v1293 = vpack.c.b16 %v1277, %v1276
        %v1294 = vpack.c.b16 %v1279, %v1278
        %v1295 = vpack.c.b16 %v1281, %v1280
        %v1296 = vpack.c.b16 %v1283, %v1282
        %v1297 = vpack.c.b16 %v1285, %v1284
        %v1298 = vpack.c.b16 %v1287, %v1286
        %v1299 = vpack.c.b16 %v1289, %v1288
        %v1300 = vpack.c.b16 %v1291, %v1290
        %1310 = vmatpush.bf16.msra.mxu0 %v1299
        %1311 = vmatpush.bf16.msra.mxu0 %v1298
        %1312 = vmatpush.bf16.msra.mxu0 %v1297
        %1313 = vmatpush.bf16.msra.mxu0 %v1296
        %1314 = vmatpush.bf16.msra.mxu0 %v1295
        %1315 = vmatpush.bf16.msra.mxu0 %v1294
        %1316 = vmatpush.bf16.msra.mxu0 %v1293
        %1317 = vmatpush.bf16.msra.mxu0 %v1292
        %1318 = vmatmul.bf16.gmra.mxu0 %v619
        %v1319 = vpop.f32.mrf.mxu0
        %v1320 = vadd.f32 %v1217, %v1319
        %v1321 = vpop.f32.mrf.mxu0
        %v1322 = vadd.f32 %v1219, %v1321
        %1323 = vmatmul.bf16.gmra.mxu0 %v621
        %v1324 = vpop.f32.mrf.mxu0
        %v1325 = vadd.f32 %v1222, %v1324
        %v1326 = vpop.f32.mrf.mxu0
        %v1327 = vadd.f32 %v1224, %v1326
        %1328 = vmatmul.bf16.gmra.mxu0 %v623
        %v1329 = vpop.f32.mrf.mxu0
        %v1330 = vadd.f32 %v1227, %v1329
        %v1331 = vpop.f32.mrf.mxu0
        %v1332 = vadd.f32 %v1229, %v1331
        %1333 = vmatmul.bf16.gmra.mxu0 %v625
        %v1334 = vpop.f32.mrf.mxu0
        %v1335 = vadd.f32 %v1232, %v1334
        %v1336 = vpop.f32.mrf.mxu0
        %v1337 = vadd.f32 %v1234, %v1336
        %1338 = vmatmul.bf16.gmra.mxu0 %v627
        %v1339 = vpop.f32.mrf.mxu0
        %v1340 = vadd.f32 %v1237, %v1339
        %v1341 = vpop.f32.mrf.mxu0
        %v1342 = vadd.f32 %v1239, %v1341
        %1343 = vmatmul.bf16.gmra.mxu0 %v629
        %v1344 = vpop.f32.mrf.mxu0
        %v1345 = vadd.f32 %v1242, %v1344
        %v1346 = vpop.f32.mrf.mxu0
        %v1347 = vadd.f32 %v1244, %v1346
        %1348 = vmatmul.bf16.gmra.mxu0 %v631
        %v1349 = vpop.f32.mrf.mxu0
        %v1350 = vadd.f32 %v1247, %v1349
        %v1351 = vpop.f32.mrf.mxu0
        %v1352 = vadd.f32 %v1249, %v1351
        %1353 = vmatmul.bf16.gmra.mxu0 %v633
        %v1354 = vpop.f32.mrf.mxu0
        %v1355 = vadd.f32 %v1252, %v1354
        %v1356 = vpop.f32.mrf.mxu0
        %v1357 = vadd.f32 %v1254, %v1356
        %1358 = vdwg.mxu0
        %1359 = vmatpush.bf16.msra.mxu0 0
        %1360 = vmatpush.bf16.msra.mxu0 0
        %1361 = vmatpush.bf16.msra.mxu0 0
        %1362 = vmatpush.bf16.msra.mxu0 0
        %1363 = vmatpush.bf16.msra.mxu0 0
        %1364 = vmatpush.bf16.msra.mxu0 0
        %1365 = vmatpush.bf16.msra.mxu0 0
        %1366 = vmatpush.bf16.msra.mxu0 %v1300
        %1367 = vmatmul.bf16.gmra.mxu0 %v699
        %v1368 = vpop.f32.mrf.mxu0
        %v1369 = vadd.f32 %v1320, %v1368
        %v1370 = vpop.f32.mrf.mxu0
        %v1371 = vadd.f32 %v1322, %v1370
        %1372 = vmatmul.bf16.gmra.mxu0 %v702
        %v1373 = vpop.f32.mrf.mxu0
        %v1374 = vadd.f32 %v1325, %v1373
        %v1375 = vpop.f32.mrf.mxu0
        %v1376 = vadd.f32 %v1327, %v1375
        %1377 = vmatmul.bf16.gmra.mxu0 %v705
        %v1378 = vpop.f32.mrf.mxu0
        %v1379 = vadd.f32 %v1330, %v1378
        %v1380 = vpop.f32.mrf.mxu0
        %v1381 = vadd.f32 %v1332, %v1380
        %1382 = vmatmul.bf16.gmra.mxu0 %v708
        %v1383 = vpop.f32.mrf.mxu0
        %v1384 = vadd.f32 %v1335, %v1383
        %v1385 = vpop.f32.mrf.mxu0
        %v1386 = vadd.f32 %v1337, %v1385
        %1387 = vmatmul.bf16.gmra.mxu0 %v711
        %v1388 = vpop.f32.mrf.mxu0
        %v1389 = vadd.f32 %v1340, %v1388
        %v1390 = vpop.f32.mrf.mxu0
        %v1391 = vadd.f32 %v1342, %v1390
        %1392 = vmatmul.bf16.gmra.mxu0 %v714
        %v1393 = vpop.f32.mrf.mxu0
        %v1394 = vadd.f32 %v1345, %v1393
        %v1395 = vpop.f32.mrf.mxu0
        %v1396 = vadd.f32 %v1347, %v1395
        %1397 = vmatmul.bf16.gmra.mxu0 %v717
        %v1398 = vpop.f32.mrf.mxu0
        %v1399 = vadd.f32 %v1350, %v1398
        %v1400 = vpop.f32.mrf.mxu0
        %v1401 = vadd.f32 %v1352, %v1400
        %1402 = vmatmul.bf16.gmra.mxu0 %v720
        %v1403 = vpop.f32.mrf.mxu0
        %v1404 = vadd.f32 %v1355, %v1403
        %v1405 = vpop.f32.mrf.mxu0
        %v1406 = vadd.f32 %v1357, %v1405
        %1407 = vdwg.mxu0
        %s1408 = scalar_lea.vmem %s462, 8 [#allocation2]
        %v1409 = vld [vmem:[%s1408] sm:$0xff]
        %v1410 = vld [vmem:[%s1408 + $0x8] sm:$0xff]
        %v1411 = vld [vmem:[%s1408 + $0x10] sm:$0xff]
        %v1412 = vld [vmem:[%s1408 + $0x18] sm:$0xff]
        %v1413 = vld [vmem:[%s1408 + $0x20] sm:$0xff]
        %v1414 = vld [vmem:[%s1408 + $0x28] sm:$0xff]
        %v1415 = vld [vmem:[%s1408 + $0x30] sm:$0xff]
        %v1416 = vld [vmem:[%s1408 + $0x38] sm:$0xff]
        %v1417 = vld [vmem:[%s1408 + $0x40] sm:$0xff]
        %v1418 = vld [vmem:[%s1408 + $0x48] sm:$0xff]
        %v1419 = vld [vmem:[%s1408 + $0x50] sm:$0xff]
        %v1420 = vld [vmem:[%s1408 + $0x58] sm:$0xff]
        %v1421 = vld [vmem:[%s1408 + $0x60] sm:$0xff]
        %v1422 = vld [vmem:[%s1408 + $0x68] sm:$0xff]
        %v1423 = vld [vmem:[%s1408 + $0x70] sm:$0xff]
        %v1424 = vld [vmem:[%s1408 + $0x78] sm:$0xff]
        %s1425 = scalar_lea.vmem %s469, 8 [#allocation3]
        %v1426 = vld [vmem:[%s1425] sm:$0xff]
        %v1427 = vld [vmem:[%s1425 + $0x8] sm:$0xff]
        %v1428 = vld [vmem:[%s1425 + $0x10] sm:$0xff]
        %v1429 = vld [vmem:[%s1425 + $0x18] sm:$0xff]
        %v1430 = vld [vmem:[%s1425 + $0x20] sm:$0xff]
        %v1431 = vld [vmem:[%s1425 + $0x28] sm:$0xff]
        %v1432 = vld [vmem:[%s1425 + $0x30] sm:$0xff]
        %v1433 = vld [vmem:[%s1425 + $0x38] sm:$0xff]
        %v1434 = vld [vmem:[%s1425 + $0x40] sm:$0xff]
        %v1435 = vld [vmem:[%s1425 + $0x48] sm:$0xff]
        %v1436 = vld [vmem:[%s1425 + $0x50] sm:$0xff]
        %v1437 = vld [vmem:[%s1425 + $0x58] sm:$0xff]
        %v1438 = vld [vmem:[%s1425 + $0x60] sm:$0xff]
        %v1439 = vld [vmem:[%s1425 + $0x68] sm:$0xff]
        %v1440 = vld [vmem:[%s1425 + $0x70] sm:$0xff]
        %v1441 = vld [vmem:[%s1425 + $0x78] sm:$0xff]
        %s1442 = scalar_lea.vmem %s2, 72
        %v1443 = vld [vmem:[%s1442] sm:$0xf]
        %v1444 = vld [vmem:[%s1442 + $0x4] sm:$0xf]
        %v1445 = vld [vmem:[%s1442 + $0x8] sm:$0xf]
        %v1446 = vld [vmem:[%s1442 + $0xc] sm:$0xf]
        %v1447 = vld [vmem:[%s1442 + $0x10] sm:$0xf]
        %v1448 = vld [vmem:[%s1442 + $0x14] sm:$0xf]
        %v1449 = vld [vmem:[%s1442 + $0x18] sm:$0xf]
        %v1450 = vld [vmem:[%s1442 + $0x1c] sm:$0xf]
        %v1451 = vld [vmem:[%s1442 + $0x20] sm:$0xf]
        %v1452 = vld [vmem:[%s1442 + $0x24] sm:$0xf]
        %v1453 = vld [vmem:[%s1442 + $0x28] sm:$0xf]
        %v1454 = vld [vmem:[%s1442 + $0x2c] sm:$0xf]
        %v1455 = vld [vmem:[%s1442 + $0x30] sm:$0xf]
        %v1456 = vld [vmem:[%s1442 + $0x34] sm:$0xf]
        %v1457 = vld [vmem:[%s1442 + $0x38] sm:$0xf]
        %v1458 = vld [vmem:[%s1442 + $0x3c] sm:$0xf]
        %v1459 = vld [vmem:[%s1442 + $0x40] sm:$0xf]
        %v1460 = vld [vmem:[%s1442 + $0x44] sm:$0xf]
        %v1477 = vunpack.c.l.b16 %v1409
        %v1478 = vunpack.c.h.b16 %v1409
        %v1479 = vunpack.c.l.b16 %v1410
        %v1480 = vunpack.c.h.b16 %v1410
        %v1481 = vunpack.c.l.b16 %v1411
        %v1482 = vunpack.c.h.b16 %v1411
        %v1483 = vunpack.c.l.b16 %v1412
        %v1484 = vunpack.c.h.b16 %v1412
        %v1485 = vunpack.c.l.b16 %v1413
        %v1486 = vunpack.c.h.b16 %v1413
        %v1487 = vunpack.c.l.b16 %v1414
        %v1488 = vunpack.c.h.b16 %v1414
        %v1489 = vunpack.c.l.b16 %v1415
        %v1490 = vunpack.c.h.b16 %v1415
        %v1491 = vunpack.c.l.b16 %v1416
        %v1492 = vunpack.c.h.b16 %v1416
        %v1493 = vunpack.c.l.b16 %v1417
        %v1494 = vunpack.c.h.b16 %v1417
        %v1495 = vunpack.c.l.b16 %v1418
        %v1496 = vunpack.c.h.b16 %v1418
        %v1497 = vunpack.c.l.b16 %v1419
        %v1498 = vunpack.c.h.b16 %v1419
        %v1499 = vunpack.c.l.b16 %v1420
        %v1500 = vunpack.c.h.b16 %v1420
        %v1501 = vunpack.c.l.b16 %v1421
        %v1502 = vunpack.c.h.b16 %v1421
        %v1503 = vunpack.c.l.b16 %v1422
        %v1504 = vunpack.c.h.b16 %v1422
        %v1505 = vunpack.c.l.b16 %v1423
        %v1506 = vunpack.c.h.b16 %v1423
        %v1507 = vunpack.c.l.b16 %v1424
        %v1508 = vunpack.c.h.b16 %v1424
        %v1509 = vpack.c.b16 %v1479, %v1477
        %v1510 = vpack.c.b16 %v1480, %v1478
        %v1511 = vpack.c.b16 %v1483, %v1481
        %v1512 = vpack.c.b16 %v1484, %v1482
        %v1513 = vpack.c.b16 %v1487, %v1485
        %v1514 = vpack.c.b16 %v1488, %v1486
        %v1515 = vpack.c.b16 %v1491, %v1489
        %v1516 = vpack.c.b16 %v1492, %v1490
        %v1517 = vpack.c.b16 %v1495, %v1493
        %v1518 = vpack.c.b16 %v1496, %v1494
        %v1519 = vpack.c.b16 %v1499, %v1497
        %v1520 = vpack.c.b16 %v1500, %v1498
        %v1521 = vpack.c.b16 %v1503, %v1501
        %v1522 = vpack.c.b16 %v1504, %v1502
        %v1523 = vpack.c.b16 %v1507, %v1505
        %v1524 = vpack.c.b16 %v1508, %v1506
        %v1551 = vunpack.c.l.b16 %v1443
        %v1552 = vunpack.c.l.b16 %v1444
        %v1553 = vunpack.c.l.b16 %v1445
        %v1554 = vunpack.c.l.b16 %v1446
        %v1555 = vunpack.c.l.b16 %v1447
        %v1556 = vunpack.c.l.b16 %v1448
        %v1557 = vunpack.c.l.b16 %v1449
        %v1558 = vunpack.c.l.b16 %v1450
        %v1559 = vunpack.c.l.b16 %v1451
        %v1560 = vunpack.c.l.b16 %v1452
        %v1561 = vunpack.c.l.b16 %v1453
        %v1562 = vunpack.c.l.b16 %v1454
        %v1563 = vunpack.c.l.b16 %v1455
        %v1564 = vunpack.c.l.b16 %v1456
        %v1565 = vunpack.c.l.b16 %v1457
        %v1566 = vunpack.c.l.b16 %v1458
        %v1567 = vunpack.c.l.b16 %v1459
        %v1568 = vunpack.c.l.b16 %v1460
        %v1569 = vpack.c.b16 %v1552, %v1551
        %v1570 = vpack.c.b16 %v1554, %v1553
        %v1571 = vpack.c.b16 %v1556, %v1555
        %v1572 = vpack.c.b16 %v1558, %v1557
        %v1573 = vpack.c.b16 %v1560, %v1559
        %v1574 = vpack.c.b16 %v1562, %v1561
        %v1575 = vpack.c.b16 %v1564, %v1563
        %v1576 = vpack.c.b16 %v1566, %v1565
        %v1577 = vpack.c.b16 %v1568, %v1567
        %v1588 = vsel %vm697, %v1510, 0
        %v1591 = vsel %vm697, %v1512, 0
        %v1594 = vsel %vm697, %v1514, 0
        %v1597 = vsel %vm697, %v1516, 0
        %v1600 = vsel %vm697, %v1518, 0
        %v1603 = vsel %vm697, %v1520, 0
        %v1606 = vsel %vm697, %v1522, 0
        %v1609 = vsel %vm697, %v1524, 0
        %1611 = vmatpush.bf16.msra.mxu0 %v1576
        %1612 = vmatpush.bf16.msra.mxu0 %v1575
        %1613 = vmatpush.bf16.msra.mxu0 %v1574
        %1614 = vmatpush.bf16.msra.mxu0 %v1573
        %1615 = vmatpush.bf16.msra.mxu0 %v1572
        %1616 = vmatpush.bf16.msra.mxu0 %v1571
        %1617 = vmatpush.bf16.msra.mxu0 %v1570
        %1618 = vmatpush.bf16.msra.mxu0 %v1569
        %1619 = vmatmul.bf16.gmra.mxu0 %v1509
        %v1620 = vpop.f32.mrf.mxu0
        %v1621 = vadd.f32 0.0, %v1620
        %v1622 = vpop.f32.mrf.mxu0
        %v1623 = vadd.f32 0.0, %v1622
        %1624 = vmatmul.bf16.gmra.mxu0 %v1511
        %v1625 = vpop.f32.mrf.mxu0
        %v1626 = vadd.f32 0.0, %v1625
        %v1627 = vpop.f32.mrf.mxu0
        %v1628 = vadd.f32 0.0, %v1627
        %1629 = vmatmul.bf16.gmra.mxu0 %v1513
        %v1630 = vpop.f32.mrf.mxu0
        %v1631 = vadd.f32 0.0, %v1630
        %v1632 = vpop.f32.mrf.mxu0
        %v1633 = vadd.f32 0.0, %v1632
        %1634 = vmatmul.bf16.gmra.mxu0 %v1515
        %v1635 = vpop.f32.mrf.mxu0
        %v1636 = vadd.f32 0.0, %v1635
        %v1637 = vpop.f32.mrf.mxu0
        %v1638 = vadd.f32 0.0, %v1637
        %1639 = vmatmul.bf16.gmra.mxu0 %v1517
        %v1640 = vpop.f32.mrf.mxu0
        %v1641 = vadd.f32 0.0, %v1640
        %v1642 = vpop.f32.mrf.mxu0
        %v1643 = vadd.f32 0.0, %v1642
        %1644 = vmatmul.bf16.gmra.mxu0 %v1519
        %v1645 = vpop.f32.mrf.mxu0
        %v1646 = vadd.f32 0.0, %v1645
        %v1647 = vpop.f32.mrf.mxu0
        %v1648 = vadd.f32 0.0, %v1647
        %1649 = vmatmul.bf16.gmra.mxu0 %v1521
        %v1650 = vpop.f32.mrf.mxu0
        %v1651 = vadd.f32 0.0, %v1650
        %v1652 = vpop.f32.mrf.mxu0
        %v1653 = vadd.f32 0.0, %v1652
        %1654 = vmatmul.bf16.gmra.mxu0 %v1523
        %v1655 = vpop.f32.mrf.mxu0
        %v1656 = vadd.f32 0.0, %v1655
        %v1657 = vpop.f32.mrf.mxu0
        %v1658 = vadd.f32 0.0, %v1657
        %1659 = vdwg.mxu0
        %1660 = vmatpush.bf16.msra.mxu0 0
        %1661 = vmatpush.bf16.msra.mxu0 0
        %1662 = vmatpush.bf16.msra.mxu0 0
        %1663 = vmatpush.bf16.msra.mxu0 0
        %1664 = vmatpush.bf16.msra.mxu0 0
        %1665 = vmatpush.bf16.msra.mxu0 0
        %1666 = vmatpush.bf16.msra.mxu0 0
        %1667 = vmatpush.bf16.msra.mxu0 %v1577
        %1668 = vmatmul.bf16.gmra.mxu0 %v1588
        %v1669 = vpop.f32.mrf.mxu0
        %v1670 = vadd.f32 %v1621, %v1669
        %v1671 = vpop.f32.mrf.mxu0
        %v1672 = vadd.f32 %v1623, %v1671
        %1673 = vmatmul.bf16.gmra.mxu0 %v1591
        %v1674 = vpop.f32.mrf.mxu0
        %v1675 = vadd.f32 %v1626, %v1674
        %v1676 = vpop.f32.mrf.mxu0
        %v1677 = vadd.f32 %v1628, %v1676
        %1678 = vmatmul.bf16.gmra.mxu0 %v1594
        %v1679 = vpop.f32.mrf.mxu0
        %v1680 = vadd.f32 %v1631, %v1679
        %v1681 = vpop.f32.mrf.mxu0
        %v1682 = vadd.f32 %v1633, %v1681
        %1683 = vmatmul.bf16.gmra.mxu0 %v1597
        %v1684 = vpop.f32.mrf.mxu0
        %v1685 = vadd.f32 %v1636, %v1684
        %v1686 = vpop.f32.mrf.mxu0
        %v1687 = vadd.f32 %v1638, %v1686
        %1688 = vmatmul.bf16.gmra.mxu0 %v1600
        %v1689 = vpop.f32.mrf.mxu0
        %v1690 = vadd.f32 %v1641, %v1689
        %v1691 = vpop.f32.mrf.mxu0
        %v1692 = vadd.f32 %v1643, %v1691
        %1693 = vmatmul.bf16.gmra.mxu0 %v1603
        %v1694 = vpop.f32.mrf.mxu0
        %v1695 = vadd.f32 %v1646, %v1694
        %v1696 = vpop.f32.mrf.mxu0
        %v1697 = vadd.f32 %v1648, %v1696
        %1698 = vmatmul.bf16.gmra.mxu0 %v1606
        %v1699 = vpop.f32.mrf.mxu0
        %v1700 = vadd.f32 %v1651, %v1699
        %v1701 = vpop.f32.mrf.mxu0
        %v1702 = vadd.f32 %v1653, %v1701
        %1703 = vmatmul.bf16.gmra.mxu0 %v1609
        %v1704 = vpop.f32.mrf.mxu0
        %v1705 = vadd.f32 %v1656, %v1704
        %v1706 = vpop.f32.mrf.mxu0
        %v1707 = vadd.f32 %v1658, %v1706
        %1708 = vdwg.mxu0
        %v1709 = vadd.f32 %v1029, %v1670
        %v1710 = vadd.f32 %v1031, %v1672
        %v1711 = vadd.f32 %v1034, %v1675
        %v1712 = vadd.f32 %v1036, %v1677
        %v1713 = vadd.f32 %v1039, %v1680
        %v1714 = vadd.f32 %v1041, %v1682
        %v1715 = vadd.f32 %v1044, %v1685
        %v1716 = vadd.f32 %v1046, %v1687
        %v1717 = vadd.f32 %v1049, %v1690
        %v1718 = vadd.f32 %v1051, %v1692
        %v1719 = vadd.f32 %v1054, %v1695
        %v1720 = vadd.f32 %v1056, %v1697
        %v1721 = vadd.f32 %v1059, %v1700
        %v1722 = vadd.f32 %v1061, %v1702
        %v1723 = vadd.f32 %v1064, %v1705
        %v1724 = vadd.f32 %v1066, %v1707
        %s1725 = scalar_lea.vmem %s3, 72
        %v1726 = vld [vmem:[%s1725] sm:$0xf]
        %v1727 = vld [vmem:[%s1725 + $0x4] sm:$0xf]
        %v1728 = vld [vmem:[%s1725 + $0x8] sm:$0xf]
        %v1729 = vld [vmem:[%s1725 + $0xc] sm:$0xf]
        %v1730 = vld [vmem:[%s1725 + $0x10] sm:$0xf]
        %v1731 = vld [vmem:[%s1725 + $0x14] sm:$0xf]
        %v1732 = vld [vmem:[%s1725 + $0x18] sm:$0xf]
        %v1733 = vld [vmem:[%s1725 + $0x1c] sm:$0xf]
        %v1734 = vld [vmem:[%s1725 + $0x20] sm:$0xf]
        %v1735 = vld [vmem:[%s1725 + $0x24] sm:$0xf]
        %v1736 = vld [vmem:[%s1725 + $0x28] sm:$0xf]
        %v1737 = vld [vmem:[%s1725 + $0x2c] sm:$0xf]
        %v1738 = vld [vmem:[%s1725 + $0x30] sm:$0xf]
        %v1739 = vld [vmem:[%s1725 + $0x34] sm:$0xf]
        %v1740 = vld [vmem:[%s1725 + $0x38] sm:$0xf]
        %v1741 = vld [vmem:[%s1725 + $0x3c] sm:$0xf]
        %v1742 = vld [vmem:[%s1725 + $0x40] sm:$0xf]
        %v1743 = vld [vmem:[%s1725 + $0x44] sm:$0xf]
        %v1760 = vunpack.c.l.b16 %v1426
        %v1761 = vunpack.c.h.b16 %v1426
        %v1762 = vunpack.c.l.b16 %v1427
        %v1763 = vunpack.c.h.b16 %v1427
        %v1764 = vunpack.c.l.b16 %v1428
        %v1765 = vunpack.c.h.b16 %v1428
        %v1766 = vunpack.c.l.b16 %v1429
        %v1767 = vunpack.c.h.b16 %v1429
        %v1768 = vunpack.c.l.b16 %v1430
        %v1769 = vunpack.c.h.b16 %v1430
        %v1770 = vunpack.c.l.b16 %v1431
        %v1771 = vunpack.c.h.b16 %v1431
        %v1772 = vunpack.c.l.b16 %v1432
        %v1773 = vunpack.c.h.b16 %v1432
        %v1774 = vunpack.c.l.b16 %v1433
        %v1775 = vunpack.c.h.b16 %v1433
        %v1776 = vunpack.c.l.b16 %v1434
        %v1777 = vunpack.c.h.b16 %v1434
        %v1778 = vunpack.c.l.b16 %v1435
        %v1779 = vunpack.c.h.b16 %v1435
        %v1780 = vunpack.c.l.b16 %v1436
        %v1781 = vunpack.c.h.b16 %v1436
        %v1782 = vunpack.c.l.b16 %v1437
        %v1783 = vunpack.c.h.b16 %v1437
        %v1784 = vunpack.c.l.b16 %v1438
        %v1785 = vunpack.c.h.b16 %v1438
        %v1786 = vunpack.c.l.b16 %v1439
        %v1787 = vunpack.c.h.b16 %v1439
        %v1788 = vunpack.c.l.b16 %v1440
        %v1789 = vunpack.c.h.b16 %v1440
        %v1790 = vunpack.c.l.b16 %v1441
        %v1791 = vunpack.c.h.b16 %v1441
        %v1792 = vpack.c.b16 %v1762, %v1760
        %v1793 = vpack.c.b16 %v1763, %v1761
        %v1794 = vpack.c.b16 %v1766, %v1764
        %v1795 = vpack.c.b16 %v1767, %v1765
        %v1796 = vpack.c.b16 %v1770, %v1768
        %v1797 = vpack.c.b16 %v1771, %v1769
        %v1798 = vpack.c.b16 %v1774, %v1772
        %v1799 = vpack.c.b16 %v1775, %v1773
        %v1800 = vpack.c.b16 %v1778, %v1776
        %v1801 = vpack.c.b16 %v1779, %v1777
        %v1802 = vpack.c.b16 %v1782, %v1780
        %v1803 = vpack.c.b16 %v1783, %v1781
        %v1804 = vpack.c.b16 %v1786, %v1784
        %v1805 = vpack.c.b16 %v1787, %v1785
        %v1806 = vpack.c.b16 %v1790, %v1788
        %v1807 = vpack.c.b16 %v1791, %v1789
        %v1834 = vunpack.c.l.b16 %v1726
        %v1835 = vunpack.c.l.b16 %v1727
        %v1836 = vunpack.c.l.b16 %v1728
        %v1837 = vunpack.c.l.b16 %v1729
        %v1838 = vunpack.c.l.b16 %v1730
        %v1839 = vunpack.c.l.b16 %v1731
        %v1840 = vunpack.c.l.b16 %v1732
        %v1841 = vunpack.c.l.b16 %v1733
        %v1842 = vunpack.c.l.b16 %v1734
        %v1843 = vunpack.c.l.b16 %v1735
        %v1844 = vunpack.c.l.b16 %v1736
        %v1845 = vunpack.c.l.b16 %v1737
        %v1846 = vunpack.c.l.b16 %v1738
        %v1847 = vunpack.c.l.b16 %v1739
        %v1848 = vunpack.c.l.b16 %v1740
        %v1849 = vunpack.c.l.b16 %v1741
        %v1850 = vunpack.c.l.b16 %v1742
        %v1851 = vunpack.c.l.b16 %v1743
        %v1852 = vpack.c.b16 %v1835, %v1834
        %v1853 = vpack.c.b16 %v1837, %v1836
        %v1854 = vpack.c.b16 %v1839, %v1838
        %v1855 = vpack.c.b16 %v1841, %v1840
        %v1856 = vpack.c.b16 %v1843, %v1842
        %v1857 = vpack.c.b16 %v1845, %v1844
        %v1858 = vpack.c.b16 %v1847, %v1846
        %v1859 = vpack.c.b16 %v1849, %v1848
        %v1860 = vpack.c.b16 %v1851, %v1850
        %v1871 = vsel %vm697, %v1793, 0
        %v1874 = vsel %vm697, %v1795, 0
        %v1877 = vsel %vm697, %v1797, 0
        %v1880 = vsel %vm697, %v1799, 0
        %v1883 = vsel %vm697, %v1801, 0
        %v1886 = vsel %vm697, %v1803, 0
        %v1889 = vsel %vm697, %v1805, 0
        %v1892 = vsel %vm697, %v1807, 0
        %1894 = vmatpush.bf16.msra.mxu0 %v1859
        %1895 = vmatpush.bf16.msra.mxu0 %v1858
        %1896 = vmatpush.bf16.msra.mxu0 %v1857
        %1897 = vmatpush.bf16.msra.mxu0 %v1856
        %1898 = vmatpush.bf16.msra.mxu0 %v1855
        %1899 = vmatpush.bf16.msra.mxu0 %v1854
        %1900 = vmatpush.bf16.msra.mxu0 %v1853
        %1901 = vmatpush.bf16.msra.mxu0 %v1852
        %1902 = vmatmul.bf16.gmra.mxu0 %v1792
        %v1903 = vpop.f32.mrf.mxu0
        %v1904 = vadd.f32 0.0, %v1903
        %v1905 = vpop.f32.mrf.mxu0
        %v1906 = vadd.f32 0.0, %v1905
        %1907 = vmatmul.bf16.gmra.mxu0 %v1794
        %v1908 = vpop.f32.mrf.mxu0
        %v1909 = vadd.f32 0.0, %v1908
        %v1910 = vpop.f32.mrf.mxu0
        %v1911 = vadd.f32 0.0, %v1910
        %1912 = vmatmul.bf16.gmra.mxu0 %v1796
        %v1913 = vpop.f32.mrf.mxu0
        %v1914 = vadd.f32 0.0, %v1913
        %v1915 = vpop.f32.mrf.mxu0
        %v1916 = vadd.f32 0.0, %v1915
        %1917 = vmatmul.bf16.gmra.mxu0 %v1798
        %v1918 = vpop.f32.mrf.mxu0
        %v1919 = vadd.f32 0.0, %v1918
        %v1920 = vpop.f32.mrf.mxu0
        %v1921 = vadd.f32 0.0, %v1920
        %1922 = vmatmul.bf16.gmra.mxu0 %v1800
        %v1923 = vpop.f32.mrf.mxu0
        %v1924 = vadd.f32 0.0, %v1923
        %v1925 = vpop.f32.mrf.mxu0
        %v1926 = vadd.f32 0.0, %v1925
        %1927 = vmatmul.bf16.gmra.mxu0 %v1802
        %v1928 = vpop.f32.mrf.mxu0
        %v1929 = vadd.f32 0.0, %v1928
        %v1930 = vpop.f32.mrf.mxu0
        %v1931 = vadd.f32 0.0, %v1930
        %1932 = vmatmul.bf16.gmra.mxu0 %v1804
        %v1933 = vpop.f32.mrf.mxu0
        %v1934 = vadd.f32 0.0, %v1933
        %v1935 = vpop.f32.mrf.mxu0
        %v1936 = vadd.f32 0.0, %v1935
        %1937 = vmatmul.bf16.gmra.mxu0 %v1806
        %v1938 = vpop.f32.mrf.mxu0
        %v1939 = vadd.f32 0.0, %v1938
        %v1940 = vpop.f32.mrf.mxu0
        %v1941 = vadd.f32 0.0, %v1940
        %1942 = vdwg.mxu0
        %1943 = vmatpush.bf16.msra.mxu0 0
        %1944 = vmatpush.bf16.msra.mxu0 0
        %1945 = vmatpush.bf16.msra.mxu0 0
        %1946 = vmatpush.bf16.msra.mxu0 0
        %1947 = vmatpush.bf16.msra.mxu0 0
        %1948 = vmatpush.bf16.msra.mxu0 0
        %1949 = vmatpush.bf16.msra.mxu0 0
        %1950 = vmatpush.bf16.msra.mxu0 %v1860
        %1951 = vmatmul.bf16.gmra.mxu0 %v1871
        %v1952 = vpop.f32.mrf.mxu0
        %v1953 = vadd.f32 %v1904, %v1952
        %v1954 = vpop.f32.mrf.mxu0
        %v1955 = vadd.f32 %v1906, %v1954
        %1956 = vmatmul.bf16.gmra.mxu0 %v1874
        %v1957 = vpop.f32.mrf.mxu0
        %v1958 = vadd.f32 %v1909, %v1957
        %v1959 = vpop.f32.mrf.mxu0
        %v1960 = vadd.f32 %v1911, %v1959
        %1961 = vmatmul.bf16.gmra.mxu0 %v1877
        %v1962 = vpop.f32.mrf.mxu0
        %v1963 = vadd.f32 %v1914, %v1962
        %v1964 = vpop.f32.mrf.mxu0
        %v1965 = vadd.f32 %v1916, %v1964
        %1966 = vmatmul.bf16.gmra.mxu0 %v1880
        %v1967 = vpop.f32.mrf.mxu0
        %v1968 = vadd.f32 %v1919, %v1967
        %v1969 = vpop.f32.mrf.mxu0
        %v1970 = vadd.f32 %v1921, %v1969
        %1971 = vmatmul.bf16.gmra.mxu0 %v1883
        %v1972 = vpop.f32.mrf.mxu0
        %v1973 = vadd.f32 %v1924, %v1972
        %v1974 = vpop.f32.mrf.mxu0
        %v1975 = vadd.f32 %v1926, %v1974
        %1976 = vmatmul.bf16.gmra.mxu0 %v1886
        %v1977 = vpop.f32.mrf.mxu0
        %v1978 = vadd.f32 %v1929, %v1977
        %v1979 = vpop.f32.mrf.mxu0
        %v1980 = vadd.f32 %v1931, %v1979
        %1981 = vmatmul.bf16.gmra.mxu0 %v1889
        %v1982 = vpop.f32.mrf.mxu0
        %v1983 = vadd.f32 %v1934, %v1982
        %v1984 = vpop.f32.mrf.mxu0
        %v1985 = vadd.f32 %v1936, %v1984
        %1986 = vmatmul.bf16.gmra.mxu0 %v1892
        %v1987 = vpop.f32.mrf.mxu0
        %v1988 = vadd.f32 %v1939, %v1987
        %v1989 = vpop.f32.mrf.mxu0
        %v1990 = vadd.f32 %v1941, %v1989
        %1991 = vdwg.mxu0
        %v1992 = vadd.f32 %v1709, %v1953
        %v1993 = vadd.f32 %v1710, %v1955
        %v1994 = vadd.f32 %v1711, %v1958
        %v1995 = vadd.f32 %v1712, %v1960
        %v1996 = vadd.f32 %v1713, %v1963
        %v1997 = vadd.f32 %v1714, %v1965
        %v1998 = vadd.f32 %v1715, %v1968
        %v1999 = vadd.f32 %v1716, %v1970
        %v2000 = vadd.f32 %v1717, %v1973
        %v2001 = vadd.f32 %v1718, %v1975
        %v2002 = vadd.f32 %v1719, %v1978
        %v2003 = vadd.f32 %v1720, %v1980
        %v2004 = vadd.f32 %v1721, %v1983
        %v2005 = vadd.f32 %v1722, %v1985
        %v2006 = vadd.f32 %v1723, %v1988
        %v2007 = vadd.f32 %v1724, %v1990
        %s2008 = scalar_lea.vmem %s5, 72
        %v2009 = vld [vmem:[%s2008] sm:$0xf]
        %v2010 = vld [vmem:[%s2008 + $0x4] sm:$0xf]
        %v2011 = vld [vmem:[%s2008 + $0x8] sm:$0xf]
        %v2012 = vld [vmem:[%s2008 + $0xc] sm:$0xf]
        %v2013 = vld [vmem:[%s2008 + $0x10] sm:$0xf]
        %v2014 = vld [vmem:[%s2008 + $0x14] sm:$0xf]
        %v2015 = vld [vmem:[%s2008 + $0x18] sm:$0xf]
        %v2016 = vld [vmem:[%s2008 + $0x1c] sm:$0xf]
        %v2017 = vld [vmem:[%s2008 + $0x20] sm:$0xf]
        %v2018 = vld [vmem:[%s2008 + $0x24] sm:$0xf]
        %v2019 = vld [vmem:[%s2008 + $0x28] sm:$0xf]
        %v2020 = vld [vmem:[%s2008 + $0x2c] sm:$0xf]
        %v2021 = vld [vmem:[%s2008 + $0x30] sm:$0xf]
        %v2022 = vld [vmem:[%s2008 + $0x34] sm:$0xf]
        %v2023 = vld [vmem:[%s2008 + $0x38] sm:$0xf]
        %v2024 = vld [vmem:[%s2008 + $0x3c] sm:$0xf]
        %v2025 = vld [vmem:[%s2008 + $0x40] sm:$0xf]
        %v2026 = vld [vmem:[%s2008 + $0x44] sm:$0xf]
        %v2045 = vunpack.c.l.b16 %v2009
        %v2046 = vunpack.c.l.b16 %v2010
        %v2047 = vunpack.c.l.b16 %v2011
        %v2048 = vunpack.c.l.b16 %v2012
        %v2049 = vunpack.c.l.b16 %v2013
        %v2050 = vunpack.c.l.b16 %v2014
        %v2051 = vunpack.c.l.b16 %v2015
        %v2052 = vunpack.c.l.b16 %v2016
        %v2053 = vunpack.c.l.b16 %v2017
        %v2054 = vunpack.c.l.b16 %v2018
        %v2055 = vunpack.c.l.b16 %v2019
        %v2056 = vunpack.c.l.b16 %v2020
        %v2057 = vunpack.c.l.b16 %v2021
        %v2058 = vunpack.c.l.b16 %v2022
        %v2059 = vunpack.c.l.b16 %v2023
        %v2060 = vunpack.c.l.b16 %v2024
        %v2061 = vunpack.c.l.b16 %v2025
        %v2062 = vunpack.c.l.b16 %v2026
        %v2063 = vpack.c.b16 %v2046, %v2045
        %v2064 = vpack.c.b16 %v2048, %v2047
        %v2065 = vpack.c.b16 %v2050, %v2049
        %v2066 = vpack.c.b16 %v2052, %v2051
        %v2067 = vpack.c.b16 %v2054, %v2053
        %v2068 = vpack.c.b16 %v2056, %v2055
        %v2069 = vpack.c.b16 %v2058, %v2057
        %v2070 = vpack.c.b16 %v2060, %v2059
        %v2071 = vpack.c.b16 %v2062, %v2061
        %2081 = vmatpush.bf16.msra.mxu0 %v2070
        %2082 = vmatpush.bf16.msra.mxu0 %v2069
        %2083 = vmatpush.bf16.msra.mxu0 %v2068
        %2084 = vmatpush.bf16.msra.mxu0 %v2067
        %2085 = vmatpush.bf16.msra.mxu0 %v2066
        %2086 = vmatpush.bf16.msra.mxu0 %v2065
        %2087 = vmatpush.bf16.msra.mxu0 %v2064
        %2088 = vmatpush.bf16.msra.mxu0 %v2063
        %2089 = vmatmul.bf16.gmra.mxu0 %v1792
        %v2090 = vpop.f32.mrf.mxu0
        %v2091 = vadd.f32 0.0, %v2090
        %v2092 = vpop.f32.mrf.mxu0
        %v2093 = vadd.f32 0.0, %v2092
        %2094 = vmatmul.bf16.gmra.mxu0 %v1794
        %v2095 = vpop.f32.mrf.mxu0
        %v2096 = vadd.f32 0.0, %v2095
        %v2097 = vpop.f32.mrf.mxu0
        %v2098 = vadd.f32 0.0, %v2097
        %2099 = vmatmul.bf16.gmra.mxu0 %v1796
        %v2100 = vpop.f32.mrf.mxu0
        %v2101 = vadd.f32 0.0, %v2100
        %v2102 = vpop.f32.mrf.mxu0
        %v2103 = vadd.f32 0.0, %v2102
        %2104 = vmatmul.bf16.gmra.mxu0 %v1798
        %v2105 = vpop.f32.mrf.mxu0
        %v2106 = vadd.f32 0.0, %v2105
        %v2107 = vpop.f32.mrf.mxu0
        %v2108 = vadd.f32 0.0, %v2107
        %2109 = vmatmul.bf16.gmra.mxu0 %v1800
        %v2110 = vpop.f32.mrf.mxu0
        %v2111 = vadd.f32 0.0, %v2110
        %v2112 = vpop.f32.mrf.mxu0
        %v2113 = vadd.f32 0.0, %v2112
        %2114 = vmatmul.bf16.gmra.mxu0 %v1802
        %v2115 = vpop.f32.mrf.mxu0
        %v2116 = vadd.f32 0.0, %v2115
        %v2117 = vpop.f32.mrf.mxu0
        %v2118 = vadd.f32 0.0, %v2117
        %2119 = vmatmul.bf16.gmra.mxu0 %v1804
        %v2120 = vpop.f32.mrf.mxu0
        %v2121 = vadd.f32 0.0, %v2120
        %v2122 = vpop.f32.mrf.mxu0
        %v2123 = vadd.f32 0.0, %v2122
        %2124 = vmatmul.bf16.gmra.mxu0 %v1806
        %v2125 = vpop.f32.mrf.mxu0
        %v2126 = vadd.f32 0.0, %v2125
        %v2127 = vpop.f32.mrf.mxu0
        %v2128 = vadd.f32 0.0, %v2127
        %2129 = vdwg.mxu0
        %2130 = vmatpush.bf16.msra.mxu0 0
        %2131 = vmatpush.bf16.msra.mxu0 0
        %2132 = vmatpush.bf16.msra.mxu0 0
        %2133 = vmatpush.bf16.msra.mxu0 0
        %2134 = vmatpush.bf16.msra.mxu0 0
        %2135 = vmatpush.bf16.msra.mxu0 0
        %2136 = vmatpush.bf16.msra.mxu0 0
        %2137 = vmatpush.bf16.msra.mxu0 %v2071
        %2138 = vmatmul.bf16.gmra.mxu0 %v1871
        %v2139 = vpop.f32.mrf.mxu0
        %v2140 = vadd.f32 %v2091, %v2139
        %v2141 = vpop.f32.mrf.mxu0
        %v2142 = vadd.f32 %v2093, %v2141
        %2143 = vmatmul.bf16.gmra.mxu0 %v1874
        %v2144 = vpop.f32.mrf.mxu0
        %v2145 = vadd.f32 %v2096, %v2144
        %v2146 = vpop.f32.mrf.mxu0
        %v2147 = vadd.f32 %v2098, %v2146
        %2148 = vmatmul.bf16.gmra.mxu0 %v1877
        %v2149 = vpop.f32.mrf.mxu0
        %v2150 = vadd.f32 %v2101, %v2149
        %v2151 = vpop.f32.mrf.mxu0
        %v2152 = vadd.f32 %v2103, %v2151
        %2153 = vmatmul.bf16.gmra.mxu0 %v1880
        %v2154 = vpop.f32.mrf.mxu0
        %v2155 = vadd.f32 %v2106, %v2154
        %v2156 = vpop.f32.mrf.mxu0
        %v2157 = vadd.f32 %v2108, %v2156
        %2158 = vmatmul.bf16.gmra.mxu0 %v1883
        %v2159 = vpop.f32.mrf.mxu0
        %v2160 = vadd.f32 %v2111, %v2159
        %v2161 = vpop.f32.mrf.mxu0
        %v2162 = vadd.f32 %v2113, %v2161
        %2163 = vmatmul.bf16.gmra.mxu0 %v1886
        %v2164 = vpop.f32.mrf.mxu0
        %v2165 = vadd.f32 %v2116, %v2164
        %v2166 = vpop.f32.mrf.mxu0
        %v2167 = vadd.f32 %v2118, %v2166
        %2168 = vmatmul.bf16.gmra.mxu0 %v1889
        %v2169 = vpop.f32.mrf.mxu0
        %v2170 = vadd.f32 %v2121, %v2169
        %v2171 = vpop.f32.mrf.mxu0
        %v2172 = vadd.f32 %v2123, %v2171
        %2173 = vmatmul.bf16.gmra.mxu0 %v1892
        %v2174 = vpop.f32.mrf.mxu0
        %v2175 = vadd.f32 %v2126, %v2174
        %v2176 = vpop.f32.mrf.mxu0
        %v2177 = vadd.f32 %v2128, %v2176
        %2178 = vdwg.mxu0
        %v2179 = vadd.f32 %v1369, %v2140
        %v2180 = vadd.f32 %v1371, %v2142
        %v2181 = vadd.f32 %v1374, %v2145
        %v2182 = vadd.f32 %v1376, %v2147
        %v2183 = vadd.f32 %v1379, %v2150
        %v2184 = vadd.f32 %v1381, %v2152
        %v2185 = vadd.f32 %v1384, %v2155
        %v2186 = vadd.f32 %v1386, %v2157
        %v2187 = vadd.f32 %v1389, %v2160
        %v2188 = vadd.f32 %v1391, %v2162
        %v2189 = vadd.f32 %v1394, %v2165
        %v2190 = vadd.f32 %v1396, %v2167
        %v2191 = vadd.f32 %v1399, %v2170
        %v2192 = vadd.f32 %v1401, %v2172
        %v2193 = vadd.f32 %v1404, %v2175
        %v2194 = vadd.f32 %v1406, %v2177
        %s2195 = scalar_lea.vmem %s4, 72
        %v2196 = vld [vmem:[%s2195] sm:$0xf]
        %v2197 = vld [vmem:[%s2195 + $0x4] sm:$0xf]
        %v2198 = vld [vmem:[%s2195 + $0x8] sm:$0xf]
        %v2199 = vld [vmem:[%s2195 + $0xc] sm:$0xf]
        %v2200 = vld [vmem:[%s2195 + $0x10] sm:$0xf]
        %v2201 = vld [vmem:[%s2195 + $0x14] sm:$0xf]
        %v2202 = vld [vmem:[%s2195 + $0x18] sm:$0xf]
        %v2203 = vld [vmem:[%s2195 + $0x1c] sm:$0xf]
        %v2204 = vld [vmem:[%s2195 + $0x20] sm:$0xf]
        %v2205 = vld [vmem:[%s2195 + $0x24] sm:$0xf]
        %v2206 = vld [vmem:[%s2195 + $0x28] sm:$0xf]
        %v2207 = vld [vmem:[%s2195 + $0x2c] sm:$0xf]
        %v2208 = vld [vmem:[%s2195 + $0x30] sm:$0xf]
        %v2209 = vld [vmem:[%s2195 + $0x34] sm:$0xf]
        %v2210 = vld [vmem:[%s2195 + $0x38] sm:$0xf]
        %v2211 = vld [vmem:[%s2195 + $0x3c] sm:$0xf]
        %v2212 = vld [vmem:[%s2195 + $0x40] sm:$0xf]
        %v2213 = vld [vmem:[%s2195 + $0x44] sm:$0xf]
        %v2232 = vunpack.c.l.b16 %v2196
        %v2233 = vunpack.c.l.b16 %v2197
        %v2234 = vunpack.c.l.b16 %v2198
        %v2235 = vunpack.c.l.b16 %v2199
        %v2236 = vunpack.c.l.b16 %v2200
        %v2237 = vunpack.c.l.b16 %v2201
        %v2238 = vunpack.c.l.b16 %v2202
        %v2239 = vunpack.c.l.b16 %v2203
        %v2240 = vunpack.c.l.b16 %v2204
        %v2241 = vunpack.c.l.b16 %v2205
        %v2242 = vunpack.c.l.b16 %v2206
        %v2243 = vunpack.c.l.b16 %v2207
        %v2244 = vunpack.c.l.b16 %v2208
        %v2245 = vunpack.c.l.b16 %v2209
        %v2246 = vunpack.c.l.b16 %v2210
        %v2247 = vunpack.c.l.b16 %v2211
        %v2248 = vunpack.c.l.b16 %v2212
        %v2249 = vunpack.c.l.b16 %v2213
        %v2250 = vpack.c.b16 %v2233, %v2232
        %v2251 = vpack.c.b16 %v2235, %v2234
        %v2252 = vpack.c.b16 %v2237, %v2236
        %v2253 = vpack.c.b16 %v2239, %v2238
        %v2254 = vpack.c.b16 %v2241, %v2240
        %v2255 = vpack.c.b16 %v2243, %v2242
        %v2256 = vpack.c.b16 %v2245, %v2244
        %v2257 = vpack.c.b16 %v2247, %v2246
        %v2258 = vpack.c.b16 %v2249, %v2248
        %2268 = vmatpush.bf16.msra.mxu0 %v2257
        %2269 = vmatpush.bf16.msra.mxu0 %v2256
        %2270 = vmatpush.bf16.msra.mxu0 %v2255
        %2271 = vmatpush.bf16.msra.mxu0 %v2254
        %2272 = vmatpush.bf16.msra.mxu0 %v2253
        %2273 = vmatpush.bf16.msra.mxu0 %v2252
        %2274 = vmatpush.bf16.msra.mxu0 %v2251
        %2275 = vmatpush.bf16.msra.mxu0 %v2250
        %2276 = vmatmul.bf16.gmra.mxu0 %v1509
        %v2277 = vpop.f32.mrf.mxu0
        %v2278 = vadd.f32 0.0, %v2277
        %v2279 = vpop.f32.mrf.mxu0
        %v2280 = vadd.f32 0.0, %v2279
        %2281 = vmatmul.bf16.gmra.mxu0 %v1511
        %v2282 = vpop.f32.mrf.mxu0
        %v2283 = vadd.f32 0.0, %v2282
        %v2284 = vpop.f32.mrf.mxu0
        %v2285 = vadd.f32 0.0, %v2284
        %2286 = vmatmul.bf16.gmra.mxu0 %v1513
        %v2287 = vpop.f32.mrf.mxu0
        %v2288 = vadd.f32 0.0, %v2287
        %v2289 = vpop.f32.mrf.mxu0
        %v2290 = vadd.f32 0.0, %v2289
        %2291 = vmatmul.bf16.gmra.mxu0 %v1515
        %v2292 = vpop.f32.mrf.mxu0
        %v2293 = vadd.f32 0.0, %v2292
        %v2294 = vpop.f32.mrf.mxu0
        %v2295 = vadd.f32 0.0, %v2294
        %2296 = vmatmul.bf16.gmra.mxu0 %v1517
        %v2297 = vpop.f32.mrf.mxu0
        %v2298 = vadd.f32 0.0, %v2297
        %v2299 = vpop.f32.mrf.mxu0
        %v2300 = vadd.f32 0.0, %v2299
        %2301 = vmatmul.bf16.gmra.mxu0 %v1519
        %v2302 = vpop.f32.mrf.mxu0
        %v2303 = vadd.f32 0.0, %v2302
        %v2304 = vpop.f32.mrf.mxu0
        %v2305 = vadd.f32 0.0, %v2304
        %2306 = vmatmul.bf16.gmra.mxu0 %v1521
        %v2307 = vpop.f32.mrf.mxu0
        %v2308 = vadd.f32 0.0, %v2307
        %v2309 = vpop.f32.mrf.mxu0
        %v2310 = vadd.f32 0.0, %v2309
        %2311 = vmatmul.bf16.gmra.mxu0 %v1523
        %v2312 = vpop.f32.mrf.mxu0
        %v2313 = vadd.f32 0.0, %v2312
        %v2314 = vpop.f32.mrf.mxu0
        %v2315 = vadd.f32 0.0, %v2314
        %2316 = vdwg.mxu0
        %2317 = vmatpush.bf16.msra.mxu0 0
        %2318 = vmatpush.bf16.msra.mxu0 0
        %2319 = vmatpush.bf16.msra.mxu0 0
        %2320 = vmatpush.bf16.msra.mxu0 0
        %2321 = vmatpush.bf16.msra.mxu0 0
        %2322 = vmatpush.bf16.msra.mxu0 0
        %2323 = vmatpush.bf16.msra.mxu0 0
        %2324 = vmatpush.bf16.msra.mxu0 %v2258
        %2325 = vmatmul.bf16.gmra.mxu0 %v1588
        %v2326 = vpop.f32.mrf.mxu0
        %v2327 = vadd.f32 %v2278, %v2326
        %v2328 = vpop.f32.mrf.mxu0
        %v2329 = vadd.f32 %v2280, %v2328
        %2330 = vmatmul.bf16.gmra.mxu0 %v1591
        %v2331 = vpop.f32.mrf.mxu0
        %v2332 = vadd.f32 %v2283, %v2331
        %v2333 = vpop.f32.mrf.mxu0
        %v2334 = vadd.f32 %v2285, %v2333
        %2335 = vmatmul.bf16.gmra.mxu0 %v1594
        %v2336 = vpop.f32.mrf.mxu0
        %v2337 = vadd.f32 %v2288, %v2336
        %v2338 = vpop.f32.mrf.mxu0
        %v2339 = vadd.f32 %v2290, %v2338
        %2340 = vmatmul.bf16.gmra.mxu0 %v1597
        %v2341 = vpop.f32.mrf.mxu0
        %v2342 = vadd.f32 %v2293, %v2341
        %v2343 = vpop.f32.mrf.mxu0
        %v2344 = vadd.f32 %v2295, %v2343
        %2345 = vmatmul.bf16.gmra.mxu0 %v1600
        %v2346 = vpop.f32.mrf.mxu0
        %v2347 = vadd.f32 %v2298, %v2346
        %v2348 = vpop.f32.mrf.mxu0
        %v2349 = vadd.f32 %v2300, %v2348
        %2350 = vmatmul.bf16.gmra.mxu0 %v1603
        %v2351 = vpop.f32.mrf.mxu0
        %v2352 = vadd.f32 %v2303, %v2351
        %v2353 = vpop.f32.mrf.mxu0
        %v2354 = vadd.f32 %v2305, %v2353
        %2355 = vmatmul.bf16.gmra.mxu0 %v1606
        %v2356 = vpop.f32.mrf.mxu0
        %v2357 = vadd.f32 %v2308, %v2356
        %v2358 = vpop.f32.mrf.mxu0
        %v2359 = vadd.f32 %v2310, %v2358
        %2360 = vmatmul.bf16.gmra.mxu0 %v1609
        %v2361 = vpop.f32.mrf.mxu0
        %v2362 = vadd.f32 %v2313, %v2361
        %v2363 = vpop.f32.mrf.mxu0
        %v2364 = vadd.f32 %v2315, %v2363
        %2365 = vdwg.mxu0
        %v2366 = vadd.f32 %v2179, %v2327
        %v2367 = vadd.f32 %v2180, %v2329
        %v2368 = vadd.f32 %v2181, %v2332
        %v2369 = vadd.f32 %v2182, %v2334
        %v2370 = vadd.f32 %v2183, %v2337
        %v2371 = vadd.f32 %v2184, %v2339
        %v2372 = vadd.f32 %v2185, %v2342
        %v2373 = vadd.f32 %v2186, %v2344
        %v2374 = vadd.f32 %v2187, %v2347
        %v2375 = vadd.f32 %v2188, %v2349
        %v2376 = vadd.f32 %v2189, %v2352
        %v2377 = vadd.f32 %v2190, %v2354
        %v2378 = vadd.f32 %v2191, %v2357
        %v2379 = vadd.f32 %v2192, %v2359
        %v2380 = vadd.f32 %v2193, %v2362
        %v2381 = vadd.f32 %v2194, %v2364
        %s2382 = scalar_lea.vmem %s462, 16 [#allocation2]
        %v2383 = vld [vmem:[%s2382] sm:$0xff]
        %v2384 = vld [vmem:[%s2382 + $0x8] sm:$0xff]
        %v2385 = vld [vmem:[%s2382 + $0x10] sm:$0xff]
        %v2386 = vld [vmem:[%s2382 + $0x18] sm:$0xff]
        %v2387 = vld [vmem:[%s2382 + $0x20] sm:$0xff]
        %v2388 = vld [vmem:[%s2382 + $0x28] sm:$0xff]
        %v2389 = vld [vmem:[%s2382 + $0x30] sm:$0xff]
        %v2390 = vld [vmem:[%s2382 + $0x38] sm:$0xff]
        %v2391 = vld [vmem:[%s2382 + $0x40] sm:$0xff]
        %v2392 = vld [vmem:[%s2382 + $0x48] sm:$0xff]
        %v2393 = vld [vmem:[%s2382 + $0x50] sm:$0xff]
        %v2394 = vld [vmem:[%s2382 + $0x58] sm:$0xff]
        %v2395 = vld [vmem:[%s2382 + $0x60] sm:$0xff]
        %v2396 = vld [vmem:[%s2382 + $0x68] sm:$0xff]
        %v2397 = vld [vmem:[%s2382 + $0x70] sm:$0xff]
        %v2398 = vld [vmem:[%s2382 + $0x78] sm:$0xff]
        %s2399 = scalar_lea.vmem %s469, 16 [#allocation3]
        %v2400 = vld [vmem:[%s2399] sm:$0xff]
        %v2401 = vld [vmem:[%s2399 + $0x8] sm:$0xff]
        %v2402 = vld [vmem:[%s2399 + $0x10] sm:$0xff]
        %v2403 = vld [vmem:[%s2399 + $0x18] sm:$0xff]
        %v2404 = vld [vmem:[%s2399 + $0x20] sm:$0xff]
        %v2405 = vld [vmem:[%s2399 + $0x28] sm:$0xff]
        %v2406 = vld [vmem:[%s2399 + $0x30] sm:$0xff]
        %v2407 = vld [vmem:[%s2399 + $0x38] sm:$0xff]
        %v2408 = vld [vmem:[%s2399 + $0x40] sm:$0xff]
        %v2409 = vld [vmem:[%s2399 + $0x48] sm:$0xff]
        %v2410 = vld [vmem:[%s2399 + $0x50] sm:$0xff]
        %v2411 = vld [vmem:[%s2399 + $0x58] sm:$0xff]
        %v2412 = vld [vmem:[%s2399 + $0x60] sm:$0xff]
        %v2413 = vld [vmem:[%s2399 + $0x68] sm:$0xff]
        %v2414 = vld [vmem:[%s2399 + $0x70] sm:$0xff]
        %v2415 = vld [vmem:[%s2399 + $0x78] sm:$0xff]
        %s2416 = scalar_lea.vmem %s2, 144
        %v2417 = vld [vmem:[%s2416] sm:$0xf]
        %v2418 = vld [vmem:[%s2416 + $0x4] sm:$0xf]
        %v2419 = vld [vmem:[%s2416 + $0x8] sm:$0xf]
        %v2420 = vld [vmem:[%s2416 + $0xc] sm:$0xf]
        %v2421 = vld [vmem:[%s2416 + $0x10] sm:$0xf]
        %v2422 = vld [vmem:[%s2416 + $0x14] sm:$0xf]
        %v2423 = vld [vmem:[%s2416 + $0x18] sm:$0xf]
        %v2424 = vld [vmem:[%s2416 + $0x1c] sm:$0xf]
        %v2425 = vld [vmem:[%s2416 + $0x20] sm:$0xf]
        %v2426 = vld [vmem:[%s2416 + $0x24] sm:$0xf]
        %v2427 = vld [vmem:[%s2416 + $0x28] sm:$0xf]
        %v2428 = vld [vmem:[%s2416 + $0x2c] sm:$0xf]
        %v2429 = vld [vmem:[%s2416 + $0x30] sm:$0xf]
        %v2430 = vld [vmem:[%s2416 + $0x34] sm:$0xf]
        %v2431 = vld [vmem:[%s2416 + $0x38] sm:$0xf]
        %v2432 = vld [vmem:[%s2416 + $0x3c] sm:$0xf]
        %v2433 = vld [vmem:[%s2416 + $0x40] sm:$0xf]
        %v2434 = vld [vmem:[%s2416 + $0x44] sm:$0xf]
        %v2451 = vunpack.c.l.b16 %v2383
        %v2452 = vunpack.c.h.b16 %v2383
        %v2453 = vunpack.c.l.b16 %v2384
        %v2454 = vunpack.c.h.b16 %v2384
        %v2455 = vunpack.c.l.b16 %v2385
        %v2456 = vunpack.c.h.b16 %v2385
        %v2457 = vunpack.c.l.b16 %v2386
        %v2458 = vunpack.c.h.b16 %v2386
        %v2459 = vunpack.c.l.b16 %v2387
        %v2460 = vunpack.c.h.b16 %v2387
        %v2461 = vunpack.c.l.b16 %v2388
        %v2462 = vunpack.c.h.b16 %v2388
        %v2463 = vunpack.c.l.b16 %v2389
        %v2464 = vunpack.c.h.b16 %v2389
        %v2465 = vunpack.c.l.b16 %v2390
        %v2466 = vunpack.c.h.b16 %v2390
        %v2467 = vunpack.c.l.b16 %v2391
        %v2468 = vunpack.c.h.b16 %v2391
        %v2469 = vunpack.c.l.b16 %v2392
        %v2470 = vunpack.c.h.b16 %v2392
        %v2471 = vunpack.c.l.b16 %v2393
        %v2472 = vunpack.c.h.b16 %v2393
        %v2473 = vunpack.c.l.b16 %v2394
        %v2474 = vunpack.c.h.b16 %v2394
        %v2475 = vunpack.c.l.b16 %v2395
        %v2476 = vunpack.c.h.b16 %v2395
        %v2477 = vunpack.c.l.b16 %v2396
        %v2478 = vunpack.c.h.b16 %v2396
        %v2479 = vunpack.c.l.b16 %v2397
        %v2480 = vunpack.c.h.b16 %v2397
        %v2481 = vunpack.c.l.b16 %v2398
        %v2482 = vunpack.c.h.b16 %v2398
        %v2483 = vpack.c.b16 %v2453, %v2451
        %v2484 = vpack.c.b16 %v2454, %v2452
        %v2485 = vpack.c.b16 %v2457, %v2455
        %v2486 = vpack.c.b16 %v2458, %v2456
        %v2487 = vpack.c.b16 %v2461, %v2459
        %v2488 = vpack.c.b16 %v2462, %v2460
        %v2489 = vpack.c.b16 %v2465, %v2463
        %v2490 = vpack.c.b16 %v2466, %v2464
        %v2491 = vpack.c.b16 %v2469, %v2467
        %v2492 = vpack.c.b16 %v2470, %v2468
        %v2493 = vpack.c.b16 %v2473, %v2471
        %v2494 = vpack.c.b16 %v2474, %v2472
        %v2495 = vpack.c.b16 %v2477, %v2475
        %v2496 = vpack.c.b16 %v2478, %v2476
        %v2497 = vpack.c.b16 %v2481, %v2479
        %v2498 = vpack.c.b16 %v2482, %v2480
        %v2525 = vunpack.c.l.b16 %v2417
        %v2526 = vunpack.c.l.b16 %v2418
        %v2527 = vunpack.c.l.b16 %v2419
        %v2528 = vunpack.c.l.b16 %v2420
        %v2529 = vunpack.c.l.b16 %v2421
        %v2530 = vunpack.c.l.b16 %v2422
        %v2531 = vunpack.c.l.b16 %v2423
        %v2532 = vunpack.c.l.b16 %v2424
        %v2533 = vunpack.c.l.b16 %v2425
        %v2534 = vunpack.c.l.b16 %v2426
        %v2535 = vunpack.c.l.b16 %v2427
        %v2536 = vunpack.c.l.b16 %v2428
        %v2537 = vunpack.c.l.b16 %v2429
        %v2538 = vunpack.c.l.b16 %v2430
        %v2539 = vunpack.c.l.b16 %v2431
        %v2540 = vunpack.c.l.b16 %v2432
        %v2541 = vunpack.c.l.b16 %v2433
        %v2542 = vunpack.c.l.b16 %v2434
        %v2543 = vpack.c.b16 %v2526, %v2525
        %v2544 = vpack.c.b16 %v2528, %v2527
        %v2545 = vpack.c.b16 %v2530, %v2529
        %v2546 = vpack.c.b16 %v2532, %v2531
        %v2547 = vpack.c.b16 %v2534, %v2533
        %v2548 = vpack.c.b16 %v2536, %v2535
        %v2549 = vpack.c.b16 %v2538, %v2537
        %v2550 = vpack.c.b16 %v2540, %v2539
        %v2551 = vpack.c.b16 %v2542, %v2541
        %v2562 = vsel %vm697, %v2484, 0
        %v2565 = vsel %vm697, %v2486, 0
        %v2568 = vsel %vm697, %v2488, 0
        %v2571 = vsel %vm697, %v2490, 0
        %v2574 = vsel %vm697, %v2492, 0
        %v2577 = vsel %vm697, %v2494, 0
        %v2580 = vsel %vm697, %v2496, 0
        %v2583 = vsel %vm697, %v2498, 0
        %2585 = vmatpush.bf16.msra.mxu0 %v2550
        %2586 = vmatpush.bf16.msra.mxu0 %v2549
        %2587 = vmatpush.bf16.msra.mxu0 %v2548
        %2588 = vmatpush.bf16.msra.mxu0 %v2547
        %2589 = vmatpush.bf16.msra.mxu0 %v2546
        %2590 = vmatpush.bf16.msra.mxu0 %v2545
        %2591 = vmatpush.bf16.msra.mxu0 %v2544
        %2592 = vmatpush.bf16.msra.mxu0 %v2543
        %2593 = vmatmul.bf16.gmra.mxu0 %v2483
        %v2594 = vpop.f32.mrf.mxu0
        %v2595 = vadd.f32 0.0, %v2594
        %v2596 = vpop.f32.mrf.mxu0
        %v2597 = vadd.f32 0.0, %v2596
        %2598 = vmatmul.bf16.gmra.mxu0 %v2485
        %v2599 = vpop.f32.mrf.mxu0
        %v2600 = vadd.f32 0.0, %v2599
        %v2601 = vpop.f32.mrf.mxu0
        %v2602 = vadd.f32 0.0, %v2601
        %2603 = vmatmul.bf16.gmra.mxu0 %v2487
        %v2604 = vpop.f32.mrf.mxu0
        %v2605 = vadd.f32 0.0, %v2604
        %v2606 = vpop.f32.mrf.mxu0
        %v2607 = vadd.f32 0.0, %v2606
        %2608 = vmatmul.bf16.gmra.mxu0 %v2489
        %v2609 = vpop.f32.mrf.mxu0
        %v2610 = vadd.f32 0.0, %v2609
        %v2611 = vpop.f32.mrf.mxu0
        %v2612 = vadd.f32 0.0, %v2611
        %2613 = vmatmul.bf16.gmra.mxu0 %v2491
        %v2614 = vpop.f32.mrf.mxu0
        %v2615 = vadd.f32 0.0, %v2614
        %v2616 = vpop.f32.mrf.mxu0
        %v2617 = vadd.f32 0.0, %v2616
        %2618 = vmatmul.bf16.gmra.mxu0 %v2493
        %v2619 = vpop.f32.mrf.mxu0
        %v2620 = vadd.f32 0.0, %v2619
        %v2621 = vpop.f32.mrf.mxu0
        %v2622 = vadd.f32 0.0, %v2621
        %2623 = vmatmul.bf16.gmra.mxu0 %v2495
        %v2624 = vpop.f32.mrf.mxu0
        %v2625 = vadd.f32 0.0, %v2624
        %v2626 = vpop.f32.mrf.mxu0
        %v2627 = vadd.f32 0.0, %v2626
        %2628 = vmatmul.bf16.gmra.mxu0 %v2497
        %v2629 = vpop.f32.mrf.mxu0
        %v2630 = vadd.f32 0.0, %v2629
        %v2631 = vpop.f32.mrf.mxu0
        %v2632 = vadd.f32 0.0, %v2631
        %2633 = vdwg.mxu0
        %2634 = vmatpush.bf16.msra.mxu0 0
        %2635 = vmatpush.bf16.msra.mxu0 0
        %2636 = vmatpush.bf16.msra.mxu0 0
        %2637 = vmatpush.bf16.msra.mxu0 0
        %2638 = vmatpush.bf16.msra.mxu0 0
        %2639 = vmatpush.bf16.msra.mxu0 0
        %2640 = vmatpush.bf16.msra.mxu0 0
        %2641 = vmatpush.bf16.msra.mxu0 %v2551
        %2642 = vmatmul.bf16.gmra.mxu0 %v2562
        %v2643 = vpop.f32.mrf.mxu0
        %v2644 = vadd.f32 %v2595, %v2643
        %v2645 = vpop.f32.mrf.mxu0
        %v2646 = vadd.f32 %v2597, %v2645
        %2647 = vmatmul.bf16.gmra.mxu0 %v2565
        %v2648 = vpop.f32.mrf.mxu0
        %v2649 = vadd.f32 %v2600, %v2648
        %v2650 = vpop.f32.mrf.mxu0
        %v2651 = vadd.f32 %v2602, %v2650
        %2652 = vmatmul.bf16.gmra.mxu0 %v2568
        %v2653 = vpop.f32.mrf.mxu0
        %v2654 = vadd.f32 %v2605, %v2653
        %v2655 = vpop.f32.mrf.mxu0
        %v2656 = vadd.f32 %v2607, %v2655
        %2657 = vmatmul.bf16.gmra.mxu0 %v2571
        %v2658 = vpop.f32.mrf.mxu0
        %v2659 = vadd.f32 %v2610, %v2658
        %v2660 = vpop.f32.mrf.mxu0
        %v2661 = vadd.f32 %v2612, %v2660
        %2662 = vmatmul.bf16.gmra.mxu0 %v2574
        %v2663 = vpop.f32.mrf.mxu0
        %v2664 = vadd.f32 %v2615, %v2663
        %v2665 = vpop.f32.mrf.mxu0
        %v2666 = vadd.f32 %v2617, %v2665
        %2667 = vmatmul.bf16.gmra.mxu0 %v2577
        %v2668 = vpop.f32.mrf.mxu0
        %v2669 = vadd.f32 %v2620, %v2668
        %v2670 = vpop.f32.mrf.mxu0
        %v2671 = vadd.f32 %v2622, %v2670
        %2672 = vmatmul.bf16.gmra.mxu0 %v2580
        %v2673 = vpop.f32.mrf.mxu0
        %v2674 = vadd.f32 %v2625, %v2673
        %v2675 = vpop.f32.mrf.mxu0
        %v2676 = vadd.f32 %v2627, %v2675
        %2677 = vmatmul.bf16.gmra.mxu0 %v2583
        %v2678 = vpop.f32.mrf.mxu0
        %v2679 = vadd.f32 %v2630, %v2678
        %v2680 = vpop.f32.mrf.mxu0
        %v2681 = vadd.f32 %v2632, %v2680
        %2682 = vdwg.mxu0
        %v2683 = vadd.f32 %v1992, %v2644
        %v2684 = vadd.f32 %v1993, %v2646
        %v2685 = vadd.f32 %v1994, %v2649
        %v2686 = vadd.f32 %v1995, %v2651
        %v2687 = vadd.f32 %v1996, %v2654
        %v2688 = vadd.f32 %v1997, %v2656
        %v2689 = vadd.f32 %v1998, %v2659
        %v2690 = vadd.f32 %v1999, %v2661
        %v2691 = vadd.f32 %v2000, %v2664
        %v2692 = vadd.f32 %v2001, %v2666
        %v2693 = vadd.f32 %v2002, %v2669
        %v2694 = vadd.f32 %v2003, %v2671
        %v2695 = vadd.f32 %v2004, %v2674
        %v2696 = vadd.f32 %v2005, %v2676
        %v2697 = vadd.f32 %v2006, %v2679
        %v2698 = vadd.f32 %v2007, %v2681
        %s2699 = scalar_lea.vmem %s3, 144
        %v2700 = vld [vmem:[%s2699] sm:$0xf]
        %v2701 = vld [vmem:[%s2699 + $0x4] sm:$0xf]
        %v2702 = vld [vmem:[%s2699 + $0x8] sm:$0xf]
        %v2703 = vld [vmem:[%s2699 + $0xc] sm:$0xf]
        %v2704 = vld [vmem:[%s2699 + $0x10] sm:$0xf]
        %v2705 = vld [vmem:[%s2699 + $0x14] sm:$0xf]
        %v2706 = vld [vmem:[%s2699 + $0x18] sm:$0xf]
        %v2707 = vld [vmem:[%s2699 + $0x1c] sm:$0xf]
        %v2708 = vld [vmem:[%s2699 + $0x20] sm:$0xf]
        %v2709 = vld [vmem:[%s2699 + $0x24] sm:$0xf]
        %v2710 = vld [vmem:[%s2699 + $0x28] sm:$0xf]
        %v2711 = vld [vmem:[%s2699 + $0x2c] sm:$0xf]
        %v2712 = vld [vmem:[%s2699 + $0x30] sm:$0xf]
        %v2713 = vld [vmem:[%s2699 + $0x34] sm:$0xf]
        %v2714 = vld [vmem:[%s2699 + $0x38] sm:$0xf]
        %v2715 = vld [vmem:[%s2699 + $0x3c] sm:$0xf]
        %v2716 = vld [vmem:[%s2699 + $0x40] sm:$0xf]
        %v2717 = vld [vmem:[%s2699 + $0x44] sm:$0xf]
        %v2734 = vunpack.c.l.b16 %v2400
        %v2735 = vunpack.c.h.b16 %v2400
        %v2736 = vunpack.c.l.b16 %v2401
        %v2737 = vunpack.c.h.b16 %v2401
        %v2738 = vunpack.c.l.b16 %v2402
        %v2739 = vunpack.c.h.b16 %v2402
        %v2740 = vunpack.c.l.b16 %v2403
        %v2741 = vunpack.c.h.b16 %v2403
        %v2742 = vunpack.c.l.b16 %v2404
        %v2743 = vunpack.c.h.b16 %v2404
        %v2744 = vunpack.c.l.b16 %v2405
        %v2745 = vunpack.c.h.b16 %v2405
        %v2746 = vunpack.c.l.b16 %v2406
        %v2747 = vunpack.c.h.b16 %v2406
        %v2748 = vunpack.c.l.b16 %v2407
        %v2749 = vunpack.c.h.b16 %v2407
        %v2750 = vunpack.c.l.b16 %v2408
        %v2751 = vunpack.c.h.b16 %v2408
        %v2752 = vunpack.c.l.b16 %v2409
        %v2753 = vunpack.c.h.b16 %v2409
        %v2754 = vunpack.c.l.b16 %v2410
        %v2755 = vunpack.c.h.b16 %v2410
        %v2756 = vunpack.c.l.b16 %v2411
        %v2757 = vunpack.c.h.b16 %v2411
        %v2758 = vunpack.c.l.b16 %v2412
        %v2759 = vunpack.c.h.b16 %v2412
        %v2760 = vunpack.c.l.b16 %v2413
        %v2761 = vunpack.c.h.b16 %v2413
        %v2762 = vunpack.c.l.b16 %v2414
        %v2763 = vunpack.c.h.b16 %v2414
        %v2764 = vunpack.c.l.b16 %v2415
        %v2765 = vunpack.c.h.b16 %v2415
        %v2766 = vpack.c.b16 %v2736, %v2734
        %v2767 = vpack.c.b16 %v2737, %v2735
        %v2768 = vpack.c.b16 %v2740, %v2738
        %v2769 = vpack.c.b16 %v2741, %v2739
        %v2770 = vpack.c.b16 %v2744, %v2742
        %v2771 = vpack.c.b16 %v2745, %v2743
        %v2772 = vpack.c.b16 %v2748, %v2746
        %v2773 = vpack.c.b16 %v2749, %v2747
        %v2774 = vpack.c.b16 %v2752, %v2750
        %v2775 = vpack.c.b16 %v2753, %v2751
        %v2776 = vpack.c.b16 %v2756, %v2754
        %v2777 = vpack.c.b16 %v2757, %v2755
        %v2778 = vpack.c.b16 %v2760, %v2758
        %v2779 = vpack.c.b16 %v2761, %v2759
        %v2780 = vpack.c.b16 %v2764, %v2762
        %v2781 = vpack.c.b16 %v2765, %v2763
        %v2808 = vunpack.c.l.b16 %v2700
        %v2809 = vunpack.c.l.b16 %v2701
        %v2810 = vunpack.c.l.b16 %v2702
        %v2811 = vunpack.c.l.b16 %v2703
        %v2812 = vunpack.c.l.b16 %v2704
        %v2813 = vunpack.c.l.b16 %v2705
        %v2814 = vunpack.c.l.b16 %v2706
        %v2815 = vunpack.c.l.b16 %v2707
        %v2816 = vunpack.c.l.b16 %v2708
        %v2817 = vunpack.c.l.b16 %v2709
        %v2818 = vunpack.c.l.b16 %v2710
        %v2819 = vunpack.c.l.b16 %v2711
        %v2820 = vunpack.c.l.b16 %v2712
        %v2821 = vunpack.c.l.b16 %v2713
        %v2822 = vunpack.c.l.b16 %v2714
        %v2823 = vunpack.c.l.b16 %v2715
        %v2824 = vunpack.c.l.b16 %v2716
        %v2825 = vunpack.c.l.b16 %v2717
        %v2826 = vpack.c.b16 %v2809, %v2808
        %v2827 = vpack.c.b16 %v2811, %v2810
        %v2828 = vpack.c.b16 %v2813, %v2812
        %v2829 = vpack.c.b16 %v2815, %v2814
        %v2830 = vpack.c.b16 %v2817, %v2816
        %v2831 = vpack.c.b16 %v2819, %v2818
        %v2832 = vpack.c.b16 %v2821, %v2820
        %v2833 = vpack.c.b16 %v2823, %v2822
        %v2834 = vpack.c.b16 %v2825, %v2824
        %v2845 = vsel %vm697, %v2767, 0
        %v2848 = vsel %vm697, %v2769, 0
        %v2851 = vsel %vm697, %v2771, 0
        %v2854 = vsel %vm697, %v2773, 0
        %v2857 = vsel %vm697, %v2775, 0
        %v2860 = vsel %vm697, %v2777, 0
        %v2863 = vsel %vm697, %v2779, 0
        %v2866 = vsel %vm697, %v2781, 0
        %2868 = vmatpush.bf16.msra.mxu0 %v2833
        %2869 = vmatpush.bf16.msra.mxu0 %v2832
        %2870 = vmatpush.bf16.msra.mxu0 %v2831
        %2871 = vmatpush.bf16.msra.mxu0 %v2830
        %2872 = vmatpush.bf16.msra.mxu0 %v2829
        %2873 = vmatpush.bf16.msra.mxu0 %v2828
        %2874 = vmatpush.bf16.msra.mxu0 %v2827
        %2875 = vmatpush.bf16.msra.mxu0 %v2826
        %2876 = vmatmul.bf16.gmra.mxu0 %v2766
        %v2877 = vpop.f32.mrf.mxu0
        %v2878 = vadd.f32 0.0, %v2877
        %v2879 = vpop.f32.mrf.mxu0
        %v2880 = vadd.f32 0.0, %v2879
        %2881 = vmatmul.bf16.gmra.mxu0 %v2768
        %v2882 = vpop.f32.mrf.mxu0
        %v2883 = vadd.f32 0.0, %v2882
        %v2884 = vpop.f32.mrf.mxu0
        %v2885 = vadd.f32 0.0, %v2884
        %2886 = vmatmul.bf16.gmra.mxu0 %v2770
        %v2887 = vpop.f32.mrf.mxu0
        %v2888 = vadd.f32 0.0, %v2887
        %v2889 = vpop.f32.mrf.mxu0
        %v2890 = vadd.f32 0.0, %v2889
        %2891 = vmatmul.bf16.gmra.mxu0 %v2772
        %v2892 = vpop.f32.mrf.mxu0
        %v2893 = vadd.f32 0.0, %v2892
        %v2894 = vpop.f32.mrf.mxu0
        %v2895 = vadd.f32 0.0, %v2894
        %2896 = vmatmul.bf16.gmra.mxu0 %v2774
        %v2897 = vpop.f32.mrf.mxu0
        %v2898 = vadd.f32 0.0, %v2897
        %v2899 = vpop.f32.mrf.mxu0
        %v2900 = vadd.f32 0.0, %v2899
        %2901 = vmatmul.bf16.gmra.mxu0 %v2776
        %v2902 = vpop.f32.mrf.mxu0
        %v2903 = vadd.f32 0.0, %v2902
        %v2904 = vpop.f32.mrf.mxu0
        %v2905 = vadd.f32 0.0, %v2904
        %2906 = vmatmul.bf16.gmra.mxu0 %v2778
        %v2907 = vpop.f32.mrf.mxu0
        %v2908 = vadd.f32 0.0, %v2907
        %v2909 = vpop.f32.mrf.mxu0
        %v2910 = vadd.f32 0.0, %v2909
        %2911 = vmatmul.bf16.gmra.mxu0 %v2780
        %v2912 = vpop.f32.mrf.mxu0
        %v2913 = vadd.f32 0.0, %v2912
        %v2914 = vpop.f32.mrf.mxu0
        %v2915 = vadd.f32 0.0, %v2914
        %2916 = vdwg.mxu0
        %2917 = vmatpush.bf16.msra.mxu0 0
        %2918 = vmatpush.bf16.msra.mxu0 0
        %2919 = vmatpush.bf16.msra.mxu0 0
        %2920 = vmatpush.bf16.msra.mxu0 0
        %2921 = vmatpush.bf16.msra.mxu0 0
        %2922 = vmatpush.bf16.msra.mxu0 0
        %2923 = vmatpush.bf16.msra.mxu0 0
        %2924 = vmatpush.bf16.msra.mxu0 %v2834
        %2925 = vmatmul.bf16.gmra.mxu0 %v2845
        %v2926 = vpop.f32.mrf.mxu0
        %v2927 = vadd.f32 %v2878, %v2926
        %v2928 = vpop.f32.mrf.mxu0
        %v2929 = vadd.f32 %v2880, %v2928
        %2930 = vmatmul.bf16.gmra.mxu0 %v2848
        %v2931 = vpop.f32.mrf.mxu0
        %v2932 = vadd.f32 %v2883, %v2931
        %v2933 = vpop.f32.mrf.mxu0
        %v2934 = vadd.f32 %v2885, %v2933
        %2935 = vmatmul.bf16.gmra.mxu0 %v2851
        %v2936 = vpop.f32.mrf.mxu0
        %v2937 = vadd.f32 %v2888, %v2936
        %v2938 = vpop.f32.mrf.mxu0
        %v2939 = vadd.f32 %v2890, %v2938
        %2940 = vmatmul.bf16.gmra.mxu0 %v2854
        %v2941 = vpop.f32.mrf.mxu0
        %v2942 = vadd.f32 %v2893, %v2941
        %v2943 = vpop.f32.mrf.mxu0
        %v2944 = vadd.f32 %v2895, %v2943
        %2945 = vmatmul.bf16.gmra.mxu0 %v2857
        %v2946 = vpop.f32.mrf.mxu0
        %v2947 = vadd.f32 %v2898, %v2946
        %v2948 = vpop.f32.mrf.mxu0
        %v2949 = vadd.f32 %v2900, %v2948
        %2950 = vmatmul.bf16.gmra.mxu0 %v2860
        %v2951 = vpop.f32.mrf.mxu0
        %v2952 = vadd.f32 %v2903, %v2951
        %v2953 = vpop.f32.mrf.mxu0
        %v2954 = vadd.f32 %v2905, %v2953
        %2955 = vmatmul.bf16.gmra.mxu0 %v2863
        %v2956 = vpop.f32.mrf.mxu0
        %v2957 = vadd.f32 %v2908, %v2956
        %v2958 = vpop.f32.mrf.mxu0
        %v2959 = vadd.f32 %v2910, %v2958
        %2960 = vmatmul.bf16.gmra.mxu0 %v2866
        %v2961 = vpop.f32.mrf.mxu0
        %v2962 = vadd.f32 %v2913, %v2961
        %v2963 = vpop.f32.mrf.mxu0
        %v2964 = vadd.f32 %v2915, %v2963
        %2965 = vdwg.mxu0
        %v2966 = vadd.f32 %v2683, %v2927
        %v2967 = vadd.f32 %v2684, %v2929
        %v2968 = vadd.f32 %v2685, %v2932
        %v2969 = vadd.f32 %v2686, %v2934
        %v2970 = vadd.f32 %v2687, %v2937
        %v2971 = vadd.f32 %v2688, %v2939
        %v2972 = vadd.f32 %v2689, %v2942
        %v2973 = vadd.f32 %v2690, %v2944
        %v2974 = vadd.f32 %v2691, %v2947
        %v2975 = vadd.f32 %v2692, %v2949
        %v2976 = vadd.f32 %v2693, %v2952
        %v2977 = vadd.f32 %v2694, %v2954
        %v2978 = vadd.f32 %v2695, %v2957
        %v2979 = vadd.f32 %v2696, %v2959
        %v2980 = vadd.f32 %v2697, %v2962
        %v2981 = vadd.f32 %v2698, %v2964
        %s2982 = scalar_lea.vmem %s5, 144
        %v2983 = vld [vmem:[%s2982] sm:$0xf]
        %v2984 = vld [vmem:[%s2982 + $0x4] sm:$0xf]
        %v2985 = vld [vmem:[%s2982 + $0x8] sm:$0xf]
        %v2986 = vld [vmem:[%s2982 + $0xc] sm:$0xf]
        %v2987 = vld [vmem:[%s2982 + $0x10] sm:$0xf]
        %v2988 = vld [vmem:[%s2982 + $0x14] sm:$0xf]
        %v2989 = vld [vmem:[%s2982 + $0x18] sm:$0xf]
        %v2990 = vld [vmem:[%s2982 + $0x1c] sm:$0xf]
        %v2991 = vld [vmem:[%s2982 + $0x20] sm:$0xf]
        %v2992 = vld [vmem:[%s2982 + $0x24] sm:$0xf]
        %v2993 = vld [vmem:[%s2982 + $0x28] sm:$0xf]
        %v2994 = vld [vmem:[%s2982 + $0x2c] sm:$0xf]
        %v2995 = vld [vmem:[%s2982 + $0x30] sm:$0xf]
        %v2996 = vld [vmem:[%s2982 + $0x34] sm:$0xf]
        %v2997 = vld [vmem:[%s2982 + $0x38] sm:$0xf]
        %v2998 = vld [vmem:[%s2982 + $0x3c] sm:$0xf]
        %v2999 = vld [vmem:[%s2982 + $0x40] sm:$0xf]
        %v3000 = vld [vmem:[%s2982 + $0x44] sm:$0xf]
        %v3019 = vunpack.c.l.b16 %v2983
        %v3020 = vunpack.c.l.b16 %v2984
        %v3021 = vunpack.c.l.b16 %v2985
        %v3022 = vunpack.c.l.b16 %v2986
        %v3023 = vunpack.c.l.b16 %v2987
        %v3024 = vunpack.c.l.b16 %v2988
        %v3025 = vunpack.c.l.b16 %v2989
        %v3026 = vunpack.c.l.b16 %v2990
        %v3027 = vunpack.c.l.b16 %v2991
        %v3028 = vunpack.c.l.b16 %v2992
        %v3029 = vunpack.c.l.b16 %v2993
        %v3030 = vunpack.c.l.b16 %v2994
        %v3031 = vunpack.c.l.b16 %v2995
        %v3032 = vunpack.c.l.b16 %v2996
        %v3033 = vunpack.c.l.b16 %v2997
        %v3034 = vunpack.c.l.b16 %v2998
        %v3035 = vunpack.c.l.b16 %v2999
        %v3036 = vunpack.c.l.b16 %v3000
        %v3037 = vpack.c.b16 %v3020, %v3019
        %v3038 = vpack.c.b16 %v3022, %v3021
        %v3039 = vpack.c.b16 %v3024, %v3023
        %v3040 = vpack.c.b16 %v3026, %v3025
        %v3041 = vpack.c.b16 %v3028, %v3027
        %v3042 = vpack.c.b16 %v3030, %v3029
        %v3043 = vpack.c.b16 %v3032, %v3031
        %v3044 = vpack.c.b16 %v3034, %v3033
        %v3045 = vpack.c.b16 %v3036, %v3035
        %3055 = vmatpush.bf16.msra.mxu0 %v3044
        %3056 = vmatpush.bf16.msra.mxu0 %v3043
        %3057 = vmatpush.bf16.msra.mxu0 %v3042
        %3058 = vmatpush.bf16.msra.mxu0 %v3041
        %3059 = vmatpush.bf16.msra.mxu0 %v3040
        %3060 = vmatpush.bf16.msra.mxu0 %v3039
        %3061 = vmatpush.bf16.msra.mxu0 %v3038
        %3062 = vmatpush.bf16.msra.mxu0 %v3037
        %3063 = vmatmul.bf16.gmra.mxu0 %v2766
        %v3064 = vpop.f32.mrf.mxu0
        %v3065 = vadd.f32 0.0, %v3064
        %v3066 = vpop.f32.mrf.mxu0
        %v3067 = vadd.f32 0.0, %v3066
        %3068 = vmatmul.bf16.gmra.mxu0 %v2768
        %v3069 = vpop.f32.mrf.mxu0
        %v3070 = vadd.f32 0.0, %v3069
        %v3071 = vpop.f32.mrf.mxu0
        %v3072 = vadd.f32 0.0, %v3071
        %3073 = vmatmul.bf16.gmra.mxu0 %v2770
        %v3074 = vpop.f32.mrf.mxu0
        %v3075 = vadd.f32 0.0, %v3074
        %v3076 = vpop.f32.mrf.mxu0
        %v3077 = vadd.f32 0.0, %v3076
        %3078 = vmatmul.bf16.gmra.mxu0 %v2772
        %v3079 = vpop.f32.mrf.mxu0
        %v3080 = vadd.f32 0.0, %v3079
        %v3081 = vpop.f32.mrf.mxu0
        %v3082 = vadd.f32 0.0, %v3081
        %3083 = vmatmul.bf16.gmra.mxu0 %v2774
        %v3084 = vpop.f32.mrf.mxu0
        %v3085 = vadd.f32 0.0, %v3084
        %v3086 = vpop.f32.mrf.mxu0
        %v3087 = vadd.f32 0.0, %v3086
        %3088 = vmatmul.bf16.gmra.mxu0 %v2776
        %v3089 = vpop.f32.mrf.mxu0
        %v3090 = vadd.f32 0.0, %v3089
        %v3091 = vpop.f32.mrf.mxu0
        %v3092 = vadd.f32 0.0, %v3091
        %3093 = vmatmul.bf16.gmra.mxu0 %v2778
        %v3094 = vpop.f32.mrf.mxu0
        %v3095 = vadd.f32 0.0, %v3094
        %v3096 = vpop.f32.mrf.mxu0
        %v3097 = vadd.f32 0.0, %v3096
        %3098 = vmatmul.bf16.gmra.mxu0 %v2780
        %v3099 = vpop.f32.mrf.mxu0
        %v3100 = vadd.f32 0.0, %v3099
        %v3101 = vpop.f32.mrf.mxu0
        %v3102 = vadd.f32 0.0, %v3101
        %3103 = vdwg.mxu0
        %3104 = vmatpush.bf16.msra.mxu0 0
        %3105 = vmatpush.bf16.msra.mxu0 0
        %3106 = vmatpush.bf16.msra.mxu0 0
        %3107 = vmatpush.bf16.msra.mxu0 0
        %3108 = vmatpush.bf16.msra.mxu0 0
        %3109 = vmatpush.bf16.msra.mxu0 0
        %3110 = vmatpush.bf16.msra.mxu0 0
        %3111 = vmatpush.bf16.msra.mxu0 %v3045
        %3112 = vmatmul.bf16.gmra.mxu0 %v2845
        %v3113 = vpop.f32.mrf.mxu0
        %v3114 = vadd.f32 %v3065, %v3113
        %v3115 = vpop.f32.mrf.mxu0
        %v3116 = vadd.f32 %v3067, %v3115
        %3117 = vmatmul.bf16.gmra.mxu0 %v2848
        %v3118 = vpop.f32.mrf.mxu0
        %v3119 = vadd.f32 %v3070, %v3118
        %v3120 = vpop.f32.mrf.mxu0
        %v3121 = vadd.f32 %v3072, %v3120
        %3122 = vmatmul.bf16.gmra.mxu0 %v2851
        %v3123 = vpop.f32.mrf.mxu0
        %v3124 = vadd.f32 %v3075, %v3123
        %v3125 = vpop.f32.mrf.mxu0
        %v3126 = vadd.f32 %v3077, %v3125
        %3127 = vmatmul.bf16.gmra.mxu0 %v2854
        %v3128 = vpop.f32.mrf.mxu0
        %v3129 = vadd.f32 %v3080, %v3128
        %v3130 = vpop.f32.mrf.mxu0
        %v3131 = vadd.f32 %v3082, %v3130
        %3132 = vmatmul.bf16.gmra.mxu0 %v2857
        %v3133 = vpop.f32.mrf.mxu0
        %v3134 = vadd.f32 %v3085, %v3133
        %v3135 = vpop.f32.mrf.mxu0
        %v3136 = vadd.f32 %v3087, %v3135
        %3137 = vmatmul.bf16.gmra.mxu0 %v2860
        %v3138 = vpop.f32.mrf.mxu0
        %v3139 = vadd.f32 %v3090, %v3138
        %v3140 = vpop.f32.mrf.mxu0
        %v3141 = vadd.f32 %v3092, %v3140
        %3142 = vmatmul.bf16.gmra.mxu0 %v2863
        %v3143 = vpop.f32.mrf.mxu0
        %v3144 = vadd.f32 %v3095, %v3143
        %v3145 = vpop.f32.mrf.mxu0
        %v3146 = vadd.f32 %v3097, %v3145
        %3147 = vmatmul.bf16.gmra.mxu0 %v2866
        %v3148 = vpop.f32.mrf.mxu0
        %v3149 = vadd.f32 %v3100, %v3148
        %v3150 = vpop.f32.mrf.mxu0
        %v3151 = vadd.f32 %v3102, %v3150
        %3152 = vdwg.mxu0
        %v3153 = vadd.f32 %v2366, %v3114
        %v3154 = vadd.f32 %v2367, %v3116
        %v3155 = vadd.f32 %v2368, %v3119
        %v3156 = vadd.f32 %v2369, %v3121
        %v3157 = vadd.f32 %v2370, %v3124
        %v3158 = vadd.f32 %v2371, %v3126
        %v3159 = vadd.f32 %v2372, %v3129
        %v3160 = vadd.f32 %v2373, %v3131
        %v3161 = vadd.f32 %v2374, %v3134
        %v3162 = vadd.f32 %v2375, %v3136
        %v3163 = vadd.f32 %v2376, %v3139
        %v3164 = vadd.f32 %v2377, %v3141
        %v3165 = vadd.f32 %v2378, %v3144
        %v3166 = vadd.f32 %v2379, %v3146
        %v3167 = vadd.f32 %v2380, %v3149
        %v3168 = vadd.f32 %v2381, %v3151
        %s3169 = scalar_lea.vmem %s4, 144
        %v3170 = vld [vmem:[%s3169] sm:$0xf]
        %v3171 = vld [vmem:[%s3169 + $0x4] sm:$0xf]
        %v3172 = vld [vmem:[%s3169 + $0x8] sm:$0xf]
        %v3173 = vld [vmem:[%s3169 + $0xc] sm:$0xf]
        %v3174 = vld [vmem:[%s3169 + $0x10] sm:$0xf]
        %v3175 = vld [vmem:[%s3169 + $0x14] sm:$0xf]
        %v3176 = vld [vmem:[%s3169 + $0x18] sm:$0xf]
        %v3177 = vld [vmem:[%s3169 + $0x1c] sm:$0xf]
        %v3178 = vld [vmem:[%s3169 + $0x20] sm:$0xf]
        %v3179 = vld [vmem:[%s3169 + $0x24] sm:$0xf]
        %v3180 = vld [vmem:[%s3169 + $0x28] sm:$0xf]
        %v3181 = vld [vmem:[%s3169 + $0x2c] sm:$0xf]
        %v3182 = vld [vmem:[%s3169 + $0x30] sm:$0xf]
        %v3183 = vld [vmem:[%s3169 + $0x34] sm:$0xf]
        %v3184 = vld [vmem:[%s3169 + $0x38] sm:$0xf]
        %v3185 = vld [vmem:[%s3169 + $0x3c] sm:$0xf]
        %v3186 = vld [vmem:[%s3169 + $0x40] sm:$0xf]
        %v3187 = vld [vmem:[%s3169 + $0x44] sm:$0xf]
        %v3206 = vunpack.c.l.b16 %v3170
        %v3207 = vunpack.c.l.b16 %v3171
        %v3208 = vunpack.c.l.b16 %v3172
        %v3209 = vunpack.c.l.b16 %v3173
        %v3210 = vunpack.c.l.b16 %v3174
        %v3211 = vunpack.c.l.b16 %v3175
        %v3212 = vunpack.c.l.b16 %v3176
        %v3213 = vunpack.c.l.b16 %v3177
        %v3214 = vunpack.c.l.b16 %v3178
        %v3215 = vunpack.c.l.b16 %v3179
        %v3216 = vunpack.c.l.b16 %v3180
        %v3217 = vunpack.c.l.b16 %v3181
        %v3218 = vunpack.c.l.b16 %v3182
        %v3219 = vunpack.c.l.b16 %v3183
        %v3220 = vunpack.c.l.b16 %v3184
        %v3221 = vunpack.c.l.b16 %v3185
        %v3222 = vunpack.c.l.b16 %v3186
        %v3223 = vunpack.c.l.b16 %v3187
        %v3224 = vpack.c.b16 %v3207, %v3206
        %v3225 = vpack.c.b16 %v3209, %v3208
        %v3226 = vpack.c.b16 %v3211, %v3210
        %v3227 = vpack.c.b16 %v3213, %v3212
        %v3228 = vpack.c.b16 %v3215, %v3214
        %v3229 = vpack.c.b16 %v3217, %v3216
        %v3230 = vpack.c.b16 %v3219, %v3218
        %v3231 = vpack.c.b16 %v3221, %v3220
        %v3232 = vpack.c.b16 %v3223, %v3222
        %3242 = vmatpush.bf16.msra.mxu0 %v3231
        %3243 = vmatpush.bf16.msra.mxu0 %v3230
        %3244 = vmatpush.bf16.msra.mxu0 %v3229
        %3245 = vmatpush.bf16.msra.mxu0 %v3228
        %3246 = vmatpush.bf16.msra.mxu0 %v3227
        %3247 = vmatpush.bf16.msra.mxu0 %v3226
        %3248 = vmatpush.bf16.msra.mxu0 %v3225
        %3249 = vmatpush.bf16.msra.mxu0 %v3224
        %3250 = vmatmul.bf16.gmra.mxu0 %v2483
        %v3251 = vpop.f32.mrf.mxu0
        %v3252 = vadd.f32 0.0, %v3251
        %v3253 = vpop.f32.mrf.mxu0
        %v3254 = vadd.f32 0.0, %v3253
        %3255 = vmatmul.bf16.gmra.mxu0 %v2485
        %v3256 = vpop.f32.mrf.mxu0
        %v3257 = vadd.f32 0.0, %v3256
        %v3258 = vpop.f32.mrf.mxu0
        %v3259 = vadd.f32 0.0, %v3258
        %3260 = vmatmul.bf16.gmra.mxu0 %v2487
        %v3261 = vpop.f32.mrf.mxu0
        %v3262 = vadd.f32 0.0, %v3261
        %v3263 = vpop.f32.mrf.mxu0
        %v3264 = vadd.f32 0.0, %v3263
        %3265 = vmatmul.bf16.gmra.mxu0 %v2489
        %v3266 = vpop.f32.mrf.mxu0
        %v3267 = vadd.f32 0.0, %v3266
        %v3268 = vpop.f32.mrf.mxu0
        %v3269 = vadd.f32 0.0, %v3268
        %3270 = vmatmul.bf16.gmra.mxu0 %v2491
        %v3271 = vpop.f32.mrf.mxu0
        %v3272 = vadd.f32 0.0, %v3271
        %v3273 = vpop.f32.mrf.mxu0
        %v3274 = vadd.f32 0.0, %v3273
        %3275 = vmatmul.bf16.gmra.mxu0 %v2493
        %v3276 = vpop.f32.mrf.mxu0
        %v3277 = vadd.f32 0.0, %v3276
        %v3278 = vpop.f32.mrf.mxu0
        %v3279 = vadd.f32 0.0, %v3278
        %3280 = vmatmul.bf16.gmra.mxu0 %v2495
        %v3281 = vpop.f32.mrf.mxu0
        %v3282 = vadd.f32 0.0, %v3281
        %v3283 = vpop.f32.mrf.mxu0
        %v3284 = vadd.f32 0.0, %v3283
        %3285 = vmatmul.bf16.gmra.mxu0 %v2497
        %v3286 = vpop.f32.mrf.mxu0
        %v3287 = vadd.f32 0.0, %v3286
        %v3288 = vpop.f32.mrf.mxu0
        %v3289 = vadd.f32 0.0, %v3288
        %3290 = vdwg.mxu0
        %3291 = vmatpush.bf16.msra.mxu0 0
        %3292 = vmatpush.bf16.msra.mxu0 0
        %3293 = vmatpush.bf16.msra.mxu0 0
        %3294 = vmatpush.bf16.msra.mxu0 0
        %3295 = vmatpush.bf16.msra.mxu0 0
        %3296 = vmatpush.bf16.msra.mxu0 0
        %3297 = vmatpush.bf16.msra.mxu0 0
        %3298 = vmatpush.bf16.msra.mxu0 %v3232
        %3299 = vmatmul.bf16.gmra.mxu0 %v2562
        %v3300 = vpop.f32.mrf.mxu0
        %v3301 = vadd.f32 %v3252, %v3300
        %v3302 = vpop.f32.mrf.mxu0
        %v3303 = vadd.f32 %v3254, %v3302
        %3304 = vmatmul.bf16.gmra.mxu0 %v2565
        %v3305 = vpop.f32.mrf.mxu0
        %v3306 = vadd.f32 %v3257, %v3305
        %v3307 = vpop.f32.mrf.mxu0
        %v3308 = vadd.f32 %v3259, %v3307
        %3309 = vmatmul.bf16.gmra.mxu0 %v2568
        %v3310 = vpop.f32.mrf.mxu0
        %v3311 = vadd.f32 %v3262, %v3310
        %v3312 = vpop.f32.mrf.mxu0
        %v3313 = vadd.f32 %v3264, %v3312
        %3314 = vmatmul.bf16.gmra.mxu0 %v2571
        %v3315 = vpop.f32.mrf.mxu0
        %v3316 = vadd.f32 %v3267, %v3315
        %v3317 = vpop.f32.mrf.mxu0
        %v3318 = vadd.f32 %v3269, %v3317
        %3319 = vmatmul.bf16.gmra.mxu0 %v2574
        %v3320 = vpop.f32.mrf.mxu0
        %v3321 = vadd.f32 %v3272, %v3320
        %v3322 = vpop.f32.mrf.mxu0
        %v3323 = vadd.f32 %v3274, %v3322
        %3324 = vmatmul.bf16.gmra.mxu0 %v2577
        %v3325 = vpop.f32.mrf.mxu0
        %v3326 = vadd.f32 %v3277, %v3325
        %v3327 = vpop.f32.mrf.mxu0
        %v3328 = vadd.f32 %v3279, %v3327
        %3329 = vmatmul.bf16.gmra.mxu0 %v2580
        %v3330 = vpop.f32.mrf.mxu0
        %v3331 = vadd.f32 %v3282, %v3330
        %v3332 = vpop.f32.mrf.mxu0
        %v3333 = vadd.f32 %v3284, %v3332
        %3334 = vmatmul.bf16.gmra.mxu0 %v2583
        %v3335 = vpop.f32.mrf.mxu0
        %v3336 = vadd.f32 %v3287, %v3335
        %v3337 = vpop.f32.mrf.mxu0
        %v3338 = vadd.f32 %v3289, %v3337
        %3339 = vdwg.mxu0
        %v3340 = vadd.f32 %v3153, %v3301
        %v3341 = vadd.f32 %v3154, %v3303
        %v3342 = vadd.f32 %v3155, %v3306
        %v3343 = vadd.f32 %v3156, %v3308
        %v3344 = vadd.f32 %v3157, %v3311
        %v3345 = vadd.f32 %v3158, %v3313
        %v3346 = vadd.f32 %v3159, %v3316
        %v3347 = vadd.f32 %v3160, %v3318
        %v3348 = vadd.f32 %v3161, %v3321
        %v3349 = vadd.f32 %v3162, %v3323
        %v3350 = vadd.f32 %v3163, %v3326
        %v3351 = vadd.f32 %v3164, %v3328
        %v3352 = vadd.f32 %v3165, %v3331
        %v3353 = vadd.f32 %v3166, %v3333
        %v3354 = vadd.f32 %v3167, %v3336
        %v3355 = vadd.f32 %v3168, %v3338
        %v3357 = vperm.slane %v502, 0
        %v3359 = vadd.f32 %v2966, %v3357
        %v3360 = vadd.f32 %v2967, %v3357
        %v3361 = vadd.f32 %v2968, %v3357
        %v3362 = vadd.f32 %v2969, %v3357
        %v3363 = vadd.f32 %v2970, %v3357
        %v3364 = vadd.f32 %v2971, %v3357
        %v3365 = vadd.f32 %v2972, %v3357
        %v3366 = vadd.f32 %v2973, %v3357
        %v3367 = vadd.f32 %v2974, %v3357
        %v3368 = vadd.f32 %v2975, %v3357
        %v3369 = vadd.f32 %v2976, %v3357
        %v3370 = vadd.f32 %v2977, %v3357
        %v3371 = vadd.f32 %v2978, %v3357
        %v3372 = vadd.f32 %v2979, %v3357
        %v3373 = vadd.f32 %v2980, %v3357
        %v3374 = vadd.f32 %v2981, %v3357
        %v3375 = vmax.f32 %v3359, 0.0
        %v3376 = vmax.f32 %v3360, 0.0
        %v3377 = vmax.f32 %v3361, 0.0
        %v3378 = vmax.f32 %v3362, 0.0
        %v3379 = vmax.f32 %v3363, 0.0
        %v3380 = vmax.f32 %v3364, 0.0
        %v3381 = vmax.f32 %v3365, 0.0
        %v3382 = vmax.f32 %v3366, 0.0
        %v3383 = vmax.f32 %v3367, 0.0
        %v3384 = vmax.f32 %v3368, 0.0
        %v3385 = vmax.f32 %v3369, 0.0
        %v3386 = vmax.f32 %v3370, 0.0
        %v3387 = vmax.f32 %v3371, 0.0
        %v3388 = vmax.f32 %v3372, 0.0
        %v3389 = vmax.f32 %v3373, 0.0
        %v3390 = vmax.f32 %v3374, 0.0
        %v3391 = vadd.f32 %v3340, %v3357
        %v3392 = vadd.f32 %v3341, %v3357
        %v3393 = vadd.f32 %v3342, %v3357
        %v3394 = vadd.f32 %v3343, %v3357
        %v3395 = vadd.f32 %v3344, %v3357
        %v3396 = vadd.f32 %v3345, %v3357
        %v3397 = vadd.f32 %v3346, %v3357
        %v3398 = vadd.f32 %v3347, %v3357
        %v3399 = vadd.f32 %v3348, %v3357
        %v3400 = vadd.f32 %v3349, %v3357
        %v3401 = vadd.f32 %v3350, %v3357
        %v3402 = vadd.f32 %v3351, %v3357
        %v3403 = vadd.f32 %v3352, %v3357
        %v3404 = vadd.f32 %v3353, %v3357
        %v3405 = vadd.f32 %v3354, %v3357
        %v3406 = vadd.f32 %v3355, %v3357
        %v3407 = vmax.f32 %v3391, 0.0
        %v3408 = vmax.f32 %v3392, 0.0
        %v3409 = vmax.f32 %v3393, 0.0
        %v3410 = vmax.f32 %v3394, 0.0
        %v3411 = vmax.f32 %v3395, 0.0
        %v3412 = vmax.f32 %v3396, 0.0
        %v3413 = vmax.f32 %v3397, 0.0
        %v3414 = vmax.f32 %v3398, 0.0
        %v3415 = vmax.f32 %v3399, 0.0
        %v3416 = vmax.f32 %v3400, 0.0
        %v3417 = vmax.f32 %v3401, 0.0
        %v3418 = vmax.f32 %v3402, 0.0
        %v3419 = vmax.f32 %v3403, 0.0
        %v3420 = vmax.f32 %v3404, 0.0
        %v3421 = vmax.f32 %v3405, 0.0
        %v3422 = vmax.f32 %v3406, 0.0
        %v3423 = vmax.f32 %v3375, %v3407
        %v3424 = vmax.f32 %v3376, %v3408
        %v3425 = vmax.f32 %v3377, %v3409
        %v3426 = vmax.f32 %v3378, %v3410
        %v3427 = vmax.f32 %v3379, %v3411
        %v3428 = vmax.f32 %v3380, %v3412
        %v3429 = vmax.f32 %v3381, %v3413
        %v3430 = vmax.f32 %v3382, %v3414
        %v3431 = vmax.f32 %v3383, %v3415
        %v3432 = vmax.f32 %v3384, %v3416
        %v3433 = vmax.f32 %v3385, %v3417
        %v3434 = vmax.f32 %v3386, %v3418
        %v3435 = vmax.f32 %v3387, %v3419
        %v3436 = vmax.f32 %v3388, %v3420
        %v3437 = vmax.f32 %v3389, %v3421
        %v3438 = vmax.f32 %v3390, %v3422
        %v3439 = vmax.f32 %v3423, %v3424
        %v3440 = vmax.f32 %v3425, %v3426
        %v3441 = vmax.f32 %v3427, %v3428
        %v3442 = vmax.f32 %v3429, %v3430
        %v3443 = vmax.f32 %v3431, %v3432
        %v3444 = vmax.f32 %v3433, %v3434
        %v3445 = vmax.f32 %v3435, %v3436
        %v3446 = vmax.f32 %v3437, %v3438
        %v3447 = vpack.c.bf16 %v3439, %v3439
        %v3448 = vpack.c.bf16 %v3440, %v3440
        %v3449 = vpack.c.bf16 %v3441, %v3441
        %v3450 = vpack.c.bf16 %v3442, %v3442
        %v3451 = vpack.c.bf16 %v3443, %v3443
        %v3452 = vpack.c.bf16 %v3444, %v3444
        %v3453 = vpack.c.bf16 %v3445, %v3445
        %v3454 = vpack.c.bf16 %v3446, %v3446
        %3455 = vst [vmem:[%s500] sm:$0xf] %v3447
        %3456 = vst [vmem:[%s500 + $0x4] sm:$0xf] %v3448
        %3457 = vst [vmem:[%s500 + $0x8] sm:$0xf] %v3449
        %3458 = vst [vmem:[%s500 + $0xc] sm:$0xf] %v3450
        %3459 = vst [vmem:[%s500 + $0x10] sm:$0xf] %v3451
        %3460 = vst [vmem:[%s500 + $0x14] sm:$0xf] %v3452
        %3461 = vst [vmem:[%s500 + $0x18] sm:$0xf] %v3453
        %3462 = vst [vmem:[%s500 + $0x1c] sm:$0xf] %v3454
        %s3463 = sand.u32 %s183, 1
        %s3464 = sand.u32 %s183, 1
        %s3465 = smul.addr %s3464, 32
        %s3466 = scalar_lea.vmem [#allocation4], %s3465
        // Predicated region
        $region125: #{protonet_forward.5} parent=115 // pred_check
          %p3467 = pneg %p193
        $region126: #{protonet_forward.5} parent=115 // pred_check_branch
          %3469 = sbr.rel (%p3467) target = $region128
        $region127: #{protonet_forward.5} parent=115 // pred_region
          %s3470 = smul.addr %s18, 4
          %s3471 = scalar_lea.vmem %s7, %s3470
          // Predicated region
          $region129: #{protonet_forward.5} parent=127 // pred_check
            _
          $region130: #{protonet_forward.5} parent=127 // pred_check_branch
            %3473 = sbr.rel (0) target = $region132
          $region131: #{protonet_forward.5} parent=127 // pred_region
            // Predicated region
            $region133: #{protonet_forward.5} parent=131 // pred_check
              _
            $region134: #{protonet_forward.5} parent=131 // pred_check_branch
              %3475 = sbr.rel target = $region136
            $region135: #{protonet_forward.5} parent=131 // pred_region
              // Predicated region
              $region148: #{protonet_forward.5} parent=135 // pred_check
                _
              $region149: #{protonet_forward.5} parent=135 // pred_check_branch
                %3505 = sbr.rel (0) target = $region151
              $region150: #{protonet_forward.5} parent=135 // pred_region
                loop: start=0, step=1, limit=1
                $region152: #{protonet_forward.5} parent=150 // loop_pre_header
                  _
                $region153: #{protonet_forward.5} parent=150 // loop_header
                  %s3507 = sphi 0, %s3511
                  %p3508 = scmp.ge.s32.totalorder %s3507, 1
                  %s3512 = sphi %s3466, %s3466
                  %s3513 = sphi %s3471, %s3471
                $region154: #{protonet_forward.5} parent=150 // loop_header_branch
                  %3510 = sbr.rel (%p3508) target = $region158
                $region155: #{protonet_forward.5} parent=150 // loop_body
                  _
                $region156: #{protonet_forward.5} parent=150 // loop_footer
                  %s3511 = sadd.s32 1, %s3507
                $region157: #{protonet_forward.5} parent=150 // loop_footer_branch
                  %3506 = sbr.rel target = $region153
                $region158: #{protonet_forward.5} parent=150 // loop_exit
                  _
                %s3515 = ssub.s32 16, 1
                loop: start=0, step=1, limit=1
                $region159: #{protonet_forward.5} parent=150 // loop_pre_header
                  _
                $region160: #{protonet_forward.5} parent=150 // loop_header
                  %s3517 = sphi 0, %s3521
                  %p3518 = scmp.ge.s32.totalorder %s3517, 1
                  %s3522 = sphi %s3466, %s3466
                  %s3523 = sphi %s3471, %s3471
                $region161: #{protonet_forward.5} parent=150 // loop_header_branch
                  %3520 = sbr.rel (%p3518) target = $region165
                $region162: #{protonet_forward.5} parent=150 // loop_body
                  %v3524 = vld [vmem:[%s3522] sm:%s3515]
                  %3525 = vst [vmem:[%s3523] sm:%s3515] %v3524
                  %v3526 = vld [vmem:[%s3522 + $0x4] sm:%s3515]
                  %3527 = vst [vmem:[%s3523 + $0xc] sm:%s3515] %v3526
                  %v3528 = vld [vmem:[%s3522 + $0x8] sm:%s3515]
                  %3529 = vst [vmem:[%s3523 + $0x18] sm:%s3515] %v3528
                  %v3530 = vld [vmem:[%s3522 + $0xc] sm:%s3515]
                  %3531 = vst [vmem:[%s3523 + $0x24] sm:%s3515] %v3530
                  %v3532 = vld [vmem:[%s3522 + $0x10] sm:%s3515]
                  %3533 = vst [vmem:[%s3523 + $0x30] sm:%s3515] %v3532
                  %v3534 = vld [vmem:[%s3522 + $0x14] sm:%s3515]
                  %3535 = vst [vmem:[%s3523 + $0x3c] sm:%s3515] %v3534
                  %v3536 = vld [vmem:[%s3522 + $0x18] sm:%s3515]
                  %3537 = vst [vmem:[%s3523 + $0x48] sm:%s3515] %v3536
                  %v3538 = vld [vmem:[%s3522 + $0x1c] sm:%s3515]
                  %3539 = vst [vmem:[%s3523 + $0x54] sm:%s3515] %v3538
                $region163: #{protonet_forward.5} parent=150 // loop_footer
                  %s3521 = sadd.s32 1, %s3517
                $region164: #{protonet_forward.5} parent=150 // loop_footer_branch
                  %3516 = sbr.rel target = $region160
                $region165: #{protonet_forward.5} parent=150 // loop_exit
                  _
              $region151: #{protonet_forward.5} parent=135 // pred_fallthru
                _
            $region136: #{protonet_forward.5} parent=131 // pred_fallthru
              _
            // Predicated region
            $region137: #{protonet_forward.5} parent=131 // pred_check
              _
            $region138: #{protonet_forward.5} parent=131 // pred_check_branch
              %3477 = sbr.rel (0) target = $region140
            $region139: #{protonet_forward.5} parent=131 // pred_region
              %s3479 = ssub.s32 16, 1
              loop: start=0, step=1, limit=1
              $region141: #{protonet_forward.5} parent=139 // loop_pre_header
                _
              $region142: #{protonet_forward.5} parent=139 // loop_header
                %s3481 = sphi 0, %s3485
                %p3482 = scmp.ge.s32.totalorder %s3481, 1
                %s3486 = sphi %s3466, %s3466
                %s3487 = sphi %s3471, %s3471
              $region143: #{protonet_forward.5} parent=139 // loop_header_branch
                %3484 = sbr.rel (%p3482) target = $region147
              $region144: #{protonet_forward.5} parent=139 // loop_body
                %v3488 = vld [vmem:[%s3486] sm:%s3479]
                %3489 = vst [vmem:[%s3487] sm:%s3479] %v3488
                %v3490 = vld [vmem:[%s3486 + $0x4] sm:%s3479]
                %3491 = vst [vmem:[%s3487 + $0xc] sm:%s3479] %v3490
                %v3492 = vld [vmem:[%s3486 + $0x8] sm:%s3479]
                %3493 = vst [vmem:[%s3487 + $0x18] sm:%s3479] %v3492
                %v3494 = vld [vmem:[%s3486 + $0xc] sm:%s3479]
                %3495 = vst [vmem:[%s3487 + $0x24] sm:%s3479] %v3494
                %v3496 = vld [vmem:[%s3486 + $0x10] sm:%s3479]
                %3497 = vst [vmem:[%s3487 + $0x30] sm:%s3479] %v3496
                %v3498 = vld [vmem:[%s3486 + $0x14] sm:%s3479]
                %3499 = vst [vmem:[%s3487 + $0x3c] sm:%s3479] %v3498
                %v3500 = vld [vmem:[%s3486 + $0x18] sm:%s3479]
                %3501 = vst [vmem:[%s3487 + $0x48] sm:%s3479] %v3500
                %v3502 = vld [vmem:[%s3486 + $0x1c] sm:%s3479]
                %3503 = vst [vmem:[%s3487 + $0x54] sm:%s3479] %v3502
              $region145: #{protonet_forward.5} parent=139 // loop_footer
                %s3485 = sadd.s32 1, %s3481
              $region146: #{protonet_forward.5} parent=139 // loop_footer_branch
                %3480 = sbr.rel target = $region142
              $region147: #{protonet_forward.5} parent=139 // loop_exit
                _
            $region140: #{protonet_forward.5} parent=131 // pred_fallthru
              _
          $region132: #{protonet_forward.5} parent=127 // pred_fallthru
            _
          %3540 = vnop
        $region128: #{protonet_forward.5} parent=115 // pred_fallthru
          _
      $region116: #{protonet_forward.5} parent=5 // pred_fallthru
        _
      %p3541 = scmp.le.s32.totalorder 2, %s13
      // Predicated region
      $region166: #{protonet_forward.5} parent=5 // pred_check
        %p3542 = pneg %p3541
      $region167: #{protonet_forward.5} parent=5 // pred_check_branch
        %3544 = sbr.rel (%p3542) target = $region169
      $region168: #{protonet_forward.5} parent=5 // pred_region
        %s3545 = ssub.s32 %s13, 2
        // Predicated region
        $region170: #{protonet_forward.5} parent=168 // pred_check
          %p3546 = pneg %p199
        $region171: #{protonet_forward.5} parent=168 // pred_check_branch
          %3548 = sbr.rel (%p3546) target = $region173
        $region172: #{protonet_forward.5} parent=168 // pred_region
          %s3549 = sand.u32 %s184, 1
          %s3550 = sand.u32 %s184, 1
          %s3551 = smul.addr %s3550, 32
          %s3552 = scalar_lea.vmem [#allocation4], %s3551
        $region173: #{protonet_forward.5} parent=168 // pred_fallthru
          _
      $region169: #{protonet_forward.5} parent=5 // pred_fallthru
        _
    $region6: #{protonet_forward.5} parent=1 // loop_footer
      %s17 = sadd.s32 1, %s13
    $region7: #{protonet_forward.5} parent=1 // loop_footer_branch
      %12 = sbr.rel target = $region3
    $region8: #{protonet_forward.5} parent=1 // loop_exit
      _

// kernel: protonet_forward.6
$region0: #{protonet_forward.6}
  #allocation0 [shape = 'u32[]', space=smem, size = 0x4, offset = 0x4, fixed_abs, tag = 'smem constant byte address 0x4 - core index']
  #allocation1 [shape = 'u32[72,128]{1,0:T(1,128)}', space=vmem, size = 0x9000, scoped, tag = 'internal scratch']
  %s0 = inlined_call_operand.vmem [shape: bf16[16,1024], index: 0, kind: input, shape index: {}]
  %s1 = inlined_call_operand.vmem [shape: bf16[8,1024], index: 1, kind: input, shape index: {}]
  %s2 = inlined_call_operand.vmem [shape: f32[1,8], index: 2, kind: input, shape index: {}]
  %s3 = inlined_call_operand.vmem [shape: f32[16,4], index: 3, kind: output, shape index: {}]
  %s4 = sld [smem:[#allocation0]]
  $region22: #{protonet_forward.6} parent=0
    _
  %s6 = ssub.s32 1, %s4
  %s7 = scalar_select 0, %s6, %s4
  // Predicated region
  $region2: #{protonet_forward.6} parent=0 // pred_check
    _
  $region3: #{protonet_forward.6} parent=0 // pred_check_branch
    %9 = sbr.rel (0) target = $region5
  $region4: #{protonet_forward.6} parent=0 // pred_region
    _
  $region5: #{protonet_forward.6} parent=0 // pred_fallthru
    _
  // Predicated region
  $region6: #{protonet_forward.6} parent=0 // pred_check
    _
  $region7: #{protonet_forward.6} parent=0 // pred_check_branch
    %11 = sbr.rel (0) target = $region9
  $region8: #{protonet_forward.6} parent=0 // pred_region
    _
  $region9: #{protonet_forward.6} parent=0 // pred_fallthru
    _
  // Predicated region
  $region10: #{protonet_forward.6} parent=0 // pred_check
    _
  $region11: #{protonet_forward.6} parent=0 // pred_check_branch
    %13 = sbr.rel (0) target = $region13
  $region12: #{protonet_forward.6} parent=0 // pred_region
    _
  $region13: #{protonet_forward.6} parent=0 // pred_fallthru
    _
  %v14 = vld [vmem:[%s0] sm:$0xff]
  %v15 = vld [vmem:[%s0 + $0x8] sm:$0xff]
  %v16 = vld [vmem:[%s0 + $0x10] sm:$0xff]
  %v17 = vld [vmem:[%s0 + $0x18] sm:$0xff]
  %v18 = vld [vmem:[%s0 + $0x20] sm:$0xff]
  %v19 = vld [vmem:[%s0 + $0x28] sm:$0xff]
  %v20 = vld [vmem:[%s0 + $0x30] sm:$0xff]
  %v21 = vld [vmem:[%s0 + $0x38] sm:$0xff]
  %v22 = vunpack.c.l.bf16 %v14
  %v23 = vunpack.c.h.bf16 %v14
  %v24 = vunpack.c.l.bf16 %v15
  %v25 = vunpack.c.h.bf16 %v15
  %v26 = vunpack.c.l.bf16 %v16
  %v27 = vunpack.c.h.bf16 %v16
  %v28 = vunpack.c.l.bf16 %v17
  %v29 = vunpack.c.h.bf16 %v17
  %v30 = vunpack.c.l.bf16 %v18
  %v31 = vunpack.c.h.bf16 %v18
  %v32 = vunpack.c.l.bf16 %v19
  %v33 = vunpack.c.h.bf16 %v19
  %v34 = vunpack.c.l.bf16 %v20
  %v35 = vunpack.c.h.bf16 %v20
  %v36 = vunpack.c.l.bf16 %v21
  %v37 = vunpack.c.h.bf16 %v21
  %v38 = vld [vmem:[%s1] sm:$0xff]
  %v39 = vld [vmem:[%s1 + $0x8] sm:$0xff]
  %v40 = vld [vmem:[%s1 + $0x10] sm:$0xff]
  %v41 = vld [vmem:[%s1 + $0x18] sm:$0xff]
  %v42 = vunpack.c.l.bf16 %v38
  %v43 = vunpack.c.h.bf16 %v38
  %v44 = vunpack.c.l.bf16 %v39
  %v45 = vunpack.c.h.bf16 %v39
  %v46 = vunpack.c.l.bf16 %v40
  %v47 = vunpack.c.h.bf16 %v40
  %v48 = vunpack.c.l.bf16 %v41
  %v49 = vunpack.c.h.bf16 %v41
  %50 = vmatpush.xpose.msra.mxu0 0.0
  %51 = vmatpush.xpose.msra.mxu0 0.0
  %52 = vmatpush.xpose.msra.mxu0 0.0
  %53 = vmatpush.xpose.msra.mxu0 0.0
  %54 = vmatpush.xpose.msra.mxu0 0.0
  %55 = vmatpush.xpose.msra.mxu0 0.0
  %56 = vmatpush.xpose.msra.mxu0 0.0
  %57 = vmatpush.xpose.msra.mxu0 0.0
  %58 = vmatpush.xpose.msra.mxu0 0.0
  %59 = vmatpush.xpose.msra.mxu0 0.0
  %60 = vmatpush.xpose.msra.mxu0 0.0
  %61 = vmatpush.xpose.msra.mxu0 0.0
  %62 = vmatpush.xpose.msra.mxu0 0.0
  %63 = vmatpush.xpose.msra.mxu0 0.0
  %64 = vmatpush.xpose.msra.mxu0 0.0
  %65 = vmatpush.xpose.msra.mxu0 %v42
  %66 = vmatmul.f32.gmra.mxu0 %v22
  %v67 = vpop.f32.mrf.mxu0
  %v68 = vadd.f32 0.0, %v67
  %69 = vmatmul.f32.gmra.mxu0 %v30
  %v70 = vpop.f32.mrf.mxu0
  %v71 = vadd.f32 0.0, %v70
  %72 = vdwg.mxu0
  %73 = vmatpush.xpose.msra.mxu0 0.0
  %74 = vmatpush.xpose.msra.mxu0 0.0
  %75 = vmatpush.xpose.msra.mxu0 0.0
  %76 = vmatpush.xpose.msra.mxu0 0.0
  %77 = vmatpush.xpose.msra.mxu0 0.0
  %78 = vmatpush.xpose.msra.mxu0 0.0
  %79 = vmatpush.xpose.msra.mxu0 0.0
  %80 = vmatpush.xpose.msra.mxu0 0.0
  %81 = vmatpush.xpose.msra.mxu0 0.0
  %82 = vmatpush.xpose.msra.mxu0 0.0
  %83 = vmatpush.xpose.msra.mxu0 0.0
  %84 = vmatpush.xpose.msra.mxu0 0.0
  %85 = vmatpush.xpose.msra.mxu0 0.0
  %86 = vmatpush.xpose.msra.mxu0 0.0
  %87 = vmatpush.xpose.msra.mxu0 0.0
  %88 = vmatpush.xpose.msra.mxu0 %v43
  %89 = vmatmul.f32.gmra.mxu0 %v23
  %v90 = vpop.f32.mrf.mxu0
  %v91 = vadd.f32 %v68, %v90
  %92 = vmatmul.f32.gmra.mxu0 %v31
  %v93 = vpop.f32.mrf.mxu0
  %v94 = vadd.f32 %v71, %v93
  %95 = vdwg.mxu0
  %96 = vmatpush.xpose.msra.mxu0 0.0
  %97 = vmatpush.xpose.msra.mxu0 0.0
  %98 = vmatpush.xpose.msra.mxu0 0.0
  %99 = vmatpush.xpose.msra.mxu0 0.0
  %100 = vmatpush.xpose.msra.mxu0 0.0
  %101 = vmatpush.xpose.msra.mxu0 0.0
  %102 = vmatpush.xpose.msra.mxu0 0.0
  %103 = vmatpush.xpose.msra.mxu0 0.0
  %104 = vmatpush.xpose.msra.mxu0 0.0
  %105 = vmatpush.xpose.msra.mxu0 0.0
  %106 = vmatpush.xpose.msra.mxu0 0.0
  %107 = vmatpush.xpose.msra.mxu0 0.0
  %108 = vmatpush.xpose.msra.mxu0 0.0
  %109 = vmatpush.xpose.msra.mxu0 0.0
  %110 = vmatpush.xpose.msra.mxu0 0.0
  %111 = vmatpush.xpose.msra.mxu0 %v44
  %112 = vmatmul.f32.gmra.mxu0 %v24
  %v113 = vpop.f32.mrf.mxu0
  %v114 = vadd.f32 %v91, %v113
  %115 = vmatmul.f32.gmra.mxu0 %v32
  %v116 = vpop.f32.mrf.mxu0
  %v117 = vadd.f32 %v94, %v116
  %118 = vdwg.mxu0
  %119 = vmatpush.xpose.msra.mxu0 0.0
  %120 = vmatpush.xpose.msra.mxu0 0.0
  %121 = vmatpush.xpose.msra.mxu0 0.0
  %122 = vmatpush.xpose.msra.mxu0 0.0
  %123 = vmatpush.xpose.msra.mxu0 0.0
  %124 = vmatpush.xpose.msra.mxu0 0.0
  %125 = vmatpush.xpose.msra.mxu0 0.0
  %126 = vmatpush.xpose.msra.mxu0 0.0
  %127 = vmatpush.xpose.msra.mxu0 0.0
  %128 = vmatpush.xpose.msra.mxu0 0.0
  %129 = vmatpush.xpose.msra.mxu0 0.0
  %130 = vmatpush.xpose.msra.mxu0 0.0
  %131 = vmatpush.xpose.msra.mxu0 0.0
  %132 = vmatpush.xpose.msra.mxu0 0.0
  %133 = vmatpush.xpose.msra.mxu0 0.0
  %134 = vmatpush.xpose.msra.mxu0 %v45
  %135 = vmatmul.f32.gmra.mxu0 %v25
  %v136 = vpop.f32.mrf.mxu0
  %v137 = vadd.f32 %v114, %v136
  %138 = vmatmul.f32.gmra.mxu0 %v33
  %v139 = vpop.f32.mrf.mxu0
  %v140 = vadd.f32 %v117, %v139
  %141 = vdwg.mxu0
  %142 = vmatpush.xpose.msra.mxu0 0.0
  %143 = vmatpush.xpose.msra.mxu0 0.0
  %144 = vmatpush.xpose.msra.mxu0 0.0
  %145 = vmatpush.xpose.msra.mxu0 0.0
  %146 = vmatpush.xpose.msra.mxu0 0.0
  %147 = vmatpush.xpose.msra.mxu0 0.0
  %148 = vmatpush.xpose.msra.mxu0 0.0
  %149 = vmatpush.xpose.msra.mxu0 0.0
  %150 = vmatpush.xpose.msra.mxu0 0.0
  %151 = vmatpush.xpose.msra.mxu0 0.0
  %152 = vmatpush.xpose.msra.mxu0 0.0
  %153 = vmatpush.xpose.msra.mxu0 0.0
  %154 = vmatpush.xpose.msra.mxu0 0.0
  %155 = vmatpush.xpose.msra.mxu0 0.0
  %156 = vmatpush.xpose.msra.mxu0 0.0
  %157 = vmatpush.xpose.msra.mxu0 %v46
  %158 = vmatmul.f32.gmra.mxu0 %v26
  %v159 = vpop.f32.mrf.mxu0
  %v160 = vadd.f32 %v137, %v159
  %161 = vmatmul.f32.gmra.mxu0 %v34
  %v162 = vpop.f32.mrf.mxu0
  %v163 = vadd.f32 %v140, %v162
  %164 = vdwg.mxu0
  %165 = vmatpush.xpose.msra.mxu0 0.0
  %166 = vmatpush.xpose.msra.mxu0 0.0
  %167 = vmatpush.xpose.msra.mxu0 0.0
  %168 = vmatpush.xpose.msra.mxu0 0.0
  %169 = vmatpush.xpose.msra.mxu0 0.0
  %170 = vmatpush.xpose.msra.mxu0 0.0
  %171 = vmatpush.xpose.msra.mxu0 0.0
  %172 = vmatpush.xpose.msra.mxu0 0.0
  %173 = vmatpush.xpose.msra.mxu0 0.0
  %174 = vmatpush.xpose.msra.mxu0 0.0
  %175 = vmatpush.xpose.msra.mxu0 0.0
  %176 = vmatpush.xpose.msra.mxu0 0.0
  %177 = vmatpush.xpose.msra.mxu0 0.0
  %178 = vmatpush.xpose.msra.mxu0 0.0
  %179 = vmatpush.xpose.msra.mxu0 0.0
  %180 = vmatpush.xpose.msra.mxu0 %v47
  %181 = vmatmul.f32.gmra.mxu0 %v27
  %v182 = vpop.f32.mrf.mxu0
  %v183 = vadd.f32 %v160, %v182
  %184 = vmatmul.f32.gmra.mxu0 %v35
  %v185 = vpop.f32.mrf.mxu0
  %v186 = vadd.f32 %v163, %v185
  %187 = vdwg.mxu0
  %188 = vmatpush.xpose.msra.mxu0 0.0
  %189 = vmatpush.xpose.msra.mxu0 0.0
  %190 = vmatpush.xpose.msra.mxu0 0.0
  %191 = vmatpush.xpose.msra.mxu0 0.0
  %192 = vmatpush.xpose.msra.mxu0 0.0
  %193 = vmatpush.xpose.msra.mxu0 0.0
  %194 = vmatpush.xpose.msra.mxu0 0.0
  %195 = vmatpush.xpose.msra.mxu0 0.0
  %196 = vmatpush.xpose.msra.mxu0 0.0
  %197 = vmatpush.xpose.msra.mxu0 0.0
  %198 = vmatpush.xpose.msra.mxu0 0.0
  %199 = vmatpush.xpose.msra.mxu0 0.0
  %200 = vmatpush.xpose.msra.mxu0 0.0
  %201 = vmatpush.xpose.msra.mxu0 0.0
  %202 = vmatpush.xpose.msra.mxu0 0.0
  %203 = vmatpush.xpose.msra.mxu0 %v48
  %204 = vmatmul.f32.gmra.mxu0 %v28
  %v205 = vpop.f32.mrf.mxu0
  %v206 = vadd.f32 %v183, %v205
  %207 = vmatmul.f32.gmra.mxu0 %v36
  %v208 = vpop.f32.mrf.mxu0
  %v209 = vadd.f32 %v186, %v208
  %210 = vdwg.mxu0
  %211 = vmatpush.xpose.msra.mxu0 0.0
  %212 = vmatpush.xpose.msra.mxu0 0.0
  %213 = vmatpush.xpose.msra.mxu0 0.0
  %214 = vmatpush.xpose.msra.mxu0 0.0
  %215 = vmatpush.xpose.msra.mxu0 0.0
  %216 = vmatpush.xpose.msra.mxu0 0.0
  %217 = vmatpush.xpose.msra.mxu0 0.0
  %218 = vmatpush.xpose.msra.mxu0 0.0
  %219 = vmatpush.xpose.msra.mxu0 0.0
  %220 = vmatpush.xpose.msra.mxu0 0.0
  %221 = vmatpush.xpose.msra.mxu0 0.0
  %222 = vmatpush.xpose.msra.mxu0 0.0
  %223 = vmatpush.xpose.msra.mxu0 0.0
  %224 = vmatpush.xpose.msra.mxu0 0.0
  %225 = vmatpush.xpose.msra.mxu0 0.0
  %226 = vmatpush.xpose.msra.mxu0 %v49
  %227 = vmatmul.f32.gmra.mxu0 %v29
  %v228 = vpop.f32.mrf.mxu0
  %v229 = vadd.f32 %v206, %v228
  %230 = vmatmul.f32.gmra.mxu0 %v37
  %v231 = vpop.f32.mrf.mxu0
  %v232 = vadd.f32 %v209, %v231
  %233 = vdwg.mxu0
  %v234 = vmul.f32 %v22, %v22
  %v235 = vmul.f32 %v23, %v23
  %v236 = vmul.f32 %v24, %v24
  %v237 = vmul.f32 %v25, %v25
  %v238 = vmul.f32 %v26, %v26
  %v239 = vmul.f32 %v27, %v27
  %v240 = vmul.f32 %v28, %v28
  %v241 = vmul.f32 %v29, %v29
  %v242 = vmul.f32 %v30, %v30
  %v243 = vmul.f32 %v31, %v31
  %v244 = vmul.f32 %v32, %v32
  %v245 = vmul.f32 %v33, %v33
  %v246 = vmul.f32 %v34, %v34
  %v247 = vmul.f32 %v35, %v35
  %v248 = vmul.f32 %v36, %v36
  %v249 = vmul.f32 %v37, %v37
  %v250 = vadd.f32 %v234, %v235
  %v251 = vadd.f32 %v250, %v236
  %v252 = vadd.f32 %v251, %v237
  %v253 = vadd.f32 %v252, %v238
  %v254 = vadd.f32 %v253, %v239
  %v255 = vadd.f32 %v254, %v240
  %v256 = vadd.f32 %v255, %v241
  %257 = vadd.xlane.f32.xlu0 %v256
  %v258 = vpop.xlane.xlu0 %257
  %v259 = vadd.f32 %v242, %v243
  %v260 = vadd.f32 %v259, %v244
  %v261 = vadd.f32 %v260, %v245
  %v262 = vadd.f32 %v261, %v246
  %v263 = vadd.f32 %v262, %v247
  %v264 = vadd.f32 %v263, %v248
  %v265 = vadd.f32 %v264, %v249
  %266 = vadd.xlane.f32.xlu0 %v265
  %v267 = vpop.xlane.xlu0 %266
  %v268 = vld [vmem:[%s2] sm:$0x1]
  %v270 = vperm.slane %v268, 0
  %v272 = vadd.f32 %v258, %v270
  %v273 = vadd.f32 %v267, %v270
  %v274 = vmul.f32 %v229, 2.0
  %v275 = vmul.f32 %v232, 2.0
  %v276 = vsub.f32 %v272, %v274
  %v277 = vsub.f32 %v273, %v275
  %v278 = vmax.f32 %v276, 0.0
  %v279 = vmax.f32 %v277, 0.0
  %v280 = vrsqrt.pop %v278
  %v281 = vmul.f32 %v280, %v278
  %v282 = vmul.f32 %v281, %v280
  %v283 = vmul.f32 0.5, %v282
  %v284 = vsub.f32 1.5, %v283
  %v285 = vmul.f32 %v280, %v284
  %v286 = vmul.f32 %v278, %v285
  %vm287 = vcmp.eq.f32.partialorder %v278, inf
  %v288 = vsel %vm287, %v278, %v286
  %vm289 = vcmp.eq.f32.partialorder %v278, 0.0
  %v290 = vand.u32 %v278, 2147483648
  %v291 = vsel %vm289, %v290, %v288
  %v292 = vrsqrt.pop %v279
  %v293 = vmul.f32 %v292, %v279
  %v294 = vmul.f32 %v293, %v292
  %v295 = vmul.f32 0.5, %v294
  %v296 = vsub.f32 1.5, %v295
  %v297 = vmul.f32 %v292, %v296
  %v298 = vmul.f32 %v279, %v297
  %vm299 = vcmp.eq.f32.partialorder %v279, inf
  %v300 = vsel %vm299, %v279, %v298
  %vm301 = vcmp.eq.f32.partialorder %v279, 0.0
  %v302 = vand.u32 %v279, 2147483648
  %v303 = vsel %vm301, %v302, %v300
  %306 = vrot.lane.b32.xlu0 %v291, 124
  %v307 = vpop.permute.xlu0 %306
  %308 = vrot.lane.b32.xlu0 %v303, 124
  %v309 = vpop.permute.xlu0 %308
  %v312 = vmin.f32 %v291, %v307
  %v313 = vmin.f32 %v303, %v309
  %vm314 = vcmask 31744
  %315 = vst.msk [vmem:[%s3] sm:$0xff] %vm314, %v312
  %316 = vst.msk [vmem:[%s3 + $0x8] sm:$0xff] %vm314, %v313
  // Predicated region
  $region14: #{protonet_forward.6} parent=0 // pred_check
    _
  $region15: #{protonet_forward.6} parent=0 // pred_check_branch
    %318 = sbr.rel (0) target = $region17
  $region16: #{protonet_forward.6} parent=0 // pred_region
    _
  $region17: #{protonet_forward.6} parent=0 // pred_fallthru
    _
  // Predicated region
  $region18: #{protonet_forward.6} parent=0 // pred_check
    _
  $region19: #{protonet_forward.6} parent=0 // pred_check_branch
    %320 = sbr.rel (0) target = $region21
  $region20: #{protonet_forward.6} parent=0 // pred_region
    _
  $region21: #{protonet_forward.6} parent=0 // pred_fallthru
    _

// kernel: protonet_forward.7
$region0: #{protonet_forward.7}
  #allocation0 [shape = 'u32[]', space=smem, size = 0x4, offset = 0x4, fixed_abs, tag = 'smem constant byte address 0x4 - core index']
  #allocation1 [shape = 'u32[72,128]{1,0:T(1,128)}', space=vmem, size = 0x9000, scoped, tag = 'internal scratch']
  %s0 = inlined_call_operand.vmem [shape: f32[8,4], index: 0, kind: input, shape index: {}]
  %s1 = inlined_call_operand.vmem [shape: f32[4,4], index: 1, kind: input, shape index: {}]
  %s2 = inlined_call_operand.vmem [shape: f32[1,4], index: 2, kind: input, shape index: {}]
  %s3 = inlined_call_operand.vmem [shape: f32[8,4], index: 3, kind: output, shape index: {}]
  %s4 = sld [smem:[#allocation0]]
  $region22: #{protonet_forward.7} parent=0
    _
  %s6 = ssub.s32 1, %s4
  %s7 = scalar_select 0, %s6, %s4
  // Predicated region
  $region2: #{protonet_forward.7} parent=0 // pred_check
    _
  $region3: #{protonet_forward.7} parent=0 // pred_check_branch
    %9 = sbr.rel (0) target = $region5
  $region4: #{protonet_forward.7} parent=0 // pred_region
    _
  $region5: #{protonet_forward.7} parent=0 // pred_fallthru
    _
  // Predicated region
  $region6: #{protonet_forward.7} parent=0 // pred_check
    _
  $region7: #{protonet_forward.7} parent=0 // pred_check_branch
    %11 = sbr.rel (0) target = $region9
  $region8: #{protonet_forward.7} parent=0 // pred_region
    _
  $region9: #{protonet_forward.7} parent=0 // pred_fallthru
    _
  // Predicated region
  $region10: #{protonet_forward.7} parent=0 // pred_check
    _
  $region11: #{protonet_forward.7} parent=0 // pred_check_branch
    %13 = sbr.rel (0) target = $region13
  $region12: #{protonet_forward.7} parent=0 // pred_region
    _
  $region13: #{protonet_forward.7} parent=0 // pred_fallthru
    _
  %v14 = vld [vmem:[%s0] sm:$0xff]
  %v15 = vld [vmem:[%s1] sm:$0xf]
  %vm16 = vcmask 31744
  %v18 = vsel %vm16, %v14, 0
  %v21 = vsel %vm16, %v15, 0
  %23 = vmatpush.xpose.msra.mxu0 0.0
  %24 = vmatpush.xpose.msra.mxu0 0.0
  %25 = vmatpush.xpose.msra.mxu0 0.0
  %26 = vmatpush.xpose.msra.mxu0 0.0
  %27 = vmatpush.xpose.msra.mxu0 0.0
  %28 = vmatpush.xpose.msra.mxu0 0.0
  %29 = vmatpush.xpose.msra.mxu0 0.0
  %30 = vmatpush.xpose.msra.mxu0 0.0
  %31 = vmatpush.xpose.msra.mxu0 0.0
  %32 = vmatpush.xpose.msra.mxu0 0.0
  %33 = vmatpush.xpose.msra.mxu0 0.0
  %34 = vmatpush.xpose.msra.mxu0 0.0
  %35 = vmatpush.xpose.msra.mxu0 0.0
  %36 = vmatpush.xpose.msra.mxu0 0.0
  %37 = vmatpush.xpose.msra.mxu0 0.0
  %38 = vmatpush.xpose.msra.mxu0 %v21
  %39 = vmatmul.f32.gmra.mxu0 %v18
  %v40 = vpop.f32.mrf.mxu0
  %v41 = vadd.f32 0.0, %v40
  %42 = vdwg.mxu0
  %v43 = vmul.f32 %v14, %v14
  %v44 = vsel %vm16, %v43, 0.0
  %45 = vadd.xlane.f32.xlu0 %v44
  %v46 = vpop.xlane.xlu0 %45
  %v47 = vld [vmem:[%s2] sm:$0x1]
  %v49 = vperm.slane %v47, 0
  %v51 = vadd.f32 %v46, %v49
  %v52 = vmul.f32 %v41, 2.0
  %v53 = vsub.f32 %v51, %v52
  %v54 = vsub.f32 0.0, %v53
  %v55 = vmul.f32 %v54, 0.0625
  %56 = vst.msk [vmem:[%s3] sm:$0xff] %vm16, %v55
  // Predicated region
  $region14: #{protonet_forward.7} parent=0 // pred_check
    _
  $region15: #{protonet_forward.7} parent=0 // pred_check_branch
    %58 = sbr.rel (0) target = $region17
  $region16: #{protonet_forward.7} parent=0 // pred_region
    _
  $region17: #{protonet_forward.7} parent=0 // pred_fallthru
    _
  // Predicated region
  $region18: #{protonet_forward.7} parent=0 // pred_check
    _
  $region19: #{protonet_forward.7} parent=0 // pred_check_branch
    %60 = sbr.rel (0) target = $region21
  $region20: #{protonet_forward.7} parent=0 // pred_region
    _
  $region21: #{protonet_forward.7} parent=0 // pred_fallthru
    _

</llo_original>
